<compile_context>
chip_gen: v5e
topology: v5e:2x2
jax: 0.10.0
libtpu: 0.0.40
codegen_flags: <defaults>
</compile_context>

<pallas_src>
import functools

import jax
import jax.numpy as jnp
from jax.experimental import pallas as pl
from jax.experimental.pallas import tpu as pltpu


def _round_up(n, m):
    return ((n + m - 1) // m) * m


def _pad_to(a, axis, target):
    pad = target - a.shape[axis]
    if pad == 0:
        return a
    widths = [(0, 0)] * a.ndim
    widths[axis] = (0, pad)
    return jnp.pad(a, widths)


# Single-buffer resident (constant index-map) blocks when the API supports it.
_RESIDENT_PIPELINE_MODE = None
try:
    _RESIDENT_PIPELINE_MODE = pl.Buffered(1)
    pl.BlockSpec((8, 128), lambda i: (0, 0), pipeline_mode=_RESIDENT_PIPELINE_MODE)
except Exception:  # older API: fall back to default double-buffering
    _RESIDENT_PIPELINE_MODE = None


def _resident_spec(shape):
    index_map = lambda i: (0, 0)
    if _RESIDENT_PIPELINE_MODE is not None:
        return pl.BlockSpec(shape, index_map, pipeline_mode=_RESIDENT_PIPELINE_MODE)
    return pl.BlockSpec(shape, index_map)


def _pick_tile_b(B):
    """Per-generation batch tile: v5e 128, v6e 256, v7x >=2 parallel steps."""
    kind = ""
    try:
        kind = jax.devices()[0].device_kind.lower()
    except Exception:
        pass
    is_v5e = ("v5 lite" in kind) or ("v5e" in kind) or ("v5litepod" in kind)
    is_v7 = "v7" in kind
    if is_v5e:
        t = 128                      # 4x128x128 MXU; 256 rows buys nothing
    elif is_v7:
        t = 256 if B >= 512 else 128  # keep >=2 "parallel" steps for 2 TCs
    else:                            # v6e and unknown/newer
        t = 256                      # matches 2x256x256 MXU rows
    if B <= t:
        return max(8, _round_up(B, 8))
    return t


def _cell_embednet_kernel(x_ref, w1_ref, b1_ref, w2_ref, b2_ref,
                          w3_ref, b3_ref, o_ref):
    # bf16 operands on the MXU, f32 accumulation; ReLU / casts on the VPU.
    cdt = w1_ref.dtype
    x = x_ref[...].astype(cdt)                              # f32 -> bf16 in-kernel
    h = jnp.dot(x, w1_ref[...],
                preferred_element_type=jnp.float32) + b1_ref[...]
    h = jnp.maximum(h, 0.0).astype(cdt)                     # relu(self.fc(x))

    h = jnp.dot(h, w2_ref[...],
                preferred_element_type=jnp.float32) + b2_ref[...]
    h = jnp.maximum(h, 0.0).astype(cdt)                     # classifier[0]: Linear+ReLU
    # TODO(synk): nn.Dropout(p=0.5) is identity at inference; no mask applied here.

    out = jnp.dot(h, w3_ref[...],
                  preferred_element_type=jnp.float32) + b3_ref[...]
    o_ref[...] = out.astype(o_ref.dtype)                    # self.fc2(x)


def prepare_params(params, *, compute_dtype=jnp.bfloat16):
    """One-time pad (128-lane multiples) + cast of weights/biases.

    Call once at init and reuse the result; redoing this every forward call
    roughly doubles the HBM traffic of this memory-bound kernel.
    Weights are [in, out] (= PyTorch W^T); biases are [1, out]; biases stay f32.
    """
    w1, b1 = params["w1"], params["b1"]
    w2, b2 = params["w2"], params["b2"]
    w3, b3 = params["w3"], params["b3"]
    D, H1 = w1.shape
    H2, E = w2.shape[1], w3.shape[1]
    Dp, H1p, H2p, Ep = (_round_up(d, 128) for d in (D, H1, H2, E))
    prepped = {
        "w1": _pad_to(_pad_to(w1, 0, Dp), 1, H1p).astype(compute_dtype),
        "b1": _pad_to(b1, 1, H1p).astype(jnp.float32),
        "w2": _pad_to(_pad_to(w2, 0, H1p), 1, H2p).astype(compute_dtype),
        "b2": _pad_to(b2, 1, H2p).astype(jnp.float32),
        "w3": _pad_to(_pad_to(w3, 0, H2p), 1, Ep).astype(compute_dtype),
        "b3": _pad_to(b3, 1, Ep).astype(jnp.float32),
    }
    meta = {"fc_in_dim": D, "embed_dim": E}
    return prepped, meta


def cell_embednet_forward(x, prepped, *, embed_dim, tile_b=None,
                          out_dtype=jnp.bfloat16):
    """x: [B, fc_in_dim] f32. prepped: output of prepare_params (padded/cast)."""
    B, D_in = x.shape
    w1, b1 = prepped["w1"], prepped["b1"]
    w2, b2 = prepped["w2"], prepped["b2"]
    w3, b3 = prepped["w3"], prepped["b3"]
    Dp, H1p = w1.shape
    H2p, Ep = w2.shape[1], w3.shape[1]
    E = embed_dim

    tile_b = _pick_tile_b(B) if tile_b is None else tile_b
    Bp = _round_up(B, tile_b)
    grid = (Bp // tile_b,)

    # Pad x (kept f32) only when ragged; no wrapper-side cast.
    xp = x
    if D_in != Dp:
        xp = _pad_to(xp, 1, Dp)
    if B != Bp:
        xp = _pad_to(xp, 0, Bp)

    cdt_size = jnp.dtype(w1.dtype).itemsize
    out_size = jnp.dtype(out_dtype).itemsize
    w_bytes = (Dp * H1p + H1p * H2p + H2p * Ep) * cdt_size
    b_bytes = (H1p + H2p + Ep) * 4

    cost = pl.CostEstimate(
        flops=2 * Bp * (Dp * H1p + H1p * H2p + H2p * Ep),
        transcendentals=0,
        bytes_accessed=Bp * Dp * 4 + w_bytes + b_bytes + Bp * Ep * out_size,
    )

    # Honest VMEM sizing: weights (1 or 2 buffers) + double-buffered x/out
    # tiles + f32 intermediates, with 2x headroom, capped at v7x's 64 MiB/TC.
    w_buf = 1 if _RESIDENT_PIPELINE_MODE is not None else 2
    working_set = (
        w_buf * (w_bytes + b_bytes)
        + 2 * tile_b * Dp * 4
        + 2 * tile_b * Ep * out_size
        + 3 * tile_b * max(H1p, H2p) * 4
    )
    vmem_limit = int(min(64 * 1024 * 1024,
                         max(8 * 1024 * 1024, 2 * working_set)))

    out = pl.pallas_call(
        _cell_embednet_kernel,
        out_shape=jax.ShapeDtypeStruct((Bp, Ep), out_dtype),
        grid_spec=pltpu.PrefetchScalarGridSpec(
            num_scalar_prefetch=0,
            grid=grid,
            in_specs=[
                pl.BlockSpec((tile_b, Dp), lambda i: (i, 0)),   # x tile (f32, pipelined)
                _resident_spec((Dp, H1p)),                      # w1 (resident)
                _resident_spec((1, H1p)),                       # b1
                _resident_spec((H1p, H2p)),                     # w2
                _resident_spec((1, H2p)),                       # b2
                _resident_spec((H2p, Ep)),                      # w3
                _resident_spec((1, Ep)),                        # b3
            ],
            out_specs=pl.BlockSpec((tile_b, Ep), lambda i: (i, 0)),
        ),
        compiler_params=pltpu.CompilerParams(
            dimension_semantics=("parallel",),
            vmem_limit_bytes=vmem_limit,
        ),
        cost_estimate=cost,
    )(xp, w1, b1, w2, b2, w3, b3)

    if Bp != B or Ep != E:
        out = out[:B, :E]
    return out


def init_params(key, fc_in_dim, fc_hid_dim, embed_dim, dtype=jnp.float32):
    """Deterministic synthetic params. Weights stored as [in, out] (= PyTorch W^T)."""
    k = jax.random.split(key, 6)

    def uniform_fan_in(kk, fan_in, shape):      # PyTorch nn.Linear default init
        bound = 1.0 / jnp.sqrt(fan_in)
        return jax.random.uniform(kk, shape, dtype, -bound, bound)

    def xavier_uniform(kk, fan_in, fan_out):    # classifier layers use xavier_uniform_
        bound = jnp.sqrt(6.0 / (fan_in + fan_out))
        return jax.random.uniform(kk, (fan_in, fan_out), dtype, -bound, bound)

    H1, H2 = fc_hid_dim[0], fc_hid_dim[-1]
    return {
        "w1": uniform_fan_in(k[0], fc_in_dim, (fc_in_dim, H1)),
        "b1": uniform_fan_in(k[1], fc_in_dim, (1, H1)),
        "w2": xavier_uniform(k[2], H1, H2),
        "b2": uniform_fan_in(k[3], H1, (1, H2)),
        "w3": uniform_fan_in(k[4], H2, (H2, embed_dim)),
        "b3": uniform_fan_in(k[5], H2, (1, embed_dim)),
    }


def reference_forward(x, p, compute_dtype=jnp.bfloat16):
    """Same math as the kernel: bf16 operands, f32 accumulation, f32 biases."""
    c = lambda a: a.astype(compute_dtype)
    h = jnp.maximum(
        jnp.dot(c(x), c(p["w1"]), preferred_element_type=jnp.float32) + p["b1"], 0.0)
    h = jnp.maximum(
        jnp.dot(c(h), c(p["w2"]), preferred_element_type=jnp.float32) + p["b2"], 0.0)
    return jnp.dot(c(h), c(p["w3"]), preferred_element_type=jnp.float32) + p["b3"]


if __name__ == "__main__":
    # Module-default feature shapes; batch kept small.
    batch, fc_in_dim = 256, 1024
    fc_hid_dim = [512, 512]
    embed_dim = 512

    key = jax.random.PRNGKey(0)
    kx, kp = jax.random.split(key)
    x = jax.random.normal(kx, (batch, fc_in_dim), jnp.float32)
    params = init_params(kp, fc_in_dim, fc_hid_dim, embed_dim)

    # One-time hoisted pad + bf16 cast of the weights (NOT redone per call).
    prepped, meta = prepare_params(params, compute_dtype=jnp.bfloat16)

    fwd = jax.jit(functools.partial(cell_embednet_forward,
                                    embed_dim=meta["embed_dim"],
                                    out_dtype=jnp.bfloat16))
    out = jax.block_until_ready(fwd(x, prepped))

    ref = reference_forward(x, params)
    assert out.shape == (batch, embed_dim)
    assert out.dtype == jnp.bfloat16
    assert jnp.allclose(out.astype(jnp.float32), ref, atol=2e-2, rtol=2e-2), \
        "mismatch vs reference"
    print("KERNEL_OK")
</pallas_src>

<mosaic_0001>
module attributes {stable_mosaic.version = 11 : i64} {
  func.func @_cell_embednet_kernel(%arg0: i32, %arg1: memref<256x1024xf32, #tpu.memory_space<vmem>>, %arg2: memref<1024x512xbf16, #tpu.memory_space<vmem>>, %arg3: memref<1x512xf32, #tpu.memory_space<vmem>>, %arg4: memref<512x512xbf16, #tpu.memory_space<vmem>>, %arg5: memref<1x512xf32, #tpu.memory_space<vmem>>, %arg6: memref<512x512xbf16, #tpu.memory_space<vmem>>, %arg7: memref<1x512xf32, #tpu.memory_space<vmem>>, %arg8: memref<256x512xbf16, #tpu.memory_space<vmem>>) attributes {dimension_semantics = [#tpu.dimension_semantics<parallel>], iteration_bounds = array<i64: 1>, scalar_prefetch = 0 : i64, scratch_operands = 0 : i64, tpu.core_type = #tpu.core_type<tc>, window_params = [{transform_indices = @transform_0, window_bounds = array<i64: 256, 1024>}, {pipeline_mode = #tpu.pipeline_mode<synchronous>, transform_indices = @transform_1, window_bounds = array<i64: 1024, 512>}, {pipeline_mode = #tpu.pipeline_mode<synchronous>, transform_indices = @transform_2, window_bounds = array<i64: 1, 512>}, {pipeline_mode = #tpu.pipeline_mode<synchronous>, transform_indices = @transform_3, window_bounds = array<i64: 512, 512>}, {pipeline_mode = #tpu.pipeline_mode<synchronous>, transform_indices = @transform_4, window_bounds = array<i64: 1, 512>}, {pipeline_mode = #tpu.pipeline_mode<synchronous>, transform_indices = @transform_5, window_bounds = array<i64: 512, 512>}, {pipeline_mode = #tpu.pipeline_mode<synchronous>, transform_indices = @transform_6, window_bounds = array<i64: 1, 512>}, {transform_indices = @transform_7, window_bounds = array<i64: 256, 512>}]} {
    %c0 = arith.constant 0 : index
    %c0_0 = arith.constant 0 : index
    %0 = vector.load %arg1[%c0, %c0_0] : memref<256x1024xf32, #tpu.memory_space<vmem>>, vector<256x1024xf32>
    %1 = arith.truncf %0 : vector<256x1024xf32> to vector<256x1024xbf16>
    %c0_1 = arith.constant 0 : index
    %c0_2 = arith.constant 0 : index
    %2 = vector.load %arg2[%c0_1, %c0_2] : memref<1024x512xbf16, #tpu.memory_space<vmem>>, vector<1024x512xbf16>
    %cst = arith.constant dense<0.000000e+00> : vector<256x512xf32>
    %3 = tpu.matmul %1, %2, %cst {dimension_numbers = #tpu.dot_dimension_numbers<[1], [0], [0], [1], [0, 0, 1, 1], [], []>} : vector<256x1024xbf16>, vector<1024x512xbf16>, vector<256x512xf32> -> vector<256x512xf32>
    %c0_3 = arith.constant 0 : index
    %c0_4 = arith.constant 0 : index
    %4 = vector.load %arg3[%c0_3, %c0_4] : memref<1x512xf32, #tpu.memory_space<vmem>>, vector<1x512xf32>
    %5 = vector.broadcast %4 : vector<1x512xf32> to vector<256x512xf32>
    %6 = arith.addf %3, %5 : vector<256x512xf32>
    %cst_5 = arith.constant 0.000000e+00 : f32
    %7 = vector.broadcast %cst_5 : f32 to vector<256x512xf32>
    %8 = arith.maximumf %6, %7 : vector<256x512xf32>
    %9 = arith.truncf %8 : vector<256x512xf32> to vector<256x512xbf16>
    %c0_6 = arith.constant 0 : index
    %c0_7 = arith.constant 0 : index
    %10 = vector.load %arg4[%c0_6, %c0_7] : memref<512x512xbf16, #tpu.memory_space<vmem>>, vector<512x512xbf16>
    %cst_8 = arith.constant dense<0.000000e+00> : vector<256x512xf32>
    %11 = tpu.matmul %9, %10, %cst_8 {dimension_numbers = #tpu.dot_dimension_numbers<[1], [0], [0], [1], [0, 0, 1, 1], [], []>} : vector<256x512xbf16>, vector<512x512xbf16>, vector<256x512xf32> -> vector<256x512xf32>
    %c0_9 = arith.constant 0 : index
    %c0_10 = arith.constant 0 : index
    %12 = vector.load %arg5[%c0_9, %c0_10] : memref<1x512xf32, #tpu.memory_space<vmem>>, vector<1x512xf32>
    %13 = vector.broadcast %12 : vector<1x512xf32> to vector<256x512xf32>
    %14 = arith.addf %11, %13 : vector<256x512xf32>
    %cst_11 = arith.constant 0.000000e+00 : f32
    %15 = vector.broadcast %cst_11 : f32 to vector<256x512xf32>
    %16 = arith.maximumf %14, %15 : vector<256x512xf32>
    %17 = arith.truncf %16 : vector<256x512xf32> to vector<256x512xbf16>
    %c0_12 = arith.constant 0 : index
    %c0_13 = arith.constant 0 : index
    %18 = vector.load %arg6[%c0_12, %c0_13] : memref<512x512xbf16, #tpu.memory_space<vmem>>, vector<512x512xbf16>
    %cst_14 = arith.constant dense<0.000000e+00> : vector<256x512xf32>
    %19 = tpu.matmul %17, %18, %cst_14 {dimension_numbers = #tpu.dot_dimension_numbers<[1], [0], [0], [1], [0, 0, 1, 1], [], []>} : vector<256x512xbf16>, vector<512x512xbf16>, vector<256x512xf32> -> vector<256x512xf32>
    %c0_15 = arith.constant 0 : index
    %c0_16 = arith.constant 0 : index
    %20 = vector.load %arg7[%c0_15, %c0_16] : memref<1x512xf32, #tpu.memory_space<vmem>>, vector<1x512xf32>
    %21 = vector.broadcast %20 : vector<1x512xf32> to vector<256x512xf32>
    %22 = arith.addf %19, %21 : vector<256x512xf32>
    %23 = arith.truncf %22 : vector<256x512xf32> to vector<256x512xbf16>
    %c0_17 = arith.constant 0 : index
    %c0_18 = arith.constant 0 : index
    %24 = vector.load %arg8[%c0_17, %c0_18] : memref<256x512xbf16, #tpu.memory_space<vmem>>, vector<256x512xbf16>
    tpu.vector_store %arg8[%c0_17, %c0_18], %23 {strides = array<i32>} : memref<256x512xbf16, #tpu.memory_space<vmem>>, vector<256x512xbf16>,
    return
  }
  func.func @transform_0(%arg0: i32) -> (i32, i32) {
    %c0_i32 = arith.constant 0 : i32
    %c0_i32_0 = arith.constant 0 : i32
    return %arg0, %c0_i32 : i32, i32
  }
  func.func @transform_1(%arg0: i32) -> (i32, i32) {
    %c0_i32 = arith.constant 0 : i32
    %c0_i32_0 = arith.constant 0 : i32
    %c0_i32_1 = arith.constant 0 : i32
    return %c0_i32, %c0_i32_0 : i32, i32
  }
  func.func @transform_2(%arg0: i32) -> (i32, i32) {
    %c0_i32 = arith.constant 0 : i32
    %c0_i32_0 = arith.constant 0 : i32
    %c0_i32_1 = arith.constant 0 : i32
    return %c0_i32, %c0_i32_0 : i32, i32
  }
  func.func @transform_3(%arg0: i32) -> (i32, i32) {
    %c0_i32 = arith.constant 0 : i32
    %c0_i32_0 = arith.constant 0 : i32
    %c0_i32_1 = arith.constant 0 : i32
    return %c0_i32, %c0_i32_0 : i32, i32
  }
  func.func @transform_4(%arg0: i32) -> (i32, i32) {
    %c0_i32 = arith.constant 0 : i32
    %c0_i32_0 = arith.constant 0 : i32
    %c0_i32_1 = arith.constant 0 : i32
    return %c0_i32, %c0_i32_0 : i32, i32
  }
  func.func @transform_5(%arg0: i32) -> (i32, i32) {
    %c0_i32 = arith.constant 0 : i32
    %c0_i32_0 = arith.constant 0 : i32
    %c0_i32_1 = arith.constant 0 : i32
    return %c0_i32, %c0_i32_0 : i32, i32
  }
  func.func @transform_6(%arg0: i32) -> (i32, i32) {
    %c0_i32 = arith.constant 0 : i32
    %c0_i32_0 = arith.constant 0 : i32
    %c0_i32_1 = arith.constant 0 : i32
    return %c0_i32, %c0_i32_0 : i32, i32
  }
  func.func @transform_7(%arg0: i32) -> (i32, i32) {
    %c0_i32 = arith.constant 0 : i32
    %c0_i32_0 = arith.constant 0 : i32
    return %arg0, %c0_i32 : i32, i32
  }
}

</mosaic_0001>

<llo_original>
// kernel: cell_embednet_forward.1
$region0: #{cell_embednet_forward.1}
  #allocation0 [shape = 'u32[]', space=smem, size = 0x4, offset = 0x4, fixed_abs, tag = 'smem constant byte address 0x4 - core index']
  #allocation1 [shape = 'u32[72,128]{1,0:T(1,128)}', space=vmem, size = 0x9000, scoped, tag = 'internal scratch']
  %s0 = inlined_call_operand.hbm [shape: f32[256,1024], index: 0, kind: input, shape index: {}]
  %s1 = inlined_call_operand.hbm [shape: bf16[1024,512], index: 1, kind: input, shape index: {}]
  %s2 = inlined_call_operand.hbm [shape: f32[1,512], index: 2, kind: input, shape index: {}]
  %s3 = inlined_call_operand.hbm [shape: bf16[512,512], index: 3, kind: input, shape index: {}]
  %s4 = inlined_call_operand.hbm [shape: f32[1,512], index: 4, kind: input, shape index: {}]
  %s5 = inlined_call_operand.hbm [shape: bf16[512,512], index: 5, kind: input, shape index: {}]
  %s6 = inlined_call_operand.hbm [shape: f32[1,512], index: 6, kind: input, shape index: {}]
  %s7 = inlined_call_operand.hbm [shape: bf16[256,512], index: 7, kind: output, shape index: {}]
  %s8 = sld [smem:[#allocation0]]
  $region66: #{cell_embednet_forward.1} parent=0
    _
  %s10 = ssub.s32 1, %s8
  %s11 = scalar_select 0, %s10, %s8
  $region1: #{cell_embednet_forward.1} parent=0
    #allocation2 [shape = 'u8[1048576]{0}', space=vmem, size = 0x100000, scoped, tag = 'input window, operand 0, single buffered']
    #allocation3 [shape = 's32[1]{0}', space=sflag, size = 0x4, scoped, tag = 'scoped memory for cell_embednet_forward.1']
    #allocation4 [shape = 's32[1]{0}', space=sflag, size = 0x4, scoped, tag = 'scoped memory for cell_embednet_forward.1']
    #allocation5 [shape = 'u8[1048576]{0}', space=vmem, size = 0x100000, scoped, tag = 'input window, operand 1, single buffered']
    #allocation6 [shape = 's32[1]{0}', space=sflag, size = 0x4, scoped, tag = 'scoped memory for cell_embednet_forward.1']
    #allocation7 [shape = 'u8[2048]{0}', space=vmem, size = 0x800, scoped, tag = 'input window, operand 2, single buffered']
    #allocation8 [shape = 'u8[524288]{0}', space=vmem, size = 0x80000, scoped, tag = 'input window, operand 3, single buffered']
    #allocation9 [shape = 's32[1]{0}', space=sflag, size = 0x4, scoped, tag = 'scoped memory for cell_embednet_forward.1']
    #allocation10 [shape = 'u8[2048]{0}', space=vmem, size = 0x800, scoped, tag = 'input window, operand 4, single buffered']
    #allocation11 [shape = 'u8[524288]{0}', space=vmem, size = 0x80000, scoped, tag = 'input window, operand 5, single buffered']
    #allocation12 [shape = 's32[1]{0}', space=sflag, size = 0x4, scoped, tag = 'scoped memory for cell_embednet_forward.1']
    #allocation13 [shape = 'u8[2048]{0}', space=vmem, size = 0x800, scoped, tag = 'input window, operand 6, single buffered']
    #allocation14 [shape = 'u8[262144]{0}', space=vmem, size = 0x40000, scoped, tag = 'output window, operand 0, single buffered']
    %12 = vsyncpa [#allocation3], 0
    %13 = vsyncpa [#allocation6], 0
    %14 = vsyncpa [#allocation9], 0
    %15 = vsyncpa [#allocation12], 0
    %16 = vsyncpa [#allocation4], 0
    // Predicated region
    $region2: #{cell_embednet_forward.1} parent=1 // pred_check
      _
    $region3: #{cell_embednet_forward.1} parent=1 // pred_check_branch
      %18 = sbr.rel (0) target = $region5
    $region4: #{cell_embednet_forward.1} parent=1 // pred_region
      %20 = vsyncadd [#allocation3], 0
      %s21 = sshll.u32 %s0, 4
      %s22 = int_to_ptr.hbm [resolvable:$true] %s21
      %s23 = sshll.u32 [#allocation2], 4
      %s24 = int_to_ptr.vmem [resolvable:$true] %s23
      %29 = dma.hbm_to_vmem [thread:$0]  %s22, 32768, %s24, [#allocation3], 1024, 1024, 64
    $region5: #{cell_embednet_forward.1} parent=1 // pred_fallthru
      _
    // Predicated region
    $region6: #{cell_embednet_forward.1} parent=1 // pred_check
      _
    $region7: #{cell_embednet_forward.1} parent=1 // pred_check_branch
      %31 = sbr.rel (0) target = $region9
    $region8: #{cell_embednet_forward.1} parent=1 // pred_region
      %33 = vsyncadd [#allocation6], 0
      %s34 = sshll.u32 %s1, 4
      %s35 = int_to_ptr.hbm [resolvable:$true] %s34
      %s36 = sshll.u32 [#allocation5], 4
      %s37 = int_to_ptr.vmem [resolvable:$true] %s36
      %42 = dma.hbm_to_vmem [thread:$0]  %s35, 32768, %s37, [#allocation6], 256, 256, 16
    $region9: #{cell_embednet_forward.1} parent=1 // pred_fallthru
      _
    // Predicated region
    $region10: #{cell_embednet_forward.1} parent=1 // pred_check
      _
    $region11: #{cell_embednet_forward.1} parent=1 // pred_check_branch
      %44 = sbr.rel (0) target = $region13
    $region12: #{cell_embednet_forward.1} parent=1 // pred_region
      %46 = vsyncadd [#allocation6], 0
      %s48 = sshll.u32 %s2, 4
      %s49 = int_to_ptr.hbm [resolvable:$true] %s48
      %s50 = sshll.u32 [#allocation7], 4
      %s51 = int_to_ptr.vmem [resolvable:$true] %s50
      %53 = dma.hbm_to_vmem [thread:$0]  %s49, 64, %s51, [#allocation6]
    $region13: #{cell_embednet_forward.1} parent=1 // pred_fallthru
      _
    // Predicated region
    $region14: #{cell_embednet_forward.1} parent=1 // pred_check
      _
    $region15: #{cell_embednet_forward.1} parent=1 // pred_check_branch
      %55 = sbr.rel (0) target = $region17
    $region16: #{cell_embednet_forward.1} parent=1 // pred_region
      %57 = vsyncadd [#allocation9], 0
      %s58 = sshll.u32 %s3, 4
      %s59 = int_to_ptr.hbm [resolvable:$true] %s58
      %s60 = sshll.u32 [#allocation8], 4
      %s61 = int_to_ptr.vmem [resolvable:$true] %s60
      %66 = dma.hbm_to_vmem [thread:$0]  %s59, 16384, %s61, [#allocation9], 256, 256, 16
    $region17: #{cell_embednet_forward.1} parent=1 // pred_fallthru
      _
    // Predicated region
    $region18: #{cell_embednet_forward.1} parent=1 // pred_check
      _
    $region19: #{cell_embednet_forward.1} parent=1 // pred_check_branch
      %68 = sbr.rel (0) target = $region21
    $region20: #{cell_embednet_forward.1} parent=1 // pred_region
      %70 = vsyncadd [#allocation9], 0
      %s72 = sshll.u32 %s4, 4
      %s73 = int_to_ptr.hbm [resolvable:$true] %s72
      %s74 = sshll.u32 [#allocation10], 4
      %s75 = int_to_ptr.vmem [resolvable:$true] %s74
      %77 = dma.hbm_to_vmem [thread:$0]  %s73, 64, %s75, [#allocation9]
    $region21: #{cell_embednet_forward.1} parent=1 // pred_fallthru
      _
    // Predicated region
    $region22: #{cell_embednet_forward.1} parent=1 // pred_check
      _
    $region23: #{cell_embednet_forward.1} parent=1 // pred_check_branch
      %79 = sbr.rel (0) target = $region25
    $region24: #{cell_embednet_forward.1} parent=1 // pred_region
      %81 = vsyncadd [#allocation12], 0
      %s82 = sshll.u32 %s5, 4
      %s83 = int_to_ptr.hbm [resolvable:$true] %s82
      %s84 = sshll.u32 [#allocation11], 4
      %s85 = int_to_ptr.vmem [resolvable:$true] %s84
      %90 = dma.hbm_to_vmem [thread:$0]  %s83, 16384, %s85, [#allocation12], 256, 256, 16
    $region25: #{cell_embednet_forward.1} parent=1 // pred_fallthru
      _
    // Predicated region
    $region26: #{cell_embednet_forward.1} parent=1 // pred_check
      _
    $region27: #{cell_embednet_forward.1} parent=1 // pred_check_branch
      %92 = sbr.rel (0) target = $region29
    $region28: #{cell_embednet_forward.1} parent=1 // pred_region
      %94 = vsyncadd [#allocation12], 0
      %s96 = sshll.u32 %s6, 4
      %s97 = int_to_ptr.hbm [resolvable:$true] %s96
      %s98 = sshll.u32 [#allocation13], 4
      %s99 = int_to_ptr.vmem [resolvable:$true] %s98
      %101 = dma.hbm_to_vmem [thread:$0]  %s97, 64, %s99, [#allocation12]
    $region29: #{cell_embednet_forward.1} parent=1 // pred_fallthru
      _
    // Predicated region
    $region30: #{cell_embednet_forward.1} parent=1 // pred_check
      _
    $region31: #{cell_embednet_forward.1} parent=1 // pred_check_branch
      %103 = sbr.rel (0) target = $region33
    $region32: #{cell_embednet_forward.1} parent=1 // pred_region
      %105 = dma.done [#allocation3], 32768
    $region33: #{cell_embednet_forward.1} parent=1 // pred_fallthru
      _
    // Predicated region
    $region34: #{cell_embednet_forward.1} parent=1 // pred_check
      _
    $region35: #{cell_embednet_forward.1} parent=1 // pred_check_branch
      %107 = sbr.rel (0) target = $region37
    $region36: #{cell_embednet_forward.1} parent=1 // pred_region
      %109 = dma.done [#allocation6], 32768
    $region37: #{cell_embednet_forward.1} parent=1 // pred_fallthru
      _
    // Predicated region
    $region38: #{cell_embednet_forward.1} parent=1 // pred_check
      _
    $region39: #{cell_embednet_forward.1} parent=1 // pred_check_branch
      %111 = sbr.rel (0) target = $region41
    $region40: #{cell_embednet_forward.1} parent=1 // pred_region
      %113 = dma.done [#allocation6], 64
    $region41: #{cell_embednet_forward.1} parent=1 // pred_fallthru
      _
    // Predicated region
    $region42: #{cell_embednet_forward.1} parent=1 // pred_check
      _
    $region43: #{cell_embednet_forward.1} parent=1 // pred_check_branch
      %115 = sbr.rel (0) target = $region45
    $region44: #{cell_embednet_forward.1} parent=1 // pred_region
      %117 = dma.done [#allocation9], 16384
    $region45: #{cell_embednet_forward.1} parent=1 // pred_fallthru
      _
    // Predicated region
    $region46: #{cell_embednet_forward.1} parent=1 // pred_check
      _
    $region47: #{cell_embednet_forward.1} parent=1 // pred_check_branch
      %119 = sbr.rel (0) target = $region49
    $region48: #{cell_embednet_forward.1} parent=1 // pred_region
      %121 = dma.done [#allocation9], 64
    $region49: #{cell_embednet_forward.1} parent=1 // pred_fallthru
      _
    // Predicated region
    $region50: #{cell_embednet_forward.1} parent=1 // pred_check
      _
    $region51: #{cell_embednet_forward.1} parent=1 // pred_check_branch
      %123 = sbr.rel (0) target = $region53
    $region52: #{cell_embednet_forward.1} parent=1 // pred_region
      %125 = dma.done [#allocation12], 16384
    $region53: #{cell_embednet_forward.1} parent=1 // pred_fallthru
      _
    // Predicated region
    $region54: #{cell_embednet_forward.1} parent=1 // pred_check
      _
    $region55: #{cell_embednet_forward.1} parent=1 // pred_check_branch
      %127 = sbr.rel (0) target = $region57
    $region56: #{cell_embednet_forward.1} parent=1 // pred_region
      %129 = dma.done [#allocation12], 64
    $region57: #{cell_embednet_forward.1} parent=1 // pred_fallthru
      _
    %v130 = vld [vmem:[#allocation2] sm:$0xff]
    %v131 = vld [vmem:[#allocation2 + $0x8] sm:$0xff]
    %v132 = vld [vmem:[#allocation2 + $0x10] sm:$0xff]
    %v133 = vld [vmem:[#allocation2 + $0x18] sm:$0xff]
    %v134 = vld [vmem:[#allocation2 + $0x20] sm:$0xff]
    %v135 = vld [vmem:[#allocation2 + $0x28] sm:$0xff]
    %v136 = vld [vmem:[#allocation2 + $0x30] sm:$0xff]
    %v137 = vld [vmem:[#allocation2 + $0x38] sm:$0xff]
    %v138 = vld [vmem:[#allocation2 + $0x40] sm:$0xff]
    %v139 = vld [vmem:[#allocation2 + $0x48] sm:$0xff]
    %v140 = vld [vmem:[#allocation2 + $0x50] sm:$0xff]
    %v141 = vld [vmem:[#allocation2 + $0x58] sm:$0xff]
    %v142 = vld [vmem:[#allocation2 + $0x60] sm:$0xff]
    %v143 = vld [vmem:[#allocation2 + $0x68] sm:$0xff]
    %v144 = vld [vmem:[#allocation2 + $0x70] sm:$0xff]
    %v145 = vld [vmem:[#allocation2 + $0x78] sm:$0xff]
    %v146 = vld [vmem:[#allocation2 + $0x80] sm:$0xff]
    %v147 = vld [vmem:[#allocation2 + $0x88] sm:$0xff]
    %v148 = vld [vmem:[#allocation2 + $0x90] sm:$0xff]
    %v149 = vld [vmem:[#allocation2 + $0x98] sm:$0xff]
    %v150 = vld [vmem:[#allocation2 + $0xa0] sm:$0xff]
    %v151 = vld [vmem:[#allocation2 + $0xa8] sm:$0xff]
    %v152 = vld [vmem:[#allocation2 + $0xb0] sm:$0xff]
    %v153 = vld [vmem:[#allocation2 + $0xb8] sm:$0xff]
    %v154 = vld [vmem:[#allocation2 + $0xc0] sm:$0xff]
    %v155 = vld [vmem:[#allocation2 + $0xc8] sm:$0xff]
    %v156 = vld [vmem:[#allocation2 + $0xd0] sm:$0xff]
    %v157 = vld [vmem:[#allocation2 + $0xd8] sm:$0xff]
    %v158 = vld [vmem:[#allocation2 + $0xe0] sm:$0xff]
    %v159 = vld [vmem:[#allocation2 + $0xe8] sm:$0xff]
    %v160 = vld [vmem:[#allocation2 + $0xf0] sm:$0xff]
    %v161 = vld [vmem:[#allocation2 + $0xf8] sm:$0xff]
    %v162 = vld [vmem:[#allocation2 + $0x100] sm:$0xff]
    %v163 = vld [vmem:[#allocation2 + $0x108] sm:$0xff]
    %v164 = vld [vmem:[#allocation2 + $0x110] sm:$0xff]
    %v165 = vld [vmem:[#allocation2 + $0x118] sm:$0xff]
    %v166 = vld [vmem:[#allocation2 + $0x120] sm:$0xff]
    %v167 = vld [vmem:[#allocation2 + $0x128] sm:$0xff]
    %v168 = vld [vmem:[#allocation2 + $0x130] sm:$0xff]
    %v169 = vld [vmem:[#allocation2 + $0x138] sm:$0xff]
    %v170 = vld [vmem:[#allocation2 + $0x140] sm:$0xff]
    %v171 = vld [vmem:[#allocation2 + $0x148] sm:$0xff]
    %v172 = vld [vmem:[#allocation2 + $0x150] sm:$0xff]
    %v173 = vld [vmem:[#allocation2 + $0x158] sm:$0xff]
    %v174 = vld [vmem:[#allocation2 + $0x160] sm:$0xff]
    %v175 = vld [vmem:[#allocation2 + $0x168] sm:$0xff]
    %v176 = vld [vmem:[#allocation2 + $0x170] sm:$0xff]
    %v177 = vld [vmem:[#allocation2 + $0x178] sm:$0xff]
    %v178 = vld [vmem:[#allocation2 + $0x180] sm:$0xff]
    %v179 = vld [vmem:[#allocation2 + $0x188] sm:$0xff]
    %v180 = vld [vmem:[#allocation2 + $0x190] sm:$0xff]
    %v181 = vld [vmem:[#allocation2 + $0x198] sm:$0xff]
    %v182 = vld [vmem:[#allocation2 + $0x1a0] sm:$0xff]
    %v183 = vld [vmem:[#allocation2 + $0x1a8] sm:$0xff]
    %v184 = vld [vmem:[#allocation2 + $0x1b0] sm:$0xff]
    %v185 = vld [vmem:[#allocation2 + $0x1b8] sm:$0xff]
    %v186 = vld [vmem:[#allocation2 + $0x1c0] sm:$0xff]
    %v187 = vld [vmem:[#allocation2 + $0x1c8] sm:$0xff]
    %v188 = vld [vmem:[#allocation2 + $0x1d0] sm:$0xff]
    %v189 = vld [vmem:[#allocation2 + $0x1d8] sm:$0xff]
    %v190 = vld [vmem:[#allocation2 + $0x1e0] sm:$0xff]
    %v191 = vld [vmem:[#allocation2 + $0x1e8] sm:$0xff]
    %v192 = vld [vmem:[#allocation2 + $0x1f0] sm:$0xff]
    %v193 = vld [vmem:[#allocation2 + $0x1f8] sm:$0xff]
    %v194 = vld [vmem:[#allocation2 + $0x200] sm:$0xff]
    %v195 = vld [vmem:[#allocation2 + $0x208] sm:$0xff]
    %v196 = vld [vmem:[#allocation2 + $0x210] sm:$0xff]
    %v197 = vld [vmem:[#allocation2 + $0x218] sm:$0xff]
    %v198 = vld [vmem:[#allocation2 + $0x220] sm:$0xff]
    %v199 = vld [vmem:[#allocation2 + $0x228] sm:$0xff]
    %v200 = vld [vmem:[#allocation2 + $0x230] sm:$0xff]
    %v201 = vld [vmem:[#allocation2 + $0x238] sm:$0xff]
    %v202 = vld [vmem:[#allocation2 + $0x240] sm:$0xff]
    %v203 = vld [vmem:[#allocation2 + $0x248] sm:$0xff]
    %v204 = vld [vmem:[#allocation2 + $0x250] sm:$0xff]
    %v205 = vld [vmem:[#allocation2 + $0x258] sm:$0xff]
    %v206 = vld [vmem:[#allocation2 + $0x260] sm:$0xff]
    %v207 = vld [vmem:[#allocation2 + $0x268] sm:$0xff]
    %v208 = vld [vmem:[#allocation2 + $0x270] sm:$0xff]
    %v209 = vld [vmem:[#allocation2 + $0x278] sm:$0xff]
    %v210 = vld [vmem:[#allocation2 + $0x280] sm:$0xff]
    %v211 = vld [vmem:[#allocation2 + $0x288] sm:$0xff]
    %v212 = vld [vmem:[#allocation2 + $0x290] sm:$0xff]
    %v213 = vld [vmem:[#allocation2 + $0x298] sm:$0xff]
    %v214 = vld [vmem:[#allocation2 + $0x2a0] sm:$0xff]
    %v215 = vld [vmem:[#allocation2 + $0x2a8] sm:$0xff]
    %v216 = vld [vmem:[#allocation2 + $0x2b0] sm:$0xff]
    %v217 = vld [vmem:[#allocation2 + $0x2b8] sm:$0xff]
    %v218 = vld [vmem:[#allocation2 + $0x2c0] sm:$0xff]
    %v219 = vld [vmem:[#allocation2 + $0x2c8] sm:$0xff]
    %v220 = vld [vmem:[#allocation2 + $0x2d0] sm:$0xff]
    %v221 = vld [vmem:[#allocation2 + $0x2d8] sm:$0xff]
    %v222 = vld [vmem:[#allocation2 + $0x2e0] sm:$0xff]
    %v223 = vld [vmem:[#allocation2 + $0x2e8] sm:$0xff]
    %v224 = vld [vmem:[#allocation2 + $0x2f0] sm:$0xff]
    %v225 = vld [vmem:[#allocation2 + $0x2f8] sm:$0xff]
    %v226 = vld [vmem:[#allocation2 + $0x300] sm:$0xff]
    %v227 = vld [vmem:[#allocation2 + $0x308] sm:$0xff]
    %v228 = vld [vmem:[#allocation2 + $0x310] sm:$0xff]
    %v229 = vld [vmem:[#allocation2 + $0x318] sm:$0xff]
    %v230 = vld [vmem:[#allocation2 + $0x320] sm:$0xff]
    %v231 = vld [vmem:[#allocation2 + $0x328] sm:$0xff]
    %v232 = vld [vmem:[#allocation2 + $0x330] sm:$0xff]
    %v233 = vld [vmem:[#allocation2 + $0x338] sm:$0xff]
    %v234 = vld [vmem:[#allocation2 + $0x340] sm:$0xff]
    %v235 = vld [vmem:[#allocation2 + $0x348] sm:$0xff]
    %v236 = vld [vmem:[#allocation2 + $0x350] sm:$0xff]
    %v237 = vld [vmem:[#allocation2 + $0x358] sm:$0xff]
    %v238 = vld [vmem:[#allocation2 + $0x360] sm:$0xff]
    %v239 = vld [vmem:[#allocation2 + $0x368] sm:$0xff]
    %v240 = vld [vmem:[#allocation2 + $0x370] sm:$0xff]
    %v241 = vld [vmem:[#allocation2 + $0x378] sm:$0xff]
    %v242 = vld [vmem:[#allocation2 + $0x380] sm:$0xff]
    %v243 = vld [vmem:[#allocation2 + $0x388] sm:$0xff]
    %v244 = vld [vmem:[#allocation2 + $0x390] sm:$0xff]
    %v245 = vld [vmem:[#allocation2 + $0x398] sm:$0xff]
    %v246 = vld [vmem:[#allocation2 + $0x3a0] sm:$0xff]
    %v247 = vld [vmem:[#allocation2 + $0x3a8] sm:$0xff]
    %v248 = vld [vmem:[#allocation2 + $0x3b0] sm:$0xff]
    %v249 = vld [vmem:[#allocation2 + $0x3b8] sm:$0xff]
    %v250 = vld [vmem:[#allocation2 + $0x3c0] sm:$0xff]
    %v251 = vld [vmem:[#allocation2 + $0x3c8] sm:$0xff]
    %v252 = vld [vmem:[#allocation2 + $0x3d0] sm:$0xff]
    %v253 = vld [vmem:[#allocation2 + $0x3d8] sm:$0xff]
    %v254 = vld [vmem:[#allocation2 + $0x3e0] sm:$0xff]
    %v255 = vld [vmem:[#allocation2 + $0x3e8] sm:$0xff]
    %v256 = vld [vmem:[#allocation2 + $0x3f0] sm:$0xff]
    %v257 = vld [vmem:[#allocation2 + $0x3f8] sm:$0xff]
    %v258 = vld [vmem:[#allocation2 + $0x400] sm:$0xff]
    %v259 = vld [vmem:[#allocation2 + $0x408] sm:$0xff]
    %v260 = vld [vmem:[#allocation2 + $0x410] sm:$0xff]
    %v261 = vld [vmem:[#allocation2 + $0x418] sm:$0xff]
    %v262 = vld [vmem:[#allocation2 + $0x420] sm:$0xff]
    %v263 = vld [vmem:[#allocation2 + $0x428] sm:$0xff]
    %v264 = vld [vmem:[#allocation2 + $0x430] sm:$0xff]
    %v265 = vld [vmem:[#allocation2 + $0x438] sm:$0xff]
    %v266 = vld [vmem:[#allocation2 + $0x440] sm:$0xff]
    %v267 = vld [vmem:[#allocation2 + $0x448] sm:$0xff]
    %v268 = vld [vmem:[#allocation2 + $0x450] sm:$0xff]
    %v269 = vld [vmem:[#allocation2 + $0x458] sm:$0xff]
    %v270 = vld [vmem:[#allocation2 + $0x460] sm:$0xff]
    %v271 = vld [vmem:[#allocation2 + $0x468] sm:$0xff]
    %v272 = vld [vmem:[#allocation2 + $0x470] sm:$0xff]
    %v273 = vld [vmem:[#allocation2 + $0x478] sm:$0xff]
    %v274 = vld [vmem:[#allocation2 + $0x480] sm:$0xff]
    %v275 = vld [vmem:[#allocation2 + $0x488] sm:$0xff]
    %v276 = vld [vmem:[#allocation2 + $0x490] sm:$0xff]
    %v277 = vld [vmem:[#allocation2 + $0x498] sm:$0xff]
    %v278 = vld [vmem:[#allocation2 + $0x4a0] sm:$0xff]
    %v279 = vld [vmem:[#allocation2 + $0x4a8] sm:$0xff]
    %v280 = vld [vmem:[#allocation2 + $0x4b0] sm:$0xff]
    %v281 = vld [vmem:[#allocation2 + $0x4b8] sm:$0xff]
    %v282 = vld [vmem:[#allocation2 + $0x4c0] sm:$0xff]
    %v283 = vld [vmem:[#allocation2 + $0x4c8] sm:$0xff]
    %v284 = vld [vmem:[#allocation2 + $0x4d0] sm:$0xff]
    %v285 = vld [vmem:[#allocation2 + $0x4d8] sm:$0xff]
    %v286 = vld [vmem:[#allocation2 + $0x4e0] sm:$0xff]
    %v287 = vld [vmem:[#allocation2 + $0x4e8] sm:$0xff]
    %v288 = vld [vmem:[#allocation2 + $0x4f0] sm:$0xff]
    %v289 = vld [vmem:[#allocation2 + $0x4f8] sm:$0xff]
    %v290 = vld [vmem:[#allocation2 + $0x500] sm:$0xff]
    %v291 = vld [vmem:[#allocation2 + $0x508] sm:$0xff]
    %v292 = vld [vmem:[#allocation2 + $0x510] sm:$0xff]
    %v293 = vld [vmem:[#allocation2 + $0x518] sm:$0xff]
    %v294 = vld [vmem:[#allocation2 + $0x520] sm:$0xff]
    %v295 = vld [vmem:[#allocation2 + $0x528] sm:$0xff]
    %v296 = vld [vmem:[#allocation2 + $0x530] sm:$0xff]
    %v297 = vld [vmem:[#allocation2 + $0x538] sm:$0xff]
    %v298 = vld [vmem:[#allocation2 + $0x540] sm:$0xff]
    %v299 = vld [vmem:[#allocation2 + $0x548] sm:$0xff]
    %v300 = vld [vmem:[#allocation2 + $0x550] sm:$0xff]
    %v301 = vld [vmem:[#allocation2 + $0x558] sm:$0xff]
    %v302 = vld [vmem:[#allocation2 + $0x560] sm:$0xff]
    %v303 = vld [vmem:[#allocation2 + $0x568] sm:$0xff]
    %v304 = vld [vmem:[#allocation2 + $0x570] sm:$0xff]
    %v305 = vld [vmem:[#allocation2 + $0x578] sm:$0xff]
    %v306 = vld [vmem:[#allocation2 + $0x580] sm:$0xff]
    %v307 = vld [vmem:[#allocation2 + $0x588] sm:$0xff]
    %v308 = vld [vmem:[#allocation2 + $0x590] sm:$0xff]
    %v309 = vld [vmem:[#allocation2 + $0x598] sm:$0xff]
    %v310 = vld [vmem:[#allocation2 + $0x5a0] sm:$0xff]
    %v311 = vld [vmem:[#allocation2 + $0x5a8] sm:$0xff]
    %v312 = vld [vmem:[#allocation2 + $0x5b0] sm:$0xff]
    %v313 = vld [vmem:[#allocation2 + $0x5b8] sm:$0xff]
    %v314 = vld [vmem:[#allocation2 + $0x5c0] sm:$0xff]
    %v315 = vld [vmem:[#allocation2 + $0x5c8] sm:$0xff]
    %v316 = vld [vmem:[#allocation2 + $0x5d0] sm:$0xff]
    %v317 = vld [vmem:[#allocation2 + $0x5d8] sm:$0xff]
    %v318 = vld [vmem:[#allocation2 + $0x5e0] sm:$0xff]
    %v319 = vld [vmem:[#allocation2 + $0x5e8] sm:$0xff]
    %v320 = vld [vmem:[#allocation2 + $0x5f0] sm:$0xff]
    %v321 = vld [vmem:[#allocation2 + $0x5f8] sm:$0xff]
    %v322 = vld [vmem:[#allocation2 + $0x600] sm:$0xff]
    %v323 = vld [vmem:[#allocation2 + $0x608] sm:$0xff]
    %v324 = vld [vmem:[#allocation2 + $0x610] sm:$0xff]
    %v325 = vld [vmem:[#allocation2 + $0x618] sm:$0xff]
    %v326 = vld [vmem:[#allocation2 + $0x620] sm:$0xff]
    %v327 = vld [vmem:[#allocation2 + $0x628] sm:$0xff]
    %v328 = vld [vmem:[#allocation2 + $0x630] sm:$0xff]
    %v329 = vld [vmem:[#allocation2 + $0x638] sm:$0xff]
    %v330 = vld [vmem:[#allocation2 + $0x640] sm:$0xff]
    %v331 = vld [vmem:[#allocation2 + $0x648] sm:$0xff]
    %v332 = vld [vmem:[#allocation2 + $0x650] sm:$0xff]
    %v333 = vld [vmem:[#allocation2 + $0x658] sm:$0xff]
    %v334 = vld [vmem:[#allocation2 + $0x660] sm:$0xff]
    %v335 = vld [vmem:[#allocation2 + $0x668] sm:$0xff]
    %v336 = vld [vmem:[#allocation2 + $0x670] sm:$0xff]
    %v337 = vld [vmem:[#allocation2 + $0x678] sm:$0xff]
    %v338 = vld [vmem:[#allocation2 + $0x680] sm:$0xff]
    %v339 = vld [vmem:[#allocation2 + $0x688] sm:$0xff]
    %v340 = vld [vmem:[#allocation2 + $0x690] sm:$0xff]
    %v341 = vld [vmem:[#allocation2 + $0x698] sm:$0xff]
    %v342 = vld [vmem:[#allocation2 + $0x6a0] sm:$0xff]
    %v343 = vld [vmem:[#allocation2 + $0x6a8] sm:$0xff]
    %v344 = vld [vmem:[#allocation2 + $0x6b0] sm:$0xff]
    %v345 = vld [vmem:[#allocation2 + $0x6b8] sm:$0xff]
    %v346 = vld [vmem:[#allocation2 + $0x6c0] sm:$0xff]
    %v347 = vld [vmem:[#allocation2 + $0x6c8] sm:$0xff]
    %v348 = vld [vmem:[#allocation2 + $0x6d0] sm:$0xff]
    %v349 = vld [vmem:[#allocation2 + $0x6d8] sm:$0xff]
    %v350 = vld [vmem:[#allocation2 + $0x6e0] sm:$0xff]
    %v351 = vld [vmem:[#allocation2 + $0x6e8] sm:$0xff]
    %v352 = vld [vmem:[#allocation2 + $0x6f0] sm:$0xff]
    %v353 = vld [vmem:[#allocation2 + $0x6f8] sm:$0xff]
    %v354 = vld [vmem:[#allocation2 + $0x700] sm:$0xff]
    %v355 = vld [vmem:[#allocation2 + $0x708] sm:$0xff]
    %v356 = vld [vmem:[#allocation2 + $0x710] sm:$0xff]
    %v357 = vld [vmem:[#allocation2 + $0x718] sm:$0xff]
    %v358 = vld [vmem:[#allocation2 + $0x720] sm:$0xff]
    %v359 = vld [vmem:[#allocation2 + $0x728] sm:$0xff]
    %v360 = vld [vmem:[#allocation2 + $0x730] sm:$0xff]
    %v361 = vld [vmem:[#allocation2 + $0x738] sm:$0xff]
    %v362 = vld [vmem:[#allocation2 + $0x740] sm:$0xff]
    %v363 = vld [vmem:[#allocation2 + $0x748] sm:$0xff]
    %v364 = vld [vmem:[#allocation2 + $0x750] sm:$0xff]
    %v365 = vld [vmem:[#allocation2 + $0x758] sm:$0xff]
    %v366 = vld [vmem:[#allocation2 + $0x760] sm:$0xff]
    %v367 = vld [vmem:[#allocation2 + $0x768] sm:$0xff]
    %v368 = vld [vmem:[#allocation2 + $0x770] sm:$0xff]
    %v369 = vld [vmem:[#allocation2 + $0x778] sm:$0xff]
    %v370 = vld [vmem:[#allocation2 + $0x780] sm:$0xff]
    %v371 = vld [vmem:[#allocation2 + $0x788] sm:$0xff]
    %v372 = vld [vmem:[#allocation2 + $0x790] sm:$0xff]
    %v373 = vld [vmem:[#allocation2 + $0x798] sm:$0xff]
    %v374 = vld [vmem:[#allocation2 + $0x7a0] sm:$0xff]
    %v375 = vld [vmem:[#allocation2 + $0x7a8] sm:$0xff]
    %v376 = vld [vmem:[#allocation2 + $0x7b0] sm:$0xff]
    %v377 = vld [vmem:[#allocation2 + $0x7b8] sm:$0xff]
    %v378 = vld [vmem:[#allocation2 + $0x7c0] sm:$0xff]
    %v379 = vld [vmem:[#allocation2 + $0x7c8] sm:$0xff]
    %v380 = vld [vmem:[#allocation2 + $0x7d0] sm:$0xff]
    %v381 = vld [vmem:[#allocation2 + $0x7d8] sm:$0xff]
    %v382 = vld [vmem:[#allocation2 + $0x7e0] sm:$0xff]
    %v383 = vld [vmem:[#allocation2 + $0x7e8] sm:$0xff]
    %v384 = vld [vmem:[#allocation2 + $0x7f0] sm:$0xff]
    %v385 = vld [vmem:[#allocation2 + $0x7f8] sm:$0xff]
    %v386 = vpack.c.bf16 %v138, %v130
    %v387 = vpack.c.bf16 %v139, %v131
    %v388 = vpack.c.bf16 %v140, %v132
    %v389 = vpack.c.bf16 %v141, %v133
    %v390 = vpack.c.bf16 %v142, %v134
    %v391 = vpack.c.bf16 %v143, %v135
    %v392 = vpack.c.bf16 %v144, %v136
    %v393 = vpack.c.bf16 %v145, %v137
    %v394 = vpack.c.bf16 %v154, %v146
    %v395 = vpack.c.bf16 %v155, %v147
    %v396 = vpack.c.bf16 %v156, %v148
    %v397 = vpack.c.bf16 %v157, %v149
    %v398 = vpack.c.bf16 %v158, %v150
    %v399 = vpack.c.bf16 %v159, %v151
    %v400 = vpack.c.bf16 %v160, %v152
    %v401 = vpack.c.bf16 %v161, %v153
    %v402 = vpack.c.bf16 %v170, %v162
    %v403 = vpack.c.bf16 %v171, %v163
    %v404 = vpack.c.bf16 %v172, %v164
    %v405 = vpack.c.bf16 %v173, %v165
    %v406 = vpack.c.bf16 %v174, %v166
    %v407 = vpack.c.bf16 %v175, %v167
    %v408 = vpack.c.bf16 %v176, %v168
    %v409 = vpack.c.bf16 %v177, %v169
    %v410 = vpack.c.bf16 %v186, %v178
    %v411 = vpack.c.bf16 %v187, %v179
    %v412 = vpack.c.bf16 %v188, %v180
    %v413 = vpack.c.bf16 %v189, %v181
    %v414 = vpack.c.bf16 %v190, %v182
    %v415 = vpack.c.bf16 %v191, %v183
    %v416 = vpack.c.bf16 %v192, %v184
    %v417 = vpack.c.bf16 %v193, %v185
    %v418 = vpack.c.bf16 %v202, %v194
    %v419 = vpack.c.bf16 %v203, %v195
    %v420 = vpack.c.bf16 %v204, %v196
    %v421 = vpack.c.bf16 %v205, %v197
    %v422 = vpack.c.bf16 %v206, %v198
    %v423 = vpack.c.bf16 %v207, %v199
    %v424 = vpack.c.bf16 %v208, %v200
    %v425 = vpack.c.bf16 %v209, %v201
    %v426 = vpack.c.bf16 %v218, %v210
    %v427 = vpack.c.bf16 %v219, %v211
    %v428 = vpack.c.bf16 %v220, %v212
    %v429 = vpack.c.bf16 %v221, %v213
    %v430 = vpack.c.bf16 %v222, %v214
    %v431 = vpack.c.bf16 %v223, %v215
    %v432 = vpack.c.bf16 %v224, %v216
    %v433 = vpack.c.bf16 %v225, %v217
    %v434 = vpack.c.bf16 %v234, %v226
    %v435 = vpack.c.bf16 %v235, %v227
    %v436 = vpack.c.bf16 %v236, %v228
    %v437 = vpack.c.bf16 %v237, %v229
    %v438 = vpack.c.bf16 %v238, %v230
    %v439 = vpack.c.bf16 %v239, %v231
    %v440 = vpack.c.bf16 %v240, %v232
    %v441 = vpack.c.bf16 %v241, %v233
    %v442 = vpack.c.bf16 %v250, %v242
    %v443 = vpack.c.bf16 %v251, %v243
    %v444 = vpack.c.bf16 %v252, %v244
    %v445 = vpack.c.bf16 %v253, %v245
    %v446 = vpack.c.bf16 %v254, %v246
    %v447 = vpack.c.bf16 %v255, %v247
    %v448 = vpack.c.bf16 %v256, %v248
    %v449 = vpack.c.bf16 %v257, %v249
    %v450 = vpack.c.bf16 %v266, %v258
    %v451 = vpack.c.bf16 %v267, %v259
    %v452 = vpack.c.bf16 %v268, %v260
    %v453 = vpack.c.bf16 %v269, %v261
    %v454 = vpack.c.bf16 %v270, %v262
    %v455 = vpack.c.bf16 %v271, %v263
    %v456 = vpack.c.bf16 %v272, %v264
    %v457 = vpack.c.bf16 %v273, %v265
    %v458 = vpack.c.bf16 %v282, %v274
    %v459 = vpack.c.bf16 %v283, %v275
    %v460 = vpack.c.bf16 %v284, %v276
    %v461 = vpack.c.bf16 %v285, %v277
    %v462 = vpack.c.bf16 %v286, %v278
    %v463 = vpack.c.bf16 %v287, %v279
    %v464 = vpack.c.bf16 %v288, %v280
    %v465 = vpack.c.bf16 %v289, %v281
    %v466 = vpack.c.bf16 %v298, %v290
    %v467 = vpack.c.bf16 %v299, %v291
    %v468 = vpack.c.bf16 %v300, %v292
    %v469 = vpack.c.bf16 %v301, %v293
    %v470 = vpack.c.bf16 %v302, %v294
    %v471 = vpack.c.bf16 %v303, %v295
    %v472 = vpack.c.bf16 %v304, %v296
    %v473 = vpack.c.bf16 %v305, %v297
    %v474 = vpack.c.bf16 %v314, %v306
    %v475 = vpack.c.bf16 %v315, %v307
    %v476 = vpack.c.bf16 %v316, %v308
    %v477 = vpack.c.bf16 %v317, %v309
    %v478 = vpack.c.bf16 %v318, %v310
    %v479 = vpack.c.bf16 %v319, %v311
    %v480 = vpack.c.bf16 %v320, %v312
    %v481 = vpack.c.bf16 %v321, %v313
    %v482 = vpack.c.bf16 %v330, %v322
    %v483 = vpack.c.bf16 %v331, %v323
    %v484 = vpack.c.bf16 %v332, %v324
    %v485 = vpack.c.bf16 %v333, %v325
    %v486 = vpack.c.bf16 %v334, %v326
    %v487 = vpack.c.bf16 %v335, %v327
    %v488 = vpack.c.bf16 %v336, %v328
    %v489 = vpack.c.bf16 %v337, %v329
    %v490 = vpack.c.bf16 %v346, %v338
    %v491 = vpack.c.bf16 %v347, %v339
    %v492 = vpack.c.bf16 %v348, %v340
    %v493 = vpack.c.bf16 %v349, %v341
    %v494 = vpack.c.bf16 %v350, %v342
    %v495 = vpack.c.bf16 %v351, %v343
    %v496 = vpack.c.bf16 %v352, %v344
    %v497 = vpack.c.bf16 %v353, %v345
    %v498 = vpack.c.bf16 %v362, %v354
    %v499 = vpack.c.bf16 %v363, %v355
    %v500 = vpack.c.bf16 %v364, %v356
    %v501 = vpack.c.bf16 %v365, %v357
    %v502 = vpack.c.bf16 %v366, %v358
    %v503 = vpack.c.bf16 %v367, %v359
    %v504 = vpack.c.bf16 %v368, %v360
    %v505 = vpack.c.bf16 %v369, %v361
    %v506 = vpack.c.bf16 %v378, %v370
    %v507 = vpack.c.bf16 %v379, %v371
    %v508 = vpack.c.bf16 %v380, %v372
    %v509 = vpack.c.bf16 %v381, %v373
    %v510 = vpack.c.bf16 %v382, %v374
    %v511 = vpack.c.bf16 %v383, %v375
    %v512 = vpack.c.bf16 %v384, %v376
    %v513 = vpack.c.bf16 %v385, %v377
    %v514 = vld [vmem:[#allocation5] sm:$0xff]
    %v515 = vld [vmem:[#allocation5 + $0x8] sm:$0xff]
    %v516 = vld [vmem:[#allocation5 + $0x10] sm:$0xff]
    %v517 = vld [vmem:[#allocation5 + $0x18] sm:$0xff]
    %v518 = vld [vmem:[#allocation5 + $0x20] sm:$0xff]
    %v519 = vld [vmem:[#allocation5 + $0x28] sm:$0xff]
    %v520 = vld [vmem:[#allocation5 + $0x30] sm:$0xff]
    %v521 = vld [vmem:[#allocation5 + $0x38] sm:$0xff]
    %v522 = vld [vmem:[#allocation5 + $0x40] sm:$0xff]
    %v523 = vld [vmem:[#allocation5 + $0x48] sm:$0xff]
    %v524 = vld [vmem:[#allocation5 + $0x50] sm:$0xff]
    %v525 = vld [vmem:[#allocation5 + $0x58] sm:$0xff]
    %v526 = vld [vmem:[#allocation5 + $0x60] sm:$0xff]
    %v527 = vld [vmem:[#allocation5 + $0x68] sm:$0xff]
    %v528 = vld [vmem:[#allocation5 + $0x70] sm:$0xff]
    %v529 = vld [vmem:[#allocation5 + $0x78] sm:$0xff]
    %v530 = vld [vmem:[#allocation5 + $0x80] sm:$0xff]
    %v531 = vld [vmem:[#allocation5 + $0x88] sm:$0xff]
    %v532 = vld [vmem:[#allocation5 + $0x90] sm:$0xff]
    %v533 = vld [vmem:[#allocation5 + $0x98] sm:$0xff]
    %v534 = vld [vmem:[#allocation5 + $0xa0] sm:$0xff]
    %v535 = vld [vmem:[#allocation5 + $0xa8] sm:$0xff]
    %v536 = vld [vmem:[#allocation5 + $0xb0] sm:$0xff]
    %v537 = vld [vmem:[#allocation5 + $0xb8] sm:$0xff]
    %v538 = vld [vmem:[#allocation5 + $0xc0] sm:$0xff]
    %v539 = vld [vmem:[#allocation5 + $0xc8] sm:$0xff]
    %v540 = vld [vmem:[#allocation5 + $0xd0] sm:$0xff]
    %v541 = vld [vmem:[#allocation5 + $0xd8] sm:$0xff]
    %v542 = vld [vmem:[#allocation5 + $0xe0] sm:$0xff]
    %v543 = vld [vmem:[#allocation5 + $0xe8] sm:$0xff]
    %v544 = vld [vmem:[#allocation5 + $0xf0] sm:$0xff]
    %v545 = vld [vmem:[#allocation5 + $0xf8] sm:$0xff]
    %v546 = vld [vmem:[#allocation5 + $0x100] sm:$0xff]
    %v547 = vld [vmem:[#allocation5 + $0x108] sm:$0xff]
    %v548 = vld [vmem:[#allocation5 + $0x110] sm:$0xff]
    %v549 = vld [vmem:[#allocation5 + $0x118] sm:$0xff]
    %v550 = vld [vmem:[#allocation5 + $0x120] sm:$0xff]
    %v551 = vld [vmem:[#allocation5 + $0x128] sm:$0xff]
    %v552 = vld [vmem:[#allocation5 + $0x130] sm:$0xff]
    %v553 = vld [vmem:[#allocation5 + $0x138] sm:$0xff]
    %v554 = vld [vmem:[#allocation5 + $0x140] sm:$0xff]
    %v555 = vld [vmem:[#allocation5 + $0x148] sm:$0xff]
    %v556 = vld [vmem:[#allocation5 + $0x150] sm:$0xff]
    %v557 = vld [vmem:[#allocation5 + $0x158] sm:$0xff]
    %v558 = vld [vmem:[#allocation5 + $0x160] sm:$0xff]
    %v559 = vld [vmem:[#allocation5 + $0x168] sm:$0xff]
    %v560 = vld [vmem:[#allocation5 + $0x170] sm:$0xff]
    %v561 = vld [vmem:[#allocation5 + $0x178] sm:$0xff]
    %v562 = vld [vmem:[#allocation5 + $0x180] sm:$0xff]
    %v563 = vld [vmem:[#allocation5 + $0x188] sm:$0xff]
    %v564 = vld [vmem:[#allocation5 + $0x190] sm:$0xff]
    %v565 = vld [vmem:[#allocation5 + $0x198] sm:$0xff]
    %v566 = vld [vmem:[#allocation5 + $0x1a0] sm:$0xff]
    %v567 = vld [vmem:[#allocation5 + $0x1a8] sm:$0xff]
    %v568 = vld [vmem:[#allocation5 + $0x1b0] sm:$0xff]
    %v569 = vld [vmem:[#allocation5 + $0x1b8] sm:$0xff]
    %v570 = vld [vmem:[#allocation5 + $0x1c0] sm:$0xff]
    %v571 = vld [vmem:[#allocation5 + $0x1c8] sm:$0xff]
    %v572 = vld [vmem:[#allocation5 + $0x1d0] sm:$0xff]
    %v573 = vld [vmem:[#allocation5 + $0x1d8] sm:$0xff]
    %v574 = vld [vmem:[#allocation5 + $0x1e0] sm:$0xff]
    %v575 = vld [vmem:[#allocation5 + $0x1e8] sm:$0xff]
    %v576 = vld [vmem:[#allocation5 + $0x1f0] sm:$0xff]
    %v577 = vld [vmem:[#allocation5 + $0x1f8] sm:$0xff]
    %v578 = vld [vmem:[#allocation5 + $0x200] sm:$0xff]
    %v579 = vld [vmem:[#allocation5 + $0x208] sm:$0xff]
    %v580 = vld [vmem:[#allocation5 + $0x210] sm:$0xff]
    %v581 = vld [vmem:[#allocation5 + $0x218] sm:$0xff]
    %v582 = vld [vmem:[#allocation5 + $0x220] sm:$0xff]
    %v583 = vld [vmem:[#allocation5 + $0x228] sm:$0xff]
    %v584 = vld [vmem:[#allocation5 + $0x230] sm:$0xff]
    %v585 = vld [vmem:[#allocation5 + $0x238] sm:$0xff]
    %v586 = vld [vmem:[#allocation5 + $0x240] sm:$0xff]
    %v587 = vld [vmem:[#allocation5 + $0x248] sm:$0xff]
    %v588 = vld [vmem:[#allocation5 + $0x250] sm:$0xff]
    %v589 = vld [vmem:[#allocation5 + $0x258] sm:$0xff]
    %v590 = vld [vmem:[#allocation5 + $0x260] sm:$0xff]
    %v591 = vld [vmem:[#allocation5 + $0x268] sm:$0xff]
    %v592 = vld [vmem:[#allocation5 + $0x270] sm:$0xff]
    %v593 = vld [vmem:[#allocation5 + $0x278] sm:$0xff]
    %v594 = vld [vmem:[#allocation5 + $0x280] sm:$0xff]
    %v595 = vld [vmem:[#allocation5 + $0x288] sm:$0xff]
    %v596 = vld [vmem:[#allocation5 + $0x290] sm:$0xff]
    %v597 = vld [vmem:[#allocation5 + $0x298] sm:$0xff]
    %v598 = vld [vmem:[#allocation5 + $0x2a0] sm:$0xff]
    %v599 = vld [vmem:[#allocation5 + $0x2a8] sm:$0xff]
    %v600 = vld [vmem:[#allocation5 + $0x2b0] sm:$0xff]
    %v601 = vld [vmem:[#allocation5 + $0x2b8] sm:$0xff]
    %v602 = vld [vmem:[#allocation5 + $0x2c0] sm:$0xff]
    %v603 = vld [vmem:[#allocation5 + $0x2c8] sm:$0xff]
    %v604 = vld [vmem:[#allocation5 + $0x2d0] sm:$0xff]
    %v605 = vld [vmem:[#allocation5 + $0x2d8] sm:$0xff]
    %v606 = vld [vmem:[#allocation5 + $0x2e0] sm:$0xff]
    %v607 = vld [vmem:[#allocation5 + $0x2e8] sm:$0xff]
    %v608 = vld [vmem:[#allocation5 + $0x2f0] sm:$0xff]
    %v609 = vld [vmem:[#allocation5 + $0x2f8] sm:$0xff]
    %v610 = vld [vmem:[#allocation5 + $0x300] sm:$0xff]
    %v611 = vld [vmem:[#allocation5 + $0x308] sm:$0xff]
    %v612 = vld [vmem:[#allocation5 + $0x310] sm:$0xff]
    %v613 = vld [vmem:[#allocation5 + $0x318] sm:$0xff]
    %v614 = vld [vmem:[#allocation5 + $0x320] sm:$0xff]
    %v615 = vld [vmem:[#allocation5 + $0x328] sm:$0xff]
    %v616 = vld [vmem:[#allocation5 + $0x330] sm:$0xff]
    %v617 = vld [vmem:[#allocation5 + $0x338] sm:$0xff]
    %v618 = vld [vmem:[#allocation5 + $0x340] sm:$0xff]
    %v619 = vld [vmem:[#allocation5 + $0x348] sm:$0xff]
    %v620 = vld [vmem:[#allocation5 + $0x350] sm:$0xff]
    %v621 = vld [vmem:[#allocation5 + $0x358] sm:$0xff]
    %v622 = vld [vmem:[#allocation5 + $0x360] sm:$0xff]
    %v623 = vld [vmem:[#allocation5 + $0x368] sm:$0xff]
    %v624 = vld [vmem:[#allocation5 + $0x370] sm:$0xff]
    %v625 = vld [vmem:[#allocation5 + $0x378] sm:$0xff]
    %v626 = vld [vmem:[#allocation5 + $0x380] sm:$0xff]
    %v627 = vld [vmem:[#allocation5 + $0x388] sm:$0xff]
    %v628 = vld [vmem:[#allocation5 + $0x390] sm:$0xff]
    %v629 = vld [vmem:[#allocation5 + $0x398] sm:$0xff]
    %v630 = vld [vmem:[#allocation5 + $0x3a0] sm:$0xff]
    %v631 = vld [vmem:[#allocation5 + $0x3a8] sm:$0xff]
    %v632 = vld [vmem:[#allocation5 + $0x3b0] sm:$0xff]
    %v633 = vld [vmem:[#allocation5 + $0x3b8] sm:$0xff]
    %v634 = vld [vmem:[#allocation5 + $0x3c0] sm:$0xff]
    %v635 = vld [vmem:[#allocation5 + $0x3c8] sm:$0xff]
    %v636 = vld [vmem:[#allocation5 + $0x3d0] sm:$0xff]
    %v637 = vld [vmem:[#allocation5 + $0x3d8] sm:$0xff]
    %v638 = vld [vmem:[#allocation5 + $0x3e0] sm:$0xff]
    %v639 = vld [vmem:[#allocation5 + $0x3e8] sm:$0xff]
    %v640 = vld [vmem:[#allocation5 + $0x3f0] sm:$0xff]
    %v641 = vld [vmem:[#allocation5 + $0x3f8] sm:$0xff]
    %v642 = vld [vmem:[#allocation5 + $0x400] sm:$0xff]
    %v643 = vld [vmem:[#allocation5 + $0x408] sm:$0xff]
    %v644 = vld [vmem:[#allocation5 + $0x410] sm:$0xff]
    %v645 = vld [vmem:[#allocation5 + $0x418] sm:$0xff]
    %v646 = vld [vmem:[#allocation5 + $0x420] sm:$0xff]
    %v647 = vld [vmem:[#allocation5 + $0x428] sm:$0xff]
    %v648 = vld [vmem:[#allocation5 + $0x430] sm:$0xff]
    %v649 = vld [vmem:[#allocation5 + $0x438] sm:$0xff]
    %v650 = vld [vmem:[#allocation5 + $0x440] sm:$0xff]
    %v651 = vld [vmem:[#allocation5 + $0x448] sm:$0xff]
    %v652 = vld [vmem:[#allocation5 + $0x450] sm:$0xff]
    %v653 = vld [vmem:[#allocation5 + $0x458] sm:$0xff]
    %v654 = vld [vmem:[#allocation5 + $0x460] sm:$0xff]
    %v655 = vld [vmem:[#allocation5 + $0x468] sm:$0xff]
    %v656 = vld [vmem:[#allocation5 + $0x470] sm:$0xff]
    %v657 = vld [vmem:[#allocation5 + $0x478] sm:$0xff]
    %v658 = vld [vmem:[#allocation5 + $0x480] sm:$0xff]
    %v659 = vld [vmem:[#allocation5 + $0x488] sm:$0xff]
    %v660 = vld [vmem:[#allocation5 + $0x490] sm:$0xff]
    %v661 = vld [vmem:[#allocation5 + $0x498] sm:$0xff]
    %v662 = vld [vmem:[#allocation5 + $0x4a0] sm:$0xff]
    %v663 = vld [vmem:[#allocation5 + $0x4a8] sm:$0xff]
    %v664 = vld [vmem:[#allocation5 + $0x4b0] sm:$0xff]
    %v665 = vld [vmem:[#allocation5 + $0x4b8] sm:$0xff]
    %v666 = vld [vmem:[#allocation5 + $0x4c0] sm:$0xff]
    %v667 = vld [vmem:[#allocation5 + $0x4c8] sm:$0xff]
    %v668 = vld [vmem:[#allocation5 + $0x4d0] sm:$0xff]
    %v669 = vld [vmem:[#allocation5 + $0x4d8] sm:$0xff]
    %v670 = vld [vmem:[#allocation5 + $0x4e0] sm:$0xff]
    %v671 = vld [vmem:[#allocation5 + $0x4e8] sm:$0xff]
    %v672 = vld [vmem:[#allocation5 + $0x4f0] sm:$0xff]
    %v673 = vld [vmem:[#allocation5 + $0x4f8] sm:$0xff]
    %v674 = vld [vmem:[#allocation5 + $0x500] sm:$0xff]
    %v675 = vld [vmem:[#allocation5 + $0x508] sm:$0xff]
    %v676 = vld [vmem:[#allocation5 + $0x510] sm:$0xff]
    %v677 = vld [vmem:[#allocation5 + $0x518] sm:$0xff]
    %v678 = vld [vmem:[#allocation5 + $0x520] sm:$0xff]
    %v679 = vld [vmem:[#allocation5 + $0x528] sm:$0xff]
    %v680 = vld [vmem:[#allocation5 + $0x530] sm:$0xff]
    %v681 = vld [vmem:[#allocation5 + $0x538] sm:$0xff]
    %v682 = vld [vmem:[#allocation5 + $0x540] sm:$0xff]
    %v683 = vld [vmem:[#allocation5 + $0x548] sm:$0xff]
    %v684 = vld [vmem:[#allocation5 + $0x550] sm:$0xff]
    %v685 = vld [vmem:[#allocation5 + $0x558] sm:$0xff]
    %v686 = vld [vmem:[#allocation5 + $0x560] sm:$0xff]
    %v687 = vld [vmem:[#allocation5 + $0x568] sm:$0xff]
    %v688 = vld [vmem:[#allocation5 + $0x570] sm:$0xff]
    %v689 = vld [vmem:[#allocation5 + $0x578] sm:$0xff]
    %v690 = vld [vmem:[#allocation5 + $0x580] sm:$0xff]
    %v691 = vld [vmem:[#allocation5 + $0x588] sm:$0xff]
    %v692 = vld [vmem:[#allocation5 + $0x590] sm:$0xff]
    %v693 = vld [vmem:[#allocation5 + $0x598] sm:$0xff]
    %v694 = vld [vmem:[#allocation5 + $0x5a0] sm:$0xff]
    %v695 = vld [vmem:[#allocation5 + $0x5a8] sm:$0xff]
    %v696 = vld [vmem:[#allocation5 + $0x5b0] sm:$0xff]
    %v697 = vld [vmem:[#allocation5 + $0x5b8] sm:$0xff]
    %v698 = vld [vmem:[#allocation5 + $0x5c0] sm:$0xff]
    %v699 = vld [vmem:[#allocation5 + $0x5c8] sm:$0xff]
    %v700 = vld [vmem:[#allocation5 + $0x5d0] sm:$0xff]
    %v701 = vld [vmem:[#allocation5 + $0x5d8] sm:$0xff]
    %v702 = vld [vmem:[#allocation5 + $0x5e0] sm:$0xff]
    %v703 = vld [vmem:[#allocation5 + $0x5e8] sm:$0xff]
    %v704 = vld [vmem:[#allocation5 + $0x5f0] sm:$0xff]
    %v705 = vld [vmem:[#allocation5 + $0x5f8] sm:$0xff]
    %v706 = vld [vmem:[#allocation5 + $0x600] sm:$0xff]
    %v707 = vld [vmem:[#allocation5 + $0x608] sm:$0xff]
    %v708 = vld [vmem:[#allocation5 + $0x610] sm:$0xff]
    %v709 = vld [vmem:[#allocation5 + $0x618] sm:$0xff]
    %v710 = vld [vmem:[#allocation5 + $0x620] sm:$0xff]
    %v711 = vld [vmem:[#allocation5 + $0x628] sm:$0xff]
    %v712 = vld [vmem:[#allocation5 + $0x630] sm:$0xff]
    %v713 = vld [vmem:[#allocation5 + $0x638] sm:$0xff]
    %v714 = vld [vmem:[#allocation5 + $0x640] sm:$0xff]
    %v715 = vld [vmem:[#allocation5 + $0x648] sm:$0xff]
    %v716 = vld [vmem:[#allocation5 + $0x650] sm:$0xff]
    %v717 = vld [vmem:[#allocation5 + $0x658] sm:$0xff]
    %v718 = vld [vmem:[#allocation5 + $0x660] sm:$0xff]
    %v719 = vld [vmem:[#allocation5 + $0x668] sm:$0xff]
    %v720 = vld [vmem:[#allocation5 + $0x670] sm:$0xff]
    %v721 = vld [vmem:[#allocation5 + $0x678] sm:$0xff]
    %v722 = vld [vmem:[#allocation5 + $0x680] sm:$0xff]
    %v723 = vld [vmem:[#allocation5 + $0x688] sm:$0xff]
    %v724 = vld [vmem:[#allocation5 + $0x690] sm:$0xff]
    %v725 = vld [vmem:[#allocation5 + $0x698] sm:$0xff]
    %v726 = vld [vmem:[#allocation5 + $0x6a0] sm:$0xff]
    %v727 = vld [vmem:[#allocation5 + $0x6a8] sm:$0xff]
    %v728 = vld [vmem:[#allocation5 + $0x6b0] sm:$0xff]
    %v729 = vld [vmem:[#allocation5 + $0x6b8] sm:$0xff]
    %v730 = vld [vmem:[#allocation5 + $0x6c0] sm:$0xff]
    %v731 = vld [vmem:[#allocation5 + $0x6c8] sm:$0xff]
    %v732 = vld [vmem:[#allocation5 + $0x6d0] sm:$0xff]
    %v733 = vld [vmem:[#allocation5 + $0x6d8] sm:$0xff]
    %v734 = vld [vmem:[#allocation5 + $0x6e0] sm:$0xff]
    %v735 = vld [vmem:[#allocation5 + $0x6e8] sm:$0xff]
    %v736 = vld [vmem:[#allocation5 + $0x6f0] sm:$0xff]
    %v737 = vld [vmem:[#allocation5 + $0x6f8] sm:$0xff]
    %v738 = vld [vmem:[#allocation5 + $0x700] sm:$0xff]
    %v739 = vld [vmem:[#allocation5 + $0x708] sm:$0xff]
    %v740 = vld [vmem:[#allocation5 + $0x710] sm:$0xff]
    %v741 = vld [vmem:[#allocation5 + $0x718] sm:$0xff]
    %v742 = vld [vmem:[#allocation5 + $0x720] sm:$0xff]
    %v743 = vld [vmem:[#allocation5 + $0x728] sm:$0xff]
    %v744 = vld [vmem:[#allocation5 + $0x730] sm:$0xff]
    %v745 = vld [vmem:[#allocation5 + $0x738] sm:$0xff]
    %v746 = vld [vmem:[#allocation5 + $0x740] sm:$0xff]
    %v747 = vld [vmem:[#allocation5 + $0x748] sm:$0xff]
    %v748 = vld [vmem:[#allocation5 + $0x750] sm:$0xff]
    %v749 = vld [vmem:[#allocation5 + $0x758] sm:$0xff]
    %v750 = vld [vmem:[#allocation5 + $0x760] sm:$0xff]
    %v751 = vld [vmem:[#allocation5 + $0x768] sm:$0xff]
    %v752 = vld [vmem:[#allocation5 + $0x770] sm:$0xff]
    %v753 = vld [vmem:[#allocation5 + $0x778] sm:$0xff]
    %v754 = vld [vmem:[#allocation5 + $0x780] sm:$0xff]
    %v755 = vld [vmem:[#allocation5 + $0x788] sm:$0xff]
    %v756 = vld [vmem:[#allocation5 + $0x790] sm:$0xff]
    %v757 = vld [vmem:[#allocation5 + $0x798] sm:$0xff]
    %v758 = vld [vmem:[#allocation5 + $0x7a0] sm:$0xff]
    %v759 = vld [vmem:[#allocation5 + $0x7a8] sm:$0xff]
    %v760 = vld [vmem:[#allocation5 + $0x7b0] sm:$0xff]
    %v761 = vld [vmem:[#allocation5 + $0x7b8] sm:$0xff]
    %v762 = vld [vmem:[#allocation5 + $0x7c0] sm:$0xff]
    %v763 = vld [vmem:[#allocation5 + $0x7c8] sm:$0xff]
    %v764 = vld [vmem:[#allocation5 + $0x7d0] sm:$0xff]
    %v765 = vld [vmem:[#allocation5 + $0x7d8] sm:$0xff]
    %v766 = vld [vmem:[#allocation5 + $0x7e0] sm:$0xff]
    %v767 = vld [vmem:[#allocation5 + $0x7e8] sm:$0xff]
    %v768 = vld [vmem:[#allocation5 + $0x7f0] sm:$0xff]
    %v769 = vld [vmem:[#allocation5 + $0x7f8] sm:$0xff]
    %v770 = vld [vmem:[#allocation7] sm:$0xf]
    %v772 = vperm.slane %v770, 0
    %v773 = vperm.slane %v770, 1
    %v774 = vperm.slane %v770, 2
    %v775 = vperm.slane %v770, 3
    %v1036 = vunpack.c.l.b16 %v514
    %v1037 = vunpack.c.h.b16 %v514
    %v1038 = vunpack.c.l.b16 %v515
    %v1039 = vunpack.c.h.b16 %v515
    %v1040 = vunpack.c.l.b16 %v516
    %v1041 = vunpack.c.h.b16 %v516
    %v1042 = vunpack.c.l.b16 %v517
    %v1043 = vunpack.c.h.b16 %v517
    %v1044 = vunpack.c.l.b16 %v518
    %v1045 = vunpack.c.h.b16 %v518
    %v1046 = vunpack.c.l.b16 %v519
    %v1047 = vunpack.c.h.b16 %v519
    %v1048 = vunpack.c.l.b16 %v520
    %v1049 = vunpack.c.h.b16 %v520
    %v1050 = vunpack.c.l.b16 %v521
    %v1051 = vunpack.c.h.b16 %v521
    %v1052 = vunpack.c.l.b16 %v522
    %v1053 = vunpack.c.h.b16 %v522
    %v1054 = vunpack.c.l.b16 %v523
    %v1055 = vunpack.c.h.b16 %v523
    %v1056 = vunpack.c.l.b16 %v524
    %v1057 = vunpack.c.h.b16 %v524
    %v1058 = vunpack.c.l.b16 %v525
    %v1059 = vunpack.c.h.b16 %v525
    %v1060 = vunpack.c.l.b16 %v526
    %v1061 = vunpack.c.h.b16 %v526
    %v1062 = vunpack.c.l.b16 %v527
    %v1063 = vunpack.c.h.b16 %v527
    %v1064 = vunpack.c.l.b16 %v528
    %v1065 = vunpack.c.h.b16 %v528
    %v1066 = vunpack.c.l.b16 %v529
    %v1067 = vunpack.c.h.b16 %v529
    %v1068 = vunpack.c.l.b16 %v530
    %v1069 = vunpack.c.h.b16 %v530
    %v1070 = vunpack.c.l.b16 %v531
    %v1071 = vunpack.c.h.b16 %v531
    %v1072 = vunpack.c.l.b16 %v532
    %v1073 = vunpack.c.h.b16 %v532
    %v1074 = vunpack.c.l.b16 %v533
    %v1075 = vunpack.c.h.b16 %v533
    %v1076 = vunpack.c.l.b16 %v534
    %v1077 = vunpack.c.h.b16 %v534
    %v1078 = vunpack.c.l.b16 %v535
    %v1079 = vunpack.c.h.b16 %v535
    %v1080 = vunpack.c.l.b16 %v536
    %v1081 = vunpack.c.h.b16 %v536
    %v1082 = vunpack.c.l.b16 %v537
    %v1083 = vunpack.c.h.b16 %v537
    %v1084 = vunpack.c.l.b16 %v538
    %v1085 = vunpack.c.h.b16 %v538
    %v1086 = vunpack.c.l.b16 %v539
    %v1087 = vunpack.c.h.b16 %v539
    %v1088 = vunpack.c.l.b16 %v540
    %v1089 = vunpack.c.h.b16 %v540
    %v1090 = vunpack.c.l.b16 %v541
    %v1091 = vunpack.c.h.b16 %v541
    %v1092 = vunpack.c.l.b16 %v542
    %v1093 = vunpack.c.h.b16 %v542
    %v1094 = vunpack.c.l.b16 %v543
    %v1095 = vunpack.c.h.b16 %v543
    %v1096 = vunpack.c.l.b16 %v544
    %v1097 = vunpack.c.h.b16 %v544
    %v1098 = vunpack.c.l.b16 %v545
    %v1099 = vunpack.c.h.b16 %v545
    %v1100 = vunpack.c.l.b16 %v546
    %v1101 = vunpack.c.h.b16 %v546
    %v1102 = vunpack.c.l.b16 %v547
    %v1103 = vunpack.c.h.b16 %v547
    %v1104 = vunpack.c.l.b16 %v548
    %v1105 = vunpack.c.h.b16 %v548
    %v1106 = vunpack.c.l.b16 %v549
    %v1107 = vunpack.c.h.b16 %v549
    %v1108 = vunpack.c.l.b16 %v550
    %v1109 = vunpack.c.h.b16 %v550
    %v1110 = vunpack.c.l.b16 %v551
    %v1111 = vunpack.c.h.b16 %v551
    %v1112 = vunpack.c.l.b16 %v552
    %v1113 = vunpack.c.h.b16 %v552
    %v1114 = vunpack.c.l.b16 %v553
    %v1115 = vunpack.c.h.b16 %v553
    %v1116 = vunpack.c.l.b16 %v554
    %v1117 = vunpack.c.h.b16 %v554
    %v1118 = vunpack.c.l.b16 %v555
    %v1119 = vunpack.c.h.b16 %v555
    %v1120 = vunpack.c.l.b16 %v556
    %v1121 = vunpack.c.h.b16 %v556
    %v1122 = vunpack.c.l.b16 %v557
    %v1123 = vunpack.c.h.b16 %v557
    %v1124 = vunpack.c.l.b16 %v558
    %v1125 = vunpack.c.h.b16 %v558
    %v1126 = vunpack.c.l.b16 %v559
    %v1127 = vunpack.c.h.b16 %v559
    %v1128 = vunpack.c.l.b16 %v560
    %v1129 = vunpack.c.h.b16 %v560
    %v1130 = vunpack.c.l.b16 %v561
    %v1131 = vunpack.c.h.b16 %v561
    %v1132 = vunpack.c.l.b16 %v562
    %v1133 = vunpack.c.h.b16 %v562
    %v1134 = vunpack.c.l.b16 %v563
    %v1135 = vunpack.c.h.b16 %v563
    %v1136 = vunpack.c.l.b16 %v564
    %v1137 = vunpack.c.h.b16 %v564
    %v1138 = vunpack.c.l.b16 %v565
    %v1139 = vunpack.c.h.b16 %v565
    %v1140 = vunpack.c.l.b16 %v566
    %v1141 = vunpack.c.h.b16 %v566
    %v1142 = vunpack.c.l.b16 %v567
    %v1143 = vunpack.c.h.b16 %v567
    %v1144 = vunpack.c.l.b16 %v568
    %v1145 = vunpack.c.h.b16 %v568
    %v1146 = vunpack.c.l.b16 %v569
    %v1147 = vunpack.c.h.b16 %v569
    %v1148 = vunpack.c.l.b16 %v570
    %v1149 = vunpack.c.h.b16 %v570
    %v1150 = vunpack.c.l.b16 %v571
    %v1151 = vunpack.c.h.b16 %v571
    %v1152 = vunpack.c.l.b16 %v572
    %v1153 = vunpack.c.h.b16 %v572
    %v1154 = vunpack.c.l.b16 %v573
    %v1155 = vunpack.c.h.b16 %v573
    %v1156 = vunpack.c.l.b16 %v574
    %v1157 = vunpack.c.h.b16 %v574
    %v1158 = vunpack.c.l.b16 %v575
    %v1159 = vunpack.c.h.b16 %v575
    %v1160 = vunpack.c.l.b16 %v576
    %v1161 = vunpack.c.h.b16 %v576
    %v1162 = vunpack.c.l.b16 %v577
    %v1163 = vunpack.c.h.b16 %v577
    %v1164 = vunpack.c.l.b16 %v578
    %v1165 = vunpack.c.h.b16 %v578
    %v1166 = vunpack.c.l.b16 %v579
    %v1167 = vunpack.c.h.b16 %v579
    %v1168 = vunpack.c.l.b16 %v580
    %v1169 = vunpack.c.h.b16 %v580
    %v1170 = vunpack.c.l.b16 %v581
    %v1171 = vunpack.c.h.b16 %v581
    %v1172 = vunpack.c.l.b16 %v582
    %v1173 = vunpack.c.h.b16 %v582
    %v1174 = vunpack.c.l.b16 %v583
    %v1175 = vunpack.c.h.b16 %v583
    %v1176 = vunpack.c.l.b16 %v584
    %v1177 = vunpack.c.h.b16 %v584
    %v1178 = vunpack.c.l.b16 %v585
    %v1179 = vunpack.c.h.b16 %v585
    %v1180 = vunpack.c.l.b16 %v586
    %v1181 = vunpack.c.h.b16 %v586
    %v1182 = vunpack.c.l.b16 %v587
    %v1183 = vunpack.c.h.b16 %v587
    %v1184 = vunpack.c.l.b16 %v588
    %v1185 = vunpack.c.h.b16 %v588
    %v1186 = vunpack.c.l.b16 %v589
    %v1187 = vunpack.c.h.b16 %v589
    %v1188 = vunpack.c.l.b16 %v590
    %v1189 = vunpack.c.h.b16 %v590
    %v1190 = vunpack.c.l.b16 %v591
    %v1191 = vunpack.c.h.b16 %v591
    %v1192 = vunpack.c.l.b16 %v592
    %v1193 = vunpack.c.h.b16 %v592
    %v1194 = vunpack.c.l.b16 %v593
    %v1195 = vunpack.c.h.b16 %v593
    %v1196 = vunpack.c.l.b16 %v594
    %v1197 = vunpack.c.h.b16 %v594
    %v1198 = vunpack.c.l.b16 %v595
    %v1199 = vunpack.c.h.b16 %v595
    %v1200 = vunpack.c.l.b16 %v596
    %v1201 = vunpack.c.h.b16 %v596
    %v1202 = vunpack.c.l.b16 %v597
    %v1203 = vunpack.c.h.b16 %v597
    %v1204 = vunpack.c.l.b16 %v598
    %v1205 = vunpack.c.h.b16 %v598
    %v1206 = vunpack.c.l.b16 %v599
    %v1207 = vunpack.c.h.b16 %v599
    %v1208 = vunpack.c.l.b16 %v600
    %v1209 = vunpack.c.h.b16 %v600
    %v1210 = vunpack.c.l.b16 %v601
    %v1211 = vunpack.c.h.b16 %v601
    %v1212 = vunpack.c.l.b16 %v602
    %v1213 = vunpack.c.h.b16 %v602
    %v1214 = vunpack.c.l.b16 %v603
    %v1215 = vunpack.c.h.b16 %v603
    %v1216 = vunpack.c.l.b16 %v604
    %v1217 = vunpack.c.h.b16 %v604
    %v1218 = vunpack.c.l.b16 %v605
    %v1219 = vunpack.c.h.b16 %v605
    %v1220 = vunpack.c.l.b16 %v606
    %v1221 = vunpack.c.h.b16 %v606
    %v1222 = vunpack.c.l.b16 %v607
    %v1223 = vunpack.c.h.b16 %v607
    %v1224 = vunpack.c.l.b16 %v608
    %v1225 = vunpack.c.h.b16 %v608
    %v1226 = vunpack.c.l.b16 %v609
    %v1227 = vunpack.c.h.b16 %v609
    %v1228 = vunpack.c.l.b16 %v610
    %v1229 = vunpack.c.h.b16 %v610
    %v1230 = vunpack.c.l.b16 %v611
    %v1231 = vunpack.c.h.b16 %v611
    %v1232 = vunpack.c.l.b16 %v612
    %v1233 = vunpack.c.h.b16 %v612
    %v1234 = vunpack.c.l.b16 %v613
    %v1235 = vunpack.c.h.b16 %v613
    %v1236 = vunpack.c.l.b16 %v614
    %v1237 = vunpack.c.h.b16 %v614
    %v1238 = vunpack.c.l.b16 %v615
    %v1239 = vunpack.c.h.b16 %v615
    %v1240 = vunpack.c.l.b16 %v616
    %v1241 = vunpack.c.h.b16 %v616
    %v1242 = vunpack.c.l.b16 %v617
    %v1243 = vunpack.c.h.b16 %v617
    %v1244 = vunpack.c.l.b16 %v618
    %v1245 = vunpack.c.h.b16 %v618
    %v1246 = vunpack.c.l.b16 %v619
    %v1247 = vunpack.c.h.b16 %v619
    %v1248 = vunpack.c.l.b16 %v620
    %v1249 = vunpack.c.h.b16 %v620
    %v1250 = vunpack.c.l.b16 %v621
    %v1251 = vunpack.c.h.b16 %v621
    %v1252 = vunpack.c.l.b16 %v622
    %v1253 = vunpack.c.h.b16 %v622
    %v1254 = vunpack.c.l.b16 %v623
    %v1255 = vunpack.c.h.b16 %v623
    %v1256 = vunpack.c.l.b16 %v624
    %v1257 = vunpack.c.h.b16 %v624
    %v1258 = vunpack.c.l.b16 %v625
    %v1259 = vunpack.c.h.b16 %v625
    %v1260 = vunpack.c.l.b16 %v626
    %v1261 = vunpack.c.h.b16 %v626
    %v1262 = vunpack.c.l.b16 %v627
    %v1263 = vunpack.c.h.b16 %v627
    %v1264 = vunpack.c.l.b16 %v628
    %v1265 = vunpack.c.h.b16 %v628
    %v1266 = vunpack.c.l.b16 %v629
    %v1267 = vunpack.c.h.b16 %v629
    %v1268 = vunpack.c.l.b16 %v630
    %v1269 = vunpack.c.h.b16 %v630
    %v1270 = vunpack.c.l.b16 %v631
    %v1271 = vunpack.c.h.b16 %v631
    %v1272 = vunpack.c.l.b16 %v632
    %v1273 = vunpack.c.h.b16 %v632
    %v1274 = vunpack.c.l.b16 %v633
    %v1275 = vunpack.c.h.b16 %v633
    %v1276 = vunpack.c.l.b16 %v634
    %v1277 = vunpack.c.h.b16 %v634
    %v1278 = vunpack.c.l.b16 %v635
    %v1279 = vunpack.c.h.b16 %v635
    %v1280 = vunpack.c.l.b16 %v636
    %v1281 = vunpack.c.h.b16 %v636
    %v1282 = vunpack.c.l.b16 %v637
    %v1283 = vunpack.c.h.b16 %v637
    %v1284 = vunpack.c.l.b16 %v638
    %v1285 = vunpack.c.h.b16 %v638
    %v1286 = vunpack.c.l.b16 %v639
    %v1287 = vunpack.c.h.b16 %v639
    %v1288 = vunpack.c.l.b16 %v640
    %v1289 = vunpack.c.h.b16 %v640
    %v1290 = vunpack.c.l.b16 %v641
    %v1291 = vunpack.c.h.b16 %v641
    %v1292 = vunpack.c.l.b16 %v642
    %v1293 = vunpack.c.h.b16 %v642
    %v1294 = vunpack.c.l.b16 %v643
    %v1295 = vunpack.c.h.b16 %v643
    %v1296 = vunpack.c.l.b16 %v644
    %v1297 = vunpack.c.h.b16 %v644
    %v1298 = vunpack.c.l.b16 %v645
    %v1299 = vunpack.c.h.b16 %v645
    %v1300 = vunpack.c.l.b16 %v646
    %v1301 = vunpack.c.h.b16 %v646
    %v1302 = vunpack.c.l.b16 %v647
    %v1303 = vunpack.c.h.b16 %v647
    %v1304 = vunpack.c.l.b16 %v648
    %v1305 = vunpack.c.h.b16 %v648
    %v1306 = vunpack.c.l.b16 %v649
    %v1307 = vunpack.c.h.b16 %v649
    %v1308 = vunpack.c.l.b16 %v650
    %v1309 = vunpack.c.h.b16 %v650
    %v1310 = vunpack.c.l.b16 %v651
    %v1311 = vunpack.c.h.b16 %v651
    %v1312 = vunpack.c.l.b16 %v652
    %v1313 = vunpack.c.h.b16 %v652
    %v1314 = vunpack.c.l.b16 %v653
    %v1315 = vunpack.c.h.b16 %v653
    %v1316 = vunpack.c.l.b16 %v654
    %v1317 = vunpack.c.h.b16 %v654
    %v1318 = vunpack.c.l.b16 %v655
    %v1319 = vunpack.c.h.b16 %v655
    %v1320 = vunpack.c.l.b16 %v656
    %v1321 = vunpack.c.h.b16 %v656
    %v1322 = vunpack.c.l.b16 %v657
    %v1323 = vunpack.c.h.b16 %v657
    %v1324 = vunpack.c.l.b16 %v658
    %v1325 = vunpack.c.h.b16 %v658
    %v1326 = vunpack.c.l.b16 %v659
    %v1327 = vunpack.c.h.b16 %v659
    %v1328 = vunpack.c.l.b16 %v660
    %v1329 = vunpack.c.h.b16 %v660
    %v1330 = vunpack.c.l.b16 %v661
    %v1331 = vunpack.c.h.b16 %v661
    %v1332 = vunpack.c.l.b16 %v662
    %v1333 = vunpack.c.h.b16 %v662
    %v1334 = vunpack.c.l.b16 %v663
    %v1335 = vunpack.c.h.b16 %v663
    %v1336 = vunpack.c.l.b16 %v664
    %v1337 = vunpack.c.h.b16 %v664
    %v1338 = vunpack.c.l.b16 %v665
    %v1339 = vunpack.c.h.b16 %v665
    %v1340 = vunpack.c.l.b16 %v666
    %v1341 = vunpack.c.h.b16 %v666
    %v1342 = vunpack.c.l.b16 %v667
    %v1343 = vunpack.c.h.b16 %v667
    %v1344 = vunpack.c.l.b16 %v668
    %v1345 = vunpack.c.h.b16 %v668
    %v1346 = vunpack.c.l.b16 %v669
    %v1347 = vunpack.c.h.b16 %v669
    %v1348 = vunpack.c.l.b16 %v670
    %v1349 = vunpack.c.h.b16 %v670
    %v1350 = vunpack.c.l.b16 %v671
    %v1351 = vunpack.c.h.b16 %v671
    %v1352 = vunpack.c.l.b16 %v672
    %v1353 = vunpack.c.h.b16 %v672
    %v1354 = vunpack.c.l.b16 %v673
    %v1355 = vunpack.c.h.b16 %v673
    %v1356 = vunpack.c.l.b16 %v674
    %v1357 = vunpack.c.h.b16 %v674
    %v1358 = vunpack.c.l.b16 %v675
    %v1359 = vunpack.c.h.b16 %v675
    %v1360 = vunpack.c.l.b16 %v676
    %v1361 = vunpack.c.h.b16 %v676
    %v1362 = vunpack.c.l.b16 %v677
    %v1363 = vunpack.c.h.b16 %v677
    %v1364 = vunpack.c.l.b16 %v678
    %v1365 = vunpack.c.h.b16 %v678
    %v1366 = vunpack.c.l.b16 %v679
    %v1367 = vunpack.c.h.b16 %v679
    %v1368 = vunpack.c.l.b16 %v680
    %v1369 = vunpack.c.h.b16 %v680
    %v1370 = vunpack.c.l.b16 %v681
    %v1371 = vunpack.c.h.b16 %v681
    %v1372 = vunpack.c.l.b16 %v682
    %v1373 = vunpack.c.h.b16 %v682
    %v1374 = vunpack.c.l.b16 %v683
    %v1375 = vunpack.c.h.b16 %v683
    %v1376 = vunpack.c.l.b16 %v684
    %v1377 = vunpack.c.h.b16 %v684
    %v1378 = vunpack.c.l.b16 %v685
    %v1379 = vunpack.c.h.b16 %v685
    %v1380 = vunpack.c.l.b16 %v686
    %v1381 = vunpack.c.h.b16 %v686
    %v1382 = vunpack.c.l.b16 %v687
    %v1383 = vunpack.c.h.b16 %v687
    %v1384 = vunpack.c.l.b16 %v688
    %v1385 = vunpack.c.h.b16 %v688
    %v1386 = vunpack.c.l.b16 %v689
    %v1387 = vunpack.c.h.b16 %v689
    %v1388 = vunpack.c.l.b16 %v690
    %v1389 = vunpack.c.h.b16 %v690
    %v1390 = vunpack.c.l.b16 %v691
    %v1391 = vunpack.c.h.b16 %v691
    %v1392 = vunpack.c.l.b16 %v692
    %v1393 = vunpack.c.h.b16 %v692
    %v1394 = vunpack.c.l.b16 %v693
    %v1395 = vunpack.c.h.b16 %v693
    %v1396 = vunpack.c.l.b16 %v694
    %v1397 = vunpack.c.h.b16 %v694
    %v1398 = vunpack.c.l.b16 %v695
    %v1399 = vunpack.c.h.b16 %v695
    %v1400 = vunpack.c.l.b16 %v696
    %v1401 = vunpack.c.h.b16 %v696
    %v1402 = vunpack.c.l.b16 %v697
    %v1403 = vunpack.c.h.b16 %v697
    %v1404 = vunpack.c.l.b16 %v698
    %v1405 = vunpack.c.h.b16 %v698
    %v1406 = vunpack.c.l.b16 %v699
    %v1407 = vunpack.c.h.b16 %v699
    %v1408 = vunpack.c.l.b16 %v700
    %v1409 = vunpack.c.h.b16 %v700
    %v1410 = vunpack.c.l.b16 %v701
    %v1411 = vunpack.c.h.b16 %v701
    %v1412 = vunpack.c.l.b16 %v702
    %v1413 = vunpack.c.h.b16 %v702
    %v1414 = vunpack.c.l.b16 %v703
    %v1415 = vunpack.c.h.b16 %v703
    %v1416 = vunpack.c.l.b16 %v704
    %v1417 = vunpack.c.h.b16 %v704
    %v1418 = vunpack.c.l.b16 %v705
    %v1419 = vunpack.c.h.b16 %v705
    %v1420 = vunpack.c.l.b16 %v706
    %v1421 = vunpack.c.h.b16 %v706
    %v1422 = vunpack.c.l.b16 %v707
    %v1423 = vunpack.c.h.b16 %v707
    %v1424 = vunpack.c.l.b16 %v708
    %v1425 = vunpack.c.h.b16 %v708
    %v1426 = vunpack.c.l.b16 %v709
    %v1427 = vunpack.c.h.b16 %v709
    %v1428 = vunpack.c.l.b16 %v710
    %v1429 = vunpack.c.h.b16 %v710
    %v1430 = vunpack.c.l.b16 %v711
    %v1431 = vunpack.c.h.b16 %v711
    %v1432 = vunpack.c.l.b16 %v712
    %v1433 = vunpack.c.h.b16 %v712
    %v1434 = vunpack.c.l.b16 %v713
    %v1435 = vunpack.c.h.b16 %v713
    %v1436 = vunpack.c.l.b16 %v714
    %v1437 = vunpack.c.h.b16 %v714
    %v1438 = vunpack.c.l.b16 %v715
    %v1439 = vunpack.c.h.b16 %v715
    %v1440 = vunpack.c.l.b16 %v716
    %v1441 = vunpack.c.h.b16 %v716
    %v1442 = vunpack.c.l.b16 %v717
    %v1443 = vunpack.c.h.b16 %v717
    %v1444 = vunpack.c.l.b16 %v718
    %v1445 = vunpack.c.h.b16 %v718
    %v1446 = vunpack.c.l.b16 %v719
    %v1447 = vunpack.c.h.b16 %v719
    %v1448 = vunpack.c.l.b16 %v720
    %v1449 = vunpack.c.h.b16 %v720
    %v1450 = vunpack.c.l.b16 %v721
    %v1451 = vunpack.c.h.b16 %v721
    %v1452 = vunpack.c.l.b16 %v722
    %v1453 = vunpack.c.h.b16 %v722
    %v1454 = vunpack.c.l.b16 %v723
    %v1455 = vunpack.c.h.b16 %v723
    %v1456 = vunpack.c.l.b16 %v724
    %v1457 = vunpack.c.h.b16 %v724
    %v1458 = vunpack.c.l.b16 %v725
    %v1459 = vunpack.c.h.b16 %v725
    %v1460 = vunpack.c.l.b16 %v726
    %v1461 = vunpack.c.h.b16 %v726
    %v1462 = vunpack.c.l.b16 %v727
    %v1463 = vunpack.c.h.b16 %v727
    %v1464 = vunpack.c.l.b16 %v728
    %v1465 = vunpack.c.h.b16 %v728
    %v1466 = vunpack.c.l.b16 %v729
    %v1467 = vunpack.c.h.b16 %v729
    %v1468 = vunpack.c.l.b16 %v730
    %v1469 = vunpack.c.h.b16 %v730
    %v1470 = vunpack.c.l.b16 %v731
    %v1471 = vunpack.c.h.b16 %v731
    %v1472 = vunpack.c.l.b16 %v732
    %v1473 = vunpack.c.h.b16 %v732
    %v1474 = vunpack.c.l.b16 %v733
    %v1475 = vunpack.c.h.b16 %v733
    %v1476 = vunpack.c.l.b16 %v734
    %v1477 = vunpack.c.h.b16 %v734
    %v1478 = vunpack.c.l.b16 %v735
    %v1479 = vunpack.c.h.b16 %v735
    %v1480 = vunpack.c.l.b16 %v736
    %v1481 = vunpack.c.h.b16 %v736
    %v1482 = vunpack.c.l.b16 %v737
    %v1483 = vunpack.c.h.b16 %v737
    %v1484 = vunpack.c.l.b16 %v738
    %v1485 = vunpack.c.h.b16 %v738
    %v1486 = vunpack.c.l.b16 %v739
    %v1487 = vunpack.c.h.b16 %v739
    %v1488 = vunpack.c.l.b16 %v740
    %v1489 = vunpack.c.h.b16 %v740
    %v1490 = vunpack.c.l.b16 %v741
    %v1491 = vunpack.c.h.b16 %v741
    %v1492 = vunpack.c.l.b16 %v742
    %v1493 = vunpack.c.h.b16 %v742
    %v1494 = vunpack.c.l.b16 %v743
    %v1495 = vunpack.c.h.b16 %v743
    %v1496 = vunpack.c.l.b16 %v744
    %v1497 = vunpack.c.h.b16 %v744
    %v1498 = vunpack.c.l.b16 %v745
    %v1499 = vunpack.c.h.b16 %v745
    %v1500 = vunpack.c.l.b16 %v746
    %v1501 = vunpack.c.h.b16 %v746
    %v1502 = vunpack.c.l.b16 %v747
    %v1503 = vunpack.c.h.b16 %v747
    %v1504 = vunpack.c.l.b16 %v748
    %v1505 = vunpack.c.h.b16 %v748
    %v1506 = vunpack.c.l.b16 %v749
    %v1507 = vunpack.c.h.b16 %v749
    %v1508 = vunpack.c.l.b16 %v750
    %v1509 = vunpack.c.h.b16 %v750
    %v1510 = vunpack.c.l.b16 %v751
    %v1511 = vunpack.c.h.b16 %v751
    %v1512 = vunpack.c.l.b16 %v752
    %v1513 = vunpack.c.h.b16 %v752
    %v1514 = vunpack.c.l.b16 %v753
    %v1515 = vunpack.c.h.b16 %v753
    %v1516 = vunpack.c.l.b16 %v754
    %v1517 = vunpack.c.h.b16 %v754
    %v1518 = vunpack.c.l.b16 %v755
    %v1519 = vunpack.c.h.b16 %v755
    %v1520 = vunpack.c.l.b16 %v756
    %v1521 = vunpack.c.h.b16 %v756
    %v1522 = vunpack.c.l.b16 %v757
    %v1523 = vunpack.c.h.b16 %v757
    %v1524 = vunpack.c.l.b16 %v758
    %v1525 = vunpack.c.h.b16 %v758
    %v1526 = vunpack.c.l.b16 %v759
    %v1527 = vunpack.c.h.b16 %v759
    %v1528 = vunpack.c.l.b16 %v760
    %v1529 = vunpack.c.h.b16 %v760
    %v1530 = vunpack.c.l.b16 %v761
    %v1531 = vunpack.c.h.b16 %v761
    %v1532 = vunpack.c.l.b16 %v762
    %v1533 = vunpack.c.h.b16 %v762
    %v1534 = vunpack.c.l.b16 %v763
    %v1535 = vunpack.c.h.b16 %v763
    %v1536 = vunpack.c.l.b16 %v764
    %v1537 = vunpack.c.h.b16 %v764
    %v1538 = vunpack.c.l.b16 %v765
    %v1539 = vunpack.c.h.b16 %v765
    %v1540 = vunpack.c.l.b16 %v766
    %v1541 = vunpack.c.h.b16 %v766
    %v1542 = vunpack.c.l.b16 %v767
    %v1543 = vunpack.c.h.b16 %v767
    %v1544 = vunpack.c.l.b16 %v768
    %v1545 = vunpack.c.h.b16 %v768
    %v1546 = vunpack.c.l.b16 %v769
    %v1547 = vunpack.c.h.b16 %v769
    %v1548 = vpack.c.b16 %v1040, %v1036
    %v1549 = vpack.c.b16 %v1041, %v1037
    %v1550 = vpack.c.b16 %v1042, %v1038
    %v1551 = vpack.c.b16 %v1043, %v1039
    %v1552 = vpack.c.b16 %v1048, %v1044
    %v1553 = vpack.c.b16 %v1049, %v1045
    %v1554 = vpack.c.b16 %v1050, %v1046
    %v1555 = vpack.c.b16 %v1051, %v1047
    %v1556 = vpack.c.b16 %v1056, %v1052
    %v1557 = vpack.c.b16 %v1057, %v1053
    %v1558 = vpack.c.b16 %v1058, %v1054
    %v1559 = vpack.c.b16 %v1059, %v1055
    %v1560 = vpack.c.b16 %v1064, %v1060
    %v1561 = vpack.c.b16 %v1065, %v1061
    %v1562 = vpack.c.b16 %v1066, %v1062
    %v1563 = vpack.c.b16 %v1067, %v1063
    %v1564 = vpack.c.b16 %v1072, %v1068
    %v1565 = vpack.c.b16 %v1073, %v1069
    %v1566 = vpack.c.b16 %v1074, %v1070
    %v1567 = vpack.c.b16 %v1075, %v1071
    %v1568 = vpack.c.b16 %v1080, %v1076
    %v1569 = vpack.c.b16 %v1081, %v1077
    %v1570 = vpack.c.b16 %v1082, %v1078
    %v1571 = vpack.c.b16 %v1083, %v1079
    %v1572 = vpack.c.b16 %v1088, %v1084
    %v1573 = vpack.c.b16 %v1089, %v1085
    %v1574 = vpack.c.b16 %v1090, %v1086
    %v1575 = vpack.c.b16 %v1091, %v1087
    %v1576 = vpack.c.b16 %v1096, %v1092
    %v1577 = vpack.c.b16 %v1097, %v1093
    %v1578 = vpack.c.b16 %v1098, %v1094
    %v1579 = vpack.c.b16 %v1099, %v1095
    %v1580 = vpack.c.b16 %v1104, %v1100
    %v1581 = vpack.c.b16 %v1105, %v1101
    %v1582 = vpack.c.b16 %v1106, %v1102
    %v1583 = vpack.c.b16 %v1107, %v1103
    %v1584 = vpack.c.b16 %v1112, %v1108
    %v1585 = vpack.c.b16 %v1113, %v1109
    %v1586 = vpack.c.b16 %v1114, %v1110
    %v1587 = vpack.c.b16 %v1115, %v1111
    %v1588 = vpack.c.b16 %v1120, %v1116
    %v1589 = vpack.c.b16 %v1121, %v1117
    %v1590 = vpack.c.b16 %v1122, %v1118
    %v1591 = vpack.c.b16 %v1123, %v1119
    %v1592 = vpack.c.b16 %v1128, %v1124
    %v1593 = vpack.c.b16 %v1129, %v1125
    %v1594 = vpack.c.b16 %v1130, %v1126
    %v1595 = vpack.c.b16 %v1131, %v1127
    %v1596 = vpack.c.b16 %v1136, %v1132
    %v1597 = vpack.c.b16 %v1137, %v1133
    %v1598 = vpack.c.b16 %v1138, %v1134
    %v1599 = vpack.c.b16 %v1139, %v1135
    %v1600 = vpack.c.b16 %v1144, %v1140
    %v1601 = vpack.c.b16 %v1145, %v1141
    %v1602 = vpack.c.b16 %v1146, %v1142
    %v1603 = vpack.c.b16 %v1147, %v1143
    %v1604 = vpack.c.b16 %v1152, %v1148
    %v1605 = vpack.c.b16 %v1153, %v1149
    %v1606 = vpack.c.b16 %v1154, %v1150
    %v1607 = vpack.c.b16 %v1155, %v1151
    %v1608 = vpack.c.b16 %v1160, %v1156
    %v1609 = vpack.c.b16 %v1161, %v1157
    %v1610 = vpack.c.b16 %v1162, %v1158
    %v1611 = vpack.c.b16 %v1163, %v1159
    %v1612 = vpack.c.b16 %v1168, %v1164
    %v1613 = vpack.c.b16 %v1169, %v1165
    %v1614 = vpack.c.b16 %v1170, %v1166
    %v1615 = vpack.c.b16 %v1171, %v1167
    %v1616 = vpack.c.b16 %v1176, %v1172
    %v1617 = vpack.c.b16 %v1177, %v1173
    %v1618 = vpack.c.b16 %v1178, %v1174
    %v1619 = vpack.c.b16 %v1179, %v1175
    %v1620 = vpack.c.b16 %v1184, %v1180
    %v1621 = vpack.c.b16 %v1185, %v1181
    %v1622 = vpack.c.b16 %v1186, %v1182
    %v1623 = vpack.c.b16 %v1187, %v1183
    %v1624 = vpack.c.b16 %v1192, %v1188
    %v1625 = vpack.c.b16 %v1193, %v1189
    %v1626 = vpack.c.b16 %v1194, %v1190
    %v1627 = vpack.c.b16 %v1195, %v1191
    %v1628 = vpack.c.b16 %v1200, %v1196
    %v1629 = vpack.c.b16 %v1201, %v1197
    %v1630 = vpack.c.b16 %v1202, %v1198
    %v1631 = vpack.c.b16 %v1203, %v1199
    %v1632 = vpack.c.b16 %v1208, %v1204
    %v1633 = vpack.c.b16 %v1209, %v1205
    %v1634 = vpack.c.b16 %v1210, %v1206
    %v1635 = vpack.c.b16 %v1211, %v1207
    %v1636 = vpack.c.b16 %v1216, %v1212
    %v1637 = vpack.c.b16 %v1217, %v1213
    %v1638 = vpack.c.b16 %v1218, %v1214
    %v1639 = vpack.c.b16 %v1219, %v1215
    %v1640 = vpack.c.b16 %v1224, %v1220
    %v1641 = vpack.c.b16 %v1225, %v1221
    %v1642 = vpack.c.b16 %v1226, %v1222
    %v1643 = vpack.c.b16 %v1227, %v1223
    %v1644 = vpack.c.b16 %v1232, %v1228
    %v1645 = vpack.c.b16 %v1233, %v1229
    %v1646 = vpack.c.b16 %v1234, %v1230
    %v1647 = vpack.c.b16 %v1235, %v1231
    %v1648 = vpack.c.b16 %v1240, %v1236
    %v1649 = vpack.c.b16 %v1241, %v1237
    %v1650 = vpack.c.b16 %v1242, %v1238
    %v1651 = vpack.c.b16 %v1243, %v1239
    %v1652 = vpack.c.b16 %v1248, %v1244
    %v1653 = vpack.c.b16 %v1249, %v1245
    %v1654 = vpack.c.b16 %v1250, %v1246
    %v1655 = vpack.c.b16 %v1251, %v1247
    %v1656 = vpack.c.b16 %v1256, %v1252
    %v1657 = vpack.c.b16 %v1257, %v1253
    %v1658 = vpack.c.b16 %v1258, %v1254
    %v1659 = vpack.c.b16 %v1259, %v1255
    %v1660 = vpack.c.b16 %v1264, %v1260
    %v1661 = vpack.c.b16 %v1265, %v1261
    %v1662 = vpack.c.b16 %v1266, %v1262
    %v1663 = vpack.c.b16 %v1267, %v1263
    %v1664 = vpack.c.b16 %v1272, %v1268
    %v1665 = vpack.c.b16 %v1273, %v1269
    %v1666 = vpack.c.b16 %v1274, %v1270
    %v1667 = vpack.c.b16 %v1275, %v1271
    %v1668 = vpack.c.b16 %v1280, %v1276
    %v1669 = vpack.c.b16 %v1281, %v1277
    %v1670 = vpack.c.b16 %v1282, %v1278
    %v1671 = vpack.c.b16 %v1283, %v1279
    %v1672 = vpack.c.b16 %v1288, %v1284
    %v1673 = vpack.c.b16 %v1289, %v1285
    %v1674 = vpack.c.b16 %v1290, %v1286
    %v1675 = vpack.c.b16 %v1291, %v1287
    %v1676 = vpack.c.b16 %v1296, %v1292
    %v1677 = vpack.c.b16 %v1297, %v1293
    %v1678 = vpack.c.b16 %v1298, %v1294
    %v1679 = vpack.c.b16 %v1299, %v1295
    %v1680 = vpack.c.b16 %v1304, %v1300
    %v1681 = vpack.c.b16 %v1305, %v1301
    %v1682 = vpack.c.b16 %v1306, %v1302
    %v1683 = vpack.c.b16 %v1307, %v1303
    %v1684 = vpack.c.b16 %v1312, %v1308
    %v1685 = vpack.c.b16 %v1313, %v1309
    %v1686 = vpack.c.b16 %v1314, %v1310
    %v1687 = vpack.c.b16 %v1315, %v1311
    %v1688 = vpack.c.b16 %v1320, %v1316
    %v1689 = vpack.c.b16 %v1321, %v1317
    %v1690 = vpack.c.b16 %v1322, %v1318
    %v1691 = vpack.c.b16 %v1323, %v1319
    %v1692 = vpack.c.b16 %v1328, %v1324
    %v1693 = vpack.c.b16 %v1329, %v1325
    %v1694 = vpack.c.b16 %v1330, %v1326
    %v1695 = vpack.c.b16 %v1331, %v1327
    %v1696 = vpack.c.b16 %v1336, %v1332
    %v1697 = vpack.c.b16 %v1337, %v1333
    %v1698 = vpack.c.b16 %v1338, %v1334
    %v1699 = vpack.c.b16 %v1339, %v1335
    %v1700 = vpack.c.b16 %v1344, %v1340
    %v1701 = vpack.c.b16 %v1345, %v1341
    %v1702 = vpack.c.b16 %v1346, %v1342
    %v1703 = vpack.c.b16 %v1347, %v1343
    %v1704 = vpack.c.b16 %v1352, %v1348
    %v1705 = vpack.c.b16 %v1353, %v1349
    %v1706 = vpack.c.b16 %v1354, %v1350
    %v1707 = vpack.c.b16 %v1355, %v1351
    %v1708 = vpack.c.b16 %v1360, %v1356
    %v1709 = vpack.c.b16 %v1361, %v1357
    %v1710 = vpack.c.b16 %v1362, %v1358
    %v1711 = vpack.c.b16 %v1363, %v1359
    %v1712 = vpack.c.b16 %v1368, %v1364
    %v1713 = vpack.c.b16 %v1369, %v1365
    %v1714 = vpack.c.b16 %v1370, %v1366
    %v1715 = vpack.c.b16 %v1371, %v1367
    %v1716 = vpack.c.b16 %v1376, %v1372
    %v1717 = vpack.c.b16 %v1377, %v1373
    %v1718 = vpack.c.b16 %v1378, %v1374
    %v1719 = vpack.c.b16 %v1379, %v1375
    %v1720 = vpack.c.b16 %v1384, %v1380
    %v1721 = vpack.c.b16 %v1385, %v1381
    %v1722 = vpack.c.b16 %v1386, %v1382
    %v1723 = vpack.c.b16 %v1387, %v1383
    %v1724 = vpack.c.b16 %v1392, %v1388
    %v1725 = vpack.c.b16 %v1393, %v1389
    %v1726 = vpack.c.b16 %v1394, %v1390
    %v1727 = vpack.c.b16 %v1395, %v1391
    %v1728 = vpack.c.b16 %v1400, %v1396
    %v1729 = vpack.c.b16 %v1401, %v1397
    %v1730 = vpack.c.b16 %v1402, %v1398
    %v1731 = vpack.c.b16 %v1403, %v1399
    %v1732 = vpack.c.b16 %v1408, %v1404
    %v1733 = vpack.c.b16 %v1409, %v1405
    %v1734 = vpack.c.b16 %v1410, %v1406
    %v1735 = vpack.c.b16 %v1411, %v1407
    %v1736 = vpack.c.b16 %v1416, %v1412
    %v1737 = vpack.c.b16 %v1417, %v1413
    %v1738 = vpack.c.b16 %v1418, %v1414
    %v1739 = vpack.c.b16 %v1419, %v1415
    %v1740 = vpack.c.b16 %v1424, %v1420
    %v1741 = vpack.c.b16 %v1425, %v1421
    %v1742 = vpack.c.b16 %v1426, %v1422
    %v1743 = vpack.c.b16 %v1427, %v1423
    %v1744 = vpack.c.b16 %v1432, %v1428
    %v1745 = vpack.c.b16 %v1433, %v1429
    %v1746 = vpack.c.b16 %v1434, %v1430
    %v1747 = vpack.c.b16 %v1435, %v1431
    %v1748 = vpack.c.b16 %v1440, %v1436
    %v1749 = vpack.c.b16 %v1441, %v1437
    %v1750 = vpack.c.b16 %v1442, %v1438
    %v1751 = vpack.c.b16 %v1443, %v1439
    %v1752 = vpack.c.b16 %v1448, %v1444
    %v1753 = vpack.c.b16 %v1449, %v1445
    %v1754 = vpack.c.b16 %v1450, %v1446
    %v1755 = vpack.c.b16 %v1451, %v1447
    %v1756 = vpack.c.b16 %v1456, %v1452
    %v1757 = vpack.c.b16 %v1457, %v1453
    %v1758 = vpack.c.b16 %v1458, %v1454
    %v1759 = vpack.c.b16 %v1459, %v1455
    %v1760 = vpack.c.b16 %v1464, %v1460
    %v1761 = vpack.c.b16 %v1465, %v1461
    %v1762 = vpack.c.b16 %v1466, %v1462
    %v1763 = vpack.c.b16 %v1467, %v1463
    %v1764 = vpack.c.b16 %v1472, %v1468
    %v1765 = vpack.c.b16 %v1473, %v1469
    %v1766 = vpack.c.b16 %v1474, %v1470
    %v1767 = vpack.c.b16 %v1475, %v1471
    %v1768 = vpack.c.b16 %v1480, %v1476
    %v1769 = vpack.c.b16 %v1481, %v1477
    %v1770 = vpack.c.b16 %v1482, %v1478
    %v1771 = vpack.c.b16 %v1483, %v1479
    %v1772 = vpack.c.b16 %v1488, %v1484
    %v1773 = vpack.c.b16 %v1489, %v1485
    %v1774 = vpack.c.b16 %v1490, %v1486
    %v1775 = vpack.c.b16 %v1491, %v1487
    %v1776 = vpack.c.b16 %v1496, %v1492
    %v1777 = vpack.c.b16 %v1497, %v1493
    %v1778 = vpack.c.b16 %v1498, %v1494
    %v1779 = vpack.c.b16 %v1499, %v1495
    %v1780 = vpack.c.b16 %v1504, %v1500
    %v1781 = vpack.c.b16 %v1505, %v1501
    %v1782 = vpack.c.b16 %v1506, %v1502
    %v1783 = vpack.c.b16 %v1507, %v1503
    %v1784 = vpack.c.b16 %v1512, %v1508
    %v1785 = vpack.c.b16 %v1513, %v1509
    %v1786 = vpack.c.b16 %v1514, %v1510
    %v1787 = vpack.c.b16 %v1515, %v1511
    %v1788 = vpack.c.b16 %v1520, %v1516
    %v1789 = vpack.c.b16 %v1521, %v1517
    %v1790 = vpack.c.b16 %v1522, %v1518
    %v1791 = vpack.c.b16 %v1523, %v1519
    %v1792 = vpack.c.b16 %v1528, %v1524
    %v1793 = vpack.c.b16 %v1529, %v1525
    %v1794 = vpack.c.b16 %v1530, %v1526
    %v1795 = vpack.c.b16 %v1531, %v1527
    %v1796 = vpack.c.b16 %v1536, %v1532
    %v1797 = vpack.c.b16 %v1537, %v1533
    %v1798 = vpack.c.b16 %v1538, %v1534
    %v1799 = vpack.c.b16 %v1539, %v1535
    %v1800 = vpack.c.b16 %v1544, %v1540
    %v1801 = vpack.c.b16 %v1545, %v1541
    %v1802 = vpack.c.b16 %v1546, %v1542
    %v1803 = vpack.c.b16 %v1547, %v1543
    %2060 = vmatpush.bf16.msra.mxu0 %v1576
    %2061 = vmatpush.bf16.msra.mxu0 %v1572
    %2062 = vmatpush.bf16.msra.mxu0 %v1568
    %2063 = vmatpush.bf16.msra.mxu0 %v1564
    %2064 = vmatpush.bf16.msra.mxu0 %v1560
    %2065 = vmatpush.bf16.msra.mxu0 %v1556
    %2066 = vmatpush.bf16.msra.mxu0 %v1552
    %2067 = vmatpush.bf16.msra.mxu0 %v1548
    %2068 = vmatmul.bf16.gmra.mxu0 %v386
    %v2069 = vpop.f32.mrf.mxu0
    %v2070 = vadd.f32 %v772, %v2069
    %v2071 = vpop.f32.mrf.mxu0
    %v2072 = vadd.f32 %v772, %v2071
    %2073 = vmatmul.bf16.gmra.mxu0 %v394
    %v2074 = vpop.f32.mrf.mxu0
    %v2075 = vadd.f32 %v772, %v2074
    %v2076 = vpop.f32.mrf.mxu0
    %v2077 = vadd.f32 %v772, %v2076
    %2078 = vmatmul.bf16.gmra.mxu0 %v402
    %v2079 = vpop.f32.mrf.mxu0
    %v2080 = vadd.f32 %v772, %v2079
    %v2081 = vpop.f32.mrf.mxu0
    %v2082 = vadd.f32 %v772, %v2081
    %2083 = vmatmul.bf16.gmra.mxu0 %v410
    %v2084 = vpop.f32.mrf.mxu0
    %v2085 = vadd.f32 %v772, %v2084
    %v2086 = vpop.f32.mrf.mxu0
    %v2087 = vadd.f32 %v772, %v2086
    %2088 = vmatmul.bf16.gmra.mxu0 %v418
    %v2089 = vpop.f32.mrf.mxu0
    %v2090 = vadd.f32 %v772, %v2089
    %v2091 = vpop.f32.mrf.mxu0
    %v2092 = vadd.f32 %v772, %v2091
    %2093 = vmatmul.bf16.gmra.mxu0 %v426
    %v2094 = vpop.f32.mrf.mxu0
    %v2095 = vadd.f32 %v772, %v2094
    %v2096 = vpop.f32.mrf.mxu0
    %v2097 = vadd.f32 %v772, %v2096
    %2098 = vmatmul.bf16.gmra.mxu0 %v434
    %v2099 = vpop.f32.mrf.mxu0
    %v2100 = vadd.f32 %v772, %v2099
    %v2101 = vpop.f32.mrf.mxu0
    %v2102 = vadd.f32 %v772, %v2101
    %2103 = vmatmul.bf16.gmra.mxu0 %v442
    %v2104 = vpop.f32.mrf.mxu0
    %v2105 = vadd.f32 %v772, %v2104
    %v2106 = vpop.f32.mrf.mxu0
    %v2107 = vadd.f32 %v772, %v2106
    %2108 = vmatmul.bf16.gmra.mxu0 %v450
    %v2109 = vpop.f32.mrf.mxu0
    %v2110 = vadd.f32 %v772, %v2109
    %v2111 = vpop.f32.mrf.mxu0
    %v2112 = vadd.f32 %v772, %v2111
    %2113 = vmatmul.bf16.gmra.mxu0 %v458
    %v2114 = vpop.f32.mrf.mxu0
    %v2115 = vadd.f32 %v772, %v2114
    %v2116 = vpop.f32.mrf.mxu0
    %v2117 = vadd.f32 %v772, %v2116
    %2118 = vmatmul.bf16.gmra.mxu0 %v466
    %v2119 = vpop.f32.mrf.mxu0
    %v2120 = vadd.f32 %v772, %v2119
    %v2121 = vpop.f32.mrf.mxu0
    %v2122 = vadd.f32 %v772, %v2121
    %2123 = vmatmul.bf16.gmra.mxu0 %v474
    %v2124 = vpop.f32.mrf.mxu0
    %v2125 = vadd.f32 %v772, %v2124
    %v2126 = vpop.f32.mrf.mxu0
    %v2127 = vadd.f32 %v772, %v2126
    %2128 = vmatmul.bf16.gmra.mxu0 %v482
    %v2129 = vpop.f32.mrf.mxu0
    %v2130 = vadd.f32 %v772, %v2129
    %v2131 = vpop.f32.mrf.mxu0
    %v2132 = vadd.f32 %v772, %v2131
    %2133 = vmatmul.bf16.gmra.mxu0 %v490
    %v2134 = vpop.f32.mrf.mxu0
    %v2135 = vadd.f32 %v772, %v2134
    %v2136 = vpop.f32.mrf.mxu0
    %v2137 = vadd.f32 %v772, %v2136
    %2138 = vmatmul.bf16.gmra.mxu0 %v498
    %v2139 = vpop.f32.mrf.mxu0
    %v2140 = vadd.f32 %v772, %v2139
    %v2141 = vpop.f32.mrf.mxu0
    %v2142 = vadd.f32 %v772, %v2141
    %2143 = vmatmul.bf16.gmra.mxu0 %v506
    %v2144 = vpop.f32.mrf.mxu0
    %v2145 = vadd.f32 %v772, %v2144
    %v2146 = vpop.f32.mrf.mxu0
    %v2147 = vadd.f32 %v772, %v2146
    %2148 = vdwg.mxu0
    %2149 = vmatpush.bf16.msra.mxu0 %v1608
    %2150 = vmatpush.bf16.msra.mxu0 %v1604
    %2151 = vmatpush.bf16.msra.mxu0 %v1600
    %2152 = vmatpush.bf16.msra.mxu0 %v1596
    %2153 = vmatpush.bf16.msra.mxu0 %v1592
    %2154 = vmatpush.bf16.msra.mxu0 %v1588
    %2155 = vmatpush.bf16.msra.mxu0 %v1584
    %2156 = vmatpush.bf16.msra.mxu0 %v1580
    %2157 = vmatmul.bf16.gmra.mxu0 %v387
    %v2158 = vpop.f32.mrf.mxu0
    %v2159 = vadd.f32 %v2070, %v2158
    %v2160 = vpop.f32.mrf.mxu0
    %v2161 = vadd.f32 %v2072, %v2160
    %2162 = vmatmul.bf16.gmra.mxu0 %v395
    %v2163 = vpop.f32.mrf.mxu0
    %v2164 = vadd.f32 %v2075, %v2163
    %v2165 = vpop.f32.mrf.mxu0
    %v2166 = vadd.f32 %v2077, %v2165
    %2167 = vmatmul.bf16.gmra.mxu0 %v403
    %v2168 = vpop.f32.mrf.mxu0
    %v2169 = vadd.f32 %v2080, %v2168
    %v2170 = vpop.f32.mrf.mxu0
    %v2171 = vadd.f32 %v2082, %v2170
    %2172 = vmatmul.bf16.gmra.mxu0 %v411
    %v2173 = vpop.f32.mrf.mxu0
    %v2174 = vadd.f32 %v2085, %v2173
    %v2175 = vpop.f32.mrf.mxu0
    %v2176 = vadd.f32 %v2087, %v2175
    %2177 = vmatmul.bf16.gmra.mxu0 %v419
    %v2178 = vpop.f32.mrf.mxu0
    %v2179 = vadd.f32 %v2090, %v2178
    %v2180 = vpop.f32.mrf.mxu0
    %v2181 = vadd.f32 %v2092, %v2180
    %2182 = vmatmul.bf16.gmra.mxu0 %v427
    %v2183 = vpop.f32.mrf.mxu0
    %v2184 = vadd.f32 %v2095, %v2183
    %v2185 = vpop.f32.mrf.mxu0
    %v2186 = vadd.f32 %v2097, %v2185
    %2187 = vmatmul.bf16.gmra.mxu0 %v435
    %v2188 = vpop.f32.mrf.mxu0
    %v2189 = vadd.f32 %v2100, %v2188
    %v2190 = vpop.f32.mrf.mxu0
    %v2191 = vadd.f32 %v2102, %v2190
    %2192 = vmatmul.bf16.gmra.mxu0 %v443
    %v2193 = vpop.f32.mrf.mxu0
    %v2194 = vadd.f32 %v2105, %v2193
    %v2195 = vpop.f32.mrf.mxu0
    %v2196 = vadd.f32 %v2107, %v2195
    %2197 = vmatmul.bf16.gmra.mxu0 %v451
    %v2198 = vpop.f32.mrf.mxu0
    %v2199 = vadd.f32 %v2110, %v2198
    %v2200 = vpop.f32.mrf.mxu0
    %v2201 = vadd.f32 %v2112, %v2200
    %2202 = vmatmul.bf16.gmra.mxu0 %v459
    %v2203 = vpop.f32.mrf.mxu0
    %v2204 = vadd.f32 %v2115, %v2203
    %v2205 = vpop.f32.mrf.mxu0
    %v2206 = vadd.f32 %v2117, %v2205
    %2207 = vmatmul.bf16.gmra.mxu0 %v467
    %v2208 = vpop.f32.mrf.mxu0
    %v2209 = vadd.f32 %v2120, %v2208
    %v2210 = vpop.f32.mrf.mxu0
    %v2211 = vadd.f32 %v2122, %v2210
    %2212 = vmatmul.bf16.gmra.mxu0 %v475
    %v2213 = vpop.f32.mrf.mxu0
    %v2214 = vadd.f32 %v2125, %v2213
    %v2215 = vpop.f32.mrf.mxu0
    %v2216 = vadd.f32 %v2127, %v2215
    %2217 = vmatmul.bf16.gmra.mxu0 %v483
    %v2218 = vpop.f32.mrf.mxu0
    %v2219 = vadd.f32 %v2130, %v2218
    %v2220 = vpop.f32.mrf.mxu0
    %v2221 = vadd.f32 %v2132, %v2220
    %2222 = vmatmul.bf16.gmra.mxu0 %v491
    %v2223 = vpop.f32.mrf.mxu0
    %v2224 = vadd.f32 %v2135, %v2223
    %v2225 = vpop.f32.mrf.mxu0
    %v2226 = vadd.f32 %v2137, %v2225
    %2227 = vmatmul.bf16.gmra.mxu0 %v499
    %v2228 = vpop.f32.mrf.mxu0
    %v2229 = vadd.f32 %v2140, %v2228
    %v2230 = vpop.f32.mrf.mxu0
    %v2231 = vadd.f32 %v2142, %v2230
    %2232 = vmatmul.bf16.gmra.mxu0 %v507
    %v2233 = vpop.f32.mrf.mxu0
    %v2234 = vadd.f32 %v2145, %v2233
    %v2235 = vpop.f32.mrf.mxu0
    %v2236 = vadd.f32 %v2147, %v2235
    %2237 = vdwg.mxu0
    %2238 = vmatpush.bf16.msra.mxu0 %v1640
    %2239 = vmatpush.bf16.msra.mxu0 %v1636
    %2240 = vmatpush.bf16.msra.mxu0 %v1632
    %2241 = vmatpush.bf16.msra.mxu0 %v1628
    %2242 = vmatpush.bf16.msra.mxu0 %v1624
    %2243 = vmatpush.bf16.msra.mxu0 %v1620
    %2244 = vmatpush.bf16.msra.mxu0 %v1616
    %2245 = vmatpush.bf16.msra.mxu0 %v1612
    %2246 = vmatmul.bf16.gmra.mxu0 %v388
    %v2247 = vpop.f32.mrf.mxu0
    %v2248 = vadd.f32 %v2159, %v2247
    %v2249 = vpop.f32.mrf.mxu0
    %v2250 = vadd.f32 %v2161, %v2249
    %2251 = vmatmul.bf16.gmra.mxu0 %v396
    %v2252 = vpop.f32.mrf.mxu0
    %v2253 = vadd.f32 %v2164, %v2252
    %v2254 = vpop.f32.mrf.mxu0
    %v2255 = vadd.f32 %v2166, %v2254
    %2256 = vmatmul.bf16.gmra.mxu0 %v404
    %v2257 = vpop.f32.mrf.mxu0
    %v2258 = vadd.f32 %v2169, %v2257
    %v2259 = vpop.f32.mrf.mxu0
    %v2260 = vadd.f32 %v2171, %v2259
    %2261 = vmatmul.bf16.gmra.mxu0 %v412
    %v2262 = vpop.f32.mrf.mxu0
    %v2263 = vadd.f32 %v2174, %v2262
    %v2264 = vpop.f32.mrf.mxu0
    %v2265 = vadd.f32 %v2176, %v2264
    %2266 = vmatmul.bf16.gmra.mxu0 %v420
    %v2267 = vpop.f32.mrf.mxu0
    %v2268 = vadd.f32 %v2179, %v2267
    %v2269 = vpop.f32.mrf.mxu0
    %v2270 = vadd.f32 %v2181, %v2269
    %2271 = vmatmul.bf16.gmra.mxu0 %v428
    %v2272 = vpop.f32.mrf.mxu0
    %v2273 = vadd.f32 %v2184, %v2272
    %v2274 = vpop.f32.mrf.mxu0
    %v2275 = vadd.f32 %v2186, %v2274
    %2276 = vmatmul.bf16.gmra.mxu0 %v436
    %v2277 = vpop.f32.mrf.mxu0
    %v2278 = vadd.f32 %v2189, %v2277
    %v2279 = vpop.f32.mrf.mxu0
    %v2280 = vadd.f32 %v2191, %v2279
    %2281 = vmatmul.bf16.gmra.mxu0 %v444
    %v2282 = vpop.f32.mrf.mxu0
    %v2283 = vadd.f32 %v2194, %v2282
    %v2284 = vpop.f32.mrf.mxu0
    %v2285 = vadd.f32 %v2196, %v2284
    %2286 = vmatmul.bf16.gmra.mxu0 %v452
    %v2287 = vpop.f32.mrf.mxu0
    %v2288 = vadd.f32 %v2199, %v2287
    %v2289 = vpop.f32.mrf.mxu0
    %v2290 = vadd.f32 %v2201, %v2289
    %2291 = vmatmul.bf16.gmra.mxu0 %v460
    %v2292 = vpop.f32.mrf.mxu0
    %v2293 = vadd.f32 %v2204, %v2292
    %v2294 = vpop.f32.mrf.mxu0
    %v2295 = vadd.f32 %v2206, %v2294
    %2296 = vmatmul.bf16.gmra.mxu0 %v468
    %v2297 = vpop.f32.mrf.mxu0
    %v2298 = vadd.f32 %v2209, %v2297
    %v2299 = vpop.f32.mrf.mxu0
    %v2300 = vadd.f32 %v2211, %v2299
    %2301 = vmatmul.bf16.gmra.mxu0 %v476
    %v2302 = vpop.f32.mrf.mxu0
    %v2303 = vadd.f32 %v2214, %v2302
    %v2304 = vpop.f32.mrf.mxu0
    %v2305 = vadd.f32 %v2216, %v2304
    %2306 = vmatmul.bf16.gmra.mxu0 %v484
    %v2307 = vpop.f32.mrf.mxu0
    %v2308 = vadd.f32 %v2219, %v2307
    %v2309 = vpop.f32.mrf.mxu0
    %v2310 = vadd.f32 %v2221, %v2309
    %2311 = vmatmul.bf16.gmra.mxu0 %v492
    %v2312 = vpop.f32.mrf.mxu0
    %v2313 = vadd.f32 %v2224, %v2312
    %v2314 = vpop.f32.mrf.mxu0
    %v2315 = vadd.f32 %v2226, %v2314
    %2316 = vmatmul.bf16.gmra.mxu0 %v500
    %v2317 = vpop.f32.mrf.mxu0
    %v2318 = vadd.f32 %v2229, %v2317
    %v2319 = vpop.f32.mrf.mxu0
    %v2320 = vadd.f32 %v2231, %v2319
    %2321 = vmatmul.bf16.gmra.mxu0 %v508
    %v2322 = vpop.f32.mrf.mxu0
    %v2323 = vadd.f32 %v2234, %v2322
    %v2324 = vpop.f32.mrf.mxu0
    %v2325 = vadd.f32 %v2236, %v2324
    %2326 = vdwg.mxu0
    %2327 = vmatpush.bf16.msra.mxu0 %v1672
    %2328 = vmatpush.bf16.msra.mxu0 %v1668
    %2329 = vmatpush.bf16.msra.mxu0 %v1664
    %2330 = vmatpush.bf16.msra.mxu0 %v1660
    %2331 = vmatpush.bf16.msra.mxu0 %v1656
    %2332 = vmatpush.bf16.msra.mxu0 %v1652
    %2333 = vmatpush.bf16.msra.mxu0 %v1648
    %2334 = vmatpush.bf16.msra.mxu0 %v1644
    %2335 = vmatmul.bf16.gmra.mxu0 %v389
    %v2336 = vpop.f32.mrf.mxu0
    %v2337 = vadd.f32 %v2248, %v2336
    %v2338 = vpop.f32.mrf.mxu0
    %v2339 = vadd.f32 %v2250, %v2338
    %2340 = vmatmul.bf16.gmra.mxu0 %v397
    %v2341 = vpop.f32.mrf.mxu0
    %v2342 = vadd.f32 %v2253, %v2341
    %v2343 = vpop.f32.mrf.mxu0
    %v2344 = vadd.f32 %v2255, %v2343
    %2345 = vmatmul.bf16.gmra.mxu0 %v405
    %v2346 = vpop.f32.mrf.mxu0
    %v2347 = vadd.f32 %v2258, %v2346
    %v2348 = vpop.f32.mrf.mxu0
    %v2349 = vadd.f32 %v2260, %v2348
    %2350 = vmatmul.bf16.gmra.mxu0 %v413
    %v2351 = vpop.f32.mrf.mxu0
    %v2352 = vadd.f32 %v2263, %v2351
    %v2353 = vpop.f32.mrf.mxu0
    %v2354 = vadd.f32 %v2265, %v2353
    %2355 = vmatmul.bf16.gmra.mxu0 %v421
    %v2356 = vpop.f32.mrf.mxu0
    %v2357 = vadd.f32 %v2268, %v2356
    %v2358 = vpop.f32.mrf.mxu0
    %v2359 = vadd.f32 %v2270, %v2358
    %2360 = vmatmul.bf16.gmra.mxu0 %v429
    %v2361 = vpop.f32.mrf.mxu0
    %v2362 = vadd.f32 %v2273, %v2361
    %v2363 = vpop.f32.mrf.mxu0
    %v2364 = vadd.f32 %v2275, %v2363
    %2365 = vmatmul.bf16.gmra.mxu0 %v437
    %v2366 = vpop.f32.mrf.mxu0
    %v2367 = vadd.f32 %v2278, %v2366
    %v2368 = vpop.f32.mrf.mxu0
    %v2369 = vadd.f32 %v2280, %v2368
    %2370 = vmatmul.bf16.gmra.mxu0 %v445
    %v2371 = vpop.f32.mrf.mxu0
    %v2372 = vadd.f32 %v2283, %v2371
    %v2373 = vpop.f32.mrf.mxu0
    %v2374 = vadd.f32 %v2285, %v2373
    %2375 = vmatmul.bf16.gmra.mxu0 %v453
    %v2376 = vpop.f32.mrf.mxu0
    %v2377 = vadd.f32 %v2288, %v2376
    %v2378 = vpop.f32.mrf.mxu0
    %v2379 = vadd.f32 %v2290, %v2378
    %2380 = vmatmul.bf16.gmra.mxu0 %v461
    %v2381 = vpop.f32.mrf.mxu0
    %v2382 = vadd.f32 %v2293, %v2381
    %v2383 = vpop.f32.mrf.mxu0
    %v2384 = vadd.f32 %v2295, %v2383
    %2385 = vmatmul.bf16.gmra.mxu0 %v469
    %v2386 = vpop.f32.mrf.mxu0
    %v2387 = vadd.f32 %v2298, %v2386
    %v2388 = vpop.f32.mrf.mxu0
    %v2389 = vadd.f32 %v2300, %v2388
    %2390 = vmatmul.bf16.gmra.mxu0 %v477
    %v2391 = vpop.f32.mrf.mxu0
    %v2392 = vadd.f32 %v2303, %v2391
    %v2393 = vpop.f32.mrf.mxu0
    %v2394 = vadd.f32 %v2305, %v2393
    %2395 = vmatmul.bf16.gmra.mxu0 %v485
    %v2396 = vpop.f32.mrf.mxu0
    %v2397 = vadd.f32 %v2308, %v2396
    %v2398 = vpop.f32.mrf.mxu0
    %v2399 = vadd.f32 %v2310, %v2398
    %2400 = vmatmul.bf16.gmra.mxu0 %v493
    %v2401 = vpop.f32.mrf.mxu0
    %v2402 = vadd.f32 %v2313, %v2401
    %v2403 = vpop.f32.mrf.mxu0
    %v2404 = vadd.f32 %v2315, %v2403
    %2405 = vmatmul.bf16.gmra.mxu0 %v501
    %v2406 = vpop.f32.mrf.mxu0
    %v2407 = vadd.f32 %v2318, %v2406
    %v2408 = vpop.f32.mrf.mxu0
    %v2409 = vadd.f32 %v2320, %v2408
    %2410 = vmatmul.bf16.gmra.mxu0 %v509
    %v2411 = vpop.f32.mrf.mxu0
    %v2412 = vadd.f32 %v2323, %v2411
    %v2413 = vpop.f32.mrf.mxu0
    %v2414 = vadd.f32 %v2325, %v2413
    %2415 = vdwg.mxu0
    %2416 = vmatpush.bf16.msra.mxu0 %v1704
    %2417 = vmatpush.bf16.msra.mxu0 %v1700
    %2418 = vmatpush.bf16.msra.mxu0 %v1696
    %2419 = vmatpush.bf16.msra.mxu0 %v1692
    %2420 = vmatpush.bf16.msra.mxu0 %v1688
    %2421 = vmatpush.bf16.msra.mxu0 %v1684
    %2422 = vmatpush.bf16.msra.mxu0 %v1680
    %2423 = vmatpush.bf16.msra.mxu0 %v1676
    %2424 = vmatmul.bf16.gmra.mxu0 %v390
    %v2425 = vpop.f32.mrf.mxu0
    %v2426 = vadd.f32 %v2337, %v2425
    %v2427 = vpop.f32.mrf.mxu0
    %v2428 = vadd.f32 %v2339, %v2427
    %2429 = vmatmul.bf16.gmra.mxu0 %v398
    %v2430 = vpop.f32.mrf.mxu0
    %v2431 = vadd.f32 %v2342, %v2430
    %v2432 = vpop.f32.mrf.mxu0
    %v2433 = vadd.f32 %v2344, %v2432
    %2434 = vmatmul.bf16.gmra.mxu0 %v406
    %v2435 = vpop.f32.mrf.mxu0
    %v2436 = vadd.f32 %v2347, %v2435
    %v2437 = vpop.f32.mrf.mxu0
    %v2438 = vadd.f32 %v2349, %v2437
    %2439 = vmatmul.bf16.gmra.mxu0 %v414
    %v2440 = vpop.f32.mrf.mxu0
    %v2441 = vadd.f32 %v2352, %v2440
    %v2442 = vpop.f32.mrf.mxu0
    %v2443 = vadd.f32 %v2354, %v2442
    %2444 = vmatmul.bf16.gmra.mxu0 %v422
    %v2445 = vpop.f32.mrf.mxu0
    %v2446 = vadd.f32 %v2357, %v2445
    %v2447 = vpop.f32.mrf.mxu0
    %v2448 = vadd.f32 %v2359, %v2447
    %2449 = vmatmul.bf16.gmra.mxu0 %v430
    %v2450 = vpop.f32.mrf.mxu0
    %v2451 = vadd.f32 %v2362, %v2450
    %v2452 = vpop.f32.mrf.mxu0
    %v2453 = vadd.f32 %v2364, %v2452
    %2454 = vmatmul.bf16.gmra.mxu0 %v438
    %v2455 = vpop.f32.mrf.mxu0
    %v2456 = vadd.f32 %v2367, %v2455
    %v2457 = vpop.f32.mrf.mxu0
    %v2458 = vadd.f32 %v2369, %v2457
    %2459 = vmatmul.bf16.gmra.mxu0 %v446
    %v2460 = vpop.f32.mrf.mxu0
    %v2461 = vadd.f32 %v2372, %v2460
    %v2462 = vpop.f32.mrf.mxu0
    %v2463 = vadd.f32 %v2374, %v2462
    %2464 = vmatmul.bf16.gmra.mxu0 %v454
    %v2465 = vpop.f32.mrf.mxu0
    %v2466 = vadd.f32 %v2377, %v2465
    %v2467 = vpop.f32.mrf.mxu0
    %v2468 = vadd.f32 %v2379, %v2467
    %2469 = vmatmul.bf16.gmra.mxu0 %v462
    %v2470 = vpop.f32.mrf.mxu0
    %v2471 = vadd.f32 %v2382, %v2470
    %v2472 = vpop.f32.mrf.mxu0
    %v2473 = vadd.f32 %v2384, %v2472
    %2474 = vmatmul.bf16.gmra.mxu0 %v470
    %v2475 = vpop.f32.mrf.mxu0
    %v2476 = vadd.f32 %v2387, %v2475
    %v2477 = vpop.f32.mrf.mxu0
    %v2478 = vadd.f32 %v2389, %v2477
    %2479 = vmatmul.bf16.gmra.mxu0 %v478
    %v2480 = vpop.f32.mrf.mxu0
    %v2481 = vadd.f32 %v2392, %v2480
    %v2482 = vpop.f32.mrf.mxu0
    %v2483 = vadd.f32 %v2394, %v2482
    %2484 = vmatmul.bf16.gmra.mxu0 %v486
    %v2485 = vpop.f32.mrf.mxu0
    %v2486 = vadd.f32 %v2397, %v2485
    %v2487 = vpop.f32.mrf.mxu0
    %v2488 = vadd.f32 %v2399, %v2487
    %2489 = vmatmul.bf16.gmra.mxu0 %v494
    %v2490 = vpop.f32.mrf.mxu0
    %v2491 = vadd.f32 %v2402, %v2490
    %v2492 = vpop.f32.mrf.mxu0
    %v2493 = vadd.f32 %v2404, %v2492
    %2494 = vmatmul.bf16.gmra.mxu0 %v502
    %v2495 = vpop.f32.mrf.mxu0
    %v2496 = vadd.f32 %v2407, %v2495
    %v2497 = vpop.f32.mrf.mxu0
    %v2498 = vadd.f32 %v2409, %v2497
    %2499 = vmatmul.bf16.gmra.mxu0 %v510
    %v2500 = vpop.f32.mrf.mxu0
    %v2501 = vadd.f32 %v2412, %v2500
    %v2502 = vpop.f32.mrf.mxu0
    %v2503 = vadd.f32 %v2414, %v2502
    %2504 = vdwg.mxu0
    %2505 = vmatpush.bf16.msra.mxu0 %v1736
    %2506 = vmatpush.bf16.msra.mxu0 %v1732
    %2507 = vmatpush.bf16.msra.mxu0 %v1728
    %2508 = vmatpush.bf16.msra.mxu0 %v1724
    %2509 = vmatpush.bf16.msra.mxu0 %v1720
    %2510 = vmatpush.bf16.msra.mxu0 %v1716
    %2511 = vmatpush.bf16.msra.mxu0 %v1712
    %2512 = vmatpush.bf16.msra.mxu0 %v1708
    %2513 = vmatmul.bf16.gmra.mxu0 %v391
    %v2514 = vpop.f32.mrf.mxu0
    %v2515 = vadd.f32 %v2426, %v2514
    %v2516 = vpop.f32.mrf.mxu0
    %v2517 = vadd.f32 %v2428, %v2516
    %2518 = vmatmul.bf16.gmra.mxu0 %v399
    %v2519 = vpop.f32.mrf.mxu0
    %v2520 = vadd.f32 %v2431, %v2519
    %v2521 = vpop.f32.mrf.mxu0
    %v2522 = vadd.f32 %v2433, %v2521
    %2523 = vmatmul.bf16.gmra.mxu0 %v407
    %v2524 = vpop.f32.mrf.mxu0
    %v2525 = vadd.f32 %v2436, %v2524
    %v2526 = vpop.f32.mrf.mxu0
    %v2527 = vadd.f32 %v2438, %v2526
    %2528 = vmatmul.bf16.gmra.mxu0 %v415
    %v2529 = vpop.f32.mrf.mxu0
    %v2530 = vadd.f32 %v2441, %v2529
    %v2531 = vpop.f32.mrf.mxu0
    %v2532 = vadd.f32 %v2443, %v2531
    %2533 = vmatmul.bf16.gmra.mxu0 %v423
    %v2534 = vpop.f32.mrf.mxu0
    %v2535 = vadd.f32 %v2446, %v2534
    %v2536 = vpop.f32.mrf.mxu0
    %v2537 = vadd.f32 %v2448, %v2536
    %2538 = vmatmul.bf16.gmra.mxu0 %v431
    %v2539 = vpop.f32.mrf.mxu0
    %v2540 = vadd.f32 %v2451, %v2539
    %v2541 = vpop.f32.mrf.mxu0
    %v2542 = vadd.f32 %v2453, %v2541
    %2543 = vmatmul.bf16.gmra.mxu0 %v439
    %v2544 = vpop.f32.mrf.mxu0
    %v2545 = vadd.f32 %v2456, %v2544
    %v2546 = vpop.f32.mrf.mxu0
    %v2547 = vadd.f32 %v2458, %v2546
    %2548 = vmatmul.bf16.gmra.mxu0 %v447
    %v2549 = vpop.f32.mrf.mxu0
    %v2550 = vadd.f32 %v2461, %v2549
    %v2551 = vpop.f32.mrf.mxu0
    %v2552 = vadd.f32 %v2463, %v2551
    %2553 = vmatmul.bf16.gmra.mxu0 %v455
    %v2554 = vpop.f32.mrf.mxu0
    %v2555 = vadd.f32 %v2466, %v2554
    %v2556 = vpop.f32.mrf.mxu0
    %v2557 = vadd.f32 %v2468, %v2556
    %2558 = vmatmul.bf16.gmra.mxu0 %v463
    %v2559 = vpop.f32.mrf.mxu0
    %v2560 = vadd.f32 %v2471, %v2559
    %v2561 = vpop.f32.mrf.mxu0
    %v2562 = vadd.f32 %v2473, %v2561
    %2563 = vmatmul.bf16.gmra.mxu0 %v471
    %v2564 = vpop.f32.mrf.mxu0
    %v2565 = vadd.f32 %v2476, %v2564
    %v2566 = vpop.f32.mrf.mxu0
    %v2567 = vadd.f32 %v2478, %v2566
    %2568 = vmatmul.bf16.gmra.mxu0 %v479
    %v2569 = vpop.f32.mrf.mxu0
    %v2570 = vadd.f32 %v2481, %v2569
    %v2571 = vpop.f32.mrf.mxu0
    %v2572 = vadd.f32 %v2483, %v2571
    %2573 = vmatmul.bf16.gmra.mxu0 %v487
    %v2574 = vpop.f32.mrf.mxu0
    %v2575 = vadd.f32 %v2486, %v2574
    %v2576 = vpop.f32.mrf.mxu0
    %v2577 = vadd.f32 %v2488, %v2576
    %2578 = vmatmul.bf16.gmra.mxu0 %v495
    %v2579 = vpop.f32.mrf.mxu0
    %v2580 = vadd.f32 %v2491, %v2579
    %v2581 = vpop.f32.mrf.mxu0
    %v2582 = vadd.f32 %v2493, %v2581
    %2583 = vmatmul.bf16.gmra.mxu0 %v503
    %v2584 = vpop.f32.mrf.mxu0
    %v2585 = vadd.f32 %v2496, %v2584
    %v2586 = vpop.f32.mrf.mxu0
    %v2587 = vadd.f32 %v2498, %v2586
    %2588 = vmatmul.bf16.gmra.mxu0 %v511
    %v2589 = vpop.f32.mrf.mxu0
    %v2590 = vadd.f32 %v2501, %v2589
    %v2591 = vpop.f32.mrf.mxu0
    %v2592 = vadd.f32 %v2503, %v2591
    %2593 = vdwg.mxu0
    %2594 = vmatpush.bf16.msra.mxu0 %v1768
    %2595 = vmatpush.bf16.msra.mxu0 %v1764
    %2596 = vmatpush.bf16.msra.mxu0 %v1760
    %2597 = vmatpush.bf16.msra.mxu0 %v1756
    %2598 = vmatpush.bf16.msra.mxu0 %v1752
    %2599 = vmatpush.bf16.msra.mxu0 %v1748
    %2600 = vmatpush.bf16.msra.mxu0 %v1744
    %2601 = vmatpush.bf16.msra.mxu0 %v1740
    %2602 = vmatmul.bf16.gmra.mxu0 %v392
    %v2603 = vpop.f32.mrf.mxu0
    %v2604 = vadd.f32 %v2515, %v2603
    %v2605 = vpop.f32.mrf.mxu0
    %v2606 = vadd.f32 %v2517, %v2605
    %2607 = vmatmul.bf16.gmra.mxu0 %v400
    %v2608 = vpop.f32.mrf.mxu0
    %v2609 = vadd.f32 %v2520, %v2608
    %v2610 = vpop.f32.mrf.mxu0
    %v2611 = vadd.f32 %v2522, %v2610
    %2612 = vmatmul.bf16.gmra.mxu0 %v408
    %v2613 = vpop.f32.mrf.mxu0
    %v2614 = vadd.f32 %v2525, %v2613
    %v2615 = vpop.f32.mrf.mxu0
    %v2616 = vadd.f32 %v2527, %v2615
    %2617 = vmatmul.bf16.gmra.mxu0 %v416
    %v2618 = vpop.f32.mrf.mxu0
    %v2619 = vadd.f32 %v2530, %v2618
    %v2620 = vpop.f32.mrf.mxu0
    %v2621 = vadd.f32 %v2532, %v2620
    %2622 = vmatmul.bf16.gmra.mxu0 %v424
    %v2623 = vpop.f32.mrf.mxu0
    %v2624 = vadd.f32 %v2535, %v2623
    %v2625 = vpop.f32.mrf.mxu0
    %v2626 = vadd.f32 %v2537, %v2625
    %2627 = vmatmul.bf16.gmra.mxu0 %v432
    %v2628 = vpop.f32.mrf.mxu0
    %v2629 = vadd.f32 %v2540, %v2628
    %v2630 = vpop.f32.mrf.mxu0
    %v2631 = vadd.f32 %v2542, %v2630
    %2632 = vmatmul.bf16.gmra.mxu0 %v440
    %v2633 = vpop.f32.mrf.mxu0
    %v2634 = vadd.f32 %v2545, %v2633
    %v2635 = vpop.f32.mrf.mxu0
    %v2636 = vadd.f32 %v2547, %v2635
    %2637 = vmatmul.bf16.gmra.mxu0 %v448
    %v2638 = vpop.f32.mrf.mxu0
    %v2639 = vadd.f32 %v2550, %v2638
    %v2640 = vpop.f32.mrf.mxu0
    %v2641 = vadd.f32 %v2552, %v2640
    %2642 = vmatmul.bf16.gmra.mxu0 %v456
    %v2643 = vpop.f32.mrf.mxu0
    %v2644 = vadd.f32 %v2555, %v2643
    %v2645 = vpop.f32.mrf.mxu0
    %v2646 = vadd.f32 %v2557, %v2645
    %2647 = vmatmul.bf16.gmra.mxu0 %v464
    %v2648 = vpop.f32.mrf.mxu0
    %v2649 = vadd.f32 %v2560, %v2648
    %v2650 = vpop.f32.mrf.mxu0
    %v2651 = vadd.f32 %v2562, %v2650
    %2652 = vmatmul.bf16.gmra.mxu0 %v472
    %v2653 = vpop.f32.mrf.mxu0
    %v2654 = vadd.f32 %v2565, %v2653
    %v2655 = vpop.f32.mrf.mxu0
    %v2656 = vadd.f32 %v2567, %v2655
    %2657 = vmatmul.bf16.gmra.mxu0 %v480
    %v2658 = vpop.f32.mrf.mxu0
    %v2659 = vadd.f32 %v2570, %v2658
    %v2660 = vpop.f32.mrf.mxu0
    %v2661 = vadd.f32 %v2572, %v2660
    %2662 = vmatmul.bf16.gmra.mxu0 %v488
    %v2663 = vpop.f32.mrf.mxu0
    %v2664 = vadd.f32 %v2575, %v2663
    %v2665 = vpop.f32.mrf.mxu0
    %v2666 = vadd.f32 %v2577, %v2665
    %2667 = vmatmul.bf16.gmra.mxu0 %v496
    %v2668 = vpop.f32.mrf.mxu0
    %v2669 = vadd.f32 %v2580, %v2668
    %v2670 = vpop.f32.mrf.mxu0
    %v2671 = vadd.f32 %v2582, %v2670
    %2672 = vmatmul.bf16.gmra.mxu0 %v504
    %v2673 = vpop.f32.mrf.mxu0
    %v2674 = vadd.f32 %v2585, %v2673
    %v2675 = vpop.f32.mrf.mxu0
    %v2676 = vadd.f32 %v2587, %v2675
    %2677 = vmatmul.bf16.gmra.mxu0 %v512
    %v2678 = vpop.f32.mrf.mxu0
    %v2679 = vadd.f32 %v2590, %v2678
    %v2680 = vpop.f32.mrf.mxu0
    %v2681 = vadd.f32 %v2592, %v2680
    %2682 = vdwg.mxu0
    %2683 = vmatpush.bf16.msra.mxu0 %v1800
    %2684 = vmatpush.bf16.msra.mxu0 %v1796
    %2685 = vmatpush.bf16.msra.mxu0 %v1792
    %2686 = vmatpush.bf16.msra.mxu0 %v1788
    %2687 = vmatpush.bf16.msra.mxu0 %v1784
    %2688 = vmatpush.bf16.msra.mxu0 %v1780
    %2689 = vmatpush.bf16.msra.mxu0 %v1776
    %2690 = vmatpush.bf16.msra.mxu0 %v1772
    %2691 = vmatmul.bf16.gmra.mxu0 %v393
    %v2692 = vpop.f32.mrf.mxu0
    %v2693 = vadd.f32 %v2604, %v2692
    %v2694 = vpop.f32.mrf.mxu0
    %v2695 = vadd.f32 %v2606, %v2694
    %2696 = vmatmul.bf16.gmra.mxu0 %v401
    %v2697 = vpop.f32.mrf.mxu0
    %v2698 = vadd.f32 %v2609, %v2697
    %v2699 = vpop.f32.mrf.mxu0
    %v2700 = vadd.f32 %v2611, %v2699
    %2701 = vmatmul.bf16.gmra.mxu0 %v409
    %v2702 = vpop.f32.mrf.mxu0
    %v2703 = vadd.f32 %v2614, %v2702
    %v2704 = vpop.f32.mrf.mxu0
    %v2705 = vadd.f32 %v2616, %v2704
    %2706 = vmatmul.bf16.gmra.mxu0 %v417
    %v2707 = vpop.f32.mrf.mxu0
    %v2708 = vadd.f32 %v2619, %v2707
    %v2709 = vpop.f32.mrf.mxu0
    %v2710 = vadd.f32 %v2621, %v2709
    %2711 = vmatmul.bf16.gmra.mxu0 %v425
    %v2712 = vpop.f32.mrf.mxu0
    %v2713 = vadd.f32 %v2624, %v2712
    %v2714 = vpop.f32.mrf.mxu0
    %v2715 = vadd.f32 %v2626, %v2714
    %2716 = vmatmul.bf16.gmra.mxu0 %v433
    %v2717 = vpop.f32.mrf.mxu0
    %v2718 = vadd.f32 %v2629, %v2717
    %v2719 = vpop.f32.mrf.mxu0
    %v2720 = vadd.f32 %v2631, %v2719
    %2721 = vmatmul.bf16.gmra.mxu0 %v441
    %v2722 = vpop.f32.mrf.mxu0
    %v2723 = vadd.f32 %v2634, %v2722
    %v2724 = vpop.f32.mrf.mxu0
    %v2725 = vadd.f32 %v2636, %v2724
    %2726 = vmatmul.bf16.gmra.mxu0 %v449
    %v2727 = vpop.f32.mrf.mxu0
    %v2728 = vadd.f32 %v2639, %v2727
    %v2729 = vpop.f32.mrf.mxu0
    %v2730 = vadd.f32 %v2641, %v2729
    %2731 = vmatmul.bf16.gmra.mxu0 %v457
    %v2732 = vpop.f32.mrf.mxu0
    %v2733 = vadd.f32 %v2644, %v2732
    %v2734 = vpop.f32.mrf.mxu0
    %v2735 = vadd.f32 %v2646, %v2734
    %2736 = vmatmul.bf16.gmra.mxu0 %v465
    %v2737 = vpop.f32.mrf.mxu0
    %v2738 = vadd.f32 %v2649, %v2737
    %v2739 = vpop.f32.mrf.mxu0
    %v2740 = vadd.f32 %v2651, %v2739
    %2741 = vmatmul.bf16.gmra.mxu0 %v473
    %v2742 = vpop.f32.mrf.mxu0
    %v2743 = vadd.f32 %v2654, %v2742
    %v2744 = vpop.f32.mrf.mxu0
    %v2745 = vadd.f32 %v2656, %v2744
    %2746 = vmatmul.bf16.gmra.mxu0 %v481
    %v2747 = vpop.f32.mrf.mxu0
    %v2748 = vadd.f32 %v2659, %v2747
    %v2749 = vpop.f32.mrf.mxu0
    %v2750 = vadd.f32 %v2661, %v2749
    %2751 = vmatmul.bf16.gmra.mxu0 %v489
    %v2752 = vpop.f32.mrf.mxu0
    %v2753 = vadd.f32 %v2664, %v2752
    %v2754 = vpop.f32.mrf.mxu0
    %v2755 = vadd.f32 %v2666, %v2754
    %2756 = vmatmul.bf16.gmra.mxu0 %v497
    %v2757 = vpop.f32.mrf.mxu0
    %v2758 = vadd.f32 %v2669, %v2757
    %v2759 = vpop.f32.mrf.mxu0
    %v2760 = vadd.f32 %v2671, %v2759
    %2761 = vmatmul.bf16.gmra.mxu0 %v505
    %v2762 = vpop.f32.mrf.mxu0
    %v2763 = vadd.f32 %v2674, %v2762
    %v2764 = vpop.f32.mrf.mxu0
    %v2765 = vadd.f32 %v2676, %v2764
    %2766 = vmatmul.bf16.gmra.mxu0 %v513
    %v2767 = vpop.f32.mrf.mxu0
    %v2768 = vadd.f32 %v2679, %v2767
    %v2769 = vpop.f32.mrf.mxu0
    %v2770 = vadd.f32 %v2681, %v2769
    %2771 = vdwg.mxu0
    %2772 = vmatpush.bf16.msra.mxu0 %v1577
    %2773 = vmatpush.bf16.msra.mxu0 %v1573
    %2774 = vmatpush.bf16.msra.mxu0 %v1569
    %2775 = vmatpush.bf16.msra.mxu0 %v1565
    %2776 = vmatpush.bf16.msra.mxu0 %v1561
    %2777 = vmatpush.bf16.msra.mxu0 %v1557
    %2778 = vmatpush.bf16.msra.mxu0 %v1553
    %2779 = vmatpush.bf16.msra.mxu0 %v1549
    %2780 = vmatmul.bf16.gmra.mxu0 %v386
    %v2781 = vpop.f32.mrf.mxu0
    %v2782 = vadd.f32 %v773, %v2781
    %v2783 = vpop.f32.mrf.mxu0
    %v2784 = vadd.f32 %v773, %v2783
    %2785 = vmatmul.bf16.gmra.mxu0 %v394
    %v2786 = vpop.f32.mrf.mxu0
    %v2787 = vadd.f32 %v773, %v2786
    %v2788 = vpop.f32.mrf.mxu0
    %v2789 = vadd.f32 %v773, %v2788
    %2790 = vmatmul.bf16.gmra.mxu0 %v402
    %v2791 = vpop.f32.mrf.mxu0
    %v2792 = vadd.f32 %v773, %v2791
    %v2793 = vpop.f32.mrf.mxu0
    %v2794 = vadd.f32 %v773, %v2793
    %2795 = vmatmul.bf16.gmra.mxu0 %v410
    %v2796 = vpop.f32.mrf.mxu0
    %v2797 = vadd.f32 %v773, %v2796
    %v2798 = vpop.f32.mrf.mxu0
    %v2799 = vadd.f32 %v773, %v2798
    %2800 = vmatmul.bf16.gmra.mxu0 %v418
    %v2801 = vpop.f32.mrf.mxu0
    %v2802 = vadd.f32 %v773, %v2801
    %v2803 = vpop.f32.mrf.mxu0
    %v2804 = vadd.f32 %v773, %v2803
    %2805 = vmatmul.bf16.gmra.mxu0 %v426
    %v2806 = vpop.f32.mrf.mxu0
    %v2807 = vadd.f32 %v773, %v2806
    %v2808 = vpop.f32.mrf.mxu0
    %v2809 = vadd.f32 %v773, %v2808
    %2810 = vmatmul.bf16.gmra.mxu0 %v434
    %v2811 = vpop.f32.mrf.mxu0
    %v2812 = vadd.f32 %v773, %v2811
    %v2813 = vpop.f32.mrf.mxu0
    %v2814 = vadd.f32 %v773, %v2813
    %2815 = vmatmul.bf16.gmra.mxu0 %v442
    %v2816 = vpop.f32.mrf.mxu0
    %v2817 = vadd.f32 %v773, %v2816
    %v2818 = vpop.f32.mrf.mxu0
    %v2819 = vadd.f32 %v773, %v2818
    %2820 = vmatmul.bf16.gmra.mxu0 %v450
    %v2821 = vpop.f32.mrf.mxu0
    %v2822 = vadd.f32 %v773, %v2821
    %v2823 = vpop.f32.mrf.mxu0
    %v2824 = vadd.f32 %v773, %v2823
    %2825 = vmatmul.bf16.gmra.mxu0 %v458
    %v2826 = vpop.f32.mrf.mxu0
    %v2827 = vadd.f32 %v773, %v2826
    %v2828 = vpop.f32.mrf.mxu0
    %v2829 = vadd.f32 %v773, %v2828
    %2830 = vmatmul.bf16.gmra.mxu0 %v466
    %v2831 = vpop.f32.mrf.mxu0
    %v2832 = vadd.f32 %v773, %v2831
    %v2833 = vpop.f32.mrf.mxu0
    %v2834 = vadd.f32 %v773, %v2833
    %2835 = vmatmul.bf16.gmra.mxu0 %v474
    %v2836 = vpop.f32.mrf.mxu0
    %v2837 = vadd.f32 %v773, %v2836
    %v2838 = vpop.f32.mrf.mxu0
    %v2839 = vadd.f32 %v773, %v2838
    %2840 = vmatmul.bf16.gmra.mxu0 %v482
    %v2841 = vpop.f32.mrf.mxu0
    %v2842 = vadd.f32 %v773, %v2841
    %v2843 = vpop.f32.mrf.mxu0
    %v2844 = vadd.f32 %v773, %v2843
    %2845 = vmatmul.bf16.gmra.mxu0 %v490
    %v2846 = vpop.f32.mrf.mxu0
    %v2847 = vadd.f32 %v773, %v2846
    %v2848 = vpop.f32.mrf.mxu0
    %v2849 = vadd.f32 %v773, %v2848
    %2850 = vmatmul.bf16.gmra.mxu0 %v498
    %v2851 = vpop.f32.mrf.mxu0
    %v2852 = vadd.f32 %v773, %v2851
    %v2853 = vpop.f32.mrf.mxu0
    %v2854 = vadd.f32 %v773, %v2853
    %2855 = vmatmul.bf16.gmra.mxu0 %v506
    %v2856 = vpop.f32.mrf.mxu0
    %v2857 = vadd.f32 %v773, %v2856
    %v2858 = vpop.f32.mrf.mxu0
    %v2859 = vadd.f32 %v773, %v2858
    %2860 = vdwg.mxu0
    %2861 = vmatpush.bf16.msra.mxu0 %v1609
    %2862 = vmatpush.bf16.msra.mxu0 %v1605
    %2863 = vmatpush.bf16.msra.mxu0 %v1601
    %2864 = vmatpush.bf16.msra.mxu0 %v1597
    %2865 = vmatpush.bf16.msra.mxu0 %v1593
    %2866 = vmatpush.bf16.msra.mxu0 %v1589
    %2867 = vmatpush.bf16.msra.mxu0 %v1585
    %2868 = vmatpush.bf16.msra.mxu0 %v1581
    %2869 = vmatmul.bf16.gmra.mxu0 %v387
    %v2870 = vpop.f32.mrf.mxu0
    %v2871 = vadd.f32 %v2782, %v2870
    %v2872 = vpop.f32.mrf.mxu0
    %v2873 = vadd.f32 %v2784, %v2872
    %2874 = vmatmul.bf16.gmra.mxu0 %v395
    %v2875 = vpop.f32.mrf.mxu0
    %v2876 = vadd.f32 %v2787, %v2875
    %v2877 = vpop.f32.mrf.mxu0
    %v2878 = vadd.f32 %v2789, %v2877
    %2879 = vmatmul.bf16.gmra.mxu0 %v403
    %v2880 = vpop.f32.mrf.mxu0
    %v2881 = vadd.f32 %v2792, %v2880
    %v2882 = vpop.f32.mrf.mxu0
    %v2883 = vadd.f32 %v2794, %v2882
    %2884 = vmatmul.bf16.gmra.mxu0 %v411
    %v2885 = vpop.f32.mrf.mxu0
    %v2886 = vadd.f32 %v2797, %v2885
    %v2887 = vpop.f32.mrf.mxu0
    %v2888 = vadd.f32 %v2799, %v2887
    %2889 = vmatmul.bf16.gmra.mxu0 %v419
    %v2890 = vpop.f32.mrf.mxu0
    %v2891 = vadd.f32 %v2802, %v2890
    %v2892 = vpop.f32.mrf.mxu0
    %v2893 = vadd.f32 %v2804, %v2892
    %2894 = vmatmul.bf16.gmra.mxu0 %v427
    %v2895 = vpop.f32.mrf.mxu0
    %v2896 = vadd.f32 %v2807, %v2895
    %v2897 = vpop.f32.mrf.mxu0
    %v2898 = vadd.f32 %v2809, %v2897
    %2899 = vmatmul.bf16.gmra.mxu0 %v435
    %v2900 = vpop.f32.mrf.mxu0
    %v2901 = vadd.f32 %v2812, %v2900
    %v2902 = vpop.f32.mrf.mxu0
    %v2903 = vadd.f32 %v2814, %v2902
    %2904 = vmatmul.bf16.gmra.mxu0 %v443
    %v2905 = vpop.f32.mrf.mxu0
    %v2906 = vadd.f32 %v2817, %v2905
    %v2907 = vpop.f32.mrf.mxu0
    %v2908 = vadd.f32 %v2819, %v2907
    %2909 = vmatmul.bf16.gmra.mxu0 %v451
    %v2910 = vpop.f32.mrf.mxu0
    %v2911 = vadd.f32 %v2822, %v2910
    %v2912 = vpop.f32.mrf.mxu0
    %v2913 = vadd.f32 %v2824, %v2912
    %2914 = vmatmul.bf16.gmra.mxu0 %v459
    %v2915 = vpop.f32.mrf.mxu0
    %v2916 = vadd.f32 %v2827, %v2915
    %v2917 = vpop.f32.mrf.mxu0
    %v2918 = vadd.f32 %v2829, %v2917
    %2919 = vmatmul.bf16.gmra.mxu0 %v467
    %v2920 = vpop.f32.mrf.mxu0
    %v2921 = vadd.f32 %v2832, %v2920
    %v2922 = vpop.f32.mrf.mxu0
    %v2923 = vadd.f32 %v2834, %v2922
    %2924 = vmatmul.bf16.gmra.mxu0 %v475
    %v2925 = vpop.f32.mrf.mxu0
    %v2926 = vadd.f32 %v2837, %v2925
    %v2927 = vpop.f32.mrf.mxu0
    %v2928 = vadd.f32 %v2839, %v2927
    %2929 = vmatmul.bf16.gmra.mxu0 %v483
    %v2930 = vpop.f32.mrf.mxu0
    %v2931 = vadd.f32 %v2842, %v2930
    %v2932 = vpop.f32.mrf.mxu0
    %v2933 = vadd.f32 %v2844, %v2932
    %2934 = vmatmul.bf16.gmra.mxu0 %v491
    %v2935 = vpop.f32.mrf.mxu0
    %v2936 = vadd.f32 %v2847, %v2935
    %v2937 = vpop.f32.mrf.mxu0
    %v2938 = vadd.f32 %v2849, %v2937
    %2939 = vmatmul.bf16.gmra.mxu0 %v499
    %v2940 = vpop.f32.mrf.mxu0
    %v2941 = vadd.f32 %v2852, %v2940
    %v2942 = vpop.f32.mrf.mxu0
    %v2943 = vadd.f32 %v2854, %v2942
    %2944 = vmatmul.bf16.gmra.mxu0 %v507
    %v2945 = vpop.f32.mrf.mxu0
    %v2946 = vadd.f32 %v2857, %v2945
    %v2947 = vpop.f32.mrf.mxu0
    %v2948 = vadd.f32 %v2859, %v2947
    %2949 = vdwg.mxu0
    %2950 = vmatpush.bf16.msra.mxu0 %v1641
    %2951 = vmatpush.bf16.msra.mxu0 %v1637
    %2952 = vmatpush.bf16.msra.mxu0 %v1633
    %2953 = vmatpush.bf16.msra.mxu0 %v1629
    %2954 = vmatpush.bf16.msra.mxu0 %v1625
    %2955 = vmatpush.bf16.msra.mxu0 %v1621
    %2956 = vmatpush.bf16.msra.mxu0 %v1617
    %2957 = vmatpush.bf16.msra.mxu0 %v1613
    %2958 = vmatmul.bf16.gmra.mxu0 %v388
    %v2959 = vpop.f32.mrf.mxu0
    %v2960 = vadd.f32 %v2871, %v2959
    %v2961 = vpop.f32.mrf.mxu0
    %v2962 = vadd.f32 %v2873, %v2961
    %2963 = vmatmul.bf16.gmra.mxu0 %v396
    %v2964 = vpop.f32.mrf.mxu0
    %v2965 = vadd.f32 %v2876, %v2964
    %v2966 = vpop.f32.mrf.mxu0
    %v2967 = vadd.f32 %v2878, %v2966
    %2968 = vmatmul.bf16.gmra.mxu0 %v404
    %v2969 = vpop.f32.mrf.mxu0
    %v2970 = vadd.f32 %v2881, %v2969
    %v2971 = vpop.f32.mrf.mxu0
    %v2972 = vadd.f32 %v2883, %v2971
    %2973 = vmatmul.bf16.gmra.mxu0 %v412
    %v2974 = vpop.f32.mrf.mxu0
    %v2975 = vadd.f32 %v2886, %v2974
    %v2976 = vpop.f32.mrf.mxu0
    %v2977 = vadd.f32 %v2888, %v2976
    %2978 = vmatmul.bf16.gmra.mxu0 %v420
    %v2979 = vpop.f32.mrf.mxu0
    %v2980 = vadd.f32 %v2891, %v2979
    %v2981 = vpop.f32.mrf.mxu0
    %v2982 = vadd.f32 %v2893, %v2981
    %2983 = vmatmul.bf16.gmra.mxu0 %v428
    %v2984 = vpop.f32.mrf.mxu0
    %v2985 = vadd.f32 %v2896, %v2984
    %v2986 = vpop.f32.mrf.mxu0
    %v2987 = vadd.f32 %v2898, %v2986
    %2988 = vmatmul.bf16.gmra.mxu0 %v436
    %v2989 = vpop.f32.mrf.mxu0
    %v2990 = vadd.f32 %v2901, %v2989
    %v2991 = vpop.f32.mrf.mxu0
    %v2992 = vadd.f32 %v2903, %v2991
    %2993 = vmatmul.bf16.gmra.mxu0 %v444
    %v2994 = vpop.f32.mrf.mxu0
    %v2995 = vadd.f32 %v2906, %v2994
    %v2996 = vpop.f32.mrf.mxu0
    %v2997 = vadd.f32 %v2908, %v2996
    %2998 = vmatmul.bf16.gmra.mxu0 %v452
    %v2999 = vpop.f32.mrf.mxu0
    %v3000 = vadd.f32 %v2911, %v2999
    %v3001 = vpop.f32.mrf.mxu0
    %v3002 = vadd.f32 %v2913, %v3001
    %3003 = vmatmul.bf16.gmra.mxu0 %v460
    %v3004 = vpop.f32.mrf.mxu0
    %v3005 = vadd.f32 %v2916, %v3004
    %v3006 = vpop.f32.mrf.mxu0
    %v3007 = vadd.f32 %v2918, %v3006
    %3008 = vmatmul.bf16.gmra.mxu0 %v468
    %v3009 = vpop.f32.mrf.mxu0
    %v3010 = vadd.f32 %v2921, %v3009
    %v3011 = vpop.f32.mrf.mxu0
    %v3012 = vadd.f32 %v2923, %v3011
    %3013 = vmatmul.bf16.gmra.mxu0 %v476
    %v3014 = vpop.f32.mrf.mxu0
    %v3015 = vadd.f32 %v2926, %v3014
    %v3016 = vpop.f32.mrf.mxu0
    %v3017 = vadd.f32 %v2928, %v3016
    %3018 = vmatmul.bf16.gmra.mxu0 %v484
    %v3019 = vpop.f32.mrf.mxu0
    %v3020 = vadd.f32 %v2931, %v3019
    %v3021 = vpop.f32.mrf.mxu0
    %v3022 = vadd.f32 %v2933, %v3021
    %3023 = vmatmul.bf16.gmra.mxu0 %v492
    %v3024 = vpop.f32.mrf.mxu0
    %v3025 = vadd.f32 %v2936, %v3024
    %v3026 = vpop.f32.mrf.mxu0
    %v3027 = vadd.f32 %v2938, %v3026
    %3028 = vmatmul.bf16.gmra.mxu0 %v500
    %v3029 = vpop.f32.mrf.mxu0
    %v3030 = vadd.f32 %v2941, %v3029
    %v3031 = vpop.f32.mrf.mxu0
    %v3032 = vadd.f32 %v2943, %v3031
    %3033 = vmatmul.bf16.gmra.mxu0 %v508
    %v3034 = vpop.f32.mrf.mxu0
    %v3035 = vadd.f32 %v2946, %v3034
    %v3036 = vpop.f32.mrf.mxu0
    %v3037 = vadd.f32 %v2948, %v3036
    %3038 = vdwg.mxu0
    %3039 = vmatpush.bf16.msra.mxu0 %v1673
    %3040 = vmatpush.bf16.msra.mxu0 %v1669
    %3041 = vmatpush.bf16.msra.mxu0 %v1665
    %3042 = vmatpush.bf16.msra.mxu0 %v1661
    %3043 = vmatpush.bf16.msra.mxu0 %v1657
    %3044 = vmatpush.bf16.msra.mxu0 %v1653
    %3045 = vmatpush.bf16.msra.mxu0 %v1649
    %3046 = vmatpush.bf16.msra.mxu0 %v1645
    %3047 = vmatmul.bf16.gmra.mxu0 %v389
    %v3048 = vpop.f32.mrf.mxu0
    %v3049 = vadd.f32 %v2960, %v3048
    %v3050 = vpop.f32.mrf.mxu0
    %v3051 = vadd.f32 %v2962, %v3050
    %3052 = vmatmul.bf16.gmra.mxu0 %v397
    %v3053 = vpop.f32.mrf.mxu0
    %v3054 = vadd.f32 %v2965, %v3053
    %v3055 = vpop.f32.mrf.mxu0
    %v3056 = vadd.f32 %v2967, %v3055
    %3057 = vmatmul.bf16.gmra.mxu0 %v405
    %v3058 = vpop.f32.mrf.mxu0
    %v3059 = vadd.f32 %v2970, %v3058
    %v3060 = vpop.f32.mrf.mxu0
    %v3061 = vadd.f32 %v2972, %v3060
    %3062 = vmatmul.bf16.gmra.mxu0 %v413
    %v3063 = vpop.f32.mrf.mxu0
    %v3064 = vadd.f32 %v2975, %v3063
    %v3065 = vpop.f32.mrf.mxu0
    %v3066 = vadd.f32 %v2977, %v3065
    %3067 = vmatmul.bf16.gmra.mxu0 %v421
    %v3068 = vpop.f32.mrf.mxu0
    %v3069 = vadd.f32 %v2980, %v3068
    %v3070 = vpop.f32.mrf.mxu0
    %v3071 = vadd.f32 %v2982, %v3070
    %3072 = vmatmul.bf16.gmra.mxu0 %v429
    %v3073 = vpop.f32.mrf.mxu0
    %v3074 = vadd.f32 %v2985, %v3073
    %v3075 = vpop.f32.mrf.mxu0
    %v3076 = vadd.f32 %v2987, %v3075
    %3077 = vmatmul.bf16.gmra.mxu0 %v437
    %v3078 = vpop.f32.mrf.mxu0
    %v3079 = vadd.f32 %v2990, %v3078
    %v3080 = vpop.f32.mrf.mxu0
    %v3081 = vadd.f32 %v2992, %v3080
    %3082 = vmatmul.bf16.gmra.mxu0 %v445
    %v3083 = vpop.f32.mrf.mxu0
    %v3084 = vadd.f32 %v2995, %v3083
    %v3085 = vpop.f32.mrf.mxu0
    %v3086 = vadd.f32 %v2997, %v3085
    %3087 = vmatmul.bf16.gmra.mxu0 %v453
    %v3088 = vpop.f32.mrf.mxu0
    %v3089 = vadd.f32 %v3000, %v3088
    %v3090 = vpop.f32.mrf.mxu0
    %v3091 = vadd.f32 %v3002, %v3090
    %3092 = vmatmul.bf16.gmra.mxu0 %v461
    %v3093 = vpop.f32.mrf.mxu0
    %v3094 = vadd.f32 %v3005, %v3093
    %v3095 = vpop.f32.mrf.mxu0
    %v3096 = vadd.f32 %v3007, %v3095
    %3097 = vmatmul.bf16.gmra.mxu0 %v469
    %v3098 = vpop.f32.mrf.mxu0
    %v3099 = vadd.f32 %v3010, %v3098
    %v3100 = vpop.f32.mrf.mxu0
    %v3101 = vadd.f32 %v3012, %v3100
    %3102 = vmatmul.bf16.gmra.mxu0 %v477
    %v3103 = vpop.f32.mrf.mxu0
    %v3104 = vadd.f32 %v3015, %v3103
    %v3105 = vpop.f32.mrf.mxu0
    %v3106 = vadd.f32 %v3017, %v3105
    %3107 = vmatmul.bf16.gmra.mxu0 %v485
    %v3108 = vpop.f32.mrf.mxu0
    %v3109 = vadd.f32 %v3020, %v3108
    %v3110 = vpop.f32.mrf.mxu0
    %v3111 = vadd.f32 %v3022, %v3110
    %3112 = vmatmul.bf16.gmra.mxu0 %v493
    %v3113 = vpop.f32.mrf.mxu0
    %v3114 = vadd.f32 %v3025, %v3113
    %v3115 = vpop.f32.mrf.mxu0
    %v3116 = vadd.f32 %v3027, %v3115
    %3117 = vmatmul.bf16.gmra.mxu0 %v501
    %v3118 = vpop.f32.mrf.mxu0
    %v3119 = vadd.f32 %v3030, %v3118
    %v3120 = vpop.f32.mrf.mxu0
    %v3121 = vadd.f32 %v3032, %v3120
    %3122 = vmatmul.bf16.gmra.mxu0 %v509
    %v3123 = vpop.f32.mrf.mxu0
    %v3124 = vadd.f32 %v3035, %v3123
    %v3125 = vpop.f32.mrf.mxu0
    %v3126 = vadd.f32 %v3037, %v3125
    %3127 = vdwg.mxu0
    %3128 = vmatpush.bf16.msra.mxu0 %v1705
    %3129 = vmatpush.bf16.msra.mxu0 %v1701
    %3130 = vmatpush.bf16.msra.mxu0 %v1697
    %3131 = vmatpush.bf16.msra.mxu0 %v1693
    %3132 = vmatpush.bf16.msra.mxu0 %v1689
    %3133 = vmatpush.bf16.msra.mxu0 %v1685
    %3134 = vmatpush.bf16.msra.mxu0 %v1681
    %3135 = vmatpush.bf16.msra.mxu0 %v1677
    %3136 = vmatmul.bf16.gmra.mxu0 %v390
    %v3137 = vpop.f32.mrf.mxu0
    %v3138 = vadd.f32 %v3049, %v3137
    %v3139 = vpop.f32.mrf.mxu0
    %v3140 = vadd.f32 %v3051, %v3139
    %3141 = vmatmul.bf16.gmra.mxu0 %v398
    %v3142 = vpop.f32.mrf.mxu0
    %v3143 = vadd.f32 %v3054, %v3142
    %v3144 = vpop.f32.mrf.mxu0
    %v3145 = vadd.f32 %v3056, %v3144
    %3146 = vmatmul.bf16.gmra.mxu0 %v406
    %v3147 = vpop.f32.mrf.mxu0
    %v3148 = vadd.f32 %v3059, %v3147
    %v3149 = vpop.f32.mrf.mxu0
    %v3150 = vadd.f32 %v3061, %v3149
    %3151 = vmatmul.bf16.gmra.mxu0 %v414
    %v3152 = vpop.f32.mrf.mxu0
    %v3153 = vadd.f32 %v3064, %v3152
    %v3154 = vpop.f32.mrf.mxu0
    %v3155 = vadd.f32 %v3066, %v3154
    %3156 = vmatmul.bf16.gmra.mxu0 %v422
    %v3157 = vpop.f32.mrf.mxu0
    %v3158 = vadd.f32 %v3069, %v3157
    %v3159 = vpop.f32.mrf.mxu0
    %v3160 = vadd.f32 %v3071, %v3159
    %3161 = vmatmul.bf16.gmra.mxu0 %v430
    %v3162 = vpop.f32.mrf.mxu0
    %v3163 = vadd.f32 %v3074, %v3162
    %v3164 = vpop.f32.mrf.mxu0
    %v3165 = vadd.f32 %v3076, %v3164
    %3166 = vmatmul.bf16.gmra.mxu0 %v438
    %v3167 = vpop.f32.mrf.mxu0
    %v3168 = vadd.f32 %v3079, %v3167
    %v3169 = vpop.f32.mrf.mxu0
    %v3170 = vadd.f32 %v3081, %v3169
    %3171 = vmatmul.bf16.gmra.mxu0 %v446
    %v3172 = vpop.f32.mrf.mxu0
    %v3173 = vadd.f32 %v3084, %v3172
    %v3174 = vpop.f32.mrf.mxu0
    %v3175 = vadd.f32 %v3086, %v3174
    %3176 = vmatmul.bf16.gmra.mxu0 %v454
    %v3177 = vpop.f32.mrf.mxu0
    %v3178 = vadd.f32 %v3089, %v3177
    %v3179 = vpop.f32.mrf.mxu0
    %v3180 = vadd.f32 %v3091, %v3179
    %3181 = vmatmul.bf16.gmra.mxu0 %v462
    %v3182 = vpop.f32.mrf.mxu0
    %v3183 = vadd.f32 %v3094, %v3182
    %v3184 = vpop.f32.mrf.mxu0
    %v3185 = vadd.f32 %v3096, %v3184
    %3186 = vmatmul.bf16.gmra.mxu0 %v470
    %v3187 = vpop.f32.mrf.mxu0
    %v3188 = vadd.f32 %v3099, %v3187
    %v3189 = vpop.f32.mrf.mxu0
    %v3190 = vadd.f32 %v3101, %v3189
    %3191 = vmatmul.bf16.gmra.mxu0 %v478
    %v3192 = vpop.f32.mrf.mxu0
    %v3193 = vadd.f32 %v3104, %v3192
    %v3194 = vpop.f32.mrf.mxu0
    %v3195 = vadd.f32 %v3106, %v3194
    %3196 = vmatmul.bf16.gmra.mxu0 %v486
    %v3197 = vpop.f32.mrf.mxu0
    %v3198 = vadd.f32 %v3109, %v3197
    %v3199 = vpop.f32.mrf.mxu0
    %v3200 = vadd.f32 %v3111, %v3199
    %3201 = vmatmul.bf16.gmra.mxu0 %v494
    %v3202 = vpop.f32.mrf.mxu0
    %v3203 = vadd.f32 %v3114, %v3202
    %v3204 = vpop.f32.mrf.mxu0
    %v3205 = vadd.f32 %v3116, %v3204
    %3206 = vmatmul.bf16.gmra.mxu0 %v502
    %v3207 = vpop.f32.mrf.mxu0
    %v3208 = vadd.f32 %v3119, %v3207
    %v3209 = vpop.f32.mrf.mxu0
    %v3210 = vadd.f32 %v3121, %v3209
    %3211 = vmatmul.bf16.gmra.mxu0 %v510
    %v3212 = vpop.f32.mrf.mxu0
    %v3213 = vadd.f32 %v3124, %v3212
    %v3214 = vpop.f32.mrf.mxu0
    %v3215 = vadd.f32 %v3126, %v3214
    %3216 = vdwg.mxu0
    %3217 = vmatpush.bf16.msra.mxu0 %v1737
    %3218 = vmatpush.bf16.msra.mxu0 %v1733
    %3219 = vmatpush.bf16.msra.mxu0 %v1729
    %3220 = vmatpush.bf16.msra.mxu0 %v1725
    %3221 = vmatpush.bf16.msra.mxu0 %v1721
    %3222 = vmatpush.bf16.msra.mxu0 %v1717
    %3223 = vmatpush.bf16.msra.mxu0 %v1713
    %3224 = vmatpush.bf16.msra.mxu0 %v1709
    %3225 = vmatmul.bf16.gmra.mxu0 %v391
    %v3226 = vpop.f32.mrf.mxu0
    %v3227 = vadd.f32 %v3138, %v3226
    %v3228 = vpop.f32.mrf.mxu0
    %v3229 = vadd.f32 %v3140, %v3228
    %3230 = vmatmul.bf16.gmra.mxu0 %v399
    %v3231 = vpop.f32.mrf.mxu0
    %v3232 = vadd.f32 %v3143, %v3231
    %v3233 = vpop.f32.mrf.mxu0
    %v3234 = vadd.f32 %v3145, %v3233
    %3235 = vmatmul.bf16.gmra.mxu0 %v407
    %v3236 = vpop.f32.mrf.mxu0
    %v3237 = vadd.f32 %v3148, %v3236
    %v3238 = vpop.f32.mrf.mxu0
    %v3239 = vadd.f32 %v3150, %v3238
    %3240 = vmatmul.bf16.gmra.mxu0 %v415
    %v3241 = vpop.f32.mrf.mxu0
    %v3242 = vadd.f32 %v3153, %v3241
    %v3243 = vpop.f32.mrf.mxu0
    %v3244 = vadd.f32 %v3155, %v3243
    %3245 = vmatmul.bf16.gmra.mxu0 %v423
    %v3246 = vpop.f32.mrf.mxu0
    %v3247 = vadd.f32 %v3158, %v3246
    %v3248 = vpop.f32.mrf.mxu0
    %v3249 = vadd.f32 %v3160, %v3248
    %3250 = vmatmul.bf16.gmra.mxu0 %v431
    %v3251 = vpop.f32.mrf.mxu0
    %v3252 = vadd.f32 %v3163, %v3251
    %v3253 = vpop.f32.mrf.mxu0
    %v3254 = vadd.f32 %v3165, %v3253
    %3255 = vmatmul.bf16.gmra.mxu0 %v439
    %v3256 = vpop.f32.mrf.mxu0
    %v3257 = vadd.f32 %v3168, %v3256
    %v3258 = vpop.f32.mrf.mxu0
    %v3259 = vadd.f32 %v3170, %v3258
    %3260 = vmatmul.bf16.gmra.mxu0 %v447
    %v3261 = vpop.f32.mrf.mxu0
    %v3262 = vadd.f32 %v3173, %v3261
    %v3263 = vpop.f32.mrf.mxu0
    %v3264 = vadd.f32 %v3175, %v3263
    %3265 = vmatmul.bf16.gmra.mxu0 %v455
    %v3266 = vpop.f32.mrf.mxu0
    %v3267 = vadd.f32 %v3178, %v3266
    %v3268 = vpop.f32.mrf.mxu0
    %v3269 = vadd.f32 %v3180, %v3268
    %3270 = vmatmul.bf16.gmra.mxu0 %v463
    %v3271 = vpop.f32.mrf.mxu0
    %v3272 = vadd.f32 %v3183, %v3271
    %v3273 = vpop.f32.mrf.mxu0
    %v3274 = vadd.f32 %v3185, %v3273
    %3275 = vmatmul.bf16.gmra.mxu0 %v471
    %v3276 = vpop.f32.mrf.mxu0
    %v3277 = vadd.f32 %v3188, %v3276
    %v3278 = vpop.f32.mrf.mxu0
    %v3279 = vadd.f32 %v3190, %v3278
    %3280 = vmatmul.bf16.gmra.mxu0 %v479
    %v3281 = vpop.f32.mrf.mxu0
    %v3282 = vadd.f32 %v3193, %v3281
    %v3283 = vpop.f32.mrf.mxu0
    %v3284 = vadd.f32 %v3195, %v3283
    %3285 = vmatmul.bf16.gmra.mxu0 %v487
    %v3286 = vpop.f32.mrf.mxu0
    %v3287 = vadd.f32 %v3198, %v3286
    %v3288 = vpop.f32.mrf.mxu0
    %v3289 = vadd.f32 %v3200, %v3288
    %3290 = vmatmul.bf16.gmra.mxu0 %v495
    %v3291 = vpop.f32.mrf.mxu0
    %v3292 = vadd.f32 %v3203, %v3291
    %v3293 = vpop.f32.mrf.mxu0
    %v3294 = vadd.f32 %v3205, %v3293
    %3295 = vmatmul.bf16.gmra.mxu0 %v503
    %v3296 = vpop.f32.mrf.mxu0
    %v3297 = vadd.f32 %v3208, %v3296
    %v3298 = vpop.f32.mrf.mxu0
    %v3299 = vadd.f32 %v3210, %v3298
    %3300 = vmatmul.bf16.gmra.mxu0 %v511
    %v3301 = vpop.f32.mrf.mxu0
    %v3302 = vadd.f32 %v3213, %v3301
    %v3303 = vpop.f32.mrf.mxu0
    %v3304 = vadd.f32 %v3215, %v3303
    %3305 = vdwg.mxu0
    %3306 = vmatpush.bf16.msra.mxu0 %v1769
    %3307 = vmatpush.bf16.msra.mxu0 %v1765
    %3308 = vmatpush.bf16.msra.mxu0 %v1761
    %3309 = vmatpush.bf16.msra.mxu0 %v1757
    %3310 = vmatpush.bf16.msra.mxu0 %v1753
    %3311 = vmatpush.bf16.msra.mxu0 %v1749
    %3312 = vmatpush.bf16.msra.mxu0 %v1745
    %3313 = vmatpush.bf16.msra.mxu0 %v1741
    %3314 = vmatmul.bf16.gmra.mxu0 %v392
    %v3315 = vpop.f32.mrf.mxu0
    %v3316 = vadd.f32 %v3227, %v3315
    %v3317 = vpop.f32.mrf.mxu0
    %v3318 = vadd.f32 %v3229, %v3317
    %3319 = vmatmul.bf16.gmra.mxu0 %v400
    %v3320 = vpop.f32.mrf.mxu0
    %v3321 = vadd.f32 %v3232, %v3320
    %v3322 = vpop.f32.mrf.mxu0
    %v3323 = vadd.f32 %v3234, %v3322
    %3324 = vmatmul.bf16.gmra.mxu0 %v408
    %v3325 = vpop.f32.mrf.mxu0
    %v3326 = vadd.f32 %v3237, %v3325
    %v3327 = vpop.f32.mrf.mxu0
    %v3328 = vadd.f32 %v3239, %v3327
    %3329 = vmatmul.bf16.gmra.mxu0 %v416
    %v3330 = vpop.f32.mrf.mxu0
    %v3331 = vadd.f32 %v3242, %v3330
    %v3332 = vpop.f32.mrf.mxu0
    %v3333 = vadd.f32 %v3244, %v3332
    %3334 = vmatmul.bf16.gmra.mxu0 %v424
    %v3335 = vpop.f32.mrf.mxu0
    %v3336 = vadd.f32 %v3247, %v3335
    %v3337 = vpop.f32.mrf.mxu0
    %v3338 = vadd.f32 %v3249, %v3337
    %3339 = vmatmul.bf16.gmra.mxu0 %v432
    %v3340 = vpop.f32.mrf.mxu0
    %v3341 = vadd.f32 %v3252, %v3340
    %v3342 = vpop.f32.mrf.mxu0
    %v3343 = vadd.f32 %v3254, %v3342
    %3344 = vmatmul.bf16.gmra.mxu0 %v440
    %v3345 = vpop.f32.mrf.mxu0
    %v3346 = vadd.f32 %v3257, %v3345
    %v3347 = vpop.f32.mrf.mxu0
    %v3348 = vadd.f32 %v3259, %v3347
    %3349 = vmatmul.bf16.gmra.mxu0 %v448
    %v3350 = vpop.f32.mrf.mxu0
    %v3351 = vadd.f32 %v3262, %v3350
    %v3352 = vpop.f32.mrf.mxu0
    %v3353 = vadd.f32 %v3264, %v3352
    %3354 = vmatmul.bf16.gmra.mxu0 %v456
    %v3355 = vpop.f32.mrf.mxu0
    %v3356 = vadd.f32 %v3267, %v3355
    %v3357 = vpop.f32.mrf.mxu0
    %v3358 = vadd.f32 %v3269, %v3357
    %3359 = vmatmul.bf16.gmra.mxu0 %v464
    %v3360 = vpop.f32.mrf.mxu0
    %v3361 = vadd.f32 %v3272, %v3360
    %v3362 = vpop.f32.mrf.mxu0
    %v3363 = vadd.f32 %v3274, %v3362
    %3364 = vmatmul.bf16.gmra.mxu0 %v472
    %v3365 = vpop.f32.mrf.mxu0
    %v3366 = vadd.f32 %v3277, %v3365
    %v3367 = vpop.f32.mrf.mxu0
    %v3368 = vadd.f32 %v3279, %v3367
    %3369 = vmatmul.bf16.gmra.mxu0 %v480
    %v3370 = vpop.f32.mrf.mxu0
    %v3371 = vadd.f32 %v3282, %v3370
    %v3372 = vpop.f32.mrf.mxu0
    %v3373 = vadd.f32 %v3284, %v3372
    %3374 = vmatmul.bf16.gmra.mxu0 %v488
    %v3375 = vpop.f32.mrf.mxu0
    %v3376 = vadd.f32 %v3287, %v3375
    %v3377 = vpop.f32.mrf.mxu0
    %v3378 = vadd.f32 %v3289, %v3377
    %3379 = vmatmul.bf16.gmra.mxu0 %v496
    %v3380 = vpop.f32.mrf.mxu0
    %v3381 = vadd.f32 %v3292, %v3380
    %v3382 = vpop.f32.mrf.mxu0
    %v3383 = vadd.f32 %v3294, %v3382
    %3384 = vmatmul.bf16.gmra.mxu0 %v504
    %v3385 = vpop.f32.mrf.mxu0
    %v3386 = vadd.f32 %v3297, %v3385
    %v3387 = vpop.f32.mrf.mxu0
    %v3388 = vadd.f32 %v3299, %v3387
    %3389 = vmatmul.bf16.gmra.mxu0 %v512
    %v3390 = vpop.f32.mrf.mxu0
    %v3391 = vadd.f32 %v3302, %v3390
    %v3392 = vpop.f32.mrf.mxu0
    %v3393 = vadd.f32 %v3304, %v3392
    %3394 = vdwg.mxu0
    %3395 = vmatpush.bf16.msra.mxu0 %v1801
    %3396 = vmatpush.bf16.msra.mxu0 %v1797
    %3397 = vmatpush.bf16.msra.mxu0 %v1793
    %3398 = vmatpush.bf16.msra.mxu0 %v1789
    %3399 = vmatpush.bf16.msra.mxu0 %v1785
    %3400 = vmatpush.bf16.msra.mxu0 %v1781
    %3401 = vmatpush.bf16.msra.mxu0 %v1777
    %3402 = vmatpush.bf16.msra.mxu0 %v1773
    %3403 = vmatmul.bf16.gmra.mxu0 %v393
    %v3404 = vpop.f32.mrf.mxu0
    %v3405 = vadd.f32 %v3316, %v3404
    %v3406 = vpop.f32.mrf.mxu0
    %v3407 = vadd.f32 %v3318, %v3406
    %3408 = vmatmul.bf16.gmra.mxu0 %v401
    %v3409 = vpop.f32.mrf.mxu0
    %v3410 = vadd.f32 %v3321, %v3409
    %v3411 = vpop.f32.mrf.mxu0
    %v3412 = vadd.f32 %v3323, %v3411
    %3413 = vmatmul.bf16.gmra.mxu0 %v409
    %v3414 = vpop.f32.mrf.mxu0
    %v3415 = vadd.f32 %v3326, %v3414
    %v3416 = vpop.f32.mrf.mxu0
    %v3417 = vadd.f32 %v3328, %v3416
    %3418 = vmatmul.bf16.gmra.mxu0 %v417
    %v3419 = vpop.f32.mrf.mxu0
    %v3420 = vadd.f32 %v3331, %v3419
    %v3421 = vpop.f32.mrf.mxu0
    %v3422 = vadd.f32 %v3333, %v3421
    %3423 = vmatmul.bf16.gmra.mxu0 %v425
    %v3424 = vpop.f32.mrf.mxu0
    %v3425 = vadd.f32 %v3336, %v3424
    %v3426 = vpop.f32.mrf.mxu0
    %v3427 = vadd.f32 %v3338, %v3426
    %3428 = vmatmul.bf16.gmra.mxu0 %v433
    %v3429 = vpop.f32.mrf.mxu0
    %v3430 = vadd.f32 %v3341, %v3429
    %v3431 = vpop.f32.mrf.mxu0
    %v3432 = vadd.f32 %v3343, %v3431
    %3433 = vmatmul.bf16.gmra.mxu0 %v441
    %v3434 = vpop.f32.mrf.mxu0
    %v3435 = vadd.f32 %v3346, %v3434
    %v3436 = vpop.f32.mrf.mxu0
    %v3437 = vadd.f32 %v3348, %v3436
    %3438 = vmatmul.bf16.gmra.mxu0 %v449
    %v3439 = vpop.f32.mrf.mxu0
    %v3440 = vadd.f32 %v3351, %v3439
    %v3441 = vpop.f32.mrf.mxu0
    %v3442 = vadd.f32 %v3353, %v3441
    %3443 = vmatmul.bf16.gmra.mxu0 %v457
    %v3444 = vpop.f32.mrf.mxu0
    %v3445 = vadd.f32 %v3356, %v3444
    %v3446 = vpop.f32.mrf.mxu0
    %v3447 = vadd.f32 %v3358, %v3446
    %3448 = vmatmul.bf16.gmra.mxu0 %v465
    %v3449 = vpop.f32.mrf.mxu0
    %v3450 = vadd.f32 %v3361, %v3449
    %v3451 = vpop.f32.mrf.mxu0
    %v3452 = vadd.f32 %v3363, %v3451
    %3453 = vmatmul.bf16.gmra.mxu0 %v473
    %v3454 = vpop.f32.mrf.mxu0
    %v3455 = vadd.f32 %v3366, %v3454
    %v3456 = vpop.f32.mrf.mxu0
    %v3457 = vadd.f32 %v3368, %v3456
    %3458 = vmatmul.bf16.gmra.mxu0 %v481
    %v3459 = vpop.f32.mrf.mxu0
    %v3460 = vadd.f32 %v3371, %v3459
    %v3461 = vpop.f32.mrf.mxu0
    %v3462 = vadd.f32 %v3373, %v3461
    %3463 = vmatmul.bf16.gmra.mxu0 %v489
    %v3464 = vpop.f32.mrf.mxu0
    %v3465 = vadd.f32 %v3376, %v3464
    %v3466 = vpop.f32.mrf.mxu0
    %v3467 = vadd.f32 %v3378, %v3466
    %3468 = vmatmul.bf16.gmra.mxu0 %v497
    %v3469 = vpop.f32.mrf.mxu0
    %v3470 = vadd.f32 %v3381, %v3469
    %v3471 = vpop.f32.mrf.mxu0
    %v3472 = vadd.f32 %v3383, %v3471
    %3473 = vmatmul.bf16.gmra.mxu0 %v505
    %v3474 = vpop.f32.mrf.mxu0
    %v3475 = vadd.f32 %v3386, %v3474
    %v3476 = vpop.f32.mrf.mxu0
    %v3477 = vadd.f32 %v3388, %v3476
    %3478 = vmatmul.bf16.gmra.mxu0 %v513
    %v3479 = vpop.f32.mrf.mxu0
    %v3480 = vadd.f32 %v3391, %v3479
    %v3481 = vpop.f32.mrf.mxu0
    %v3482 = vadd.f32 %v3393, %v3481
    %3483 = vdwg.mxu0
    %3484 = vmatpush.bf16.msra.mxu0 %v1578
    %3485 = vmatpush.bf16.msra.mxu0 %v1574
    %3486 = vmatpush.bf16.msra.mxu0 %v1570
    %3487 = vmatpush.bf16.msra.mxu0 %v1566
    %3488 = vmatpush.bf16.msra.mxu0 %v1562
    %3489 = vmatpush.bf16.msra.mxu0 %v1558
    %3490 = vmatpush.bf16.msra.mxu0 %v1554
    %3491 = vmatpush.bf16.msra.mxu0 %v1550
    %3492 = vmatmul.bf16.gmra.mxu0 %v386
    %v3493 = vpop.f32.mrf.mxu0
    %v3494 = vadd.f32 %v774, %v3493
    %v3495 = vpop.f32.mrf.mxu0
    %v3496 = vadd.f32 %v774, %v3495
    %3497 = vmatmul.bf16.gmra.mxu0 %v394
    %v3498 = vpop.f32.mrf.mxu0
    %v3499 = vadd.f32 %v774, %v3498
    %v3500 = vpop.f32.mrf.mxu0
    %v3501 = vadd.f32 %v774, %v3500
    %3502 = vmatmul.bf16.gmra.mxu0 %v402
    %v3503 = vpop.f32.mrf.mxu0
    %v3504 = vadd.f32 %v774, %v3503
    %v3505 = vpop.f32.mrf.mxu0
    %v3506 = vadd.f32 %v774, %v3505
    %3507 = vmatmul.bf16.gmra.mxu0 %v410
    %v3508 = vpop.f32.mrf.mxu0
    %v3509 = vadd.f32 %v774, %v3508
    %v3510 = vpop.f32.mrf.mxu0
    %v3511 = vadd.f32 %v774, %v3510
    %3512 = vmatmul.bf16.gmra.mxu0 %v418
    %v3513 = vpop.f32.mrf.mxu0
    %v3514 = vadd.f32 %v774, %v3513
    %v3515 = vpop.f32.mrf.mxu0
    %v3516 = vadd.f32 %v774, %v3515
    %3517 = vmatmul.bf16.gmra.mxu0 %v426
    %v3518 = vpop.f32.mrf.mxu0
    %v3519 = vadd.f32 %v774, %v3518
    %v3520 = vpop.f32.mrf.mxu0
    %v3521 = vadd.f32 %v774, %v3520
    %3522 = vmatmul.bf16.gmra.mxu0 %v434
    %v3523 = vpop.f32.mrf.mxu0
    %v3524 = vadd.f32 %v774, %v3523
    %v3525 = vpop.f32.mrf.mxu0
    %v3526 = vadd.f32 %v774, %v3525
    %3527 = vmatmul.bf16.gmra.mxu0 %v442
    %v3528 = vpop.f32.mrf.mxu0
    %v3529 = vadd.f32 %v774, %v3528
    %v3530 = vpop.f32.mrf.mxu0
    %v3531 = vadd.f32 %v774, %v3530
    %3532 = vmatmul.bf16.gmra.mxu0 %v450
    %v3533 = vpop.f32.mrf.mxu0
    %v3534 = vadd.f32 %v774, %v3533
    %v3535 = vpop.f32.mrf.mxu0
    %v3536 = vadd.f32 %v774, %v3535
    %3537 = vmatmul.bf16.gmra.mxu0 %v458
    %v3538 = vpop.f32.mrf.mxu0
    %v3539 = vadd.f32 %v774, %v3538
    %v3540 = vpop.f32.mrf.mxu0
    %v3541 = vadd.f32 %v774, %v3540
    %3542 = vmatmul.bf16.gmra.mxu0 %v466
    %v3543 = vpop.f32.mrf.mxu0
    %v3544 = vadd.f32 %v774, %v3543
    %v3545 = vpop.f32.mrf.mxu0
    %v3546 = vadd.f32 %v774, %v3545
    %3547 = vmatmul.bf16.gmra.mxu0 %v474
    %v3548 = vpop.f32.mrf.mxu0
    %v3549 = vadd.f32 %v774, %v3548
    %v3550 = vpop.f32.mrf.mxu0
    %v3551 = vadd.f32 %v774, %v3550
    %3552 = vmatmul.bf16.gmra.mxu0 %v482
    %v3553 = vpop.f32.mrf.mxu0
    %v3554 = vadd.f32 %v774, %v3553
    %v3555 = vpop.f32.mrf.mxu0
    %v3556 = vadd.f32 %v774, %v3555
    %3557 = vmatmul.bf16.gmra.mxu0 %v490
    %v3558 = vpop.f32.mrf.mxu0
    %v3559 = vadd.f32 %v774, %v3558
    %v3560 = vpop.f32.mrf.mxu0
    %v3561 = vadd.f32 %v774, %v3560
    %3562 = vmatmul.bf16.gmra.mxu0 %v498
    %v3563 = vpop.f32.mrf.mxu0
    %v3564 = vadd.f32 %v774, %v3563
    %v3565 = vpop.f32.mrf.mxu0
    %v3566 = vadd.f32 %v774, %v3565
    %3567 = vmatmul.bf16.gmra.mxu0 %v506
    %v3568 = vpop.f32.mrf.mxu0
    %v3569 = vadd.f32 %v774, %v3568
    %v3570 = vpop.f32.mrf.mxu0
    %v3571 = vadd.f32 %v774, %v3570
    %3572 = vdwg.mxu0
    %3573 = vmatpush.bf16.msra.mxu0 %v1610
    %3574 = vmatpush.bf16.msra.mxu0 %v1606
    %3575 = vmatpush.bf16.msra.mxu0 %v1602
    %3576 = vmatpush.bf16.msra.mxu0 %v1598
    %3577 = vmatpush.bf16.msra.mxu0 %v1594
    %3578 = vmatpush.bf16.msra.mxu0 %v1590
    %3579 = vmatpush.bf16.msra.mxu0 %v1586
    %3580 = vmatpush.bf16.msra.mxu0 %v1582
    %3581 = vmatmul.bf16.gmra.mxu0 %v387
    %v3582 = vpop.f32.mrf.mxu0
    %v3583 = vadd.f32 %v3494, %v3582
    %v3584 = vpop.f32.mrf.mxu0
    %v3585 = vadd.f32 %v3496, %v3584
    %3586 = vmatmul.bf16.gmra.mxu0 %v395
    %v3587 = vpop.f32.mrf.mxu0
    %v3588 = vadd.f32 %v3499, %v3587
    %v3589 = vpop.f32.mrf.mxu0
    %v3590 = vadd.f32 %v3501, %v3589
    %3591 = vmatmul.bf16.gmra.mxu0 %v403
    %v3592 = vpop.f32.mrf.mxu0
    %v3593 = vadd.f32 %v3504, %v3592
    %v3594 = vpop.f32.mrf.mxu0
    %v3595 = vadd.f32 %v3506, %v3594
    %3596 = vmatmul.bf16.gmra.mxu0 %v411
    %v3597 = vpop.f32.mrf.mxu0
    %v3598 = vadd.f32 %v3509, %v3597
    %v3599 = vpop.f32.mrf.mxu0
    %v3600 = vadd.f32 %v3511, %v3599
    %3601 = vmatmul.bf16.gmra.mxu0 %v419
    %v3602 = vpop.f32.mrf.mxu0
    %v3603 = vadd.f32 %v3514, %v3602
    %v3604 = vpop.f32.mrf.mxu0
    %v3605 = vadd.f32 %v3516, %v3604
    %3606 = vmatmul.bf16.gmra.mxu0 %v427
    %v3607 = vpop.f32.mrf.mxu0
    %v3608 = vadd.f32 %v3519, %v3607
    %v3609 = vpop.f32.mrf.mxu0
    %v3610 = vadd.f32 %v3521, %v3609
    %3611 = vmatmul.bf16.gmra.mxu0 %v435
    %v3612 = vpop.f32.mrf.mxu0
    %v3613 = vadd.f32 %v3524, %v3612
    %v3614 = vpop.f32.mrf.mxu0
    %v3615 = vadd.f32 %v3526, %v3614
    %3616 = vmatmul.bf16.gmra.mxu0 %v443
    %v3617 = vpop.f32.mrf.mxu0
    %v3618 = vadd.f32 %v3529, %v3617
    %v3619 = vpop.f32.mrf.mxu0
    %v3620 = vadd.f32 %v3531, %v3619
    %3621 = vmatmul.bf16.gmra.mxu0 %v451
    %v3622 = vpop.f32.mrf.mxu0
    %v3623 = vadd.f32 %v3534, %v3622
    %v3624 = vpop.f32.mrf.mxu0
    %v3625 = vadd.f32 %v3536, %v3624
    %3626 = vmatmul.bf16.gmra.mxu0 %v459
    %v3627 = vpop.f32.mrf.mxu0
    %v3628 = vadd.f32 %v3539, %v3627
    %v3629 = vpop.f32.mrf.mxu0
    %v3630 = vadd.f32 %v3541, %v3629
    %3631 = vmatmul.bf16.gmra.mxu0 %v467
    %v3632 = vpop.f32.mrf.mxu0
    %v3633 = vadd.f32 %v3544, %v3632
    %v3634 = vpop.f32.mrf.mxu0
    %v3635 = vadd.f32 %v3546, %v3634
    %3636 = vmatmul.bf16.gmra.mxu0 %v475
    %v3637 = vpop.f32.mrf.mxu0
    %v3638 = vadd.f32 %v3549, %v3637
    %v3639 = vpop.f32.mrf.mxu0
    %v3640 = vadd.f32 %v3551, %v3639
    %3641 = vmatmul.bf16.gmra.mxu0 %v483
    %v3642 = vpop.f32.mrf.mxu0
    %v3643 = vadd.f32 %v3554, %v3642
    %v3644 = vpop.f32.mrf.mxu0
    %v3645 = vadd.f32 %v3556, %v3644
    %3646 = vmatmul.bf16.gmra.mxu0 %v491
    %v3647 = vpop.f32.mrf.mxu0
    %v3648 = vadd.f32 %v3559, %v3647
    %v3649 = vpop.f32.mrf.mxu0
    %v3650 = vadd.f32 %v3561, %v3649
    %3651 = vmatmul.bf16.gmra.mxu0 %v499
    %v3652 = vpop.f32.mrf.mxu0
    %v3653 = vadd.f32 %v3564, %v3652
    %v3654 = vpop.f32.mrf.mxu0
    %v3655 = vadd.f32 %v3566, %v3654
    %3656 = vmatmul.bf16.gmra.mxu0 %v507
    %v3657 = vpop.f32.mrf.mxu0
    %v3658 = vadd.f32 %v3569, %v3657
    %v3659 = vpop.f32.mrf.mxu0
    %v3660 = vadd.f32 %v3571, %v3659
    %3661 = vdwg.mxu0
    %3662 = vmatpush.bf16.msra.mxu0 %v1642
    %3663 = vmatpush.bf16.msra.mxu0 %v1638
    %3664 = vmatpush.bf16.msra.mxu0 %v1634
    %3665 = vmatpush.bf16.msra.mxu0 %v1630
    %3666 = vmatpush.bf16.msra.mxu0 %v1626
    %3667 = vmatpush.bf16.msra.mxu0 %v1622
    %3668 = vmatpush.bf16.msra.mxu0 %v1618
    %3669 = vmatpush.bf16.msra.mxu0 %v1614
    %3670 = vmatmul.bf16.gmra.mxu0 %v388
    %v3671 = vpop.f32.mrf.mxu0
    %v3672 = vadd.f32 %v3583, %v3671
    %v3673 = vpop.f32.mrf.mxu0
    %v3674 = vadd.f32 %v3585, %v3673
    %3675 = vmatmul.bf16.gmra.mxu0 %v396
    %v3676 = vpop.f32.mrf.mxu0
    %v3677 = vadd.f32 %v3588, %v3676
    %v3678 = vpop.f32.mrf.mxu0
    %v3679 = vadd.f32 %v3590, %v3678
    %3680 = vmatmul.bf16.gmra.mxu0 %v404
    %v3681 = vpop.f32.mrf.mxu0
    %v3682 = vadd.f32 %v3593, %v3681
    %v3683 = vpop.f32.mrf.mxu0
    %v3684 = vadd.f32 %v3595, %v3683
    %3685 = vmatmul.bf16.gmra.mxu0 %v412
    %v3686 = vpop.f32.mrf.mxu0
    %v3687 = vadd.f32 %v3598, %v3686
    %v3688 = vpop.f32.mrf.mxu0
    %v3689 = vadd.f32 %v3600, %v3688
    %3690 = vmatmul.bf16.gmra.mxu0 %v420
    %v3691 = vpop.f32.mrf.mxu0
    %v3692 = vadd.f32 %v3603, %v3691
    %v3693 = vpop.f32.mrf.mxu0
    %v3694 = vadd.f32 %v3605, %v3693
    %3695 = vmatmul.bf16.gmra.mxu0 %v428
    %v3696 = vpop.f32.mrf.mxu0
    %v3697 = vadd.f32 %v3608, %v3696
    %v3698 = vpop.f32.mrf.mxu0
    %v3699 = vadd.f32 %v3610, %v3698
    %3700 = vmatmul.bf16.gmra.mxu0 %v436
    %v3701 = vpop.f32.mrf.mxu0
    %v3702 = vadd.f32 %v3613, %v3701
    %v3703 = vpop.f32.mrf.mxu0
    %v3704 = vadd.f32 %v3615, %v3703
    %3705 = vmatmul.bf16.gmra.mxu0 %v444
    %v3706 = vpop.f32.mrf.mxu0
    %v3707 = vadd.f32 %v3618, %v3706
    %v3708 = vpop.f32.mrf.mxu0
    %v3709 = vadd.f32 %v3620, %v3708
    %3710 = vmatmul.bf16.gmra.mxu0 %v452
    %v3711 = vpop.f32.mrf.mxu0
    %v3712 = vadd.f32 %v3623, %v3711
    %v3713 = vpop.f32.mrf.mxu0
    %v3714 = vadd.f32 %v3625, %v3713
    %3715 = vmatmul.bf16.gmra.mxu0 %v460
    %v3716 = vpop.f32.mrf.mxu0
    %v3717 = vadd.f32 %v3628, %v3716
    %v3718 = vpop.f32.mrf.mxu0
    %v3719 = vadd.f32 %v3630, %v3718
    %3720 = vmatmul.bf16.gmra.mxu0 %v468
    %v3721 = vpop.f32.mrf.mxu0
    %v3722 = vadd.f32 %v3633, %v3721
    %v3723 = vpop.f32.mrf.mxu0
    %v3724 = vadd.f32 %v3635, %v3723
    %3725 = vmatmul.bf16.gmra.mxu0 %v476
    %v3726 = vpop.f32.mrf.mxu0
    %v3727 = vadd.f32 %v3638, %v3726
    %v3728 = vpop.f32.mrf.mxu0
    %v3729 = vadd.f32 %v3640, %v3728
    %3730 = vmatmul.bf16.gmra.mxu0 %v484
    %v3731 = vpop.f32.mrf.mxu0
    %v3732 = vadd.f32 %v3643, %v3731
    %v3733 = vpop.f32.mrf.mxu0
    %v3734 = vadd.f32 %v3645, %v3733
    %3735 = vmatmul.bf16.gmra.mxu0 %v492
    %v3736 = vpop.f32.mrf.mxu0
    %v3737 = vadd.f32 %v3648, %v3736
    %v3738 = vpop.f32.mrf.mxu0
    %v3739 = vadd.f32 %v3650, %v3738
    %3740 = vmatmul.bf16.gmra.mxu0 %v500
    %v3741 = vpop.f32.mrf.mxu0
    %v3742 = vadd.f32 %v3653, %v3741
    %v3743 = vpop.f32.mrf.mxu0
    %v3744 = vadd.f32 %v3655, %v3743
    %3745 = vmatmul.bf16.gmra.mxu0 %v508
    %v3746 = vpop.f32.mrf.mxu0
    %v3747 = vadd.f32 %v3658, %v3746
    %v3748 = vpop.f32.mrf.mxu0
    %v3749 = vadd.f32 %v3660, %v3748
    %3750 = vdwg.mxu0
    %3751 = vmatpush.bf16.msra.mxu0 %v1674
    %3752 = vmatpush.bf16.msra.mxu0 %v1670
    %3753 = vmatpush.bf16.msra.mxu0 %v1666
    %3754 = vmatpush.bf16.msra.mxu0 %v1662
    %3755 = vmatpush.bf16.msra.mxu0 %v1658
    %3756 = vmatpush.bf16.msra.mxu0 %v1654
    %3757 = vmatpush.bf16.msra.mxu0 %v1650
    %3758 = vmatpush.bf16.msra.mxu0 %v1646
    %3759 = vmatmul.bf16.gmra.mxu0 %v389
    %v3760 = vpop.f32.mrf.mxu0
    %v3761 = vadd.f32 %v3672, %v3760
    %v3762 = vpop.f32.mrf.mxu0
    %v3763 = vadd.f32 %v3674, %v3762
    %3764 = vmatmul.bf16.gmra.mxu0 %v397
    %v3765 = vpop.f32.mrf.mxu0
    %v3766 = vadd.f32 %v3677, %v3765
    %v3767 = vpop.f32.mrf.mxu0
    %v3768 = vadd.f32 %v3679, %v3767
    %3769 = vmatmul.bf16.gmra.mxu0 %v405
    %v3770 = vpop.f32.mrf.mxu0
    %v3771 = vadd.f32 %v3682, %v3770
    %v3772 = vpop.f32.mrf.mxu0
    %v3773 = vadd.f32 %v3684, %v3772
    %3774 = vmatmul.bf16.gmra.mxu0 %v413
    %v3775 = vpop.f32.mrf.mxu0
    %v3776 = vadd.f32 %v3687, %v3775
    %v3777 = vpop.f32.mrf.mxu0
    %v3778 = vadd.f32 %v3689, %v3777
    %3779 = vmatmul.bf16.gmra.mxu0 %v421
    %v3780 = vpop.f32.mrf.mxu0
    %v3781 = vadd.f32 %v3692, %v3780
    %v3782 = vpop.f32.mrf.mxu0
    %v3783 = vadd.f32 %v3694, %v3782
    %3784 = vmatmul.bf16.gmra.mxu0 %v429
    %v3785 = vpop.f32.mrf.mxu0
    %v3786 = vadd.f32 %v3697, %v3785
    %v3787 = vpop.f32.mrf.mxu0
    %v3788 = vadd.f32 %v3699, %v3787
    %3789 = vmatmul.bf16.gmra.mxu0 %v437
    %v3790 = vpop.f32.mrf.mxu0
    %v3791 = vadd.f32 %v3702, %v3790
    %v3792 = vpop.f32.mrf.mxu0
    %v3793 = vadd.f32 %v3704, %v3792
    %3794 = vmatmul.bf16.gmra.mxu0 %v445
    %v3795 = vpop.f32.mrf.mxu0
    %v3796 = vadd.f32 %v3707, %v3795
    %v3797 = vpop.f32.mrf.mxu0
    %v3798 = vadd.f32 %v3709, %v3797
    %3799 = vmatmul.bf16.gmra.mxu0 %v453
    %v3800 = vpop.f32.mrf.mxu0
    %v3801 = vadd.f32 %v3712, %v3800
    %v3802 = vpop.f32.mrf.mxu0
    %v3803 = vadd.f32 %v3714, %v3802
    %3804 = vmatmul.bf16.gmra.mxu0 %v461
    %v3805 = vpop.f32.mrf.mxu0
    %v3806 = vadd.f32 %v3717, %v3805
    %v3807 = vpop.f32.mrf.mxu0
    %v3808 = vadd.f32 %v3719, %v3807
    %3809 = vmatmul.bf16.gmra.mxu0 %v469
    %v3810 = vpop.f32.mrf.mxu0
    %v3811 = vadd.f32 %v3722, %v3810
    %v3812 = vpop.f32.mrf.mxu0
    %v3813 = vadd.f32 %v3724, %v3812
    %3814 = vmatmul.bf16.gmra.mxu0 %v477
    %v3815 = vpop.f32.mrf.mxu0
    %v3816 = vadd.f32 %v3727, %v3815
    %v3817 = vpop.f32.mrf.mxu0
    %v3818 = vadd.f32 %v3729, %v3817
    %3819 = vmatmul.bf16.gmra.mxu0 %v485
    %v3820 = vpop.f32.mrf.mxu0
    %v3821 = vadd.f32 %v3732, %v3820
    %v3822 = vpop.f32.mrf.mxu0
    %v3823 = vadd.f32 %v3734, %v3822
    %3824 = vmatmul.bf16.gmra.mxu0 %v493
    %v3825 = vpop.f32.mrf.mxu0
    %v3826 = vadd.f32 %v3737, %v3825
    %v3827 = vpop.f32.mrf.mxu0
    %v3828 = vadd.f32 %v3739, %v3827
    %3829 = vmatmul.bf16.gmra.mxu0 %v501
    %v3830 = vpop.f32.mrf.mxu0
    %v3831 = vadd.f32 %v3742, %v3830
    %v3832 = vpop.f32.mrf.mxu0
    %v3833 = vadd.f32 %v3744, %v3832
    %3834 = vmatmul.bf16.gmra.mxu0 %v509
    %v3835 = vpop.f32.mrf.mxu0
    %v3836 = vadd.f32 %v3747, %v3835
    %v3837 = vpop.f32.mrf.mxu0
    %v3838 = vadd.f32 %v3749, %v3837
    %3839 = vdwg.mxu0
    %3840 = vmatpush.bf16.msra.mxu0 %v1706
    %3841 = vmatpush.bf16.msra.mxu0 %v1702
    %3842 = vmatpush.bf16.msra.mxu0 %v1698
    %3843 = vmatpush.bf16.msra.mxu0 %v1694
    %3844 = vmatpush.bf16.msra.mxu0 %v1690
    %3845 = vmatpush.bf16.msra.mxu0 %v1686
    %3846 = vmatpush.bf16.msra.mxu0 %v1682
    %3847 = vmatpush.bf16.msra.mxu0 %v1678
    %3848 = vmatmul.bf16.gmra.mxu0 %v390
    %v3849 = vpop.f32.mrf.mxu0
    %v3850 = vadd.f32 %v3761, %v3849
    %v3851 = vpop.f32.mrf.mxu0
    %v3852 = vadd.f32 %v3763, %v3851
    %3853 = vmatmul.bf16.gmra.mxu0 %v398
    %v3854 = vpop.f32.mrf.mxu0
    %v3855 = vadd.f32 %v3766, %v3854
    %v3856 = vpop.f32.mrf.mxu0
    %v3857 = vadd.f32 %v3768, %v3856
    %3858 = vmatmul.bf16.gmra.mxu0 %v406
    %v3859 = vpop.f32.mrf.mxu0
    %v3860 = vadd.f32 %v3771, %v3859
    %v3861 = vpop.f32.mrf.mxu0
    %v3862 = vadd.f32 %v3773, %v3861
    %3863 = vmatmul.bf16.gmra.mxu0 %v414
    %v3864 = vpop.f32.mrf.mxu0
    %v3865 = vadd.f32 %v3776, %v3864
    %v3866 = vpop.f32.mrf.mxu0
    %v3867 = vadd.f32 %v3778, %v3866
    %3868 = vmatmul.bf16.gmra.mxu0 %v422
    %v3869 = vpop.f32.mrf.mxu0
    %v3870 = vadd.f32 %v3781, %v3869
    %v3871 = vpop.f32.mrf.mxu0
    %v3872 = vadd.f32 %v3783, %v3871
    %3873 = vmatmul.bf16.gmra.mxu0 %v430
    %v3874 = vpop.f32.mrf.mxu0
    %v3875 = vadd.f32 %v3786, %v3874
    %v3876 = vpop.f32.mrf.mxu0
    %v3877 = vadd.f32 %v3788, %v3876
    %3878 = vmatmul.bf16.gmra.mxu0 %v438
    %v3879 = vpop.f32.mrf.mxu0
    %v3880 = vadd.f32 %v3791, %v3879
    %v3881 = vpop.f32.mrf.mxu0
    %v3882 = vadd.f32 %v3793, %v3881
    %3883 = vmatmul.bf16.gmra.mxu0 %v446
    %v3884 = vpop.f32.mrf.mxu0
    %v3885 = vadd.f32 %v3796, %v3884
    %v3886 = vpop.f32.mrf.mxu0
    %v3887 = vadd.f32 %v3798, %v3886
    %3888 = vmatmul.bf16.gmra.mxu0 %v454
    %v3889 = vpop.f32.mrf.mxu0
    %v3890 = vadd.f32 %v3801, %v3889
    %v3891 = vpop.f32.mrf.mxu0
    %v3892 = vadd.f32 %v3803, %v3891
    %3893 = vmatmul.bf16.gmra.mxu0 %v462
    %v3894 = vpop.f32.mrf.mxu0
    %v3895 = vadd.f32 %v3806, %v3894
    %v3896 = vpop.f32.mrf.mxu0
    %v3897 = vadd.f32 %v3808, %v3896
    %3898 = vmatmul.bf16.gmra.mxu0 %v470
    %v3899 = vpop.f32.mrf.mxu0
    %v3900 = vadd.f32 %v3811, %v3899
    %v3901 = vpop.f32.mrf.mxu0
    %v3902 = vadd.f32 %v3813, %v3901
    %3903 = vmatmul.bf16.gmra.mxu0 %v478
    %v3904 = vpop.f32.mrf.mxu0
    %v3905 = vadd.f32 %v3816, %v3904
    %v3906 = vpop.f32.mrf.mxu0
    %v3907 = vadd.f32 %v3818, %v3906
    %3908 = vmatmul.bf16.gmra.mxu0 %v486
    %v3909 = vpop.f32.mrf.mxu0
    %v3910 = vadd.f32 %v3821, %v3909
    %v3911 = vpop.f32.mrf.mxu0
    %v3912 = vadd.f32 %v3823, %v3911
    %3913 = vmatmul.bf16.gmra.mxu0 %v494
    %v3914 = vpop.f32.mrf.mxu0
    %v3915 = vadd.f32 %v3826, %v3914
    %v3916 = vpop.f32.mrf.mxu0
    %v3917 = vadd.f32 %v3828, %v3916
    %3918 = vmatmul.bf16.gmra.mxu0 %v502
    %v3919 = vpop.f32.mrf.mxu0
    %v3920 = vadd.f32 %v3831, %v3919
    %v3921 = vpop.f32.mrf.mxu0
    %v3922 = vadd.f32 %v3833, %v3921
    %3923 = vmatmul.bf16.gmra.mxu0 %v510
    %v3924 = vpop.f32.mrf.mxu0
    %v3925 = vadd.f32 %v3836, %v3924
    %v3926 = vpop.f32.mrf.mxu0
    %v3927 = vadd.f32 %v3838, %v3926
    %3928 = vdwg.mxu0
    %3929 = vmatpush.bf16.msra.mxu0 %v1738
    %3930 = vmatpush.bf16.msra.mxu0 %v1734
    %3931 = vmatpush.bf16.msra.mxu0 %v1730
    %3932 = vmatpush.bf16.msra.mxu0 %v1726
    %3933 = vmatpush.bf16.msra.mxu0 %v1722
    %3934 = vmatpush.bf16.msra.mxu0 %v1718
    %3935 = vmatpush.bf16.msra.mxu0 %v1714
    %3936 = vmatpush.bf16.msra.mxu0 %v1710
    %3937 = vmatmul.bf16.gmra.mxu0 %v391
    %v3938 = vpop.f32.mrf.mxu0
    %v3939 = vadd.f32 %v3850, %v3938
    %v3940 = vpop.f32.mrf.mxu0
    %v3941 = vadd.f32 %v3852, %v3940
    %3942 = vmatmul.bf16.gmra.mxu0 %v399
    %v3943 = vpop.f32.mrf.mxu0
    %v3944 = vadd.f32 %v3855, %v3943
    %v3945 = vpop.f32.mrf.mxu0
    %v3946 = vadd.f32 %v3857, %v3945
    %3947 = vmatmul.bf16.gmra.mxu0 %v407
    %v3948 = vpop.f32.mrf.mxu0
    %v3949 = vadd.f32 %v3860, %v3948
    %v3950 = vpop.f32.mrf.mxu0
    %v3951 = vadd.f32 %v3862, %v3950
    %3952 = vmatmul.bf16.gmra.mxu0 %v415
    %v3953 = vpop.f32.mrf.mxu0
    %v3954 = vadd.f32 %v3865, %v3953
    %v3955 = vpop.f32.mrf.mxu0
    %v3956 = vadd.f32 %v3867, %v3955
    %3957 = vmatmul.bf16.gmra.mxu0 %v423
    %v3958 = vpop.f32.mrf.mxu0
    %v3959 = vadd.f32 %v3870, %v3958
    %v3960 = vpop.f32.mrf.mxu0
    %v3961 = vadd.f32 %v3872, %v3960
    %3962 = vmatmul.bf16.gmra.mxu0 %v431
    %v3963 = vpop.f32.mrf.mxu0
    %v3964 = vadd.f32 %v3875, %v3963
    %v3965 = vpop.f32.mrf.mxu0
    %v3966 = vadd.f32 %v3877, %v3965
    %3967 = vmatmul.bf16.gmra.mxu0 %v439
    %v3968 = vpop.f32.mrf.mxu0
    %v3969 = vadd.f32 %v3880, %v3968
    %v3970 = vpop.f32.mrf.mxu0
    %v3971 = vadd.f32 %v3882, %v3970
    %3972 = vmatmul.bf16.gmra.mxu0 %v447
    %v3973 = vpop.f32.mrf.mxu0
    %v3974 = vadd.f32 %v3885, %v3973
    %v3975 = vpop.f32.mrf.mxu0
    %v3976 = vadd.f32 %v3887, %v3975
    %3977 = vmatmul.bf16.gmra.mxu0 %v455
    %v3978 = vpop.f32.mrf.mxu0
    %v3979 = vadd.f32 %v3890, %v3978
    %v3980 = vpop.f32.mrf.mxu0
    %v3981 = vadd.f32 %v3892, %v3980
    %3982 = vmatmul.bf16.gmra.mxu0 %v463
    %v3983 = vpop.f32.mrf.mxu0
    %v3984 = vadd.f32 %v3895, %v3983
    %v3985 = vpop.f32.mrf.mxu0
    %v3986 = vadd.f32 %v3897, %v3985
    %3987 = vmatmul.bf16.gmra.mxu0 %v471
    %v3988 = vpop.f32.mrf.mxu0
    %v3989 = vadd.f32 %v3900, %v3988
    %v3990 = vpop.f32.mrf.mxu0
    %v3991 = vadd.f32 %v3902, %v3990
    %3992 = vmatmul.bf16.gmra.mxu0 %v479
    %v3993 = vpop.f32.mrf.mxu0
    %v3994 = vadd.f32 %v3905, %v3993
    %v3995 = vpop.f32.mrf.mxu0
    %v3996 = vadd.f32 %v3907, %v3995
    %3997 = vmatmul.bf16.gmra.mxu0 %v487
    %v3998 = vpop.f32.mrf.mxu0
    %v3999 = vadd.f32 %v3910, %v3998
    %v4000 = vpop.f32.mrf.mxu0
    %v4001 = vadd.f32 %v3912, %v4000
    %4002 = vmatmul.bf16.gmra.mxu0 %v495
    %v4003 = vpop.f32.mrf.mxu0
    %v4004 = vadd.f32 %v3915, %v4003
    %v4005 = vpop.f32.mrf.mxu0
    %v4006 = vadd.f32 %v3917, %v4005
    %4007 = vmatmul.bf16.gmra.mxu0 %v503
    %v4008 = vpop.f32.mrf.mxu0
    %v4009 = vadd.f32 %v3920, %v4008
    %v4010 = vpop.f32.mrf.mxu0
    %v4011 = vadd.f32 %v3922, %v4010
    %4012 = vmatmul.bf16.gmra.mxu0 %v511
    %v4013 = vpop.f32.mrf.mxu0
    %v4014 = vadd.f32 %v3925, %v4013
    %v4015 = vpop.f32.mrf.mxu0
    %v4016 = vadd.f32 %v3927, %v4015
    %4017 = vdwg.mxu0
    %4018 = vmatpush.bf16.msra.mxu0 %v1770
    %4019 = vmatpush.bf16.msra.mxu0 %v1766
    %4020 = vmatpush.bf16.msra.mxu0 %v1762
    %4021 = vmatpush.bf16.msra.mxu0 %v1758
    %4022 = vmatpush.bf16.msra.mxu0 %v1754
    %4023 = vmatpush.bf16.msra.mxu0 %v1750
    %4024 = vmatpush.bf16.msra.mxu0 %v1746
    %4025 = vmatpush.bf16.msra.mxu0 %v1742
    %4026 = vmatmul.bf16.gmra.mxu0 %v392
    %v4027 = vpop.f32.mrf.mxu0
    %v4028 = vadd.f32 %v3939, %v4027
    %v4029 = vpop.f32.mrf.mxu0
    %v4030 = vadd.f32 %v3941, %v4029
    %4031 = vmatmul.bf16.gmra.mxu0 %v400
    %v4032 = vpop.f32.mrf.mxu0
    %v4033 = vadd.f32 %v3944, %v4032
    %v4034 = vpop.f32.mrf.mxu0
    %v4035 = vadd.f32 %v3946, %v4034
    %4036 = vmatmul.bf16.gmra.mxu0 %v408
    %v4037 = vpop.f32.mrf.mxu0
    %v4038 = vadd.f32 %v3949, %v4037
    %v4039 = vpop.f32.mrf.mxu0
    %v4040 = vadd.f32 %v3951, %v4039
    %4041 = vmatmul.bf16.gmra.mxu0 %v416
    %v4042 = vpop.f32.mrf.mxu0
    %v4043 = vadd.f32 %v3954, %v4042
    %v4044 = vpop.f32.mrf.mxu0
    %v4045 = vadd.f32 %v3956, %v4044
    %4046 = vmatmul.bf16.gmra.mxu0 %v424
    %v4047 = vpop.f32.mrf.mxu0
    %v4048 = vadd.f32 %v3959, %v4047
    %v4049 = vpop.f32.mrf.mxu0
    %v4050 = vadd.f32 %v3961, %v4049
    %4051 = vmatmul.bf16.gmra.mxu0 %v432
    %v4052 = vpop.f32.mrf.mxu0
    %v4053 = vadd.f32 %v3964, %v4052
    %v4054 = vpop.f32.mrf.mxu0
    %v4055 = vadd.f32 %v3966, %v4054
    %4056 = vmatmul.bf16.gmra.mxu0 %v440
    %v4057 = vpop.f32.mrf.mxu0
    %v4058 = vadd.f32 %v3969, %v4057
    %v4059 = vpop.f32.mrf.mxu0
    %v4060 = vadd.f32 %v3971, %v4059
    %4061 = vmatmul.bf16.gmra.mxu0 %v448
    %v4062 = vpop.f32.mrf.mxu0
    %v4063 = vadd.f32 %v3974, %v4062
    %v4064 = vpop.f32.mrf.mxu0
    %v4065 = vadd.f32 %v3976, %v4064
    %4066 = vmatmul.bf16.gmra.mxu0 %v456
    %v4067 = vpop.f32.mrf.mxu0
    %v4068 = vadd.f32 %v3979, %v4067
    %v4069 = vpop.f32.mrf.mxu0
    %v4070 = vadd.f32 %v3981, %v4069
    %4071 = vmatmul.bf16.gmra.mxu0 %v464
    %v4072 = vpop.f32.mrf.mxu0
    %v4073 = vadd.f32 %v3984, %v4072
    %v4074 = vpop.f32.mrf.mxu0
    %v4075 = vadd.f32 %v3986, %v4074
    %4076 = vmatmul.bf16.gmra.mxu0 %v472
    %v4077 = vpop.f32.mrf.mxu0
    %v4078 = vadd.f32 %v3989, %v4077
    %v4079 = vpop.f32.mrf.mxu0
    %v4080 = vadd.f32 %v3991, %v4079
    %4081 = vmatmul.bf16.gmra.mxu0 %v480
    %v4082 = vpop.f32.mrf.mxu0
    %v4083 = vadd.f32 %v3994, %v4082
    %v4084 = vpop.f32.mrf.mxu0
    %v4085 = vadd.f32 %v3996, %v4084
    %4086 = vmatmul.bf16.gmra.mxu0 %v488
    %v4087 = vpop.f32.mrf.mxu0
    %v4088 = vadd.f32 %v3999, %v4087
    %v4089 = vpop.f32.mrf.mxu0
    %v4090 = vadd.f32 %v4001, %v4089
    %4091 = vmatmul.bf16.gmra.mxu0 %v496
    %v4092 = vpop.f32.mrf.mxu0
    %v4093 = vadd.f32 %v4004, %v4092
    %v4094 = vpop.f32.mrf.mxu0
    %v4095 = vadd.f32 %v4006, %v4094
    %4096 = vmatmul.bf16.gmra.mxu0 %v504
    %v4097 = vpop.f32.mrf.mxu0
    %v4098 = vadd.f32 %v4009, %v4097
    %v4099 = vpop.f32.mrf.mxu0
    %v4100 = vadd.f32 %v4011, %v4099
    %4101 = vmatmul.bf16.gmra.mxu0 %v512
    %v4102 = vpop.f32.mrf.mxu0
    %v4103 = vadd.f32 %v4014, %v4102
    %v4104 = vpop.f32.mrf.mxu0
    %v4105 = vadd.f32 %v4016, %v4104
    %4106 = vdwg.mxu0
    %4107 = vmatpush.bf16.msra.mxu0 %v1802
    %4108 = vmatpush.bf16.msra.mxu0 %v1798
    %4109 = vmatpush.bf16.msra.mxu0 %v1794
    %4110 = vmatpush.bf16.msra.mxu0 %v1790
    %4111 = vmatpush.bf16.msra.mxu0 %v1786
    %4112 = vmatpush.bf16.msra.mxu0 %v1782
    %4113 = vmatpush.bf16.msra.mxu0 %v1778
    %4114 = vmatpush.bf16.msra.mxu0 %v1774
    %4115 = vmatmul.bf16.gmra.mxu0 %v393
    %v4116 = vpop.f32.mrf.mxu0
    %v4117 = vadd.f32 %v4028, %v4116
    %v4118 = vpop.f32.mrf.mxu0
    %v4119 = vadd.f32 %v4030, %v4118
    %4120 = vmatmul.bf16.gmra.mxu0 %v401
    %v4121 = vpop.f32.mrf.mxu0
    %v4122 = vadd.f32 %v4033, %v4121
    %v4123 = vpop.f32.mrf.mxu0
    %v4124 = vadd.f32 %v4035, %v4123
    %4125 = vmatmul.bf16.gmra.mxu0 %v409
    %v4126 = vpop.f32.mrf.mxu0
    %v4127 = vadd.f32 %v4038, %v4126
    %v4128 = vpop.f32.mrf.mxu0
    %v4129 = vadd.f32 %v4040, %v4128
    %4130 = vmatmul.bf16.gmra.mxu0 %v417
    %v4131 = vpop.f32.mrf.mxu0
    %v4132 = vadd.f32 %v4043, %v4131
    %v4133 = vpop.f32.mrf.mxu0
    %v4134 = vadd.f32 %v4045, %v4133
    %4135 = vmatmul.bf16.gmra.mxu0 %v425
    %v4136 = vpop.f32.mrf.mxu0
    %v4137 = vadd.f32 %v4048, %v4136
    %v4138 = vpop.f32.mrf.mxu0
    %v4139 = vadd.f32 %v4050, %v4138
    %4140 = vmatmul.bf16.gmra.mxu0 %v433
    %v4141 = vpop.f32.mrf.mxu0
    %v4142 = vadd.f32 %v4053, %v4141
    %v4143 = vpop.f32.mrf.mxu0
    %v4144 = vadd.f32 %v4055, %v4143
    %4145 = vmatmul.bf16.gmra.mxu0 %v441
    %v4146 = vpop.f32.mrf.mxu0
    %v4147 = vadd.f32 %v4058, %v4146
    %v4148 = vpop.f32.mrf.mxu0
    %v4149 = vadd.f32 %v4060, %v4148
    %4150 = vmatmul.bf16.gmra.mxu0 %v449
    %v4151 = vpop.f32.mrf.mxu0
    %v4152 = vadd.f32 %v4063, %v4151
    %v4153 = vpop.f32.mrf.mxu0
    %v4154 = vadd.f32 %v4065, %v4153
    %4155 = vmatmul.bf16.gmra.mxu0 %v457
    %v4156 = vpop.f32.mrf.mxu0
    %v4157 = vadd.f32 %v4068, %v4156
    %v4158 = vpop.f32.mrf.mxu0
    %v4159 = vadd.f32 %v4070, %v4158
    %4160 = vmatmul.bf16.gmra.mxu0 %v465
    %v4161 = vpop.f32.mrf.mxu0
    %v4162 = vadd.f32 %v4073, %v4161
    %v4163 = vpop.f32.mrf.mxu0
    %v4164 = vadd.f32 %v4075, %v4163
    %4165 = vmatmul.bf16.gmra.mxu0 %v473
    %v4166 = vpop.f32.mrf.mxu0
    %v4167 = vadd.f32 %v4078, %v4166
    %v4168 = vpop.f32.mrf.mxu0
    %v4169 = vadd.f32 %v4080, %v4168
    %4170 = vmatmul.bf16.gmra.mxu0 %v481
    %v4171 = vpop.f32.mrf.mxu0
    %v4172 = vadd.f32 %v4083, %v4171
    %v4173 = vpop.f32.mrf.mxu0
    %v4174 = vadd.f32 %v4085, %v4173
    %4175 = vmatmul.bf16.gmra.mxu0 %v489
    %v4176 = vpop.f32.mrf.mxu0
    %v4177 = vadd.f32 %v4088, %v4176
    %v4178 = vpop.f32.mrf.mxu0
    %v4179 = vadd.f32 %v4090, %v4178
    %4180 = vmatmul.bf16.gmra.mxu0 %v497
    %v4181 = vpop.f32.mrf.mxu0
    %v4182 = vadd.f32 %v4093, %v4181
    %v4183 = vpop.f32.mrf.mxu0
    %v4184 = vadd.f32 %v4095, %v4183
    %4185 = vmatmul.bf16.gmra.mxu0 %v505
    %v4186 = vpop.f32.mrf.mxu0
    %v4187 = vadd.f32 %v4098, %v4186
    %v4188 = vpop.f32.mrf.mxu0
    %v4189 = vadd.f32 %v4100, %v4188
    %4190 = vmatmul.bf16.gmra.mxu0 %v513
    %v4191 = vpop.f32.mrf.mxu0
    %v4192 = vadd.f32 %v4103, %v4191
    %v4193 = vpop.f32.mrf.mxu0
    %v4194 = vadd.f32 %v4105, %v4193
    %4195 = vdwg.mxu0
    %4196 = vmatpush.bf16.msra.mxu0 %v1579
    %4197 = vmatpush.bf16.msra.mxu0 %v1575
    %4198 = vmatpush.bf16.msra.mxu0 %v1571
    %4199 = vmatpush.bf16.msra.mxu0 %v1567
    %4200 = vmatpush.bf16.msra.mxu0 %v1563
    %4201 = vmatpush.bf16.msra.mxu0 %v1559
    %4202 = vmatpush.bf16.msra.mxu0 %v1555
    %4203 = vmatpush.bf16.msra.mxu0 %v1551
    %4204 = vmatmul.bf16.gmra.mxu0 %v386
    %v4205 = vpop.f32.mrf.mxu0
    %v4206 = vadd.f32 %v775, %v4205
    %v4207 = vpop.f32.mrf.mxu0
    %v4208 = vadd.f32 %v775, %v4207
    %4209 = vmatmul.bf16.gmra.mxu0 %v394
    %v4210 = vpop.f32.mrf.mxu0
    %v4211 = vadd.f32 %v775, %v4210
    %v4212 = vpop.f32.mrf.mxu0
    %v4213 = vadd.f32 %v775, %v4212
    %4214 = vmatmul.bf16.gmra.mxu0 %v402
    %v4215 = vpop.f32.mrf.mxu0
    %v4216 = vadd.f32 %v775, %v4215
    %v4217 = vpop.f32.mrf.mxu0
    %v4218 = vadd.f32 %v775, %v4217
    %4219 = vmatmul.bf16.gmra.mxu0 %v410
    %v4220 = vpop.f32.mrf.mxu0
    %v4221 = vadd.f32 %v775, %v4220
    %v4222 = vpop.f32.mrf.mxu0
    %v4223 = vadd.f32 %v775, %v4222
    %4224 = vmatmul.bf16.gmra.mxu0 %v418
    %v4225 = vpop.f32.mrf.mxu0
    %v4226 = vadd.f32 %v775, %v4225
    %v4227 = vpop.f32.mrf.mxu0
    %v4228 = vadd.f32 %v775, %v4227
    %4229 = vmatmul.bf16.gmra.mxu0 %v426
    %v4230 = vpop.f32.mrf.mxu0
    %v4231 = vadd.f32 %v775, %v4230
    %v4232 = vpop.f32.mrf.mxu0
    %v4233 = vadd.f32 %v775, %v4232
    %4234 = vmatmul.bf16.gmra.mxu0 %v434
    %v4235 = vpop.f32.mrf.mxu0
    %v4236 = vadd.f32 %v775, %v4235
    %v4237 = vpop.f32.mrf.mxu0
    %v4238 = vadd.f32 %v775, %v4237
    %4239 = vmatmul.bf16.gmra.mxu0 %v442
    %v4240 = vpop.f32.mrf.mxu0
    %v4241 = vadd.f32 %v775, %v4240
    %v4242 = vpop.f32.mrf.mxu0
    %v4243 = vadd.f32 %v775, %v4242
    %4244 = vmatmul.bf16.gmra.mxu0 %v450
    %v4245 = vpop.f32.mrf.mxu0
    %v4246 = vadd.f32 %v775, %v4245
    %v4247 = vpop.f32.mrf.mxu0
    %v4248 = vadd.f32 %v775, %v4247
    %4249 = vmatmul.bf16.gmra.mxu0 %v458
    %v4250 = vpop.f32.mrf.mxu0
    %v4251 = vadd.f32 %v775, %v4250
    %v4252 = vpop.f32.mrf.mxu0
    %v4253 = vadd.f32 %v775, %v4252
    %4254 = vmatmul.bf16.gmra.mxu0 %v466
    %v4255 = vpop.f32.mrf.mxu0
    %v4256 = vadd.f32 %v775, %v4255
    %v4257 = vpop.f32.mrf.mxu0
    %v4258 = vadd.f32 %v775, %v4257
    %4259 = vmatmul.bf16.gmra.mxu0 %v474
    %v4260 = vpop.f32.mrf.mxu0
    %v4261 = vadd.f32 %v775, %v4260
    %v4262 = vpop.f32.mrf.mxu0
    %v4263 = vadd.f32 %v775, %v4262
    %4264 = vmatmul.bf16.gmra.mxu0 %v482
    %v4265 = vpop.f32.mrf.mxu0
    %v4266 = vadd.f32 %v775, %v4265
    %v4267 = vpop.f32.mrf.mxu0
    %v4268 = vadd.f32 %v775, %v4267
    %4269 = vmatmul.bf16.gmra.mxu0 %v490
    %v4270 = vpop.f32.mrf.mxu0
    %v4271 = vadd.f32 %v775, %v4270
    %v4272 = vpop.f32.mrf.mxu0
    %v4273 = vadd.f32 %v775, %v4272
    %4274 = vmatmul.bf16.gmra.mxu0 %v498
    %v4275 = vpop.f32.mrf.mxu0
    %v4276 = vadd.f32 %v775, %v4275
    %v4277 = vpop.f32.mrf.mxu0
    %v4278 = vadd.f32 %v775, %v4277
    %4279 = vmatmul.bf16.gmra.mxu0 %v506
    %v4280 = vpop.f32.mrf.mxu0
    %v4281 = vadd.f32 %v775, %v4280
    %v4282 = vpop.f32.mrf.mxu0
    %v4283 = vadd.f32 %v775, %v4282
    %4284 = vdwg.mxu0
    %4285 = vmatpush.bf16.msra.mxu0 %v1611
    %4286 = vmatpush.bf16.msra.mxu0 %v1607
    %4287 = vmatpush.bf16.msra.mxu0 %v1603
    %4288 = vmatpush.bf16.msra.mxu0 %v1599
    %4289 = vmatpush.bf16.msra.mxu0 %v1595
    %4290 = vmatpush.bf16.msra.mxu0 %v1591
    %4291 = vmatpush.bf16.msra.mxu0 %v1587
    %4292 = vmatpush.bf16.msra.mxu0 %v1583
    %4293 = vmatmul.bf16.gmra.mxu0 %v387
    %v4294 = vpop.f32.mrf.mxu0
    %v4295 = vadd.f32 %v4206, %v4294
    %v4296 = vpop.f32.mrf.mxu0
    %v4297 = vadd.f32 %v4208, %v4296
    %4298 = vmatmul.bf16.gmra.mxu0 %v395
    %v4299 = vpop.f32.mrf.mxu0
    %v4300 = vadd.f32 %v4211, %v4299
    %v4301 = vpop.f32.mrf.mxu0
    %v4302 = vadd.f32 %v4213, %v4301
    %4303 = vmatmul.bf16.gmra.mxu0 %v403
    %v4304 = vpop.f32.mrf.mxu0
    %v4305 = vadd.f32 %v4216, %v4304
    %v4306 = vpop.f32.mrf.mxu0
    %v4307 = vadd.f32 %v4218, %v4306
    %4308 = vmatmul.bf16.gmra.mxu0 %v411
    %v4309 = vpop.f32.mrf.mxu0
    %v4310 = vadd.f32 %v4221, %v4309
    %v4311 = vpop.f32.mrf.mxu0
    %v4312 = vadd.f32 %v4223, %v4311
    %4313 = vmatmul.bf16.gmra.mxu0 %v419
    %v4314 = vpop.f32.mrf.mxu0
    %v4315 = vadd.f32 %v4226, %v4314
    %v4316 = vpop.f32.mrf.mxu0
    %v4317 = vadd.f32 %v4228, %v4316
    %4318 = vmatmul.bf16.gmra.mxu0 %v427
    %v4319 = vpop.f32.mrf.mxu0
    %v4320 = vadd.f32 %v4231, %v4319
    %v4321 = vpop.f32.mrf.mxu0
    %v4322 = vadd.f32 %v4233, %v4321
    %4323 = vmatmul.bf16.gmra.mxu0 %v435
    %v4324 = vpop.f32.mrf.mxu0
    %v4325 = vadd.f32 %v4236, %v4324
    %v4326 = vpop.f32.mrf.mxu0
    %v4327 = vadd.f32 %v4238, %v4326
    %4328 = vmatmul.bf16.gmra.mxu0 %v443
    %v4329 = vpop.f32.mrf.mxu0
    %v4330 = vadd.f32 %v4241, %v4329
    %v4331 = vpop.f32.mrf.mxu0
    %v4332 = vadd.f32 %v4243, %v4331
    %4333 = vmatmul.bf16.gmra.mxu0 %v451
    %v4334 = vpop.f32.mrf.mxu0
    %v4335 = vadd.f32 %v4246, %v4334
    %v4336 = vpop.f32.mrf.mxu0
    %v4337 = vadd.f32 %v4248, %v4336
    %4338 = vmatmul.bf16.gmra.mxu0 %v459
    %v4339 = vpop.f32.mrf.mxu0
    %v4340 = vadd.f32 %v4251, %v4339
    %v4341 = vpop.f32.mrf.mxu0
    %v4342 = vadd.f32 %v4253, %v4341
    %4343 = vmatmul.bf16.gmra.mxu0 %v467
    %v4344 = vpop.f32.mrf.mxu0
    %v4345 = vadd.f32 %v4256, %v4344
    %v4346 = vpop.f32.mrf.mxu0
    %v4347 = vadd.f32 %v4258, %v4346
    %4348 = vmatmul.bf16.gmra.mxu0 %v475
    %v4349 = vpop.f32.mrf.mxu0
    %v4350 = vadd.f32 %v4261, %v4349
    %v4351 = vpop.f32.mrf.mxu0
    %v4352 = vadd.f32 %v4263, %v4351
    %4353 = vmatmul.bf16.gmra.mxu0 %v483
    %v4354 = vpop.f32.mrf.mxu0
    %v4355 = vadd.f32 %v4266, %v4354
    %v4356 = vpop.f32.mrf.mxu0
    %v4357 = vadd.f32 %v4268, %v4356
    %4358 = vmatmul.bf16.gmra.mxu0 %v491
    %v4359 = vpop.f32.mrf.mxu0
    %v4360 = vadd.f32 %v4271, %v4359
    %v4361 = vpop.f32.mrf.mxu0
    %v4362 = vadd.f32 %v4273, %v4361
    %4363 = vmatmul.bf16.gmra.mxu0 %v499
    %v4364 = vpop.f32.mrf.mxu0
    %v4365 = vadd.f32 %v4276, %v4364
    %v4366 = vpop.f32.mrf.mxu0
    %v4367 = vadd.f32 %v4278, %v4366
    %4368 = vmatmul.bf16.gmra.mxu0 %v507
    %v4369 = vpop.f32.mrf.mxu0
    %v4370 = vadd.f32 %v4281, %v4369
    %v4371 = vpop.f32.mrf.mxu0
    %v4372 = vadd.f32 %v4283, %v4371
    %4373 = vdwg.mxu0
    %4374 = vmatpush.bf16.msra.mxu0 %v1643
    %4375 = vmatpush.bf16.msra.mxu0 %v1639
    %4376 = vmatpush.bf16.msra.mxu0 %v1635
    %4377 = vmatpush.bf16.msra.mxu0 %v1631
    %4378 = vmatpush.bf16.msra.mxu0 %v1627
    %4379 = vmatpush.bf16.msra.mxu0 %v1623
    %4380 = vmatpush.bf16.msra.mxu0 %v1619
    %4381 = vmatpush.bf16.msra.mxu0 %v1615
    %4382 = vmatmul.bf16.gmra.mxu0 %v388
    %v4383 = vpop.f32.mrf.mxu0
    %v4384 = vadd.f32 %v4295, %v4383
    %v4385 = vpop.f32.mrf.mxu0
    %v4386 = vadd.f32 %v4297, %v4385
    %4387 = vmatmul.bf16.gmra.mxu0 %v396
    %v4388 = vpop.f32.mrf.mxu0
    %v4389 = vadd.f32 %v4300, %v4388
    %v4390 = vpop.f32.mrf.mxu0
    %v4391 = vadd.f32 %v4302, %v4390
    %4392 = vmatmul.bf16.gmra.mxu0 %v404
    %v4393 = vpop.f32.mrf.mxu0
    %v4394 = vadd.f32 %v4305, %v4393
    %v4395 = vpop.f32.mrf.mxu0
    %v4396 = vadd.f32 %v4307, %v4395
    %4397 = vmatmul.bf16.gmra.mxu0 %v412
    %v4398 = vpop.f32.mrf.mxu0
    %v4399 = vadd.f32 %v4310, %v4398
    %v4400 = vpop.f32.mrf.mxu0
    %v4401 = vadd.f32 %v4312, %v4400
    %4402 = vmatmul.bf16.gmra.mxu0 %v420
    %v4403 = vpop.f32.mrf.mxu0
    %v4404 = vadd.f32 %v4315, %v4403
    %v4405 = vpop.f32.mrf.mxu0
    %v4406 = vadd.f32 %v4317, %v4405
    %4407 = vmatmul.bf16.gmra.mxu0 %v428
    %v4408 = vpop.f32.mrf.mxu0
    %v4409 = vadd.f32 %v4320, %v4408
    %v4410 = vpop.f32.mrf.mxu0
    %v4411 = vadd.f32 %v4322, %v4410
    %4412 = vmatmul.bf16.gmra.mxu0 %v436
    %v4413 = vpop.f32.mrf.mxu0
    %v4414 = vadd.f32 %v4325, %v4413
    %v4415 = vpop.f32.mrf.mxu0
    %v4416 = vadd.f32 %v4327, %v4415
    %4417 = vmatmul.bf16.gmra.mxu0 %v444
    %v4418 = vpop.f32.mrf.mxu0
    %v4419 = vadd.f32 %v4330, %v4418
    %v4420 = vpop.f32.mrf.mxu0
    %v4421 = vadd.f32 %v4332, %v4420
    %4422 = vmatmul.bf16.gmra.mxu0 %v452
    %v4423 = vpop.f32.mrf.mxu0
    %v4424 = vadd.f32 %v4335, %v4423
    %v4425 = vpop.f32.mrf.mxu0
    %v4426 = vadd.f32 %v4337, %v4425
    %4427 = vmatmul.bf16.gmra.mxu0 %v460
    %v4428 = vpop.f32.mrf.mxu0
    %v4429 = vadd.f32 %v4340, %v4428
    %v4430 = vpop.f32.mrf.mxu0
    %v4431 = vadd.f32 %v4342, %v4430
    %4432 = vmatmul.bf16.gmra.mxu0 %v468
    %v4433 = vpop.f32.mrf.mxu0
    %v4434 = vadd.f32 %v4345, %v4433
    %v4435 = vpop.f32.mrf.mxu0
    %v4436 = vadd.f32 %v4347, %v4435
    %4437 = vmatmul.bf16.gmra.mxu0 %v476
    %v4438 = vpop.f32.mrf.mxu0
    %v4439 = vadd.f32 %v4350, %v4438
    %v4440 = vpop.f32.mrf.mxu0
    %v4441 = vadd.f32 %v4352, %v4440
    %4442 = vmatmul.bf16.gmra.mxu0 %v484
    %v4443 = vpop.f32.mrf.mxu0
    %v4444 = vadd.f32 %v4355, %v4443
    %v4445 = vpop.f32.mrf.mxu0
    %v4446 = vadd.f32 %v4357, %v4445
    %4447 = vmatmul.bf16.gmra.mxu0 %v492
    %v4448 = vpop.f32.mrf.mxu0
    %v4449 = vadd.f32 %v4360, %v4448
    %v4450 = vpop.f32.mrf.mxu0
    %v4451 = vadd.f32 %v4362, %v4450
    %4452 = vmatmul.bf16.gmra.mxu0 %v500
    %v4453 = vpop.f32.mrf.mxu0
    %v4454 = vadd.f32 %v4365, %v4453
    %v4455 = vpop.f32.mrf.mxu0
    %v4456 = vadd.f32 %v4367, %v4455
    %4457 = vmatmul.bf16.gmra.mxu0 %v508
    %v4458 = vpop.f32.mrf.mxu0
    %v4459 = vadd.f32 %v4370, %v4458
    %v4460 = vpop.f32.mrf.mxu0
    %v4461 = vadd.f32 %v4372, %v4460
    %4462 = vdwg.mxu0
    %4463 = vmatpush.bf16.msra.mxu0 %v1675
    %4464 = vmatpush.bf16.msra.mxu0 %v1671
    %4465 = vmatpush.bf16.msra.mxu0 %v1667
    %4466 = vmatpush.bf16.msra.mxu0 %v1663
    %4467 = vmatpush.bf16.msra.mxu0 %v1659
    %4468 = vmatpush.bf16.msra.mxu0 %v1655
    %4469 = vmatpush.bf16.msra.mxu0 %v1651
    %4470 = vmatpush.bf16.msra.mxu0 %v1647
    %4471 = vmatmul.bf16.gmra.mxu0 %v389
    %v4472 = vpop.f32.mrf.mxu0
    %v4473 = vadd.f32 %v4384, %v4472
    %v4474 = vpop.f32.mrf.mxu0
    %v4475 = vadd.f32 %v4386, %v4474
    %4476 = vmatmul.bf16.gmra.mxu0 %v397
    %v4477 = vpop.f32.mrf.mxu0
    %v4478 = vadd.f32 %v4389, %v4477
    %v4479 = vpop.f32.mrf.mxu0
    %v4480 = vadd.f32 %v4391, %v4479
    %4481 = vmatmul.bf16.gmra.mxu0 %v405
    %v4482 = vpop.f32.mrf.mxu0
    %v4483 = vadd.f32 %v4394, %v4482
    %v4484 = vpop.f32.mrf.mxu0
    %v4485 = vadd.f32 %v4396, %v4484
    %4486 = vmatmul.bf16.gmra.mxu0 %v413
    %v4487 = vpop.f32.mrf.mxu0
    %v4488 = vadd.f32 %v4399, %v4487
    %v4489 = vpop.f32.mrf.mxu0
    %v4490 = vadd.f32 %v4401, %v4489
    %4491 = vmatmul.bf16.gmra.mxu0 %v421
    %v4492 = vpop.f32.mrf.mxu0
    %v4493 = vadd.f32 %v4404, %v4492
    %v4494 = vpop.f32.mrf.mxu0
    %v4495 = vadd.f32 %v4406, %v4494
    %4496 = vmatmul.bf16.gmra.mxu0 %v429
    %v4497 = vpop.f32.mrf.mxu0
    %v4498 = vadd.f32 %v4409, %v4497
    %v4499 = vpop.f32.mrf.mxu0
    %v4500 = vadd.f32 %v4411, %v4499
    %4501 = vmatmul.bf16.gmra.mxu0 %v437
    %v4502 = vpop.f32.mrf.mxu0
    %v4503 = vadd.f32 %v4414, %v4502
    %v4504 = vpop.f32.mrf.mxu0
    %v4505 = vadd.f32 %v4416, %v4504
    %4506 = vmatmul.bf16.gmra.mxu0 %v445
    %v4507 = vpop.f32.mrf.mxu0
    %v4508 = vadd.f32 %v4419, %v4507
    %v4509 = vpop.f32.mrf.mxu0
    %v4510 = vadd.f32 %v4421, %v4509
    %4511 = vmatmul.bf16.gmra.mxu0 %v453
    %v4512 = vpop.f32.mrf.mxu0
    %v4513 = vadd.f32 %v4424, %v4512
    %v4514 = vpop.f32.mrf.mxu0
    %v4515 = vadd.f32 %v4426, %v4514
    %4516 = vmatmul.bf16.gmra.mxu0 %v461
    %v4517 = vpop.f32.mrf.mxu0
    %v4518 = vadd.f32 %v4429, %v4517
    %v4519 = vpop.f32.mrf.mxu0
    %v4520 = vadd.f32 %v4431, %v4519
    %4521 = vmatmul.bf16.gmra.mxu0 %v469
    %v4522 = vpop.f32.mrf.mxu0
    %v4523 = vadd.f32 %v4434, %v4522
    %v4524 = vpop.f32.mrf.mxu0
    %v4525 = vadd.f32 %v4436, %v4524
    %4526 = vmatmul.bf16.gmra.mxu0 %v477
    %v4527 = vpop.f32.mrf.mxu0
    %v4528 = vadd.f32 %v4439, %v4527
    %v4529 = vpop.f32.mrf.mxu0
    %v4530 = vadd.f32 %v4441, %v4529
    %4531 = vmatmul.bf16.gmra.mxu0 %v485
    %v4532 = vpop.f32.mrf.mxu0
    %v4533 = vadd.f32 %v4444, %v4532
    %v4534 = vpop.f32.mrf.mxu0
    %v4535 = vadd.f32 %v4446, %v4534
    %4536 = vmatmul.bf16.gmra.mxu0 %v493
    %v4537 = vpop.f32.mrf.mxu0
    %v4538 = vadd.f32 %v4449, %v4537
    %v4539 = vpop.f32.mrf.mxu0
    %v4540 = vadd.f32 %v4451, %v4539
    %4541 = vmatmul.bf16.gmra.mxu0 %v501
    %v4542 = vpop.f32.mrf.mxu0
    %v4543 = vadd.f32 %v4454, %v4542
    %v4544 = vpop.f32.mrf.mxu0
    %v4545 = vadd.f32 %v4456, %v4544
    %4546 = vmatmul.bf16.gmra.mxu0 %v509
    %v4547 = vpop.f32.mrf.mxu0
    %v4548 = vadd.f32 %v4459, %v4547
    %v4549 = vpop.f32.mrf.mxu0
    %v4550 = vadd.f32 %v4461, %v4549
    %4551 = vdwg.mxu0
    %4552 = vmatpush.bf16.msra.mxu0 %v1707
    %4553 = vmatpush.bf16.msra.mxu0 %v1703
    %4554 = vmatpush.bf16.msra.mxu0 %v1699
    %4555 = vmatpush.bf16.msra.mxu0 %v1695
    %4556 = vmatpush.bf16.msra.mxu0 %v1691
    %4557 = vmatpush.bf16.msra.mxu0 %v1687
    %4558 = vmatpush.bf16.msra.mxu0 %v1683
    %4559 = vmatpush.bf16.msra.mxu0 %v1679
    %4560 = vmatmul.bf16.gmra.mxu0 %v390
    %v4561 = vpop.f32.mrf.mxu0
    %v4562 = vadd.f32 %v4473, %v4561
    %v4563 = vpop.f32.mrf.mxu0
    %v4564 = vadd.f32 %v4475, %v4563
    %4565 = vmatmul.bf16.gmra.mxu0 %v398
    %v4566 = vpop.f32.mrf.mxu0
    %v4567 = vadd.f32 %v4478, %v4566
    %v4568 = vpop.f32.mrf.mxu0
    %v4569 = vadd.f32 %v4480, %v4568
    %4570 = vmatmul.bf16.gmra.mxu0 %v406
    %v4571 = vpop.f32.mrf.mxu0
    %v4572 = vadd.f32 %v4483, %v4571
    %v4573 = vpop.f32.mrf.mxu0
    %v4574 = vadd.f32 %v4485, %v4573
    %4575 = vmatmul.bf16.gmra.mxu0 %v414
    %v4576 = vpop.f32.mrf.mxu0
    %v4577 = vadd.f32 %v4488, %v4576
    %v4578 = vpop.f32.mrf.mxu0
    %v4579 = vadd.f32 %v4490, %v4578
    %4580 = vmatmul.bf16.gmra.mxu0 %v422
    %v4581 = vpop.f32.mrf.mxu0
    %v4582 = vadd.f32 %v4493, %v4581
    %v4583 = vpop.f32.mrf.mxu0
    %v4584 = vadd.f32 %v4495, %v4583
    %4585 = vmatmul.bf16.gmra.mxu0 %v430
    %v4586 = vpop.f32.mrf.mxu0
    %v4587 = vadd.f32 %v4498, %v4586
    %v4588 = vpop.f32.mrf.mxu0
    %v4589 = vadd.f32 %v4500, %v4588
    %4590 = vmatmul.bf16.gmra.mxu0 %v438
    %v4591 = vpop.f32.mrf.mxu0
    %v4592 = vadd.f32 %v4503, %v4591
    %v4593 = vpop.f32.mrf.mxu0
    %v4594 = vadd.f32 %v4505, %v4593
    %4595 = vmatmul.bf16.gmra.mxu0 %v446
    %v4596 = vpop.f32.mrf.mxu0
    %v4597 = vadd.f32 %v4508, %v4596
    %v4598 = vpop.f32.mrf.mxu0
    %v4599 = vadd.f32 %v4510, %v4598
    %4600 = vmatmul.bf16.gmra.mxu0 %v454
    %v4601 = vpop.f32.mrf.mxu0
    %v4602 = vadd.f32 %v4513, %v4601
    %v4603 = vpop.f32.mrf.mxu0
    %v4604 = vadd.f32 %v4515, %v4603
    %4605 = vmatmul.bf16.gmra.mxu0 %v462
    %v4606 = vpop.f32.mrf.mxu0
    %v4607 = vadd.f32 %v4518, %v4606
    %v4608 = vpop.f32.mrf.mxu0
    %v4609 = vadd.f32 %v4520, %v4608
    %4610 = vmatmul.bf16.gmra.mxu0 %v470
    %v4611 = vpop.f32.mrf.mxu0
    %v4612 = vadd.f32 %v4523, %v4611
    %v4613 = vpop.f32.mrf.mxu0
    %v4614 = vadd.f32 %v4525, %v4613
    %4615 = vmatmul.bf16.gmra.mxu0 %v478
    %v4616 = vpop.f32.mrf.mxu0
    %v4617 = vadd.f32 %v4528, %v4616
    %v4618 = vpop.f32.mrf.mxu0
    %v4619 = vadd.f32 %v4530, %v4618
    %4620 = vmatmul.bf16.gmra.mxu0 %v486
    %v4621 = vpop.f32.mrf.mxu0
    %v4622 = vadd.f32 %v4533, %v4621
    %v4623 = vpop.f32.mrf.mxu0
    %v4624 = vadd.f32 %v4535, %v4623
    %4625 = vmatmul.bf16.gmra.mxu0 %v494
    %v4626 = vpop.f32.mrf.mxu0
    %v4627 = vadd.f32 %v4538, %v4626
    %v4628 = vpop.f32.mrf.mxu0
    %v4629 = vadd.f32 %v4540, %v4628
    %4630 = vmatmul.bf16.gmra.mxu0 %v502
    %v4631 = vpop.f32.mrf.mxu0
    %v4632 = vadd.f32 %v4543, %v4631
    %v4633 = vpop.f32.mrf.mxu0
    %v4634 = vadd.f32 %v4545, %v4633
    %4635 = vmatmul.bf16.gmra.mxu0 %v510
    %v4636 = vpop.f32.mrf.mxu0
    %v4637 = vadd.f32 %v4548, %v4636
    %v4638 = vpop.f32.mrf.mxu0
    %v4639 = vadd.f32 %v4550, %v4638
    %4640 = vdwg.mxu0
    %4641 = vmatpush.bf16.msra.mxu0 %v1739
    %4642 = vmatpush.bf16.msra.mxu0 %v1735
    %4643 = vmatpush.bf16.msra.mxu0 %v1731
    %4644 = vmatpush.bf16.msra.mxu0 %v1727
    %4645 = vmatpush.bf16.msra.mxu0 %v1723
    %4646 = vmatpush.bf16.msra.mxu0 %v1719
    %4647 = vmatpush.bf16.msra.mxu0 %v1715
    %4648 = vmatpush.bf16.msra.mxu0 %v1711
    %4649 = vmatmul.bf16.gmra.mxu0 %v391
    %v4650 = vpop.f32.mrf.mxu0
    %v4651 = vadd.f32 %v4562, %v4650
    %v4652 = vpop.f32.mrf.mxu0
    %v4653 = vadd.f32 %v4564, %v4652
    %4654 = vmatmul.bf16.gmra.mxu0 %v399
    %v4655 = vpop.f32.mrf.mxu0
    %v4656 = vadd.f32 %v4567, %v4655
    %v4657 = vpop.f32.mrf.mxu0
    %v4658 = vadd.f32 %v4569, %v4657
    %4659 = vmatmul.bf16.gmra.mxu0 %v407
    %v4660 = vpop.f32.mrf.mxu0
    %v4661 = vadd.f32 %v4572, %v4660
    %v4662 = vpop.f32.mrf.mxu0
    %v4663 = vadd.f32 %v4574, %v4662
    %4664 = vmatmul.bf16.gmra.mxu0 %v415
    %v4665 = vpop.f32.mrf.mxu0
    %v4666 = vadd.f32 %v4577, %v4665
    %v4667 = vpop.f32.mrf.mxu0
    %v4668 = vadd.f32 %v4579, %v4667
    %4669 = vmatmul.bf16.gmra.mxu0 %v423
    %v4670 = vpop.f32.mrf.mxu0
    %v4671 = vadd.f32 %v4582, %v4670
    %v4672 = vpop.f32.mrf.mxu0
    %v4673 = vadd.f32 %v4584, %v4672
    %4674 = vmatmul.bf16.gmra.mxu0 %v431
    %v4675 = vpop.f32.mrf.mxu0
    %v4676 = vadd.f32 %v4587, %v4675
    %v4677 = vpop.f32.mrf.mxu0
    %v4678 = vadd.f32 %v4589, %v4677
    %4679 = vmatmul.bf16.gmra.mxu0 %v439
    %v4680 = vpop.f32.mrf.mxu0
    %v4681 = vadd.f32 %v4592, %v4680
    %v4682 = vpop.f32.mrf.mxu0
    %v4683 = vadd.f32 %v4594, %v4682
    %4684 = vmatmul.bf16.gmra.mxu0 %v447
    %v4685 = vpop.f32.mrf.mxu0
    %v4686 = vadd.f32 %v4597, %v4685
    %v4687 = vpop.f32.mrf.mxu0
    %v4688 = vadd.f32 %v4599, %v4687
    %4689 = vmatmul.bf16.gmra.mxu0 %v455
    %v4690 = vpop.f32.mrf.mxu0
    %v4691 = vadd.f32 %v4602, %v4690
    %v4692 = vpop.f32.mrf.mxu0
    %v4693 = vadd.f32 %v4604, %v4692
    %4694 = vmatmul.bf16.gmra.mxu0 %v463
    %v4695 = vpop.f32.mrf.mxu0
    %v4696 = vadd.f32 %v4607, %v4695
    %v4697 = vpop.f32.mrf.mxu0
    %v4698 = vadd.f32 %v4609, %v4697
    %4699 = vmatmul.bf16.gmra.mxu0 %v471
    %v4700 = vpop.f32.mrf.mxu0
    %v4701 = vadd.f32 %v4612, %v4700
    %v4702 = vpop.f32.mrf.mxu0
    %v4703 = vadd.f32 %v4614, %v4702
    %4704 = vmatmul.bf16.gmra.mxu0 %v479
    %v4705 = vpop.f32.mrf.mxu0
    %v4706 = vadd.f32 %v4617, %v4705
    %v4707 = vpop.f32.mrf.mxu0
    %v4708 = vadd.f32 %v4619, %v4707
    %4709 = vmatmul.bf16.gmra.mxu0 %v487
    %v4710 = vpop.f32.mrf.mxu0
    %v4711 = vadd.f32 %v4622, %v4710
    %v4712 = vpop.f32.mrf.mxu0
    %v4713 = vadd.f32 %v4624, %v4712
    %4714 = vmatmul.bf16.gmra.mxu0 %v495
    %v4715 = vpop.f32.mrf.mxu0
    %v4716 = vadd.f32 %v4627, %v4715
    %v4717 = vpop.f32.mrf.mxu0
    %v4718 = vadd.f32 %v4629, %v4717
    %4719 = vmatmul.bf16.gmra.mxu0 %v503
    %v4720 = vpop.f32.mrf.mxu0
    %v4721 = vadd.f32 %v4632, %v4720
    %v4722 = vpop.f32.mrf.mxu0
    %v4723 = vadd.f32 %v4634, %v4722
    %4724 = vmatmul.bf16.gmra.mxu0 %v511
    %v4725 = vpop.f32.mrf.mxu0
    %v4726 = vadd.f32 %v4637, %v4725
    %v4727 = vpop.f32.mrf.mxu0
    %v4728 = vadd.f32 %v4639, %v4727
    %4729 = vdwg.mxu0
    %4730 = vmatpush.bf16.msra.mxu0 %v1771
    %4731 = vmatpush.bf16.msra.mxu0 %v1767
    %4732 = vmatpush.bf16.msra.mxu0 %v1763
    %4733 = vmatpush.bf16.msra.mxu0 %v1759
    %4734 = vmatpush.bf16.msra.mxu0 %v1755
    %4735 = vmatpush.bf16.msra.mxu0 %v1751
    %4736 = vmatpush.bf16.msra.mxu0 %v1747
    %4737 = vmatpush.bf16.msra.mxu0 %v1743
    %4738 = vmatmul.bf16.gmra.mxu0 %v392
    %v4739 = vpop.f32.mrf.mxu0
    %v4740 = vadd.f32 %v4651, %v4739
    %v4741 = vpop.f32.mrf.mxu0
    %v4742 = vadd.f32 %v4653, %v4741
    %4743 = vmatmul.bf16.gmra.mxu0 %v400
    %v4744 = vpop.f32.mrf.mxu0
    %v4745 = vadd.f32 %v4656, %v4744
    %v4746 = vpop.f32.mrf.mxu0
    %v4747 = vadd.f32 %v4658, %v4746
    %4748 = vmatmul.bf16.gmra.mxu0 %v408
    %v4749 = vpop.f32.mrf.mxu0
    %v4750 = vadd.f32 %v4661, %v4749
    %v4751 = vpop.f32.mrf.mxu0
    %v4752 = vadd.f32 %v4663, %v4751
    %4753 = vmatmul.bf16.gmra.mxu0 %v416
    %v4754 = vpop.f32.mrf.mxu0
    %v4755 = vadd.f32 %v4666, %v4754
    %v4756 = vpop.f32.mrf.mxu0
    %v4757 = vadd.f32 %v4668, %v4756
    %4758 = vmatmul.bf16.gmra.mxu0 %v424
    %v4759 = vpop.f32.mrf.mxu0
    %v4760 = vadd.f32 %v4671, %v4759
    %v4761 = vpop.f32.mrf.mxu0
    %v4762 = vadd.f32 %v4673, %v4761
    %4763 = vmatmul.bf16.gmra.mxu0 %v432
    %v4764 = vpop.f32.mrf.mxu0
    %v4765 = vadd.f32 %v4676, %v4764
    %v4766 = vpop.f32.mrf.mxu0
    %v4767 = vadd.f32 %v4678, %v4766
    %4768 = vmatmul.bf16.gmra.mxu0 %v440
    %v4769 = vpop.f32.mrf.mxu0
    %v4770 = vadd.f32 %v4681, %v4769
    %v4771 = vpop.f32.mrf.mxu0
    %v4772 = vadd.f32 %v4683, %v4771
    %4773 = vmatmul.bf16.gmra.mxu0 %v448
    %v4774 = vpop.f32.mrf.mxu0
    %v4775 = vadd.f32 %v4686, %v4774
    %v4776 = vpop.f32.mrf.mxu0
    %v4777 = vadd.f32 %v4688, %v4776
    %4778 = vmatmul.bf16.gmra.mxu0 %v456
    %v4779 = vpop.f32.mrf.mxu0
    %v4780 = vadd.f32 %v4691, %v4779
    %v4781 = vpop.f32.mrf.mxu0
    %v4782 = vadd.f32 %v4693, %v4781
    %4783 = vmatmul.bf16.gmra.mxu0 %v464
    %v4784 = vpop.f32.mrf.mxu0
    %v4785 = vadd.f32 %v4696, %v4784
    %v4786 = vpop.f32.mrf.mxu0
    %v4787 = vadd.f32 %v4698, %v4786
    %4788 = vmatmul.bf16.gmra.mxu0 %v472
    %v4789 = vpop.f32.mrf.mxu0
    %v4790 = vadd.f32 %v4701, %v4789
    %v4791 = vpop.f32.mrf.mxu0
    %v4792 = vadd.f32 %v4703, %v4791
    %4793 = vmatmul.bf16.gmra.mxu0 %v480
    %v4794 = vpop.f32.mrf.mxu0
    %v4795 = vadd.f32 %v4706, %v4794
    %v4796 = vpop.f32.mrf.mxu0
    %v4797 = vadd.f32 %v4708, %v4796
    %4798 = vmatmul.bf16.gmra.mxu0 %v488
    %v4799 = vpop.f32.mrf.mxu0
    %v4800 = vadd.f32 %v4711, %v4799
    %v4801 = vpop.f32.mrf.mxu0
    %v4802 = vadd.f32 %v4713, %v4801
    %4803 = vmatmul.bf16.gmra.mxu0 %v496
    %v4804 = vpop.f32.mrf.mxu0
    %v4805 = vadd.f32 %v4716, %v4804
    %v4806 = vpop.f32.mrf.mxu0
    %v4807 = vadd.f32 %v4718, %v4806
    %4808 = vmatmul.bf16.gmra.mxu0 %v504
    %v4809 = vpop.f32.mrf.mxu0
    %v4810 = vadd.f32 %v4721, %v4809
    %v4811 = vpop.f32.mrf.mxu0
    %v4812 = vadd.f32 %v4723, %v4811
    %4813 = vmatmul.bf16.gmra.mxu0 %v512
    %v4814 = vpop.f32.mrf.mxu0
    %v4815 = vadd.f32 %v4726, %v4814
    %v4816 = vpop.f32.mrf.mxu0
    %v4817 = vadd.f32 %v4728, %v4816
    %4818 = vdwg.mxu0
    %4819 = vmatpush.bf16.msra.mxu0 %v1803
    %4820 = vmatpush.bf16.msra.mxu0 %v1799
    %4821 = vmatpush.bf16.msra.mxu0 %v1795
    %4822 = vmatpush.bf16.msra.mxu0 %v1791
    %4823 = vmatpush.bf16.msra.mxu0 %v1787
    %4824 = vmatpush.bf16.msra.mxu0 %v1783
    %4825 = vmatpush.bf16.msra.mxu0 %v1779
    %4826 = vmatpush.bf16.msra.mxu0 %v1775
    %4827 = vmatmul.bf16.gmra.mxu0 %v393
    %v4828 = vpop.f32.mrf.mxu0
    %v4829 = vadd.f32 %v4740, %v4828
    %v4830 = vpop.f32.mrf.mxu0
    %v4831 = vadd.f32 %v4742, %v4830
    %4832 = vmatmul.bf16.gmra.mxu0 %v401
    %v4833 = vpop.f32.mrf.mxu0
    %v4834 = vadd.f32 %v4745, %v4833
    %v4835 = vpop.f32.mrf.mxu0
    %v4836 = vadd.f32 %v4747, %v4835
    %4837 = vmatmul.bf16.gmra.mxu0 %v409
    %v4838 = vpop.f32.mrf.mxu0
    %v4839 = vadd.f32 %v4750, %v4838
    %v4840 = vpop.f32.mrf.mxu0
    %v4841 = vadd.f32 %v4752, %v4840
    %4842 = vmatmul.bf16.gmra.mxu0 %v417
    %v4843 = vpop.f32.mrf.mxu0
    %v4844 = vadd.f32 %v4755, %v4843
    %v4845 = vpop.f32.mrf.mxu0
    %v4846 = vadd.f32 %v4757, %v4845
    %4847 = vmatmul.bf16.gmra.mxu0 %v425
    %v4848 = vpop.f32.mrf.mxu0
    %v4849 = vadd.f32 %v4760, %v4848
    %v4850 = vpop.f32.mrf.mxu0
    %v4851 = vadd.f32 %v4762, %v4850
    %4852 = vmatmul.bf16.gmra.mxu0 %v433
    %v4853 = vpop.f32.mrf.mxu0
    %v4854 = vadd.f32 %v4765, %v4853
    %v4855 = vpop.f32.mrf.mxu0
    %v4856 = vadd.f32 %v4767, %v4855
    %4857 = vmatmul.bf16.gmra.mxu0 %v441
    %v4858 = vpop.f32.mrf.mxu0
    %v4859 = vadd.f32 %v4770, %v4858
    %v4860 = vpop.f32.mrf.mxu0
    %v4861 = vadd.f32 %v4772, %v4860
    %4862 = vmatmul.bf16.gmra.mxu0 %v449
    %v4863 = vpop.f32.mrf.mxu0
    %v4864 = vadd.f32 %v4775, %v4863
    %v4865 = vpop.f32.mrf.mxu0
    %v4866 = vadd.f32 %v4777, %v4865
    %4867 = vmatmul.bf16.gmra.mxu0 %v457
    %v4868 = vpop.f32.mrf.mxu0
    %v4869 = vadd.f32 %v4780, %v4868
    %v4870 = vpop.f32.mrf.mxu0
    %v4871 = vadd.f32 %v4782, %v4870
    %4872 = vmatmul.bf16.gmra.mxu0 %v465
    %v4873 = vpop.f32.mrf.mxu0
    %v4874 = vadd.f32 %v4785, %v4873
    %v4875 = vpop.f32.mrf.mxu0
    %v4876 = vadd.f32 %v4787, %v4875
    %4877 = vmatmul.bf16.gmra.mxu0 %v473
    %v4878 = vpop.f32.mrf.mxu0
    %v4879 = vadd.f32 %v4790, %v4878
    %v4880 = vpop.f32.mrf.mxu0
    %v4881 = vadd.f32 %v4792, %v4880
    %4882 = vmatmul.bf16.gmra.mxu0 %v481
    %v4883 = vpop.f32.mrf.mxu0
    %v4884 = vadd.f32 %v4795, %v4883
    %v4885 = vpop.f32.mrf.mxu0
    %v4886 = vadd.f32 %v4797, %v4885
    %4887 = vmatmul.bf16.gmra.mxu0 %v489
    %v4888 = vpop.f32.mrf.mxu0
    %v4889 = vadd.f32 %v4800, %v4888
    %v4890 = vpop.f32.mrf.mxu0
    %v4891 = vadd.f32 %v4802, %v4890
    %4892 = vmatmul.bf16.gmra.mxu0 %v497
    %v4893 = vpop.f32.mrf.mxu0
    %v4894 = vadd.f32 %v4805, %v4893
    %v4895 = vpop.f32.mrf.mxu0
    %v4896 = vadd.f32 %v4807, %v4895
    %4897 = vmatmul.bf16.gmra.mxu0 %v505
    %v4898 = vpop.f32.mrf.mxu0
    %v4899 = vadd.f32 %v4810, %v4898
    %v4900 = vpop.f32.mrf.mxu0
    %v4901 = vadd.f32 %v4812, %v4900
    %4902 = vmatmul.bf16.gmra.mxu0 %v513
    %v4903 = vpop.f32.mrf.mxu0
    %v4904 = vadd.f32 %v4815, %v4903
    %v4905 = vpop.f32.mrf.mxu0
    %v4906 = vadd.f32 %v4817, %v4905
    %4907 = vdwg.mxu0
    %v4908 = vmax.f32 %v2693, 0.0
    %v4909 = vmax.f32 %v3405, 0.0
    %v4910 = vmax.f32 %v4117, 0.0
    %v4911 = vmax.f32 %v4829, 0.0
    %v4912 = vmax.f32 %v2695, 0.0
    %v4913 = vmax.f32 %v3407, 0.0
    %v4914 = vmax.f32 %v4119, 0.0
    %v4915 = vmax.f32 %v4831, 0.0
    %v4916 = vmax.f32 %v2698, 0.0
    %v4917 = vmax.f32 %v3410, 0.0
    %v4918 = vmax.f32 %v4122, 0.0
    %v4919 = vmax.f32 %v4834, 0.0
    %v4920 = vmax.f32 %v2700, 0.0
    %v4921 = vmax.f32 %v3412, 0.0
    %v4922 = vmax.f32 %v4124, 0.0
    %v4923 = vmax.f32 %v4836, 0.0
    %v4924 = vmax.f32 %v2703, 0.0
    %v4925 = vmax.f32 %v3415, 0.0
    %v4926 = vmax.f32 %v4127, 0.0
    %v4927 = vmax.f32 %v4839, 0.0
    %v4928 = vmax.f32 %v2705, 0.0
    %v4929 = vmax.f32 %v3417, 0.0
    %v4930 = vmax.f32 %v4129, 0.0
    %v4931 = vmax.f32 %v4841, 0.0
    %v4932 = vmax.f32 %v2708, 0.0
    %v4933 = vmax.f32 %v3420, 0.0
    %v4934 = vmax.f32 %v4132, 0.0
    %v4935 = vmax.f32 %v4844, 0.0
    %v4936 = vmax.f32 %v2710, 0.0
    %v4937 = vmax.f32 %v3422, 0.0
    %v4938 = vmax.f32 %v4134, 0.0
    %v4939 = vmax.f32 %v4846, 0.0
    %v4940 = vmax.f32 %v2713, 0.0
    %v4941 = vmax.f32 %v3425, 0.0
    %v4942 = vmax.f32 %v4137, 0.0
    %v4943 = vmax.f32 %v4849, 0.0
    %v4944 = vmax.f32 %v2715, 0.0
    %v4945 = vmax.f32 %v3427, 0.0
    %v4946 = vmax.f32 %v4139, 0.0
    %v4947 = vmax.f32 %v4851, 0.0
    %v4948 = vmax.f32 %v2718, 0.0
    %v4949 = vmax.f32 %v3430, 0.0
    %v4950 = vmax.f32 %v4142, 0.0
    %v4951 = vmax.f32 %v4854, 0.0
    %v4952 = vmax.f32 %v2720, 0.0
    %v4953 = vmax.f32 %v3432, 0.0
    %v4954 = vmax.f32 %v4144, 0.0
    %v4955 = vmax.f32 %v4856, 0.0
    %v4956 = vmax.f32 %v2723, 0.0
    %v4957 = vmax.f32 %v3435, 0.0
    %v4958 = vmax.f32 %v4147, 0.0
    %v4959 = vmax.f32 %v4859, 0.0
    %v4960 = vmax.f32 %v2725, 0.0
    %v4961 = vmax.f32 %v3437, 0.0
    %v4962 = vmax.f32 %v4149, 0.0
    %v4963 = vmax.f32 %v4861, 0.0
    %v4964 = vmax.f32 %v2728, 0.0
    %v4965 = vmax.f32 %v3440, 0.0
    %v4966 = vmax.f32 %v4152, 0.0
    %v4967 = vmax.f32 %v4864, 0.0
    %v4968 = vmax.f32 %v2730, 0.0
    %v4969 = vmax.f32 %v3442, 0.0
    %v4970 = vmax.f32 %v4154, 0.0
    %v4971 = vmax.f32 %v4866, 0.0
    %v4972 = vmax.f32 %v2733, 0.0
    %v4973 = vmax.f32 %v3445, 0.0
    %v4974 = vmax.f32 %v4157, 0.0
    %v4975 = vmax.f32 %v4869, 0.0
    %v4976 = vmax.f32 %v2735, 0.0
    %v4977 = vmax.f32 %v3447, 0.0
    %v4978 = vmax.f32 %v4159, 0.0
    %v4979 = vmax.f32 %v4871, 0.0
    %v4980 = vmax.f32 %v2738, 0.0
    %v4981 = vmax.f32 %v3450, 0.0
    %v4982 = vmax.f32 %v4162, 0.0
    %v4983 = vmax.f32 %v4874, 0.0
    %v4984 = vmax.f32 %v2740, 0.0
    %v4985 = vmax.f32 %v3452, 0.0
    %v4986 = vmax.f32 %v4164, 0.0
    %v4987 = vmax.f32 %v4876, 0.0
    %v4988 = vmax.f32 %v2743, 0.0
    %v4989 = vmax.f32 %v3455, 0.0
    %v4990 = vmax.f32 %v4167, 0.0
    %v4991 = vmax.f32 %v4879, 0.0
    %v4992 = vmax.f32 %v2745, 0.0
    %v4993 = vmax.f32 %v3457, 0.0
    %v4994 = vmax.f32 %v4169, 0.0
    %v4995 = vmax.f32 %v4881, 0.0
    %v4996 = vmax.f32 %v2748, 0.0
    %v4997 = vmax.f32 %v3460, 0.0
    %v4998 = vmax.f32 %v4172, 0.0
    %v4999 = vmax.f32 %v4884, 0.0
    %v5000 = vmax.f32 %v2750, 0.0
    %v5001 = vmax.f32 %v3462, 0.0
    %v5002 = vmax.f32 %v4174, 0.0
    %v5003 = vmax.f32 %v4886, 0.0
    %v5004 = vmax.f32 %v2753, 0.0
    %v5005 = vmax.f32 %v3465, 0.0
    %v5006 = vmax.f32 %v4177, 0.0
    %v5007 = vmax.f32 %v4889, 0.0
    %v5008 = vmax.f32 %v2755, 0.0
    %v5009 = vmax.f32 %v3467, 0.0
    %v5010 = vmax.f32 %v4179, 0.0
    %v5011 = vmax.f32 %v4891, 0.0
    %v5012 = vmax.f32 %v2758, 0.0
    %v5013 = vmax.f32 %v3470, 0.0
    %v5014 = vmax.f32 %v4182, 0.0
    %v5015 = vmax.f32 %v4894, 0.0
    %v5016 = vmax.f32 %v2760, 0.0
    %v5017 = vmax.f32 %v3472, 0.0
    %v5018 = vmax.f32 %v4184, 0.0
    %v5019 = vmax.f32 %v4896, 0.0
    %v5020 = vmax.f32 %v2763, 0.0
    %v5021 = vmax.f32 %v3475, 0.0
    %v5022 = vmax.f32 %v4187, 0.0
    %v5023 = vmax.f32 %v4899, 0.0
    %v5024 = vmax.f32 %v2765, 0.0
    %v5025 = vmax.f32 %v3477, 0.0
    %v5026 = vmax.f32 %v4189, 0.0
    %v5027 = vmax.f32 %v4901, 0.0
    %v5028 = vmax.f32 %v2768, 0.0
    %v5029 = vmax.f32 %v3480, 0.0
    %v5030 = vmax.f32 %v4192, 0.0
    %v5031 = vmax.f32 %v4904, 0.0
    %v5032 = vmax.f32 %v2770, 0.0
    %v5033 = vmax.f32 %v3482, 0.0
    %v5034 = vmax.f32 %v4194, 0.0
    %v5035 = vmax.f32 %v4906, 0.0
    %v5036 = vpack.c.bf16 %v4912, %v4908
    %v5037 = vpack.c.bf16 %v4913, %v4909
    %v5038 = vpack.c.bf16 %v4914, %v4910
    %v5039 = vpack.c.bf16 %v4915, %v4911
    %v5040 = vpack.c.bf16 %v4920, %v4916
    %v5041 = vpack.c.bf16 %v4921, %v4917
    %v5042 = vpack.c.bf16 %v4922, %v4918
    %v5043 = vpack.c.bf16 %v4923, %v4919
    %v5044 = vpack.c.bf16 %v4928, %v4924
    %v5045 = vpack.c.bf16 %v4929, %v4925
    %v5046 = vpack.c.bf16 %v4930, %v4926
    %v5047 = vpack.c.bf16 %v4931, %v4927
    %v5048 = vpack.c.bf16 %v4936, %v4932
    %v5049 = vpack.c.bf16 %v4937, %v4933
    %v5050 = vpack.c.bf16 %v4938, %v4934
    %v5051 = vpack.c.bf16 %v4939, %v4935
    %v5052 = vpack.c.bf16 %v4944, %v4940
    %v5053 = vpack.c.bf16 %v4945, %v4941
    %v5054 = vpack.c.bf16 %v4946, %v4942
    %v5055 = vpack.c.bf16 %v4947, %v4943
    %v5056 = vpack.c.bf16 %v4952, %v4948
    %v5057 = vpack.c.bf16 %v4953, %v4949
    %v5058 = vpack.c.bf16 %v4954, %v4950
    %v5059 = vpack.c.bf16 %v4955, %v4951
    %v5060 = vpack.c.bf16 %v4960, %v4956
    %v5061 = vpack.c.bf16 %v4961, %v4957
    %v5062 = vpack.c.bf16 %v4962, %v4958
    %v5063 = vpack.c.bf16 %v4963, %v4959
    %v5064 = vpack.c.bf16 %v4968, %v4964
    %v5065 = vpack.c.bf16 %v4969, %v4965
    %v5066 = vpack.c.bf16 %v4970, %v4966
    %v5067 = vpack.c.bf16 %v4971, %v4967
    %v5068 = vpack.c.bf16 %v4976, %v4972
    %v5069 = vpack.c.bf16 %v4977, %v4973
    %v5070 = vpack.c.bf16 %v4978, %v4974
    %v5071 = vpack.c.bf16 %v4979, %v4975
    %v5072 = vpack.c.bf16 %v4984, %v4980
    %v5073 = vpack.c.bf16 %v4985, %v4981
    %v5074 = vpack.c.bf16 %v4986, %v4982
    %v5075 = vpack.c.bf16 %v4987, %v4983
    %v5076 = vpack.c.bf16 %v4992, %v4988
    %v5077 = vpack.c.bf16 %v4993, %v4989
    %v5078 = vpack.c.bf16 %v4994, %v4990
    %v5079 = vpack.c.bf16 %v4995, %v4991
    %v5080 = vpack.c.bf16 %v5000, %v4996
    %v5081 = vpack.c.bf16 %v5001, %v4997
    %v5082 = vpack.c.bf16 %v5002, %v4998
    %v5083 = vpack.c.bf16 %v5003, %v4999
    %v5084 = vpack.c.bf16 %v5008, %v5004
    %v5085 = vpack.c.bf16 %v5009, %v5005
    %v5086 = vpack.c.bf16 %v5010, %v5006
    %v5087 = vpack.c.bf16 %v5011, %v5007
    %v5088 = vpack.c.bf16 %v5016, %v5012
    %v5089 = vpack.c.bf16 %v5017, %v5013
    %v5090 = vpack.c.bf16 %v5018, %v5014
    %v5091 = vpack.c.bf16 %v5019, %v5015
    %v5092 = vpack.c.bf16 %v5024, %v5020
    %v5093 = vpack.c.bf16 %v5025, %v5021
    %v5094 = vpack.c.bf16 %v5026, %v5022
    %v5095 = vpack.c.bf16 %v5027, %v5023
    %v5096 = vpack.c.bf16 %v5032, %v5028
    %v5097 = vpack.c.bf16 %v5033, %v5029
    %v5098 = vpack.c.bf16 %v5034, %v5030
    %v5099 = vpack.c.bf16 %v5035, %v5031
    %v5100 = vld [vmem:[#allocation8] sm:$0xff]
    %v5101 = vld [vmem:[#allocation8 + $0x8] sm:$0xff]
    %v5102 = vld [vmem:[#allocation8 + $0x10] sm:$0xff]
    %v5103 = vld [vmem:[#allocation8 + $0x18] sm:$0xff]
    %v5104 = vld [vmem:[#allocation8 + $0x20] sm:$0xff]
    %v5105 = vld [vmem:[#allocation8 + $0x28] sm:$0xff]
    %v5106 = vld [vmem:[#allocation8 + $0x30] sm:$0xff]
    %v5107 = vld [vmem:[#allocation8 + $0x38] sm:$0xff]
    %v5108 = vld [vmem:[#allocation8 + $0x40] sm:$0xff]
    %v5109 = vld [vmem:[#allocation8 + $0x48] sm:$0xff]
    %v5110 = vld [vmem:[#allocation8 + $0x50] sm:$0xff]
    %v5111 = vld [vmem:[#allocation8 + $0x58] sm:$0xff]
    %v5112 = vld [vmem:[#allocation8 + $0x60] sm:$0xff]
    %v5113 = vld [vmem:[#allocation8 + $0x68] sm:$0xff]
    %v5114 = vld [vmem:[#allocation8 + $0x70] sm:$0xff]
    %v5115 = vld [vmem:[#allocation8 + $0x78] sm:$0xff]
    %v5116 = vld [vmem:[#allocation8 + $0x80] sm:$0xff]
    %v5117 = vld [vmem:[#allocation8 + $0x88] sm:$0xff]
    %v5118 = vld [vmem:[#allocation8 + $0x90] sm:$0xff]
    %v5119 = vld [vmem:[#allocation8 + $0x98] sm:$0xff]
    %v5120 = vld [vmem:[#allocation8 + $0xa0] sm:$0xff]
    %v5121 = vld [vmem:[#allocation8 + $0xa8] sm:$0xff]
    %v5122 = vld [vmem:[#allocation8 + $0xb0] sm:$0xff]
    %v5123 = vld [vmem:[#allocation8 + $0xb8] sm:$0xff]
    %v5124 = vld [vmem:[#allocation8 + $0xc0] sm:$0xff]
    %v5125 = vld [vmem:[#allocation8 + $0xc8] sm:$0xff]
    %v5126 = vld [vmem:[#allocation8 + $0xd0] sm:$0xff]
    %v5127 = vld [vmem:[#allocation8 + $0xd8] sm:$0xff]
    %v5128 = vld [vmem:[#allocation8 + $0xe0] sm:$0xff]
    %v5129 = vld [vmem:[#allocation8 + $0xe8] sm:$0xff]
    %v5130 = vld [vmem:[#allocation8 + $0xf0] sm:$0xff]
    %v5131 = vld [vmem:[#allocation8 + $0xf8] sm:$0xff]
    %v5132 = vld [vmem:[#allocation8 + $0x100] sm:$0xff]
    %v5133 = vld [vmem:[#allocation8 + $0x108] sm:$0xff]
    %v5134 = vld [vmem:[#allocation8 + $0x110] sm:$0xff]
    %v5135 = vld [vmem:[#allocation8 + $0x118] sm:$0xff]
    %v5136 = vld [vmem:[#allocation8 + $0x120] sm:$0xff]
    %v5137 = vld [vmem:[#allocation8 + $0x128] sm:$0xff]
    %v5138 = vld [vmem:[#allocation8 + $0x130] sm:$0xff]
    %v5139 = vld [vmem:[#allocation8 + $0x138] sm:$0xff]
    %v5140 = vld [vmem:[#allocation8 + $0x140] sm:$0xff]
    %v5141 = vld [vmem:[#allocation8 + $0x148] sm:$0xff]
    %v5142 = vld [vmem:[#allocation8 + $0x150] sm:$0xff]
    %v5143 = vld [vmem:[#allocation8 + $0x158] sm:$0xff]
    %v5144 = vld [vmem:[#allocation8 + $0x160] sm:$0xff]
    %v5145 = vld [vmem:[#allocation8 + $0x168] sm:$0xff]
    %v5146 = vld [vmem:[#allocation8 + $0x170] sm:$0xff]
    %v5147 = vld [vmem:[#allocation8 + $0x178] sm:$0xff]
    %v5148 = vld [vmem:[#allocation8 + $0x180] sm:$0xff]
    %v5149 = vld [vmem:[#allocation8 + $0x188] sm:$0xff]
    %v5150 = vld [vmem:[#allocation8 + $0x190] sm:$0xff]
    %v5151 = vld [vmem:[#allocation8 + $0x198] sm:$0xff]
    %v5152 = vld [vmem:[#allocation8 + $0x1a0] sm:$0xff]
    %v5153 = vld [vmem:[#allocation8 + $0x1a8] sm:$0xff]
    %v5154 = vld [vmem:[#allocation8 + $0x1b0] sm:$0xff]
    %v5155 = vld [vmem:[#allocation8 + $0x1b8] sm:$0xff]
    %v5156 = vld [vmem:[#allocation8 + $0x1c0] sm:$0xff]
    %v5157 = vld [vmem:[#allocation8 + $0x1c8] sm:$0xff]
    %v5158 = vld [vmem:[#allocation8 + $0x1d0] sm:$0xff]
    %v5159 = vld [vmem:[#allocation8 + $0x1d8] sm:$0xff]
    %v5160 = vld [vmem:[#allocation8 + $0x1e0] sm:$0xff]
    %v5161 = vld [vmem:[#allocation8 + $0x1e8] sm:$0xff]
    %v5162 = vld [vmem:[#allocation8 + $0x1f0] sm:$0xff]
    %v5163 = vld [vmem:[#allocation8 + $0x1f8] sm:$0xff]
    %v5164 = vld [vmem:[#allocation8 + $0x200] sm:$0xff]
    %v5165 = vld [vmem:[#allocation8 + $0x208] sm:$0xff]
    %v5166 = vld [vmem:[#allocation8 + $0x210] sm:$0xff]
    %v5167 = vld [vmem:[#allocation8 + $0x218] sm:$0xff]
    %v5168 = vld [vmem:[#allocation8 + $0x220] sm:$0xff]
    %v5169 = vld [vmem:[#allocation8 + $0x228] sm:$0xff]
    %v5170 = vld [vmem:[#allocation8 + $0x230] sm:$0xff]
    %v5171 = vld [vmem:[#allocation8 + $0x238] sm:$0xff]
    %v5172 = vld [vmem:[#allocation8 + $0x240] sm:$0xff]
    %v5173 = vld [vmem:[#allocation8 + $0x248] sm:$0xff]
    %v5174 = vld [vmem:[#allocation8 + $0x250] sm:$0xff]
    %v5175 = vld [vmem:[#allocation8 + $0x258] sm:$0xff]
    %v5176 = vld [vmem:[#allocation8 + $0x260] sm:$0xff]
    %v5177 = vld [vmem:[#allocation8 + $0x268] sm:$0xff]
    %v5178 = vld [vmem:[#allocation8 + $0x270] sm:$0xff]
    %v5179 = vld [vmem:[#allocation8 + $0x278] sm:$0xff]
    %v5180 = vld [vmem:[#allocation8 + $0x280] sm:$0xff]
    %v5181 = vld [vmem:[#allocation8 + $0x288] sm:$0xff]
    %v5182 = vld [vmem:[#allocation8 + $0x290] sm:$0xff]
    %v5183 = vld [vmem:[#allocation8 + $0x298] sm:$0xff]
    %v5184 = vld [vmem:[#allocation8 + $0x2a0] sm:$0xff]
    %v5185 = vld [vmem:[#allocation8 + $0x2a8] sm:$0xff]
    %v5186 = vld [vmem:[#allocation8 + $0x2b0] sm:$0xff]
    %v5187 = vld [vmem:[#allocation8 + $0x2b8] sm:$0xff]
    %v5188 = vld [vmem:[#allocation8 + $0x2c0] sm:$0xff]
    %v5189 = vld [vmem:[#allocation8 + $0x2c8] sm:$0xff]
    %v5190 = vld [vmem:[#allocation8 + $0x2d0] sm:$0xff]
    %v5191 = vld [vmem:[#allocation8 + $0x2d8] sm:$0xff]
    %v5192 = vld [vmem:[#allocation8 + $0x2e0] sm:$0xff]
    %v5193 = vld [vmem:[#allocation8 + $0x2e8] sm:$0xff]
    %v5194 = vld [vmem:[#allocation8 + $0x2f0] sm:$0xff]
    %v5195 = vld [vmem:[#allocation8 + $0x2f8] sm:$0xff]
    %v5196 = vld [vmem:[#allocation8 + $0x300] sm:$0xff]
    %v5197 = vld [vmem:[#allocation8 + $0x308] sm:$0xff]
    %v5198 = vld [vmem:[#allocation8 + $0x310] sm:$0xff]
    %v5199 = vld [vmem:[#allocation8 + $0x318] sm:$0xff]
    %v5200 = vld [vmem:[#allocation8 + $0x320] sm:$0xff]
    %v5201 = vld [vmem:[#allocation8 + $0x328] sm:$0xff]
    %v5202 = vld [vmem:[#allocation8 + $0x330] sm:$0xff]
    %v5203 = vld [vmem:[#allocation8 + $0x338] sm:$0xff]
    %v5204 = vld [vmem:[#allocation8 + $0x340] sm:$0xff]
    %v5205 = vld [vmem:[#allocation8 + $0x348] sm:$0xff]
    %v5206 = vld [vmem:[#allocation8 + $0x350] sm:$0xff]
    %v5207 = vld [vmem:[#allocation8 + $0x358] sm:$0xff]
    %v5208 = vld [vmem:[#allocation8 + $0x360] sm:$0xff]
    %v5209 = vld [vmem:[#allocation8 + $0x368] sm:$0xff]
    %v5210 = vld [vmem:[#allocation8 + $0x370] sm:$0xff]
    %v5211 = vld [vmem:[#allocation8 + $0x378] sm:$0xff]
    %v5212 = vld [vmem:[#allocation8 + $0x380] sm:$0xff]
    %v5213 = vld [vmem:[#allocation8 + $0x388] sm:$0xff]
    %v5214 = vld [vmem:[#allocation8 + $0x390] sm:$0xff]
    %v5215 = vld [vmem:[#allocation8 + $0x398] sm:$0xff]
    %v5216 = vld [vmem:[#allocation8 + $0x3a0] sm:$0xff]
    %v5217 = vld [vmem:[#allocation8 + $0x3a8] sm:$0xff]
    %v5218 = vld [vmem:[#allocation8 + $0x3b0] sm:$0xff]
    %v5219 = vld [vmem:[#allocation8 + $0x3b8] sm:$0xff]
    %v5220 = vld [vmem:[#allocation8 + $0x3c0] sm:$0xff]
    %v5221 = vld [vmem:[#allocation8 + $0x3c8] sm:$0xff]
    %v5222 = vld [vmem:[#allocation8 + $0x3d0] sm:$0xff]
    %v5223 = vld [vmem:[#allocation8 + $0x3d8] sm:$0xff]
    %v5224 = vld [vmem:[#allocation8 + $0x3e0] sm:$0xff]
    %v5225 = vld [vmem:[#allocation8 + $0x3e8] sm:$0xff]
    %v5226 = vld [vmem:[#allocation8 + $0x3f0] sm:$0xff]
    %v5227 = vld [vmem:[#allocation8 + $0x3f8] sm:$0xff]
    %v5228 = vld [vmem:[#allocation10] sm:$0xf]
    %v5230 = vperm.slane %v5228, 0
    %v5231 = vperm.slane %v5228, 1
    %v5232 = vperm.slane %v5228, 2
    %v5233 = vperm.slane %v5228, 3
    %v5366 = vunpack.c.l.b16 %v5100
    %v5367 = vunpack.c.h.b16 %v5100
    %v5368 = vunpack.c.l.b16 %v5101
    %v5369 = vunpack.c.h.b16 %v5101
    %v5370 = vunpack.c.l.b16 %v5102
    %v5371 = vunpack.c.h.b16 %v5102
    %v5372 = vunpack.c.l.b16 %v5103
    %v5373 = vunpack.c.h.b16 %v5103
    %v5374 = vunpack.c.l.b16 %v5104
    %v5375 = vunpack.c.h.b16 %v5104
    %v5376 = vunpack.c.l.b16 %v5105
    %v5377 = vunpack.c.h.b16 %v5105
    %v5378 = vunpack.c.l.b16 %v5106
    %v5379 = vunpack.c.h.b16 %v5106
    %v5380 = vunpack.c.l.b16 %v5107
    %v5381 = vunpack.c.h.b16 %v5107
    %v5382 = vunpack.c.l.b16 %v5108
    %v5383 = vunpack.c.h.b16 %v5108
    %v5384 = vunpack.c.l.b16 %v5109
    %v5385 = vunpack.c.h.b16 %v5109
    %v5386 = vunpack.c.l.b16 %v5110
    %v5387 = vunpack.c.h.b16 %v5110
    %v5388 = vunpack.c.l.b16 %v5111
    %v5389 = vunpack.c.h.b16 %v5111
    %v5390 = vunpack.c.l.b16 %v5112
    %v5391 = vunpack.c.h.b16 %v5112
    %v5392 = vunpack.c.l.b16 %v5113
    %v5393 = vunpack.c.h.b16 %v5113
    %v5394 = vunpack.c.l.b16 %v5114
    %v5395 = vunpack.c.h.b16 %v5114
    %v5396 = vunpack.c.l.b16 %v5115
    %v5397 = vunpack.c.h.b16 %v5115
    %v5398 = vunpack.c.l.b16 %v5116
    %v5399 = vunpack.c.h.b16 %v5116
    %v5400 = vunpack.c.l.b16 %v5117
    %v5401 = vunpack.c.h.b16 %v5117
    %v5402 = vunpack.c.l.b16 %v5118
    %v5403 = vunpack.c.h.b16 %v5118
    %v5404 = vunpack.c.l.b16 %v5119
    %v5405 = vunpack.c.h.b16 %v5119
    %v5406 = vunpack.c.l.b16 %v5120
    %v5407 = vunpack.c.h.b16 %v5120
    %v5408 = vunpack.c.l.b16 %v5121
    %v5409 = vunpack.c.h.b16 %v5121
    %v5410 = vunpack.c.l.b16 %v5122
    %v5411 = vunpack.c.h.b16 %v5122
    %v5412 = vunpack.c.l.b16 %v5123
    %v5413 = vunpack.c.h.b16 %v5123
    %v5414 = vunpack.c.l.b16 %v5124
    %v5415 = vunpack.c.h.b16 %v5124
    %v5416 = vunpack.c.l.b16 %v5125
    %v5417 = vunpack.c.h.b16 %v5125
    %v5418 = vunpack.c.l.b16 %v5126
    %v5419 = vunpack.c.h.b16 %v5126
    %v5420 = vunpack.c.l.b16 %v5127
    %v5421 = vunpack.c.h.b16 %v5127
    %v5422 = vunpack.c.l.b16 %v5128
    %v5423 = vunpack.c.h.b16 %v5128
    %v5424 = vunpack.c.l.b16 %v5129
    %v5425 = vunpack.c.h.b16 %v5129
    %v5426 = vunpack.c.l.b16 %v5130
    %v5427 = vunpack.c.h.b16 %v5130
    %v5428 = vunpack.c.l.b16 %v5131
    %v5429 = vunpack.c.h.b16 %v5131
    %v5430 = vunpack.c.l.b16 %v5132
    %v5431 = vunpack.c.h.b16 %v5132
    %v5432 = vunpack.c.l.b16 %v5133
    %v5433 = vunpack.c.h.b16 %v5133
    %v5434 = vunpack.c.l.b16 %v5134
    %v5435 = vunpack.c.h.b16 %v5134
    %v5436 = vunpack.c.l.b16 %v5135
    %v5437 = vunpack.c.h.b16 %v5135
    %v5438 = vunpack.c.l.b16 %v5136
    %v5439 = vunpack.c.h.b16 %v5136
    %v5440 = vunpack.c.l.b16 %v5137
    %v5441 = vunpack.c.h.b16 %v5137
    %v5442 = vunpack.c.l.b16 %v5138
    %v5443 = vunpack.c.h.b16 %v5138
    %v5444 = vunpack.c.l.b16 %v5139
    %v5445 = vunpack.c.h.b16 %v5139
    %v5446 = vunpack.c.l.b16 %v5140
    %v5447 = vunpack.c.h.b16 %v5140
    %v5448 = vunpack.c.l.b16 %v5141
    %v5449 = vunpack.c.h.b16 %v5141
    %v5450 = vunpack.c.l.b16 %v5142
    %v5451 = vunpack.c.h.b16 %v5142
    %v5452 = vunpack.c.l.b16 %v5143
    %v5453 = vunpack.c.h.b16 %v5143
    %v5454 = vunpack.c.l.b16 %v5144
    %v5455 = vunpack.c.h.b16 %v5144
    %v5456 = vunpack.c.l.b16 %v5145
    %v5457 = vunpack.c.h.b16 %v5145
    %v5458 = vunpack.c.l.b16 %v5146
    %v5459 = vunpack.c.h.b16 %v5146
    %v5460 = vunpack.c.l.b16 %v5147
    %v5461 = vunpack.c.h.b16 %v5147
    %v5462 = vunpack.c.l.b16 %v5148
    %v5463 = vunpack.c.h.b16 %v5148
    %v5464 = vunpack.c.l.b16 %v5149
    %v5465 = vunpack.c.h.b16 %v5149
    %v5466 = vunpack.c.l.b16 %v5150
    %v5467 = vunpack.c.h.b16 %v5150
    %v5468 = vunpack.c.l.b16 %v5151
    %v5469 = vunpack.c.h.b16 %v5151
    %v5470 = vunpack.c.l.b16 %v5152
    %v5471 = vunpack.c.h.b16 %v5152
    %v5472 = vunpack.c.l.b16 %v5153
    %v5473 = vunpack.c.h.b16 %v5153
    %v5474 = vunpack.c.l.b16 %v5154
    %v5475 = vunpack.c.h.b16 %v5154
    %v5476 = vunpack.c.l.b16 %v5155
    %v5477 = vunpack.c.h.b16 %v5155
    %v5478 = vunpack.c.l.b16 %v5156
    %v5479 = vunpack.c.h.b16 %v5156
    %v5480 = vunpack.c.l.b16 %v5157
    %v5481 = vunpack.c.h.b16 %v5157
    %v5482 = vunpack.c.l.b16 %v5158
    %v5483 = vunpack.c.h.b16 %v5158
    %v5484 = vunpack.c.l.b16 %v5159
    %v5485 = vunpack.c.h.b16 %v5159
    %v5486 = vunpack.c.l.b16 %v5160
    %v5487 = vunpack.c.h.b16 %v5160
    %v5488 = vunpack.c.l.b16 %v5161
    %v5489 = vunpack.c.h.b16 %v5161
    %v5490 = vunpack.c.l.b16 %v5162
    %v5491 = vunpack.c.h.b16 %v5162
    %v5492 = vunpack.c.l.b16 %v5163
    %v5493 = vunpack.c.h.b16 %v5163
    %v5494 = vunpack.c.l.b16 %v5164
    %v5495 = vunpack.c.h.b16 %v5164
    %v5496 = vunpack.c.l.b16 %v5165
    %v5497 = vunpack.c.h.b16 %v5165
    %v5498 = vunpack.c.l.b16 %v5166
    %v5499 = vunpack.c.h.b16 %v5166
    %v5500 = vunpack.c.l.b16 %v5167
    %v5501 = vunpack.c.h.b16 %v5167
    %v5502 = vunpack.c.l.b16 %v5168
    %v5503 = vunpack.c.h.b16 %v5168
    %v5504 = vunpack.c.l.b16 %v5169
    %v5505 = vunpack.c.h.b16 %v5169
    %v5506 = vunpack.c.l.b16 %v5170
    %v5507 = vunpack.c.h.b16 %v5170
    %v5508 = vunpack.c.l.b16 %v5171
    %v5509 = vunpack.c.h.b16 %v5171
    %v5510 = vunpack.c.l.b16 %v5172
    %v5511 = vunpack.c.h.b16 %v5172
    %v5512 = vunpack.c.l.b16 %v5173
    %v5513 = vunpack.c.h.b16 %v5173
    %v5514 = vunpack.c.l.b16 %v5174
    %v5515 = vunpack.c.h.b16 %v5174
    %v5516 = vunpack.c.l.b16 %v5175
    %v5517 = vunpack.c.h.b16 %v5175
    %v5518 = vunpack.c.l.b16 %v5176
    %v5519 = vunpack.c.h.b16 %v5176
    %v5520 = vunpack.c.l.b16 %v5177
    %v5521 = vunpack.c.h.b16 %v5177
    %v5522 = vunpack.c.l.b16 %v5178
    %v5523 = vunpack.c.h.b16 %v5178
    %v5524 = vunpack.c.l.b16 %v5179
    %v5525 = vunpack.c.h.b16 %v5179
    %v5526 = vunpack.c.l.b16 %v5180
    %v5527 = vunpack.c.h.b16 %v5180
    %v5528 = vunpack.c.l.b16 %v5181
    %v5529 = vunpack.c.h.b16 %v5181
    %v5530 = vunpack.c.l.b16 %v5182
    %v5531 = vunpack.c.h.b16 %v5182
    %v5532 = vunpack.c.l.b16 %v5183
    %v5533 = vunpack.c.h.b16 %v5183
    %v5534 = vunpack.c.l.b16 %v5184
    %v5535 = vunpack.c.h.b16 %v5184
    %v5536 = vunpack.c.l.b16 %v5185
    %v5537 = vunpack.c.h.b16 %v5185
    %v5538 = vunpack.c.l.b16 %v5186
    %v5539 = vunpack.c.h.b16 %v5186
    %v5540 = vunpack.c.l.b16 %v5187
    %v5541 = vunpack.c.h.b16 %v5187
    %v5542 = vunpack.c.l.b16 %v5188
    %v5543 = vunpack.c.h.b16 %v5188
    %v5544 = vunpack.c.l.b16 %v5189
    %v5545 = vunpack.c.h.b16 %v5189
    %v5546 = vunpack.c.l.b16 %v5190
    %v5547 = vunpack.c.h.b16 %v5190
    %v5548 = vunpack.c.l.b16 %v5191
    %v5549 = vunpack.c.h.b16 %v5191
    %v5550 = vunpack.c.l.b16 %v5192
    %v5551 = vunpack.c.h.b16 %v5192
    %v5552 = vunpack.c.l.b16 %v5193
    %v5553 = vunpack.c.h.b16 %v5193
    %v5554 = vunpack.c.l.b16 %v5194
    %v5555 = vunpack.c.h.b16 %v5194
    %v5556 = vunpack.c.l.b16 %v5195
    %v5557 = vunpack.c.h.b16 %v5195
    %v5558 = vunpack.c.l.b16 %v5196
    %v5559 = vunpack.c.h.b16 %v5196
    %v5560 = vunpack.c.l.b16 %v5197
    %v5561 = vunpack.c.h.b16 %v5197
    %v5562 = vunpack.c.l.b16 %v5198
    %v5563 = vunpack.c.h.b16 %v5198
    %v5564 = vunpack.c.l.b16 %v5199
    %v5565 = vunpack.c.h.b16 %v5199
    %v5566 = vunpack.c.l.b16 %v5200
    %v5567 = vunpack.c.h.b16 %v5200
    %v5568 = vunpack.c.l.b16 %v5201
    %v5569 = vunpack.c.h.b16 %v5201
    %v5570 = vunpack.c.l.b16 %v5202
    %v5571 = vunpack.c.h.b16 %v5202
    %v5572 = vunpack.c.l.b16 %v5203
    %v5573 = vunpack.c.h.b16 %v5203
    %v5574 = vunpack.c.l.b16 %v5204
    %v5575 = vunpack.c.h.b16 %v5204
    %v5576 = vunpack.c.l.b16 %v5205
    %v5577 = vunpack.c.h.b16 %v5205
    %v5578 = vunpack.c.l.b16 %v5206
    %v5579 = vunpack.c.h.b16 %v5206
    %v5580 = vunpack.c.l.b16 %v5207
    %v5581 = vunpack.c.h.b16 %v5207
    %v5582 = vunpack.c.l.b16 %v5208
    %v5583 = vunpack.c.h.b16 %v5208
    %v5584 = vunpack.c.l.b16 %v5209
    %v5585 = vunpack.c.h.b16 %v5209
    %v5586 = vunpack.c.l.b16 %v5210
    %v5587 = vunpack.c.h.b16 %v5210
    %v5588 = vunpack.c.l.b16 %v5211
    %v5589 = vunpack.c.h.b16 %v5211
    %v5590 = vunpack.c.l.b16 %v5212
    %v5591 = vunpack.c.h.b16 %v5212
    %v5592 = vunpack.c.l.b16 %v5213
    %v5593 = vunpack.c.h.b16 %v5213
    %v5594 = vunpack.c.l.b16 %v5214
    %v5595 = vunpack.c.h.b16 %v5214
    %v5596 = vunpack.c.l.b16 %v5215
    %v5597 = vunpack.c.h.b16 %v5215
    %v5598 = vunpack.c.l.b16 %v5216
    %v5599 = vunpack.c.h.b16 %v5216
    %v5600 = vunpack.c.l.b16 %v5217
    %v5601 = vunpack.c.h.b16 %v5217
    %v5602 = vunpack.c.l.b16 %v5218
    %v5603 = vunpack.c.h.b16 %v5218
    %v5604 = vunpack.c.l.b16 %v5219
    %v5605 = vunpack.c.h.b16 %v5219
    %v5606 = vunpack.c.l.b16 %v5220
    %v5607 = vunpack.c.h.b16 %v5220
    %v5608 = vunpack.c.l.b16 %v5221
    %v5609 = vunpack.c.h.b16 %v5221
    %v5610 = vunpack.c.l.b16 %v5222
    %v5611 = vunpack.c.h.b16 %v5222
    %v5612 = vunpack.c.l.b16 %v5223
    %v5613 = vunpack.c.h.b16 %v5223
    %v5614 = vunpack.c.l.b16 %v5224
    %v5615 = vunpack.c.h.b16 %v5224
    %v5616 = vunpack.c.l.b16 %v5225
    %v5617 = vunpack.c.h.b16 %v5225
    %v5618 = vunpack.c.l.b16 %v5226
    %v5619 = vunpack.c.h.b16 %v5226
    %v5620 = vunpack.c.l.b16 %v5227
    %v5621 = vunpack.c.h.b16 %v5227
    %v5622 = vpack.c.b16 %v5370, %v5366
    %v5623 = vpack.c.b16 %v5371, %v5367
    %v5624 = vpack.c.b16 %v5372, %v5368
    %v5625 = vpack.c.b16 %v5373, %v5369
    %v5626 = vpack.c.b16 %v5378, %v5374
    %v5627 = vpack.c.b16 %v5379, %v5375
    %v5628 = vpack.c.b16 %v5380, %v5376
    %v5629 = vpack.c.b16 %v5381, %v5377
    %v5630 = vpack.c.b16 %v5386, %v5382
    %v5631 = vpack.c.b16 %v5387, %v5383
    %v5632 = vpack.c.b16 %v5388, %v5384
    %v5633 = vpack.c.b16 %v5389, %v5385
    %v5634 = vpack.c.b16 %v5394, %v5390
    %v5635 = vpack.c.b16 %v5395, %v5391
    %v5636 = vpack.c.b16 %v5396, %v5392
    %v5637 = vpack.c.b16 %v5397, %v5393
    %v5638 = vpack.c.b16 %v5402, %v5398
    %v5639 = vpack.c.b16 %v5403, %v5399
    %v5640 = vpack.c.b16 %v5404, %v5400
    %v5641 = vpack.c.b16 %v5405, %v5401
    %v5642 = vpack.c.b16 %v5410, %v5406
    %v5643 = vpack.c.b16 %v5411, %v5407
    %v5644 = vpack.c.b16 %v5412, %v5408
    %v5645 = vpack.c.b16 %v5413, %v5409
    %v5646 = vpack.c.b16 %v5418, %v5414
    %v5647 = vpack.c.b16 %v5419, %v5415
    %v5648 = vpack.c.b16 %v5420, %v5416
    %v5649 = vpack.c.b16 %v5421, %v5417
    %v5650 = vpack.c.b16 %v5426, %v5422
    %v5651 = vpack.c.b16 %v5427, %v5423
    %v5652 = vpack.c.b16 %v5428, %v5424
    %v5653 = vpack.c.b16 %v5429, %v5425
    %v5654 = vpack.c.b16 %v5434, %v5430
    %v5655 = vpack.c.b16 %v5435, %v5431
    %v5656 = vpack.c.b16 %v5436, %v5432
    %v5657 = vpack.c.b16 %v5437, %v5433
    %v5658 = vpack.c.b16 %v5442, %v5438
    %v5659 = vpack.c.b16 %v5443, %v5439
    %v5660 = vpack.c.b16 %v5444, %v5440
    %v5661 = vpack.c.b16 %v5445, %v5441
    %v5662 = vpack.c.b16 %v5450, %v5446
    %v5663 = vpack.c.b16 %v5451, %v5447
    %v5664 = vpack.c.b16 %v5452, %v5448
    %v5665 = vpack.c.b16 %v5453, %v5449
    %v5666 = vpack.c.b16 %v5458, %v5454
    %v5667 = vpack.c.b16 %v5459, %v5455
    %v5668 = vpack.c.b16 %v5460, %v5456
    %v5669 = vpack.c.b16 %v5461, %v5457
    %v5670 = vpack.c.b16 %v5466, %v5462
    %v5671 = vpack.c.b16 %v5467, %v5463
    %v5672 = vpack.c.b16 %v5468, %v5464
    %v5673 = vpack.c.b16 %v5469, %v5465
    %v5674 = vpack.c.b16 %v5474, %v5470
    %v5675 = vpack.c.b16 %v5475, %v5471
    %v5676 = vpack.c.b16 %v5476, %v5472
    %v5677 = vpack.c.b16 %v5477, %v5473
    %v5678 = vpack.c.b16 %v5482, %v5478
    %v5679 = vpack.c.b16 %v5483, %v5479
    %v5680 = vpack.c.b16 %v5484, %v5480
    %v5681 = vpack.c.b16 %v5485, %v5481
    %v5682 = vpack.c.b16 %v5490, %v5486
    %v5683 = vpack.c.b16 %v5491, %v5487
    %v5684 = vpack.c.b16 %v5492, %v5488
    %v5685 = vpack.c.b16 %v5493, %v5489
    %v5686 = vpack.c.b16 %v5498, %v5494
    %v5687 = vpack.c.b16 %v5499, %v5495
    %v5688 = vpack.c.b16 %v5500, %v5496
    %v5689 = vpack.c.b16 %v5501, %v5497
    %v5690 = vpack.c.b16 %v5506, %v5502
    %v5691 = vpack.c.b16 %v5507, %v5503
    %v5692 = vpack.c.b16 %v5508, %v5504
    %v5693 = vpack.c.b16 %v5509, %v5505
    %v5694 = vpack.c.b16 %v5514, %v5510
    %v5695 = vpack.c.b16 %v5515, %v5511
    %v5696 = vpack.c.b16 %v5516, %v5512
    %v5697 = vpack.c.b16 %v5517, %v5513
    %v5698 = vpack.c.b16 %v5522, %v5518
    %v5699 = vpack.c.b16 %v5523, %v5519
    %v5700 = vpack.c.b16 %v5524, %v5520
    %v5701 = vpack.c.b16 %v5525, %v5521
    %v5702 = vpack.c.b16 %v5530, %v5526
    %v5703 = vpack.c.b16 %v5531, %v5527
    %v5704 = vpack.c.b16 %v5532, %v5528
    %v5705 = vpack.c.b16 %v5533, %v5529
    %v5706 = vpack.c.b16 %v5538, %v5534
    %v5707 = vpack.c.b16 %v5539, %v5535
    %v5708 = vpack.c.b16 %v5540, %v5536
    %v5709 = vpack.c.b16 %v5541, %v5537
    %v5710 = vpack.c.b16 %v5546, %v5542
    %v5711 = vpack.c.b16 %v5547, %v5543
    %v5712 = vpack.c.b16 %v5548, %v5544
    %v5713 = vpack.c.b16 %v5549, %v5545
    %v5714 = vpack.c.b16 %v5554, %v5550
    %v5715 = vpack.c.b16 %v5555, %v5551
    %v5716 = vpack.c.b16 %v5556, %v5552
    %v5717 = vpack.c.b16 %v5557, %v5553
    %v5718 = vpack.c.b16 %v5562, %v5558
    %v5719 = vpack.c.b16 %v5563, %v5559
    %v5720 = vpack.c.b16 %v5564, %v5560
    %v5721 = vpack.c.b16 %v5565, %v5561
    %v5722 = vpack.c.b16 %v5570, %v5566
    %v5723 = vpack.c.b16 %v5571, %v5567
    %v5724 = vpack.c.b16 %v5572, %v5568
    %v5725 = vpack.c.b16 %v5573, %v5569
    %v5726 = vpack.c.b16 %v5578, %v5574
    %v5727 = vpack.c.b16 %v5579, %v5575
    %v5728 = vpack.c.b16 %v5580, %v5576
    %v5729 = vpack.c.b16 %v5581, %v5577
    %v5730 = vpack.c.b16 %v5586, %v5582
    %v5731 = vpack.c.b16 %v5587, %v5583
    %v5732 = vpack.c.b16 %v5588, %v5584
    %v5733 = vpack.c.b16 %v5589, %v5585
    %v5734 = vpack.c.b16 %v5594, %v5590
    %v5735 = vpack.c.b16 %v5595, %v5591
    %v5736 = vpack.c.b16 %v5596, %v5592
    %v5737 = vpack.c.b16 %v5597, %v5593
    %v5738 = vpack.c.b16 %v5602, %v5598
    %v5739 = vpack.c.b16 %v5603, %v5599
    %v5740 = vpack.c.b16 %v5604, %v5600
    %v5741 = vpack.c.b16 %v5605, %v5601
    %v5742 = vpack.c.b16 %v5610, %v5606
    %v5743 = vpack.c.b16 %v5611, %v5607
    %v5744 = vpack.c.b16 %v5612, %v5608
    %v5745 = vpack.c.b16 %v5613, %v5609
    %v5746 = vpack.c.b16 %v5618, %v5614
    %v5747 = vpack.c.b16 %v5619, %v5615
    %v5748 = vpack.c.b16 %v5620, %v5616
    %v5749 = vpack.c.b16 %v5621, %v5617
    %5878 = vmatpush.bf16.msra.mxu0 %v5650
    %5879 = vmatpush.bf16.msra.mxu0 %v5646
    %5880 = vmatpush.bf16.msra.mxu0 %v5642
    %5881 = vmatpush.bf16.msra.mxu0 %v5638
    %5882 = vmatpush.bf16.msra.mxu0 %v5634
    %5883 = vmatpush.bf16.msra.mxu0 %v5630
    %5884 = vmatpush.bf16.msra.mxu0 %v5626
    %5885 = vmatpush.bf16.msra.mxu0 %v5622
    %5886 = vmatmul.bf16.gmra.mxu0 %v5036
    %v5887 = vpop.f32.mrf.mxu0
    %v5888 = vadd.f32 %v5230, %v5887
    %v5889 = vpop.f32.mrf.mxu0
    %v5890 = vadd.f32 %v5230, %v5889
    %5891 = vmatmul.bf16.gmra.mxu0 %v5040
    %v5892 = vpop.f32.mrf.mxu0
    %v5893 = vadd.f32 %v5230, %v5892
    %v5894 = vpop.f32.mrf.mxu0
    %v5895 = vadd.f32 %v5230, %v5894
    %5896 = vmatmul.bf16.gmra.mxu0 %v5044
    %v5897 = vpop.f32.mrf.mxu0
    %v5898 = vadd.f32 %v5230, %v5897
    %v5899 = vpop.f32.mrf.mxu0
    %v5900 = vadd.f32 %v5230, %v5899
    %5901 = vmatmul.bf16.gmra.mxu0 %v5048
    %v5902 = vpop.f32.mrf.mxu0
    %v5903 = vadd.f32 %v5230, %v5902
    %v5904 = vpop.f32.mrf.mxu0
    %v5905 = vadd.f32 %v5230, %v5904
    %5906 = vmatmul.bf16.gmra.mxu0 %v5052
    %v5907 = vpop.f32.mrf.mxu0
    %v5908 = vadd.f32 %v5230, %v5907
    %v5909 = vpop.f32.mrf.mxu0
    %v5910 = vadd.f32 %v5230, %v5909
    %5911 = vmatmul.bf16.gmra.mxu0 %v5056
    %v5912 = vpop.f32.mrf.mxu0
    %v5913 = vadd.f32 %v5230, %v5912
    %v5914 = vpop.f32.mrf.mxu0
    %v5915 = vadd.f32 %v5230, %v5914
    %5916 = vmatmul.bf16.gmra.mxu0 %v5060
    %v5917 = vpop.f32.mrf.mxu0
    %v5918 = vadd.f32 %v5230, %v5917
    %v5919 = vpop.f32.mrf.mxu0
    %v5920 = vadd.f32 %v5230, %v5919
    %5921 = vmatmul.bf16.gmra.mxu0 %v5064
    %v5922 = vpop.f32.mrf.mxu0
    %v5923 = vadd.f32 %v5230, %v5922
    %v5924 = vpop.f32.mrf.mxu0
    %v5925 = vadd.f32 %v5230, %v5924
    %5926 = vmatmul.bf16.gmra.mxu0 %v5068
    %v5927 = vpop.f32.mrf.mxu0
    %v5928 = vadd.f32 %v5230, %v5927
    %v5929 = vpop.f32.mrf.mxu0
    %v5930 = vadd.f32 %v5230, %v5929
    %5931 = vmatmul.bf16.gmra.mxu0 %v5072
    %v5932 = vpop.f32.mrf.mxu0
    %v5933 = vadd.f32 %v5230, %v5932
    %v5934 = vpop.f32.mrf.mxu0
    %v5935 = vadd.f32 %v5230, %v5934
    %5936 = vmatmul.bf16.gmra.mxu0 %v5076
    %v5937 = vpop.f32.mrf.mxu0
    %v5938 = vadd.f32 %v5230, %v5937
    %v5939 = vpop.f32.mrf.mxu0
    %v5940 = vadd.f32 %v5230, %v5939
    %5941 = vmatmul.bf16.gmra.mxu0 %v5080
    %v5942 = vpop.f32.mrf.mxu0
    %v5943 = vadd.f32 %v5230, %v5942
    %v5944 = vpop.f32.mrf.mxu0
    %v5945 = vadd.f32 %v5230, %v5944
    %5946 = vmatmul.bf16.gmra.mxu0 %v5084
    %v5947 = vpop.f32.mrf.mxu0
    %v5948 = vadd.f32 %v5230, %v5947
    %v5949 = vpop.f32.mrf.mxu0
    %v5950 = vadd.f32 %v5230, %v5949
    %5951 = vmatmul.bf16.gmra.mxu0 %v5088
    %v5952 = vpop.f32.mrf.mxu0
    %v5953 = vadd.f32 %v5230, %v5952
    %v5954 = vpop.f32.mrf.mxu0
    %v5955 = vadd.f32 %v5230, %v5954
    %5956 = vmatmul.bf16.gmra.mxu0 %v5092
    %v5957 = vpop.f32.mrf.mxu0
    %v5958 = vadd.f32 %v5230, %v5957
    %v5959 = vpop.f32.mrf.mxu0
    %v5960 = vadd.f32 %v5230, %v5959
    %5961 = vmatmul.bf16.gmra.mxu0 %v5096
    %v5962 = vpop.f32.mrf.mxu0
    %v5963 = vadd.f32 %v5230, %v5962
    %v5964 = vpop.f32.mrf.mxu0
    %v5965 = vadd.f32 %v5230, %v5964
    %5966 = vdwg.mxu0
    %5967 = vmatpush.bf16.msra.mxu0 %v5682
    %5968 = vmatpush.bf16.msra.mxu0 %v5678
    %5969 = vmatpush.bf16.msra.mxu0 %v5674
    %5970 = vmatpush.bf16.msra.mxu0 %v5670
    %5971 = vmatpush.bf16.msra.mxu0 %v5666
    %5972 = vmatpush.bf16.msra.mxu0 %v5662
    %5973 = vmatpush.bf16.msra.mxu0 %v5658
    %5974 = vmatpush.bf16.msra.mxu0 %v5654
    %5975 = vmatmul.bf16.gmra.mxu0 %v5037
    %v5976 = vpop.f32.mrf.mxu0
    %v5977 = vadd.f32 %v5888, %v5976
    %v5978 = vpop.f32.mrf.mxu0
    %v5979 = vadd.f32 %v5890, %v5978
    %5980 = vmatmul.bf16.gmra.mxu0 %v5041
    %v5981 = vpop.f32.mrf.mxu0
    %v5982 = vadd.f32 %v5893, %v5981
    %v5983 = vpop.f32.mrf.mxu0
    %v5984 = vadd.f32 %v5895, %v5983
    %5985 = vmatmul.bf16.gmra.mxu0 %v5045
    %v5986 = vpop.f32.mrf.mxu0
    %v5987 = vadd.f32 %v5898, %v5986
    %v5988 = vpop.f32.mrf.mxu0
    %v5989 = vadd.f32 %v5900, %v5988
    %5990 = vmatmul.bf16.gmra.mxu0 %v5049
    %v5991 = vpop.f32.mrf.mxu0
    %v5992 = vadd.f32 %v5903, %v5991
    %v5993 = vpop.f32.mrf.mxu0
    %v5994 = vadd.f32 %v5905, %v5993
    %5995 = vmatmul.bf16.gmra.mxu0 %v5053
    %v5996 = vpop.f32.mrf.mxu0
    %v5997 = vadd.f32 %v5908, %v5996
    %v5998 = vpop.f32.mrf.mxu0
    %v5999 = vadd.f32 %v5910, %v5998
    %6000 = vmatmul.bf16.gmra.mxu0 %v5057
    %v6001 = vpop.f32.mrf.mxu0
    %v6002 = vadd.f32 %v5913, %v6001
    %v6003 = vpop.f32.mrf.mxu0
    %v6004 = vadd.f32 %v5915, %v6003
    %6005 = vmatmul.bf16.gmra.mxu0 %v5061
    %v6006 = vpop.f32.mrf.mxu0
    %v6007 = vadd.f32 %v5918, %v6006
    %v6008 = vpop.f32.mrf.mxu0
    %v6009 = vadd.f32 %v5920, %v6008
    %6010 = vmatmul.bf16.gmra.mxu0 %v5065
    %v6011 = vpop.f32.mrf.mxu0
    %v6012 = vadd.f32 %v5923, %v6011
    %v6013 = vpop.f32.mrf.mxu0
    %v6014 = vadd.f32 %v5925, %v6013
    %6015 = vmatmul.bf16.gmra.mxu0 %v5069
    %v6016 = vpop.f32.mrf.mxu0
    %v6017 = vadd.f32 %v5928, %v6016
    %v6018 = vpop.f32.mrf.mxu0
    %v6019 = vadd.f32 %v5930, %v6018
    %6020 = vmatmul.bf16.gmra.mxu0 %v5073
    %v6021 = vpop.f32.mrf.mxu0
    %v6022 = vadd.f32 %v5933, %v6021
    %v6023 = vpop.f32.mrf.mxu0
    %v6024 = vadd.f32 %v5935, %v6023
    %6025 = vmatmul.bf16.gmra.mxu0 %v5077
    %v6026 = vpop.f32.mrf.mxu0
    %v6027 = vadd.f32 %v5938, %v6026
    %v6028 = vpop.f32.mrf.mxu0
    %v6029 = vadd.f32 %v5940, %v6028
    %6030 = vmatmul.bf16.gmra.mxu0 %v5081
    %v6031 = vpop.f32.mrf.mxu0
    %v6032 = vadd.f32 %v5943, %v6031
    %v6033 = vpop.f32.mrf.mxu0
    %v6034 = vadd.f32 %v5945, %v6033
    %6035 = vmatmul.bf16.gmra.mxu0 %v5085
    %v6036 = vpop.f32.mrf.mxu0
    %v6037 = vadd.f32 %v5948, %v6036
    %v6038 = vpop.f32.mrf.mxu0
    %v6039 = vadd.f32 %v5950, %v6038
    %6040 = vmatmul.bf16.gmra.mxu0 %v5089
    %v6041 = vpop.f32.mrf.mxu0
    %v6042 = vadd.f32 %v5953, %v6041
    %v6043 = vpop.f32.mrf.mxu0
    %v6044 = vadd.f32 %v5955, %v6043
    %6045 = vmatmul.bf16.gmra.mxu0 %v5093
    %v6046 = vpop.f32.mrf.mxu0
    %v6047 = vadd.f32 %v5958, %v6046
    %v6048 = vpop.f32.mrf.mxu0
    %v6049 = vadd.f32 %v5960, %v6048
    %6050 = vmatmul.bf16.gmra.mxu0 %v5097
    %v6051 = vpop.f32.mrf.mxu0
    %v6052 = vadd.f32 %v5963, %v6051
    %v6053 = vpop.f32.mrf.mxu0
    %v6054 = vadd.f32 %v5965, %v6053
    %6055 = vdwg.mxu0
    %6056 = vmatpush.bf16.msra.mxu0 %v5714
    %6057 = vmatpush.bf16.msra.mxu0 %v5710
    %6058 = vmatpush.bf16.msra.mxu0 %v5706
    %6059 = vmatpush.bf16.msra.mxu0 %v5702
    %6060 = vmatpush.bf16.msra.mxu0 %v5698
    %6061 = vmatpush.bf16.msra.mxu0 %v5694
    %6062 = vmatpush.bf16.msra.mxu0 %v5690
    %6063 = vmatpush.bf16.msra.mxu0 %v5686
    %6064 = vmatmul.bf16.gmra.mxu0 %v5038
    %v6065 = vpop.f32.mrf.mxu0
    %v6066 = vadd.f32 %v5977, %v6065
    %v6067 = vpop.f32.mrf.mxu0
    %v6068 = vadd.f32 %v5979, %v6067
    %6069 = vmatmul.bf16.gmra.mxu0 %v5042
    %v6070 = vpop.f32.mrf.mxu0
    %v6071 = vadd.f32 %v5982, %v6070
    %v6072 = vpop.f32.mrf.mxu0
    %v6073 = vadd.f32 %v5984, %v6072
    %6074 = vmatmul.bf16.gmra.mxu0 %v5046
    %v6075 = vpop.f32.mrf.mxu0
    %v6076 = vadd.f32 %v5987, %v6075
    %v6077 = vpop.f32.mrf.mxu0
    %v6078 = vadd.f32 %v5989, %v6077
    %6079 = vmatmul.bf16.gmra.mxu0 %v5050
    %v6080 = vpop.f32.mrf.mxu0
    %v6081 = vadd.f32 %v5992, %v6080
    %v6082 = vpop.f32.mrf.mxu0
    %v6083 = vadd.f32 %v5994, %v6082
    %6084 = vmatmul.bf16.gmra.mxu0 %v5054
    %v6085 = vpop.f32.mrf.mxu0
    %v6086 = vadd.f32 %v5997, %v6085
    %v6087 = vpop.f32.mrf.mxu0
    %v6088 = vadd.f32 %v5999, %v6087
    %6089 = vmatmul.bf16.gmra.mxu0 %v5058
    %v6090 = vpop.f32.mrf.mxu0
    %v6091 = vadd.f32 %v6002, %v6090
    %v6092 = vpop.f32.mrf.mxu0
    %v6093 = vadd.f32 %v6004, %v6092
    %6094 = vmatmul.bf16.gmra.mxu0 %v5062
    %v6095 = vpop.f32.mrf.mxu0
    %v6096 = vadd.f32 %v6007, %v6095
    %v6097 = vpop.f32.mrf.mxu0
    %v6098 = vadd.f32 %v6009, %v6097
    %6099 = vmatmul.bf16.gmra.mxu0 %v5066
    %v6100 = vpop.f32.mrf.mxu0
    %v6101 = vadd.f32 %v6012, %v6100
    %v6102 = vpop.f32.mrf.mxu0
    %v6103 = vadd.f32 %v6014, %v6102
    %6104 = vmatmul.bf16.gmra.mxu0 %v5070
    %v6105 = vpop.f32.mrf.mxu0
    %v6106 = vadd.f32 %v6017, %v6105
    %v6107 = vpop.f32.mrf.mxu0
    %v6108 = vadd.f32 %v6019, %v6107
    %6109 = vmatmul.bf16.gmra.mxu0 %v5074
    %v6110 = vpop.f32.mrf.mxu0
    %v6111 = vadd.f32 %v6022, %v6110
    %v6112 = vpop.f32.mrf.mxu0
    %v6113 = vadd.f32 %v6024, %v6112
    %6114 = vmatmul.bf16.gmra.mxu0 %v5078
    %v6115 = vpop.f32.mrf.mxu0
    %v6116 = vadd.f32 %v6027, %v6115
    %v6117 = vpop.f32.mrf.mxu0
    %v6118 = vadd.f32 %v6029, %v6117
    %6119 = vmatmul.bf16.gmra.mxu0 %v5082
    %v6120 = vpop.f32.mrf.mxu0
    %v6121 = vadd.f32 %v6032, %v6120
    %v6122 = vpop.f32.mrf.mxu0
    %v6123 = vadd.f32 %v6034, %v6122
    %6124 = vmatmul.bf16.gmra.mxu0 %v5086
    %v6125 = vpop.f32.mrf.mxu0
    %v6126 = vadd.f32 %v6037, %v6125
    %v6127 = vpop.f32.mrf.mxu0
    %v6128 = vadd.f32 %v6039, %v6127
    %6129 = vmatmul.bf16.gmra.mxu0 %v5090
    %v6130 = vpop.f32.mrf.mxu0
    %v6131 = vadd.f32 %v6042, %v6130
    %v6132 = vpop.f32.mrf.mxu0
    %v6133 = vadd.f32 %v6044, %v6132
    %6134 = vmatmul.bf16.gmra.mxu0 %v5094
    %v6135 = vpop.f32.mrf.mxu0
    %v6136 = vadd.f32 %v6047, %v6135
    %v6137 = vpop.f32.mrf.mxu0
    %v6138 = vadd.f32 %v6049, %v6137
    %6139 = vmatmul.bf16.gmra.mxu0 %v5098
    %v6140 = vpop.f32.mrf.mxu0
    %v6141 = vadd.f32 %v6052, %v6140
    %v6142 = vpop.f32.mrf.mxu0
    %v6143 = vadd.f32 %v6054, %v6142
    %6144 = vdwg.mxu0
    %6145 = vmatpush.bf16.msra.mxu0 %v5746
    %6146 = vmatpush.bf16.msra.mxu0 %v5742
    %6147 = vmatpush.bf16.msra.mxu0 %v5738
    %6148 = vmatpush.bf16.msra.mxu0 %v5734
    %6149 = vmatpush.bf16.msra.mxu0 %v5730
    %6150 = vmatpush.bf16.msra.mxu0 %v5726
    %6151 = vmatpush.bf16.msra.mxu0 %v5722
    %6152 = vmatpush.bf16.msra.mxu0 %v5718
    %6153 = vmatmul.bf16.gmra.mxu0 %v5039
    %v6154 = vpop.f32.mrf.mxu0
    %v6155 = vadd.f32 %v6066, %v6154
    %v6156 = vpop.f32.mrf.mxu0
    %v6157 = vadd.f32 %v6068, %v6156
    %6158 = vmatmul.bf16.gmra.mxu0 %v5043
    %v6159 = vpop.f32.mrf.mxu0
    %v6160 = vadd.f32 %v6071, %v6159
    %v6161 = vpop.f32.mrf.mxu0
    %v6162 = vadd.f32 %v6073, %v6161
    %6163 = vmatmul.bf16.gmra.mxu0 %v5047
    %v6164 = vpop.f32.mrf.mxu0
    %v6165 = vadd.f32 %v6076, %v6164
    %v6166 = vpop.f32.mrf.mxu0
    %v6167 = vadd.f32 %v6078, %v6166
    %6168 = vmatmul.bf16.gmra.mxu0 %v5051
    %v6169 = vpop.f32.mrf.mxu0
    %v6170 = vadd.f32 %v6081, %v6169
    %v6171 = vpop.f32.mrf.mxu0
    %v6172 = vadd.f32 %v6083, %v6171
    %6173 = vmatmul.bf16.gmra.mxu0 %v5055
    %v6174 = vpop.f32.mrf.mxu0
    %v6175 = vadd.f32 %v6086, %v6174
    %v6176 = vpop.f32.mrf.mxu0
    %v6177 = vadd.f32 %v6088, %v6176
    %6178 = vmatmul.bf16.gmra.mxu0 %v5059
    %v6179 = vpop.f32.mrf.mxu0
    %v6180 = vadd.f32 %v6091, %v6179
    %v6181 = vpop.f32.mrf.mxu0
    %v6182 = vadd.f32 %v6093, %v6181
    %6183 = vmatmul.bf16.gmra.mxu0 %v5063
    %v6184 = vpop.f32.mrf.mxu0
    %v6185 = vadd.f32 %v6096, %v6184
    %v6186 = vpop.f32.mrf.mxu0
    %v6187 = vadd.f32 %v6098, %v6186
    %6188 = vmatmul.bf16.gmra.mxu0 %v5067
    %v6189 = vpop.f32.mrf.mxu0
    %v6190 = vadd.f32 %v6101, %v6189
    %v6191 = vpop.f32.mrf.mxu0
    %v6192 = vadd.f32 %v6103, %v6191
    %6193 = vmatmul.bf16.gmra.mxu0 %v5071
    %v6194 = vpop.f32.mrf.mxu0
    %v6195 = vadd.f32 %v6106, %v6194
    %v6196 = vpop.f32.mrf.mxu0
    %v6197 = vadd.f32 %v6108, %v6196
    %6198 = vmatmul.bf16.gmra.mxu0 %v5075
    %v6199 = vpop.f32.mrf.mxu0
    %v6200 = vadd.f32 %v6111, %v6199
    %v6201 = vpop.f32.mrf.mxu0
    %v6202 = vadd.f32 %v6113, %v6201
    %6203 = vmatmul.bf16.gmra.mxu0 %v5079
    %v6204 = vpop.f32.mrf.mxu0
    %v6205 = vadd.f32 %v6116, %v6204
    %v6206 = vpop.f32.mrf.mxu0
    %v6207 = vadd.f32 %v6118, %v6206
    %6208 = vmatmul.bf16.gmra.mxu0 %v5083
    %v6209 = vpop.f32.mrf.mxu0
    %v6210 = vadd.f32 %v6121, %v6209
    %v6211 = vpop.f32.mrf.mxu0
    %v6212 = vadd.f32 %v6123, %v6211
    %6213 = vmatmul.bf16.gmra.mxu0 %v5087
    %v6214 = vpop.f32.mrf.mxu0
    %v6215 = vadd.f32 %v6126, %v6214
    %v6216 = vpop.f32.mrf.mxu0
    %v6217 = vadd.f32 %v6128, %v6216
    %6218 = vmatmul.bf16.gmra.mxu0 %v5091
    %v6219 = vpop.f32.mrf.mxu0
    %v6220 = vadd.f32 %v6131, %v6219
    %v6221 = vpop.f32.mrf.mxu0
    %v6222 = vadd.f32 %v6133, %v6221
    %6223 = vmatmul.bf16.gmra.mxu0 %v5095
    %v6224 = vpop.f32.mrf.mxu0
    %v6225 = vadd.f32 %v6136, %v6224
    %v6226 = vpop.f32.mrf.mxu0
    %v6227 = vadd.f32 %v6138, %v6226
    %6228 = vmatmul.bf16.gmra.mxu0 %v5099
    %v6229 = vpop.f32.mrf.mxu0
    %v6230 = vadd.f32 %v6141, %v6229
    %v6231 = vpop.f32.mrf.mxu0
    %v6232 = vadd.f32 %v6143, %v6231
    %6233 = vdwg.mxu0
    %6234 = vmatpush.bf16.msra.mxu0 %v5651
    %6235 = vmatpush.bf16.msra.mxu0 %v5647
    %6236 = vmatpush.bf16.msra.mxu0 %v5643
    %6237 = vmatpush.bf16.msra.mxu0 %v5639
    %6238 = vmatpush.bf16.msra.mxu0 %v5635
    %6239 = vmatpush.bf16.msra.mxu0 %v5631
    %6240 = vmatpush.bf16.msra.mxu0 %v5627
    %6241 = vmatpush.bf16.msra.mxu0 %v5623
    %6242 = vmatmul.bf16.gmra.mxu0 %v5036
    %v6243 = vpop.f32.mrf.mxu0
    %v6244 = vadd.f32 %v5231, %v6243
    %v6245 = vpop.f32.mrf.mxu0
    %v6246 = vadd.f32 %v5231, %v6245
    %6247 = vmatmul.bf16.gmra.mxu0 %v5040
    %v6248 = vpop.f32.mrf.mxu0
    %v6249 = vadd.f32 %v5231, %v6248
    %v6250 = vpop.f32.mrf.mxu0
    %v6251 = vadd.f32 %v5231, %v6250
    %6252 = vmatmul.bf16.gmra.mxu0 %v5044
    %v6253 = vpop.f32.mrf.mxu0
    %v6254 = vadd.f32 %v5231, %v6253
    %v6255 = vpop.f32.mrf.mxu0
    %v6256 = vadd.f32 %v5231, %v6255
    %6257 = vmatmul.bf16.gmra.mxu0 %v5048
    %v6258 = vpop.f32.mrf.mxu0
    %v6259 = vadd.f32 %v5231, %v6258
    %v6260 = vpop.f32.mrf.mxu0
    %v6261 = vadd.f32 %v5231, %v6260
    %6262 = vmatmul.bf16.gmra.mxu0 %v5052
    %v6263 = vpop.f32.mrf.mxu0
    %v6264 = vadd.f32 %v5231, %v6263
    %v6265 = vpop.f32.mrf.mxu0
    %v6266 = vadd.f32 %v5231, %v6265
    %6267 = vmatmul.bf16.gmra.mxu0 %v5056
    %v6268 = vpop.f32.mrf.mxu0
    %v6269 = vadd.f32 %v5231, %v6268
    %v6270 = vpop.f32.mrf.mxu0
    %v6271 = vadd.f32 %v5231, %v6270
    %6272 = vmatmul.bf16.gmra.mxu0 %v5060
    %v6273 = vpop.f32.mrf.mxu0
    %v6274 = vadd.f32 %v5231, %v6273
    %v6275 = vpop.f32.mrf.mxu0
    %v6276 = vadd.f32 %v5231, %v6275
    %6277 = vmatmul.bf16.gmra.mxu0 %v5064
    %v6278 = vpop.f32.mrf.mxu0
    %v6279 = vadd.f32 %v5231, %v6278
    %v6280 = vpop.f32.mrf.mxu0
    %v6281 = vadd.f32 %v5231, %v6280
    %6282 = vmatmul.bf16.gmra.mxu0 %v5068
    %v6283 = vpop.f32.mrf.mxu0
    %v6284 = vadd.f32 %v5231, %v6283
    %v6285 = vpop.f32.mrf.mxu0
    %v6286 = vadd.f32 %v5231, %v6285
    %6287 = vmatmul.bf16.gmra.mxu0 %v5072
    %v6288 = vpop.f32.mrf.mxu0
    %v6289 = vadd.f32 %v5231, %v6288
    %v6290 = vpop.f32.mrf.mxu0
    %v6291 = vadd.f32 %v5231, %v6290
    %6292 = vmatmul.bf16.gmra.mxu0 %v5076
    %v6293 = vpop.f32.mrf.mxu0
    %v6294 = vadd.f32 %v5231, %v6293
    %v6295 = vpop.f32.mrf.mxu0
    %v6296 = vadd.f32 %v5231, %v6295
    %6297 = vmatmul.bf16.gmra.mxu0 %v5080
    %v6298 = vpop.f32.mrf.mxu0
    %v6299 = vadd.f32 %v5231, %v6298
    %v6300 = vpop.f32.mrf.mxu0
    %v6301 = vadd.f32 %v5231, %v6300
    %6302 = vmatmul.bf16.gmra.mxu0 %v5084
    %v6303 = vpop.f32.mrf.mxu0
    %v6304 = vadd.f32 %v5231, %v6303
    %v6305 = vpop.f32.mrf.mxu0
    %v6306 = vadd.f32 %v5231, %v6305
    %6307 = vmatmul.bf16.gmra.mxu0 %v5088
    %v6308 = vpop.f32.mrf.mxu0
    %v6309 = vadd.f32 %v5231, %v6308
    %v6310 = vpop.f32.mrf.mxu0
    %v6311 = vadd.f32 %v5231, %v6310
    %6312 = vmatmul.bf16.gmra.mxu0 %v5092
    %v6313 = vpop.f32.mrf.mxu0
    %v6314 = vadd.f32 %v5231, %v6313
    %v6315 = vpop.f32.mrf.mxu0
    %v6316 = vadd.f32 %v5231, %v6315
    %6317 = vmatmul.bf16.gmra.mxu0 %v5096
    %v6318 = vpop.f32.mrf.mxu0
    %v6319 = vadd.f32 %v5231, %v6318
    %v6320 = vpop.f32.mrf.mxu0
    %v6321 = vadd.f32 %v5231, %v6320
    %6322 = vdwg.mxu0
    %6323 = vmatpush.bf16.msra.mxu0 %v5683
    %6324 = vmatpush.bf16.msra.mxu0 %v5679
    %6325 = vmatpush.bf16.msra.mxu0 %v5675
    %6326 = vmatpush.bf16.msra.mxu0 %v5671
    %6327 = vmatpush.bf16.msra.mxu0 %v5667
    %6328 = vmatpush.bf16.msra.mxu0 %v5663
    %6329 = vmatpush.bf16.msra.mxu0 %v5659
    %6330 = vmatpush.bf16.msra.mxu0 %v5655
    %6331 = vmatmul.bf16.gmra.mxu0 %v5037
    %v6332 = vpop.f32.mrf.mxu0
    %v6333 = vadd.f32 %v6244, %v6332
    %v6334 = vpop.f32.mrf.mxu0
    %v6335 = vadd.f32 %v6246, %v6334
    %6336 = vmatmul.bf16.gmra.mxu0 %v5041
    %v6337 = vpop.f32.mrf.mxu0
    %v6338 = vadd.f32 %v6249, %v6337
    %v6339 = vpop.f32.mrf.mxu0
    %v6340 = vadd.f32 %v6251, %v6339
    %6341 = vmatmul.bf16.gmra.mxu0 %v5045
    %v6342 = vpop.f32.mrf.mxu0
    %v6343 = vadd.f32 %v6254, %v6342
    %v6344 = vpop.f32.mrf.mxu0
    %v6345 = vadd.f32 %v6256, %v6344
    %6346 = vmatmul.bf16.gmra.mxu0 %v5049
    %v6347 = vpop.f32.mrf.mxu0
    %v6348 = vadd.f32 %v6259, %v6347
    %v6349 = vpop.f32.mrf.mxu0
    %v6350 = vadd.f32 %v6261, %v6349
    %6351 = vmatmul.bf16.gmra.mxu0 %v5053
    %v6352 = vpop.f32.mrf.mxu0
    %v6353 = vadd.f32 %v6264, %v6352
    %v6354 = vpop.f32.mrf.mxu0
    %v6355 = vadd.f32 %v6266, %v6354
    %6356 = vmatmul.bf16.gmra.mxu0 %v5057
    %v6357 = vpop.f32.mrf.mxu0
    %v6358 = vadd.f32 %v6269, %v6357
    %v6359 = vpop.f32.mrf.mxu0
    %v6360 = vadd.f32 %v6271, %v6359
    %6361 = vmatmul.bf16.gmra.mxu0 %v5061
    %v6362 = vpop.f32.mrf.mxu0
    %v6363 = vadd.f32 %v6274, %v6362
    %v6364 = vpop.f32.mrf.mxu0
    %v6365 = vadd.f32 %v6276, %v6364
    %6366 = vmatmul.bf16.gmra.mxu0 %v5065
    %v6367 = vpop.f32.mrf.mxu0
    %v6368 = vadd.f32 %v6279, %v6367
    %v6369 = vpop.f32.mrf.mxu0
    %v6370 = vadd.f32 %v6281, %v6369
    %6371 = vmatmul.bf16.gmra.mxu0 %v5069
    %v6372 = vpop.f32.mrf.mxu0
    %v6373 = vadd.f32 %v6284, %v6372
    %v6374 = vpop.f32.mrf.mxu0
    %v6375 = vadd.f32 %v6286, %v6374
    %6376 = vmatmul.bf16.gmra.mxu0 %v5073
    %v6377 = vpop.f32.mrf.mxu0
    %v6378 = vadd.f32 %v6289, %v6377
    %v6379 = vpop.f32.mrf.mxu0
    %v6380 = vadd.f32 %v6291, %v6379
    %6381 = vmatmul.bf16.gmra.mxu0 %v5077
    %v6382 = vpop.f32.mrf.mxu0
    %v6383 = vadd.f32 %v6294, %v6382
    %v6384 = vpop.f32.mrf.mxu0
    %v6385 = vadd.f32 %v6296, %v6384
    %6386 = vmatmul.bf16.gmra.mxu0 %v5081
    %v6387 = vpop.f32.mrf.mxu0
    %v6388 = vadd.f32 %v6299, %v6387
    %v6389 = vpop.f32.mrf.mxu0
    %v6390 = vadd.f32 %v6301, %v6389
    %6391 = vmatmul.bf16.gmra.mxu0 %v5085
    %v6392 = vpop.f32.mrf.mxu0
    %v6393 = vadd.f32 %v6304, %v6392
    %v6394 = vpop.f32.mrf.mxu0
    %v6395 = vadd.f32 %v6306, %v6394
    %6396 = vmatmul.bf16.gmra.mxu0 %v5089
    %v6397 = vpop.f32.mrf.mxu0
    %v6398 = vadd.f32 %v6309, %v6397
    %v6399 = vpop.f32.mrf.mxu0
    %v6400 = vadd.f32 %v6311, %v6399
    %6401 = vmatmul.bf16.gmra.mxu0 %v5093
    %v6402 = vpop.f32.mrf.mxu0
    %v6403 = vadd.f32 %v6314, %v6402
    %v6404 = vpop.f32.mrf.mxu0
    %v6405 = vadd.f32 %v6316, %v6404
    %6406 = vmatmul.bf16.gmra.mxu0 %v5097
    %v6407 = vpop.f32.mrf.mxu0
    %v6408 = vadd.f32 %v6319, %v6407
    %v6409 = vpop.f32.mrf.mxu0
    %v6410 = vadd.f32 %v6321, %v6409
    %6411 = vdwg.mxu0
    %6412 = vmatpush.bf16.msra.mxu0 %v5715
    %6413 = vmatpush.bf16.msra.mxu0 %v5711
    %6414 = vmatpush.bf16.msra.mxu0 %v5707
    %6415 = vmatpush.bf16.msra.mxu0 %v5703
    %6416 = vmatpush.bf16.msra.mxu0 %v5699
    %6417 = vmatpush.bf16.msra.mxu0 %v5695
    %6418 = vmatpush.bf16.msra.mxu0 %v5691
    %6419 = vmatpush.bf16.msra.mxu0 %v5687
    %6420 = vmatmul.bf16.gmra.mxu0 %v5038
    %v6421 = vpop.f32.mrf.mxu0
    %v6422 = vadd.f32 %v6333, %v6421
    %v6423 = vpop.f32.mrf.mxu0
    %v6424 = vadd.f32 %v6335, %v6423
    %6425 = vmatmul.bf16.gmra.mxu0 %v5042
    %v6426 = vpop.f32.mrf.mxu0
    %v6427 = vadd.f32 %v6338, %v6426
    %v6428 = vpop.f32.mrf.mxu0
    %v6429 = vadd.f32 %v6340, %v6428
    %6430 = vmatmul.bf16.gmra.mxu0 %v5046
    %v6431 = vpop.f32.mrf.mxu0
    %v6432 = vadd.f32 %v6343, %v6431
    %v6433 = vpop.f32.mrf.mxu0
    %v6434 = vadd.f32 %v6345, %v6433
    %6435 = vmatmul.bf16.gmra.mxu0 %v5050
    %v6436 = vpop.f32.mrf.mxu0
    %v6437 = vadd.f32 %v6348, %v6436
    %v6438 = vpop.f32.mrf.mxu0
    %v6439 = vadd.f32 %v6350, %v6438
    %6440 = vmatmul.bf16.gmra.mxu0 %v5054
    %v6441 = vpop.f32.mrf.mxu0
    %v6442 = vadd.f32 %v6353, %v6441
    %v6443 = vpop.f32.mrf.mxu0
    %v6444 = vadd.f32 %v6355, %v6443
    %6445 = vmatmul.bf16.gmra.mxu0 %v5058
    %v6446 = vpop.f32.mrf.mxu0
    %v6447 = vadd.f32 %v6358, %v6446
    %v6448 = vpop.f32.mrf.mxu0
    %v6449 = vadd.f32 %v6360, %v6448
    %6450 = vmatmul.bf16.gmra.mxu0 %v5062
    %v6451 = vpop.f32.mrf.mxu0
    %v6452 = vadd.f32 %v6363, %v6451
    %v6453 = vpop.f32.mrf.mxu0
    %v6454 = vadd.f32 %v6365, %v6453
    %6455 = vmatmul.bf16.gmra.mxu0 %v5066
    %v6456 = vpop.f32.mrf.mxu0
    %v6457 = vadd.f32 %v6368, %v6456
    %v6458 = vpop.f32.mrf.mxu0
    %v6459 = vadd.f32 %v6370, %v6458
    %6460 = vmatmul.bf16.gmra.mxu0 %v5070
    %v6461 = vpop.f32.mrf.mxu0
    %v6462 = vadd.f32 %v6373, %v6461
    %v6463 = vpop.f32.mrf.mxu0
    %v6464 = vadd.f32 %v6375, %v6463
    %6465 = vmatmul.bf16.gmra.mxu0 %v5074
    %v6466 = vpop.f32.mrf.mxu0
    %v6467 = vadd.f32 %v6378, %v6466
    %v6468 = vpop.f32.mrf.mxu0
    %v6469 = vadd.f32 %v6380, %v6468
    %6470 = vmatmul.bf16.gmra.mxu0 %v5078
    %v6471 = vpop.f32.mrf.mxu0
    %v6472 = vadd.f32 %v6383, %v6471
    %v6473 = vpop.f32.mrf.mxu0
    %v6474 = vadd.f32 %v6385, %v6473
    %6475 = vmatmul.bf16.gmra.mxu0 %v5082
    %v6476 = vpop.f32.mrf.mxu0
    %v6477 = vadd.f32 %v6388, %v6476
    %v6478 = vpop.f32.mrf.mxu0
    %v6479 = vadd.f32 %v6390, %v6478
    %6480 = vmatmul.bf16.gmra.mxu0 %v5086
    %v6481 = vpop.f32.mrf.mxu0
    %v6482 = vadd.f32 %v6393, %v6481
    %v6483 = vpop.f32.mrf.mxu0
    %v6484 = vadd.f32 %v6395, %v6483
    %6485 = vmatmul.bf16.gmra.mxu0 %v5090
    %v6486 = vpop.f32.mrf.mxu0
    %v6487 = vadd.f32 %v6398, %v6486
    %v6488 = vpop.f32.mrf.mxu0
    %v6489 = vadd.f32 %v6400, %v6488
    %6490 = vmatmul.bf16.gmra.mxu0 %v5094
    %v6491 = vpop.f32.mrf.mxu0
    %v6492 = vadd.f32 %v6403, %v6491
    %v6493 = vpop.f32.mrf.mxu0
    %v6494 = vadd.f32 %v6405, %v6493
    %6495 = vmatmul.bf16.gmra.mxu0 %v5098
    %v6496 = vpop.f32.mrf.mxu0
    %v6497 = vadd.f32 %v6408, %v6496
    %v6498 = vpop.f32.mrf.mxu0
    %v6499 = vadd.f32 %v6410, %v6498
    %6500 = vdwg.mxu0
    %6501 = vmatpush.bf16.msra.mxu0 %v5747
    %6502 = vmatpush.bf16.msra.mxu0 %v5743
    %6503 = vmatpush.bf16.msra.mxu0 %v5739
    %6504 = vmatpush.bf16.msra.mxu0 %v5735
    %6505 = vmatpush.bf16.msra.mxu0 %v5731
    %6506 = vmatpush.bf16.msra.mxu0 %v5727
    %6507 = vmatpush.bf16.msra.mxu0 %v5723
    %6508 = vmatpush.bf16.msra.mxu0 %v5719
    %6509 = vmatmul.bf16.gmra.mxu0 %v5039
    %v6510 = vpop.f32.mrf.mxu0
    %v6511 = vadd.f32 %v6422, %v6510
    %v6512 = vpop.f32.mrf.mxu0
    %v6513 = vadd.f32 %v6424, %v6512
    %6514 = vmatmul.bf16.gmra.mxu0 %v5043
    %v6515 = vpop.f32.mrf.mxu0
    %v6516 = vadd.f32 %v6427, %v6515
    %v6517 = vpop.f32.mrf.mxu0
    %v6518 = vadd.f32 %v6429, %v6517
    %6519 = vmatmul.bf16.gmra.mxu0 %v5047
    %v6520 = vpop.f32.mrf.mxu0
    %v6521 = vadd.f32 %v6432, %v6520
    %v6522 = vpop.f32.mrf.mxu0
    %v6523 = vadd.f32 %v6434, %v6522
    %6524 = vmatmul.bf16.gmra.mxu0 %v5051
    %v6525 = vpop.f32.mrf.mxu0
    %v6526 = vadd.f32 %v6437, %v6525
    %v6527 = vpop.f32.mrf.mxu0
    %v6528 = vadd.f32 %v6439, %v6527
    %6529 = vmatmul.bf16.gmra.mxu0 %v5055
    %v6530 = vpop.f32.mrf.mxu0
    %v6531 = vadd.f32 %v6442, %v6530
    %v6532 = vpop.f32.mrf.mxu0
    %v6533 = vadd.f32 %v6444, %v6532
    %6534 = vmatmul.bf16.gmra.mxu0 %v5059
    %v6535 = vpop.f32.mrf.mxu0
    %v6536 = vadd.f32 %v6447, %v6535
    %v6537 = vpop.f32.mrf.mxu0
    %v6538 = vadd.f32 %v6449, %v6537
    %6539 = vmatmul.bf16.gmra.mxu0 %v5063
    %v6540 = vpop.f32.mrf.mxu0
    %v6541 = vadd.f32 %v6452, %v6540
    %v6542 = vpop.f32.mrf.mxu0
    %v6543 = vadd.f32 %v6454, %v6542
    %6544 = vmatmul.bf16.gmra.mxu0 %v5067
    %v6545 = vpop.f32.mrf.mxu0
    %v6546 = vadd.f32 %v6457, %v6545
    %v6547 = vpop.f32.mrf.mxu0
    %v6548 = vadd.f32 %v6459, %v6547
    %6549 = vmatmul.bf16.gmra.mxu0 %v5071
    %v6550 = vpop.f32.mrf.mxu0
    %v6551 = vadd.f32 %v6462, %v6550
    %v6552 = vpop.f32.mrf.mxu0
    %v6553 = vadd.f32 %v6464, %v6552
    %6554 = vmatmul.bf16.gmra.mxu0 %v5075
    %v6555 = vpop.f32.mrf.mxu0
    %v6556 = vadd.f32 %v6467, %v6555
    %v6557 = vpop.f32.mrf.mxu0
    %v6558 = vadd.f32 %v6469, %v6557
    %6559 = vmatmul.bf16.gmra.mxu0 %v5079
    %v6560 = vpop.f32.mrf.mxu0
    %v6561 = vadd.f32 %v6472, %v6560
    %v6562 = vpop.f32.mrf.mxu0
    %v6563 = vadd.f32 %v6474, %v6562
    %6564 = vmatmul.bf16.gmra.mxu0 %v5083
    %v6565 = vpop.f32.mrf.mxu0
    %v6566 = vadd.f32 %v6477, %v6565
    %v6567 = vpop.f32.mrf.mxu0
    %v6568 = vadd.f32 %v6479, %v6567
    %6569 = vmatmul.bf16.gmra.mxu0 %v5087
    %v6570 = vpop.f32.mrf.mxu0
    %v6571 = vadd.f32 %v6482, %v6570
    %v6572 = vpop.f32.mrf.mxu0
    %v6573 = vadd.f32 %v6484, %v6572
    %6574 = vmatmul.bf16.gmra.mxu0 %v5091
    %v6575 = vpop.f32.mrf.mxu0
    %v6576 = vadd.f32 %v6487, %v6575
    %v6577 = vpop.f32.mrf.mxu0
    %v6578 = vadd.f32 %v6489, %v6577
    %6579 = vmatmul.bf16.gmra.mxu0 %v5095
    %v6580 = vpop.f32.mrf.mxu0
    %v6581 = vadd.f32 %v6492, %v6580
    %v6582 = vpop.f32.mrf.mxu0
    %v6583 = vadd.f32 %v6494, %v6582
    %6584 = vmatmul.bf16.gmra.mxu0 %v5099
    %v6585 = vpop.f32.mrf.mxu0
    %v6586 = vadd.f32 %v6497, %v6585
    %v6587 = vpop.f32.mrf.mxu0
    %v6588 = vadd.f32 %v6499, %v6587
    %6589 = vdwg.mxu0
    %6590 = vmatpush.bf16.msra.mxu0 %v5652
    %6591 = vmatpush.bf16.msra.mxu0 %v5648
    %6592 = vmatpush.bf16.msra.mxu0 %v5644
    %6593 = vmatpush.bf16.msra.mxu0 %v5640
    %6594 = vmatpush.bf16.msra.mxu0 %v5636
    %6595 = vmatpush.bf16.msra.mxu0 %v5632
    %6596 = vmatpush.bf16.msra.mxu0 %v5628
    %6597 = vmatpush.bf16.msra.mxu0 %v5624
    %6598 = vmatmul.bf16.gmra.mxu0 %v5036
    %v6599 = vpop.f32.mrf.mxu0
    %v6600 = vadd.f32 %v5232, %v6599
    %v6601 = vpop.f32.mrf.mxu0
    %v6602 = vadd.f32 %v5232, %v6601
    %6603 = vmatmul.bf16.gmra.mxu0 %v5040
    %v6604 = vpop.f32.mrf.mxu0
    %v6605 = vadd.f32 %v5232, %v6604
    %v6606 = vpop.f32.mrf.mxu0
    %v6607 = vadd.f32 %v5232, %v6606
    %6608 = vmatmul.bf16.gmra.mxu0 %v5044
    %v6609 = vpop.f32.mrf.mxu0
    %v6610 = vadd.f32 %v5232, %v6609
    %v6611 = vpop.f32.mrf.mxu0
    %v6612 = vadd.f32 %v5232, %v6611
    %6613 = vmatmul.bf16.gmra.mxu0 %v5048
    %v6614 = vpop.f32.mrf.mxu0
    %v6615 = vadd.f32 %v5232, %v6614
    %v6616 = vpop.f32.mrf.mxu0
    %v6617 = vadd.f32 %v5232, %v6616
    %6618 = vmatmul.bf16.gmra.mxu0 %v5052
    %v6619 = vpop.f32.mrf.mxu0
    %v6620 = vadd.f32 %v5232, %v6619
    %v6621 = vpop.f32.mrf.mxu0
    %v6622 = vadd.f32 %v5232, %v6621
    %6623 = vmatmul.bf16.gmra.mxu0 %v5056
    %v6624 = vpop.f32.mrf.mxu0
    %v6625 = vadd.f32 %v5232, %v6624
    %v6626 = vpop.f32.mrf.mxu0
    %v6627 = vadd.f32 %v5232, %v6626
    %6628 = vmatmul.bf16.gmra.mxu0 %v5060
    %v6629 = vpop.f32.mrf.mxu0
    %v6630 = vadd.f32 %v5232, %v6629
    %v6631 = vpop.f32.mrf.mxu0
    %v6632 = vadd.f32 %v5232, %v6631
    %6633 = vmatmul.bf16.gmra.mxu0 %v5064
    %v6634 = vpop.f32.mrf.mxu0
    %v6635 = vadd.f32 %v5232, %v6634
    %v6636 = vpop.f32.mrf.mxu0
    %v6637 = vadd.f32 %v5232, %v6636
    %6638 = vmatmul.bf16.gmra.mxu0 %v5068
    %v6639 = vpop.f32.mrf.mxu0
    %v6640 = vadd.f32 %v5232, %v6639
    %v6641 = vpop.f32.mrf.mxu0
    %v6642 = vadd.f32 %v5232, %v6641
    %6643 = vmatmul.bf16.gmra.mxu0 %v5072
    %v6644 = vpop.f32.mrf.mxu0
    %v6645 = vadd.f32 %v5232, %v6644
    %v6646 = vpop.f32.mrf.mxu0
    %v6647 = vadd.f32 %v5232, %v6646
    %6648 = vmatmul.bf16.gmra.mxu0 %v5076
    %v6649 = vpop.f32.mrf.mxu0
    %v6650 = vadd.f32 %v5232, %v6649
    %v6651 = vpop.f32.mrf.mxu0
    %v6652 = vadd.f32 %v5232, %v6651
    %6653 = vmatmul.bf16.gmra.mxu0 %v5080
    %v6654 = vpop.f32.mrf.mxu0
    %v6655 = vadd.f32 %v5232, %v6654
    %v6656 = vpop.f32.mrf.mxu0
    %v6657 = vadd.f32 %v5232, %v6656
    %6658 = vmatmul.bf16.gmra.mxu0 %v5084
    %v6659 = vpop.f32.mrf.mxu0
    %v6660 = vadd.f32 %v5232, %v6659
    %v6661 = vpop.f32.mrf.mxu0
    %v6662 = vadd.f32 %v5232, %v6661
    %6663 = vmatmul.bf16.gmra.mxu0 %v5088
    %v6664 = vpop.f32.mrf.mxu0
    %v6665 = vadd.f32 %v5232, %v6664
    %v6666 = vpop.f32.mrf.mxu0
    %v6667 = vadd.f32 %v5232, %v6666
    %6668 = vmatmul.bf16.gmra.mxu0 %v5092
    %v6669 = vpop.f32.mrf.mxu0
    %v6670 = vadd.f32 %v5232, %v6669
    %v6671 = vpop.f32.mrf.mxu0
    %v6672 = vadd.f32 %v5232, %v6671
    %6673 = vmatmul.bf16.gmra.mxu0 %v5096
    %v6674 = vpop.f32.mrf.mxu0
    %v6675 = vadd.f32 %v5232, %v6674
    %v6676 = vpop.f32.mrf.mxu0
    %v6677 = vadd.f32 %v5232, %v6676
    %6678 = vdwg.mxu0
    %6679 = vmatpush.bf16.msra.mxu0 %v5684
    %6680 = vmatpush.bf16.msra.mxu0 %v5680
    %6681 = vmatpush.bf16.msra.mxu0 %v5676
    %6682 = vmatpush.bf16.msra.mxu0 %v5672
    %6683 = vmatpush.bf16.msra.mxu0 %v5668
    %6684 = vmatpush.bf16.msra.mxu0 %v5664
    %6685 = vmatpush.bf16.msra.mxu0 %v5660
    %6686 = vmatpush.bf16.msra.mxu0 %v5656
    %6687 = vmatmul.bf16.gmra.mxu0 %v5037
    %v6688 = vpop.f32.mrf.mxu0
    %v6689 = vadd.f32 %v6600, %v6688
    %v6690 = vpop.f32.mrf.mxu0
    %v6691 = vadd.f32 %v6602, %v6690
    %6692 = vmatmul.bf16.gmra.mxu0 %v5041
    %v6693 = vpop.f32.mrf.mxu0
    %v6694 = vadd.f32 %v6605, %v6693
    %v6695 = vpop.f32.mrf.mxu0
    %v6696 = vadd.f32 %v6607, %v6695
    %6697 = vmatmul.bf16.gmra.mxu0 %v5045
    %v6698 = vpop.f32.mrf.mxu0
    %v6699 = vadd.f32 %v6610, %v6698
    %v6700 = vpop.f32.mrf.mxu0
    %v6701 = vadd.f32 %v6612, %v6700
    %6702 = vmatmul.bf16.gmra.mxu0 %v5049
    %v6703 = vpop.f32.mrf.mxu0
    %v6704 = vadd.f32 %v6615, %v6703
    %v6705 = vpop.f32.mrf.mxu0
    %v6706 = vadd.f32 %v6617, %v6705
    %6707 = vmatmul.bf16.gmra.mxu0 %v5053
    %v6708 = vpop.f32.mrf.mxu0
    %v6709 = vadd.f32 %v6620, %v6708
    %v6710 = vpop.f32.mrf.mxu0
    %v6711 = vadd.f32 %v6622, %v6710
    %6712 = vmatmul.bf16.gmra.mxu0 %v5057
    %v6713 = vpop.f32.mrf.mxu0
    %v6714 = vadd.f32 %v6625, %v6713
    %v6715 = vpop.f32.mrf.mxu0
    %v6716 = vadd.f32 %v6627, %v6715
    %6717 = vmatmul.bf16.gmra.mxu0 %v5061
    %v6718 = vpop.f32.mrf.mxu0
    %v6719 = vadd.f32 %v6630, %v6718
    %v6720 = vpop.f32.mrf.mxu0
    %v6721 = vadd.f32 %v6632, %v6720
    %6722 = vmatmul.bf16.gmra.mxu0 %v5065
    %v6723 = vpop.f32.mrf.mxu0
    %v6724 = vadd.f32 %v6635, %v6723
    %v6725 = vpop.f32.mrf.mxu0
    %v6726 = vadd.f32 %v6637, %v6725
    %6727 = vmatmul.bf16.gmra.mxu0 %v5069
    %v6728 = vpop.f32.mrf.mxu0
    %v6729 = vadd.f32 %v6640, %v6728
    %v6730 = vpop.f32.mrf.mxu0
    %v6731 = vadd.f32 %v6642, %v6730
    %6732 = vmatmul.bf16.gmra.mxu0 %v5073
    %v6733 = vpop.f32.mrf.mxu0
    %v6734 = vadd.f32 %v6645, %v6733
    %v6735 = vpop.f32.mrf.mxu0
    %v6736 = vadd.f32 %v6647, %v6735
    %6737 = vmatmul.bf16.gmra.mxu0 %v5077
    %v6738 = vpop.f32.mrf.mxu0
    %v6739 = vadd.f32 %v6650, %v6738
    %v6740 = vpop.f32.mrf.mxu0
    %v6741 = vadd.f32 %v6652, %v6740
    %6742 = vmatmul.bf16.gmra.mxu0 %v5081
    %v6743 = vpop.f32.mrf.mxu0
    %v6744 = vadd.f32 %v6655, %v6743
    %v6745 = vpop.f32.mrf.mxu0
    %v6746 = vadd.f32 %v6657, %v6745
    %6747 = vmatmul.bf16.gmra.mxu0 %v5085
    %v6748 = vpop.f32.mrf.mxu0
    %v6749 = vadd.f32 %v6660, %v6748
    %v6750 = vpop.f32.mrf.mxu0
    %v6751 = vadd.f32 %v6662, %v6750
    %6752 = vmatmul.bf16.gmra.mxu0 %v5089
    %v6753 = vpop.f32.mrf.mxu0
    %v6754 = vadd.f32 %v6665, %v6753
    %v6755 = vpop.f32.mrf.mxu0
    %v6756 = vadd.f32 %v6667, %v6755
    %6757 = vmatmul.bf16.gmra.mxu0 %v5093
    %v6758 = vpop.f32.mrf.mxu0
    %v6759 = vadd.f32 %v6670, %v6758
    %v6760 = vpop.f32.mrf.mxu0
    %v6761 = vadd.f32 %v6672, %v6760
    %6762 = vmatmul.bf16.gmra.mxu0 %v5097
    %v6763 = vpop.f32.mrf.mxu0
    %v6764 = vadd.f32 %v6675, %v6763
    %v6765 = vpop.f32.mrf.mxu0
    %v6766 = vadd.f32 %v6677, %v6765
    %6767 = vdwg.mxu0
    %6768 = vmatpush.bf16.msra.mxu0 %v5716
    %6769 = vmatpush.bf16.msra.mxu0 %v5712
    %6770 = vmatpush.bf16.msra.mxu0 %v5708
    %6771 = vmatpush.bf16.msra.mxu0 %v5704
    %6772 = vmatpush.bf16.msra.mxu0 %v5700
    %6773 = vmatpush.bf16.msra.mxu0 %v5696
    %6774 = vmatpush.bf16.msra.mxu0 %v5692
    %6775 = vmatpush.bf16.msra.mxu0 %v5688
    %6776 = vmatmul.bf16.gmra.mxu0 %v5038
    %v6777 = vpop.f32.mrf.mxu0
    %v6778 = vadd.f32 %v6689, %v6777
    %v6779 = vpop.f32.mrf.mxu0
    %v6780 = vadd.f32 %v6691, %v6779
    %6781 = vmatmul.bf16.gmra.mxu0 %v5042
    %v6782 = vpop.f32.mrf.mxu0
    %v6783 = vadd.f32 %v6694, %v6782
    %v6784 = vpop.f32.mrf.mxu0
    %v6785 = vadd.f32 %v6696, %v6784
    %6786 = vmatmul.bf16.gmra.mxu0 %v5046
    %v6787 = vpop.f32.mrf.mxu0
    %v6788 = vadd.f32 %v6699, %v6787
    %v6789 = vpop.f32.mrf.mxu0
    %v6790 = vadd.f32 %v6701, %v6789
    %6791 = vmatmul.bf16.gmra.mxu0 %v5050
    %v6792 = vpop.f32.mrf.mxu0
    %v6793 = vadd.f32 %v6704, %v6792
    %v6794 = vpop.f32.mrf.mxu0
    %v6795 = vadd.f32 %v6706, %v6794
    %6796 = vmatmul.bf16.gmra.mxu0 %v5054
    %v6797 = vpop.f32.mrf.mxu0
    %v6798 = vadd.f32 %v6709, %v6797
    %v6799 = vpop.f32.mrf.mxu0
    %v6800 = vadd.f32 %v6711, %v6799
    %6801 = vmatmul.bf16.gmra.mxu0 %v5058
    %v6802 = vpop.f32.mrf.mxu0
    %v6803 = vadd.f32 %v6714, %v6802
    %v6804 = vpop.f32.mrf.mxu0
    %v6805 = vadd.f32 %v6716, %v6804
    %6806 = vmatmul.bf16.gmra.mxu0 %v5062
    %v6807 = vpop.f32.mrf.mxu0
    %v6808 = vadd.f32 %v6719, %v6807
    %v6809 = vpop.f32.mrf.mxu0
    %v6810 = vadd.f32 %v6721, %v6809
    %6811 = vmatmul.bf16.gmra.mxu0 %v5066
    %v6812 = vpop.f32.mrf.mxu0
    %v6813 = vadd.f32 %v6724, %v6812
    %v6814 = vpop.f32.mrf.mxu0
    %v6815 = vadd.f32 %v6726, %v6814
    %6816 = vmatmul.bf16.gmra.mxu0 %v5070
    %v6817 = vpop.f32.mrf.mxu0
    %v6818 = vadd.f32 %v6729, %v6817
    %v6819 = vpop.f32.mrf.mxu0
    %v6820 = vadd.f32 %v6731, %v6819
    %6821 = vmatmul.bf16.gmra.mxu0 %v5074
    %v6822 = vpop.f32.mrf.mxu0
    %v6823 = vadd.f32 %v6734, %v6822
    %v6824 = vpop.f32.mrf.mxu0
    %v6825 = vadd.f32 %v6736, %v6824
    %6826 = vmatmul.bf16.gmra.mxu0 %v5078
    %v6827 = vpop.f32.mrf.mxu0
    %v6828 = vadd.f32 %v6739, %v6827
    %v6829 = vpop.f32.mrf.mxu0
    %v6830 = vadd.f32 %v6741, %v6829
    %6831 = vmatmul.bf16.gmra.mxu0 %v5082
    %v6832 = vpop.f32.mrf.mxu0
    %v6833 = vadd.f32 %v6744, %v6832
    %v6834 = vpop.f32.mrf.mxu0
    %v6835 = vadd.f32 %v6746, %v6834
    %6836 = vmatmul.bf16.gmra.mxu0 %v5086
    %v6837 = vpop.f32.mrf.mxu0
    %v6838 = vadd.f32 %v6749, %v6837
    %v6839 = vpop.f32.mrf.mxu0
    %v6840 = vadd.f32 %v6751, %v6839
    %6841 = vmatmul.bf16.gmra.mxu0 %v5090
    %v6842 = vpop.f32.mrf.mxu0
    %v6843 = vadd.f32 %v6754, %v6842
    %v6844 = vpop.f32.mrf.mxu0
    %v6845 = vadd.f32 %v6756, %v6844
    %6846 = vmatmul.bf16.gmra.mxu0 %v5094
    %v6847 = vpop.f32.mrf.mxu0
    %v6848 = vadd.f32 %v6759, %v6847
    %v6849 = vpop.f32.mrf.mxu0
    %v6850 = vadd.f32 %v6761, %v6849
    %6851 = vmatmul.bf16.gmra.mxu0 %v5098
    %v6852 = vpop.f32.mrf.mxu0
    %v6853 = vadd.f32 %v6764, %v6852
    %v6854 = vpop.f32.mrf.mxu0
    %v6855 = vadd.f32 %v6766, %v6854
    %6856 = vdwg.mxu0
    %6857 = vmatpush.bf16.msra.mxu0 %v5748
    %6858 = vmatpush.bf16.msra.mxu0 %v5744
    %6859 = vmatpush.bf16.msra.mxu0 %v5740
    %6860 = vmatpush.bf16.msra.mxu0 %v5736
    %6861 = vmatpush.bf16.msra.mxu0 %v5732
    %6862 = vmatpush.bf16.msra.mxu0 %v5728
    %6863 = vmatpush.bf16.msra.mxu0 %v5724
    %6864 = vmatpush.bf16.msra.mxu0 %v5720
    %6865 = vmatmul.bf16.gmra.mxu0 %v5039
    %v6866 = vpop.f32.mrf.mxu0
    %v6867 = vadd.f32 %v6778, %v6866
    %v6868 = vpop.f32.mrf.mxu0
    %v6869 = vadd.f32 %v6780, %v6868
    %6870 = vmatmul.bf16.gmra.mxu0 %v5043
    %v6871 = vpop.f32.mrf.mxu0
    %v6872 = vadd.f32 %v6783, %v6871
    %v6873 = vpop.f32.mrf.mxu0
    %v6874 = vadd.f32 %v6785, %v6873
    %6875 = vmatmul.bf16.gmra.mxu0 %v5047
    %v6876 = vpop.f32.mrf.mxu0
    %v6877 = vadd.f32 %v6788, %v6876
    %v6878 = vpop.f32.mrf.mxu0
    %v6879 = vadd.f32 %v6790, %v6878
    %6880 = vmatmul.bf16.gmra.mxu0 %v5051
    %v6881 = vpop.f32.mrf.mxu0
    %v6882 = vadd.f32 %v6793, %v6881
    %v6883 = vpop.f32.mrf.mxu0
    %v6884 = vadd.f32 %v6795, %v6883
    %6885 = vmatmul.bf16.gmra.mxu0 %v5055
    %v6886 = vpop.f32.mrf.mxu0
    %v6887 = vadd.f32 %v6798, %v6886
    %v6888 = vpop.f32.mrf.mxu0
    %v6889 = vadd.f32 %v6800, %v6888
    %6890 = vmatmul.bf16.gmra.mxu0 %v5059
    %v6891 = vpop.f32.mrf.mxu0
    %v6892 = vadd.f32 %v6803, %v6891
    %v6893 = vpop.f32.mrf.mxu0
    %v6894 = vadd.f32 %v6805, %v6893
    %6895 = vmatmul.bf16.gmra.mxu0 %v5063
    %v6896 = vpop.f32.mrf.mxu0
    %v6897 = vadd.f32 %v6808, %v6896
    %v6898 = vpop.f32.mrf.mxu0
    %v6899 = vadd.f32 %v6810, %v6898
    %6900 = vmatmul.bf16.gmra.mxu0 %v5067
    %v6901 = vpop.f32.mrf.mxu0
    %v6902 = vadd.f32 %v6813, %v6901
    %v6903 = vpop.f32.mrf.mxu0
    %v6904 = vadd.f32 %v6815, %v6903
    %6905 = vmatmul.bf16.gmra.mxu0 %v5071
    %v6906 = vpop.f32.mrf.mxu0
    %v6907 = vadd.f32 %v6818, %v6906
    %v6908 = vpop.f32.mrf.mxu0
    %v6909 = vadd.f32 %v6820, %v6908
    %6910 = vmatmul.bf16.gmra.mxu0 %v5075
    %v6911 = vpop.f32.mrf.mxu0
    %v6912 = vadd.f32 %v6823, %v6911
    %v6913 = vpop.f32.mrf.mxu0
    %v6914 = vadd.f32 %v6825, %v6913
    %6915 = vmatmul.bf16.gmra.mxu0 %v5079
    %v6916 = vpop.f32.mrf.mxu0
    %v6917 = vadd.f32 %v6828, %v6916
    %v6918 = vpop.f32.mrf.mxu0
    %v6919 = vadd.f32 %v6830, %v6918
    %6920 = vmatmul.bf16.gmra.mxu0 %v5083
    %v6921 = vpop.f32.mrf.mxu0
    %v6922 = vadd.f32 %v6833, %v6921
    %v6923 = vpop.f32.mrf.mxu0
    %v6924 = vadd.f32 %v6835, %v6923
    %6925 = vmatmul.bf16.gmra.mxu0 %v5087
    %v6926 = vpop.f32.mrf.mxu0
    %v6927 = vadd.f32 %v6838, %v6926
    %v6928 = vpop.f32.mrf.mxu0
    %v6929 = vadd.f32 %v6840, %v6928
    %6930 = vmatmul.bf16.gmra.mxu0 %v5091
    %v6931 = vpop.f32.mrf.mxu0
    %v6932 = vadd.f32 %v6843, %v6931
    %v6933 = vpop.f32.mrf.mxu0
    %v6934 = vadd.f32 %v6845, %v6933
    %6935 = vmatmul.bf16.gmra.mxu0 %v5095
    %v6936 = vpop.f32.mrf.mxu0
    %v6937 = vadd.f32 %v6848, %v6936
    %v6938 = vpop.f32.mrf.mxu0
    %v6939 = vadd.f32 %v6850, %v6938
    %6940 = vmatmul.bf16.gmra.mxu0 %v5099
    %v6941 = vpop.f32.mrf.mxu0
    %v6942 = vadd.f32 %v6853, %v6941
    %v6943 = vpop.f32.mrf.mxu0
    %v6944 = vadd.f32 %v6855, %v6943
    %6945 = vdwg.mxu0
    %6946 = vmatpush.bf16.msra.mxu0 %v5653
    %6947 = vmatpush.bf16.msra.mxu0 %v5649
    %6948 = vmatpush.bf16.msra.mxu0 %v5645
    %6949 = vmatpush.bf16.msra.mxu0 %v5641
    %6950 = vmatpush.bf16.msra.mxu0 %v5637
    %6951 = vmatpush.bf16.msra.mxu0 %v5633
    %6952 = vmatpush.bf16.msra.mxu0 %v5629
    %6953 = vmatpush.bf16.msra.mxu0 %v5625
    %6954 = vmatmul.bf16.gmra.mxu0 %v5036
    %v6955 = vpop.f32.mrf.mxu0
    %v6956 = vadd.f32 %v5233, %v6955
    %v6957 = vpop.f32.mrf.mxu0
    %v6958 = vadd.f32 %v5233, %v6957
    %6959 = vmatmul.bf16.gmra.mxu0 %v5040
    %v6960 = vpop.f32.mrf.mxu0
    %v6961 = vadd.f32 %v5233, %v6960
    %v6962 = vpop.f32.mrf.mxu0
    %v6963 = vadd.f32 %v5233, %v6962
    %6964 = vmatmul.bf16.gmra.mxu0 %v5044
    %v6965 = vpop.f32.mrf.mxu0
    %v6966 = vadd.f32 %v5233, %v6965
    %v6967 = vpop.f32.mrf.mxu0
    %v6968 = vadd.f32 %v5233, %v6967
    %6969 = vmatmul.bf16.gmra.mxu0 %v5048
    %v6970 = vpop.f32.mrf.mxu0
    %v6971 = vadd.f32 %v5233, %v6970
    %v6972 = vpop.f32.mrf.mxu0
    %v6973 = vadd.f32 %v5233, %v6972
    %6974 = vmatmul.bf16.gmra.mxu0 %v5052
    %v6975 = vpop.f32.mrf.mxu0
    %v6976 = vadd.f32 %v5233, %v6975
    %v6977 = vpop.f32.mrf.mxu0
    %v6978 = vadd.f32 %v5233, %v6977
    %6979 = vmatmul.bf16.gmra.mxu0 %v5056
    %v6980 = vpop.f32.mrf.mxu0
    %v6981 = vadd.f32 %v5233, %v6980
    %v6982 = vpop.f32.mrf.mxu0
    %v6983 = vadd.f32 %v5233, %v6982
    %6984 = vmatmul.bf16.gmra.mxu0 %v5060
    %v6985 = vpop.f32.mrf.mxu0
    %v6986 = vadd.f32 %v5233, %v6985
    %v6987 = vpop.f32.mrf.mxu0
    %v6988 = vadd.f32 %v5233, %v6987
    %6989 = vmatmul.bf16.gmra.mxu0 %v5064
    %v6990 = vpop.f32.mrf.mxu0
    %v6991 = vadd.f32 %v5233, %v6990
    %v6992 = vpop.f32.mrf.mxu0
    %v6993 = vadd.f32 %v5233, %v6992
    %6994 = vmatmul.bf16.gmra.mxu0 %v5068
    %v6995 = vpop.f32.mrf.mxu0
    %v6996 = vadd.f32 %v5233, %v6995
    %v6997 = vpop.f32.mrf.mxu0
    %v6998 = vadd.f32 %v5233, %v6997
    %6999 = vmatmul.bf16.gmra.mxu0 %v5072
    %v7000 = vpop.f32.mrf.mxu0
    %v7001 = vadd.f32 %v5233, %v7000
    %v7002 = vpop.f32.mrf.mxu0
    %v7003 = vadd.f32 %v5233, %v7002
    %7004 = vmatmul.bf16.gmra.mxu0 %v5076
    %v7005 = vpop.f32.mrf.mxu0
    %v7006 = vadd.f32 %v5233, %v7005
    %v7007 = vpop.f32.mrf.mxu0
    %v7008 = vadd.f32 %v5233, %v7007
    %7009 = vmatmul.bf16.gmra.mxu0 %v5080
    %v7010 = vpop.f32.mrf.mxu0
    %v7011 = vadd.f32 %v5233, %v7010
    %v7012 = vpop.f32.mrf.mxu0
    %v7013 = vadd.f32 %v5233, %v7012
    %7014 = vmatmul.bf16.gmra.mxu0 %v5084
    %v7015 = vpop.f32.mrf.mxu0
    %v7016 = vadd.f32 %v5233, %v7015
    %v7017 = vpop.f32.mrf.mxu0
    %v7018 = vadd.f32 %v5233, %v7017
    %7019 = vmatmul.bf16.gmra.mxu0 %v5088
    %v7020 = vpop.f32.mrf.mxu0
    %v7021 = vadd.f32 %v5233, %v7020
    %v7022 = vpop.f32.mrf.mxu0
    %v7023 = vadd.f32 %v5233, %v7022
    %7024 = vmatmul.bf16.gmra.mxu0 %v5092
    %v7025 = vpop.f32.mrf.mxu0
    %v7026 = vadd.f32 %v5233, %v7025
    %v7027 = vpop.f32.mrf.mxu0
    %v7028 = vadd.f32 %v5233, %v7027
    %7029 = vmatmul.bf16.gmra.mxu0 %v5096
    %v7030 = vpop.f32.mrf.mxu0
    %v7031 = vadd.f32 %v5233, %v7030
    %v7032 = vpop.f32.mrf.mxu0
    %v7033 = vadd.f32 %v5233, %v7032
    %7034 = vdwg.mxu0
    %7035 = vmatpush.bf16.msra.mxu0 %v5685
    %7036 = vmatpush.bf16.msra.mxu0 %v5681
    %7037 = vmatpush.bf16.msra.mxu0 %v5677
    %7038 = vmatpush.bf16.msra.mxu0 %v5673
    %7039 = vmatpush.bf16.msra.mxu0 %v5669
    %7040 = vmatpush.bf16.msra.mxu0 %v5665
    %7041 = vmatpush.bf16.msra.mxu0 %v5661
    %7042 = vmatpush.bf16.msra.mxu0 %v5657
    %7043 = vmatmul.bf16.gmra.mxu0 %v5037
    %v7044 = vpop.f32.mrf.mxu0
    %v7045 = vadd.f32 %v6956, %v7044
    %v7046 = vpop.f32.mrf.mxu0
    %v7047 = vadd.f32 %v6958, %v7046
    %7048 = vmatmul.bf16.gmra.mxu0 %v5041
    %v7049 = vpop.f32.mrf.mxu0
    %v7050 = vadd.f32 %v6961, %v7049
    %v7051 = vpop.f32.mrf.mxu0
    %v7052 = vadd.f32 %v6963, %v7051
    %7053 = vmatmul.bf16.gmra.mxu0 %v5045
    %v7054 = vpop.f32.mrf.mxu0
    %v7055 = vadd.f32 %v6966, %v7054
    %v7056 = vpop.f32.mrf.mxu0
    %v7057 = vadd.f32 %v6968, %v7056
    %7058 = vmatmul.bf16.gmra.mxu0 %v5049
    %v7059 = vpop.f32.mrf.mxu0
    %v7060 = vadd.f32 %v6971, %v7059
    %v7061 = vpop.f32.mrf.mxu0
    %v7062 = vadd.f32 %v6973, %v7061
    %7063 = vmatmul.bf16.gmra.mxu0 %v5053
    %v7064 = vpop.f32.mrf.mxu0
    %v7065 = vadd.f32 %v6976, %v7064
    %v7066 = vpop.f32.mrf.mxu0
    %v7067 = vadd.f32 %v6978, %v7066
    %7068 = vmatmul.bf16.gmra.mxu0 %v5057
    %v7069 = vpop.f32.mrf.mxu0
    %v7070 = vadd.f32 %v6981, %v7069
    %v7071 = vpop.f32.mrf.mxu0
    %v7072 = vadd.f32 %v6983, %v7071
    %7073 = vmatmul.bf16.gmra.mxu0 %v5061
    %v7074 = vpop.f32.mrf.mxu0
    %v7075 = vadd.f32 %v6986, %v7074
    %v7076 = vpop.f32.mrf.mxu0
    %v7077 = vadd.f32 %v6988, %v7076
    %7078 = vmatmul.bf16.gmra.mxu0 %v5065
    %v7079 = vpop.f32.mrf.mxu0
    %v7080 = vadd.f32 %v6991, %v7079
    %v7081 = vpop.f32.mrf.mxu0
    %v7082 = vadd.f32 %v6993, %v7081
    %7083 = vmatmul.bf16.gmra.mxu0 %v5069
    %v7084 = vpop.f32.mrf.mxu0
    %v7085 = vadd.f32 %v6996, %v7084
    %v7086 = vpop.f32.mrf.mxu0
    %v7087 = vadd.f32 %v6998, %v7086
    %7088 = vmatmul.bf16.gmra.mxu0 %v5073
    %v7089 = vpop.f32.mrf.mxu0
    %v7090 = vadd.f32 %v7001, %v7089
    %v7091 = vpop.f32.mrf.mxu0
    %v7092 = vadd.f32 %v7003, %v7091
    %7093 = vmatmul.bf16.gmra.mxu0 %v5077
    %v7094 = vpop.f32.mrf.mxu0
    %v7095 = vadd.f32 %v7006, %v7094
    %v7096 = vpop.f32.mrf.mxu0
    %v7097 = vadd.f32 %v7008, %v7096
    %7098 = vmatmul.bf16.gmra.mxu0 %v5081
    %v7099 = vpop.f32.mrf.mxu0
    %v7100 = vadd.f32 %v7011, %v7099
    %v7101 = vpop.f32.mrf.mxu0
    %v7102 = vadd.f32 %v7013, %v7101
    %7103 = vmatmul.bf16.gmra.mxu0 %v5085
    %v7104 = vpop.f32.mrf.mxu0
    %v7105 = vadd.f32 %v7016, %v7104
    %v7106 = vpop.f32.mrf.mxu0
    %v7107 = vadd.f32 %v7018, %v7106
    %7108 = vmatmul.bf16.gmra.mxu0 %v5089
    %v7109 = vpop.f32.mrf.mxu0
    %v7110 = vadd.f32 %v7021, %v7109
    %v7111 = vpop.f32.mrf.mxu0
    %v7112 = vadd.f32 %v7023, %v7111
    %7113 = vmatmul.bf16.gmra.mxu0 %v5093
    %v7114 = vpop.f32.mrf.mxu0
    %v7115 = vadd.f32 %v7026, %v7114
    %v7116 = vpop.f32.mrf.mxu0
    %v7117 = vadd.f32 %v7028, %v7116
    %7118 = vmatmul.bf16.gmra.mxu0 %v5097
    %v7119 = vpop.f32.mrf.mxu0
    %v7120 = vadd.f32 %v7031, %v7119
    %v7121 = vpop.f32.mrf.mxu0
    %v7122 = vadd.f32 %v7033, %v7121
    %7123 = vdwg.mxu0
    %7124 = vmatpush.bf16.msra.mxu0 %v5717
    %7125 = vmatpush.bf16.msra.mxu0 %v5713
    %7126 = vmatpush.bf16.msra.mxu0 %v5709
    %7127 = vmatpush.bf16.msra.mxu0 %v5705
    %7128 = vmatpush.bf16.msra.mxu0 %v5701
    %7129 = vmatpush.bf16.msra.mxu0 %v5697
    %7130 = vmatpush.bf16.msra.mxu0 %v5693
    %7131 = vmatpush.bf16.msra.mxu0 %v5689
    %7132 = vmatmul.bf16.gmra.mxu0 %v5038
    %v7133 = vpop.f32.mrf.mxu0
    %v7134 = vadd.f32 %v7045, %v7133
    %v7135 = vpop.f32.mrf.mxu0
    %v7136 = vadd.f32 %v7047, %v7135
    %7137 = vmatmul.bf16.gmra.mxu0 %v5042
    %v7138 = vpop.f32.mrf.mxu0
    %v7139 = vadd.f32 %v7050, %v7138
    %v7140 = vpop.f32.mrf.mxu0
    %v7141 = vadd.f32 %v7052, %v7140
    %7142 = vmatmul.bf16.gmra.mxu0 %v5046
    %v7143 = vpop.f32.mrf.mxu0
    %v7144 = vadd.f32 %v7055, %v7143
    %v7145 = vpop.f32.mrf.mxu0
    %v7146 = vadd.f32 %v7057, %v7145
    %7147 = vmatmul.bf16.gmra.mxu0 %v5050
    %v7148 = vpop.f32.mrf.mxu0
    %v7149 = vadd.f32 %v7060, %v7148
    %v7150 = vpop.f32.mrf.mxu0
    %v7151 = vadd.f32 %v7062, %v7150
    %7152 = vmatmul.bf16.gmra.mxu0 %v5054
    %v7153 = vpop.f32.mrf.mxu0
    %v7154 = vadd.f32 %v7065, %v7153
    %v7155 = vpop.f32.mrf.mxu0
    %v7156 = vadd.f32 %v7067, %v7155
    %7157 = vmatmul.bf16.gmra.mxu0 %v5058
    %v7158 = vpop.f32.mrf.mxu0
    %v7159 = vadd.f32 %v7070, %v7158
    %v7160 = vpop.f32.mrf.mxu0
    %v7161 = vadd.f32 %v7072, %v7160
    %7162 = vmatmul.bf16.gmra.mxu0 %v5062
    %v7163 = vpop.f32.mrf.mxu0
    %v7164 = vadd.f32 %v7075, %v7163
    %v7165 = vpop.f32.mrf.mxu0
    %v7166 = vadd.f32 %v7077, %v7165
    %7167 = vmatmul.bf16.gmra.mxu0 %v5066
    %v7168 = vpop.f32.mrf.mxu0
    %v7169 = vadd.f32 %v7080, %v7168
    %v7170 = vpop.f32.mrf.mxu0
    %v7171 = vadd.f32 %v7082, %v7170
    %7172 = vmatmul.bf16.gmra.mxu0 %v5070
    %v7173 = vpop.f32.mrf.mxu0
    %v7174 = vadd.f32 %v7085, %v7173
    %v7175 = vpop.f32.mrf.mxu0
    %v7176 = vadd.f32 %v7087, %v7175
    %7177 = vmatmul.bf16.gmra.mxu0 %v5074
    %v7178 = vpop.f32.mrf.mxu0
    %v7179 = vadd.f32 %v7090, %v7178
    %v7180 = vpop.f32.mrf.mxu0
    %v7181 = vadd.f32 %v7092, %v7180
    %7182 = vmatmul.bf16.gmra.mxu0 %v5078
    %v7183 = vpop.f32.mrf.mxu0
    %v7184 = vadd.f32 %v7095, %v7183
    %v7185 = vpop.f32.mrf.mxu0
    %v7186 = vadd.f32 %v7097, %v7185
    %7187 = vmatmul.bf16.gmra.mxu0 %v5082
    %v7188 = vpop.f32.mrf.mxu0
    %v7189 = vadd.f32 %v7100, %v7188
    %v7190 = vpop.f32.mrf.mxu0
    %v7191 = vadd.f32 %v7102, %v7190
    %7192 = vmatmul.bf16.gmra.mxu0 %v5086
    %v7193 = vpop.f32.mrf.mxu0
    %v7194 = vadd.f32 %v7105, %v7193
    %v7195 = vpop.f32.mrf.mxu0
    %v7196 = vadd.f32 %v7107, %v7195
    %7197 = vmatmul.bf16.gmra.mxu0 %v5090
    %v7198 = vpop.f32.mrf.mxu0
    %v7199 = vadd.f32 %v7110, %v7198
    %v7200 = vpop.f32.mrf.mxu0
    %v7201 = vadd.f32 %v7112, %v7200
    %7202 = vmatmul.bf16.gmra.mxu0 %v5094
    %v7203 = vpop.f32.mrf.mxu0
    %v7204 = vadd.f32 %v7115, %v7203
    %v7205 = vpop.f32.mrf.mxu0
    %v7206 = vadd.f32 %v7117, %v7205
    %7207 = vmatmul.bf16.gmra.mxu0 %v5098
    %v7208 = vpop.f32.mrf.mxu0
    %v7209 = vadd.f32 %v7120, %v7208
    %v7210 = vpop.f32.mrf.mxu0
    %v7211 = vadd.f32 %v7122, %v7210
    %7212 = vdwg.mxu0
    %7213 = vmatpush.bf16.msra.mxu0 %v5749
    %7214 = vmatpush.bf16.msra.mxu0 %v5745
    %7215 = vmatpush.bf16.msra.mxu0 %v5741
    %7216 = vmatpush.bf16.msra.mxu0 %v5737
    %7217 = vmatpush.bf16.msra.mxu0 %v5733
    %7218 = vmatpush.bf16.msra.mxu0 %v5729
    %7219 = vmatpush.bf16.msra.mxu0 %v5725
    %7220 = vmatpush.bf16.msra.mxu0 %v5721
    %7221 = vmatmul.bf16.gmra.mxu0 %v5039
    %v7222 = vpop.f32.mrf.mxu0
    %v7223 = vadd.f32 %v7134, %v7222
    %v7224 = vpop.f32.mrf.mxu0
    %v7225 = vadd.f32 %v7136, %v7224
    %7226 = vmatmul.bf16.gmra.mxu0 %v5043
    %v7227 = vpop.f32.mrf.mxu0
    %v7228 = vadd.f32 %v7139, %v7227
    %v7229 = vpop.f32.mrf.mxu0
    %v7230 = vadd.f32 %v7141, %v7229
    %7231 = vmatmul.bf16.gmra.mxu0 %v5047
    %v7232 = vpop.f32.mrf.mxu0
    %v7233 = vadd.f32 %v7144, %v7232
    %v7234 = vpop.f32.mrf.mxu0
    %v7235 = vadd.f32 %v7146, %v7234
    %7236 = vmatmul.bf16.gmra.mxu0 %v5051
    %v7237 = vpop.f32.mrf.mxu0
    %v7238 = vadd.f32 %v7149, %v7237
    %v7239 = vpop.f32.mrf.mxu0
    %v7240 = vadd.f32 %v7151, %v7239
    %7241 = vmatmul.bf16.gmra.mxu0 %v5055
    %v7242 = vpop.f32.mrf.mxu0
    %v7243 = vadd.f32 %v7154, %v7242
    %v7244 = vpop.f32.mrf.mxu0
    %v7245 = vadd.f32 %v7156, %v7244
    %7246 = vmatmul.bf16.gmra.mxu0 %v5059
    %v7247 = vpop.f32.mrf.mxu0
    %v7248 = vadd.f32 %v7159, %v7247
    %v7249 = vpop.f32.mrf.mxu0
    %v7250 = vadd.f32 %v7161, %v7249
    %7251 = vmatmul.bf16.gmra.mxu0 %v5063
    %v7252 = vpop.f32.mrf.mxu0
    %v7253 = vadd.f32 %v7164, %v7252
    %v7254 = vpop.f32.mrf.mxu0
    %v7255 = vadd.f32 %v7166, %v7254
    %7256 = vmatmul.bf16.gmra.mxu0 %v5067
    %v7257 = vpop.f32.mrf.mxu0
    %v7258 = vadd.f32 %v7169, %v7257
    %v7259 = vpop.f32.mrf.mxu0
    %v7260 = vadd.f32 %v7171, %v7259
    %7261 = vmatmul.bf16.gmra.mxu0 %v5071
    %v7262 = vpop.f32.mrf.mxu0
    %v7263 = vadd.f32 %v7174, %v7262
    %v7264 = vpop.f32.mrf.mxu0
    %v7265 = vadd.f32 %v7176, %v7264
    %7266 = vmatmul.bf16.gmra.mxu0 %v5075
    %v7267 = vpop.f32.mrf.mxu0
    %v7268 = vadd.f32 %v7179, %v7267
    %v7269 = vpop.f32.mrf.mxu0
    %v7270 = vadd.f32 %v7181, %v7269
    %7271 = vmatmul.bf16.gmra.mxu0 %v5079
    %v7272 = vpop.f32.mrf.mxu0
    %v7273 = vadd.f32 %v7184, %v7272
    %v7274 = vpop.f32.mrf.mxu0
    %v7275 = vadd.f32 %v7186, %v7274
    %7276 = vmatmul.bf16.gmra.mxu0 %v5083
    %v7277 = vpop.f32.mrf.mxu0
    %v7278 = vadd.f32 %v7189, %v7277
    %v7279 = vpop.f32.mrf.mxu0
    %v7280 = vadd.f32 %v7191, %v7279
    %7281 = vmatmul.bf16.gmra.mxu0 %v5087
    %v7282 = vpop.f32.mrf.mxu0
    %v7283 = vadd.f32 %v7194, %v7282
    %v7284 = vpop.f32.mrf.mxu0
    %v7285 = vadd.f32 %v7196, %v7284
    %7286 = vmatmul.bf16.gmra.mxu0 %v5091
    %v7287 = vpop.f32.mrf.mxu0
    %v7288 = vadd.f32 %v7199, %v7287
    %v7289 = vpop.f32.mrf.mxu0
    %v7290 = vadd.f32 %v7201, %v7289
    %7291 = vmatmul.bf16.gmra.mxu0 %v5095
    %v7292 = vpop.f32.mrf.mxu0
    %v7293 = vadd.f32 %v7204, %v7292
    %v7294 = vpop.f32.mrf.mxu0
    %v7295 = vadd.f32 %v7206, %v7294
    %7296 = vmatmul.bf16.gmra.mxu0 %v5099
    %v7297 = vpop.f32.mrf.mxu0
    %v7298 = vadd.f32 %v7209, %v7297
    %v7299 = vpop.f32.mrf.mxu0
    %v7300 = vadd.f32 %v7211, %v7299
    %7301 = vdwg.mxu0
    %v7302 = vmax.f32 %v6155, 0.0
    %v7303 = vmax.f32 %v6511, 0.0
    %v7304 = vmax.f32 %v6867, 0.0
    %v7305 = vmax.f32 %v7223, 0.0
    %v7306 = vmax.f32 %v6157, 0.0
    %v7307 = vmax.f32 %v6513, 0.0
    %v7308 = vmax.f32 %v6869, 0.0
    %v7309 = vmax.f32 %v7225, 0.0
    %v7310 = vmax.f32 %v6160, 0.0
    %v7311 = vmax.f32 %v6516, 0.0
    %v7312 = vmax.f32 %v6872, 0.0
    %v7313 = vmax.f32 %v7228, 0.0
    %v7314 = vmax.f32 %v6162, 0.0
    %v7315 = vmax.f32 %v6518, 0.0
    %v7316 = vmax.f32 %v6874, 0.0
    %v7317 = vmax.f32 %v7230, 0.0
    %v7318 = vmax.f32 %v6165, 0.0
    %v7319 = vmax.f32 %v6521, 0.0
    %v7320 = vmax.f32 %v6877, 0.0
    %v7321 = vmax.f32 %v7233, 0.0
    %v7322 = vmax.f32 %v6167, 0.0
    %v7323 = vmax.f32 %v6523, 0.0
    %v7324 = vmax.f32 %v6879, 0.0
    %v7325 = vmax.f32 %v7235, 0.0
    %v7326 = vmax.f32 %v6170, 0.0
    %v7327 = vmax.f32 %v6526, 0.0
    %v7328 = vmax.f32 %v6882, 0.0
    %v7329 = vmax.f32 %v7238, 0.0
    %v7330 = vmax.f32 %v6172, 0.0
    %v7331 = vmax.f32 %v6528, 0.0
    %v7332 = vmax.f32 %v6884, 0.0
    %v7333 = vmax.f32 %v7240, 0.0
    %v7334 = vmax.f32 %v6175, 0.0
    %v7335 = vmax.f32 %v6531, 0.0
    %v7336 = vmax.f32 %v6887, 0.0
    %v7337 = vmax.f32 %v7243, 0.0
    %v7338 = vmax.f32 %v6177, 0.0
    %v7339 = vmax.f32 %v6533, 0.0
    %v7340 = vmax.f32 %v6889, 0.0
    %v7341 = vmax.f32 %v7245, 0.0
    %v7342 = vmax.f32 %v6180, 0.0
    %v7343 = vmax.f32 %v6536, 0.0
    %v7344 = vmax.f32 %v6892, 0.0
    %v7345 = vmax.f32 %v7248, 0.0
    %v7346 = vmax.f32 %v6182, 0.0
    %v7347 = vmax.f32 %v6538, 0.0
    %v7348 = vmax.f32 %v6894, 0.0
    %v7349 = vmax.f32 %v7250, 0.0
    %v7350 = vmax.f32 %v6185, 0.0
    %v7351 = vmax.f32 %v6541, 0.0
    %v7352 = vmax.f32 %v6897, 0.0
    %v7353 = vmax.f32 %v7253, 0.0
    %v7354 = vmax.f32 %v6187, 0.0
    %v7355 = vmax.f32 %v6543, 0.0
    %v7356 = vmax.f32 %v6899, 0.0
    %v7357 = vmax.f32 %v7255, 0.0
    %v7358 = vmax.f32 %v6190, 0.0
    %v7359 = vmax.f32 %v6546, 0.0
    %v7360 = vmax.f32 %v6902, 0.0
    %v7361 = vmax.f32 %v7258, 0.0
    %v7362 = vmax.f32 %v6192, 0.0
    %v7363 = vmax.f32 %v6548, 0.0
    %v7364 = vmax.f32 %v6904, 0.0
    %v7365 = vmax.f32 %v7260, 0.0
    %v7366 = vmax.f32 %v6195, 0.0
    %v7367 = vmax.f32 %v6551, 0.0
    %v7368 = vmax.f32 %v6907, 0.0
    %v7369 = vmax.f32 %v7263, 0.0
    %v7370 = vmax.f32 %v6197, 0.0
    %v7371 = vmax.f32 %v6553, 0.0
    %v7372 = vmax.f32 %v6909, 0.0
    %v7373 = vmax.f32 %v7265, 0.0
    %v7374 = vmax.f32 %v6200, 0.0
    %v7375 = vmax.f32 %v6556, 0.0
    %v7376 = vmax.f32 %v6912, 0.0
    %v7377 = vmax.f32 %v7268, 0.0
    %v7378 = vmax.f32 %v6202, 0.0
    %v7379 = vmax.f32 %v6558, 0.0
    %v7380 = vmax.f32 %v6914, 0.0
    %v7381 = vmax.f32 %v7270, 0.0
    %v7382 = vmax.f32 %v6205, 0.0
    %v7383 = vmax.f32 %v6561, 0.0
    %v7384 = vmax.f32 %v6917, 0.0
    %v7385 = vmax.f32 %v7273, 0.0
    %v7386 = vmax.f32 %v6207, 0.0
    %v7387 = vmax.f32 %v6563, 0.0
    %v7388 = vmax.f32 %v6919, 0.0
    %v7389 = vmax.f32 %v7275, 0.0
    %v7390 = vmax.f32 %v6210, 0.0
    %v7391 = vmax.f32 %v6566, 0.0
    %v7392 = vmax.f32 %v6922, 0.0
    %v7393 = vmax.f32 %v7278, 0.0
    %v7394 = vmax.f32 %v6212, 0.0
    %v7395 = vmax.f32 %v6568, 0.0
    %v7396 = vmax.f32 %v6924, 0.0
    %v7397 = vmax.f32 %v7280, 0.0
    %v7398 = vmax.f32 %v6215, 0.0
    %v7399 = vmax.f32 %v6571, 0.0
    %v7400 = vmax.f32 %v6927, 0.0
    %v7401 = vmax.f32 %v7283, 0.0
    %v7402 = vmax.f32 %v6217, 0.0
    %v7403 = vmax.f32 %v6573, 0.0
    %v7404 = vmax.f32 %v6929, 0.0
    %v7405 = vmax.f32 %v7285, 0.0
    %v7406 = vmax.f32 %v6220, 0.0
    %v7407 = vmax.f32 %v6576, 0.0
    %v7408 = vmax.f32 %v6932, 0.0
    %v7409 = vmax.f32 %v7288, 0.0
    %v7410 = vmax.f32 %v6222, 0.0
    %v7411 = vmax.f32 %v6578, 0.0
    %v7412 = vmax.f32 %v6934, 0.0
    %v7413 = vmax.f32 %v7290, 0.0
    %v7414 = vmax.f32 %v6225, 0.0
    %v7415 = vmax.f32 %v6581, 0.0
    %v7416 = vmax.f32 %v6937, 0.0
    %v7417 = vmax.f32 %v7293, 0.0
    %v7418 = vmax.f32 %v6227, 0.0
    %v7419 = vmax.f32 %v6583, 0.0
    %v7420 = vmax.f32 %v6939, 0.0
    %v7421 = vmax.f32 %v7295, 0.0
    %v7422 = vmax.f32 %v6230, 0.0
    %v7423 = vmax.f32 %v6586, 0.0
    %v7424 = vmax.f32 %v6942, 0.0
    %v7425 = vmax.f32 %v7298, 0.0
    %v7426 = vmax.f32 %v6232, 0.0
    %v7427 = vmax.f32 %v6588, 0.0
    %v7428 = vmax.f32 %v6944, 0.0
    %v7429 = vmax.f32 %v7300, 0.0
    %v7430 = vpack.c.bf16 %v7306, %v7302
    %v7431 = vpack.c.bf16 %v7307, %v7303
    %v7432 = vpack.c.bf16 %v7308, %v7304
    %v7433 = vpack.c.bf16 %v7309, %v7305
    %v7434 = vpack.c.bf16 %v7314, %v7310
    %v7435 = vpack.c.bf16 %v7315, %v7311
    %v7436 = vpack.c.bf16 %v7316, %v7312
    %v7437 = vpack.c.bf16 %v7317, %v7313
    %v7438 = vpack.c.bf16 %v7322, %v7318
    %v7439 = vpack.c.bf16 %v7323, %v7319
    %v7440 = vpack.c.bf16 %v7324, %v7320
    %v7441 = vpack.c.bf16 %v7325, %v7321
    %v7442 = vpack.c.bf16 %v7330, %v7326
    %v7443 = vpack.c.bf16 %v7331, %v7327
    %v7444 = vpack.c.bf16 %v7332, %v7328
    %v7445 = vpack.c.bf16 %v7333, %v7329
    %v7446 = vpack.c.bf16 %v7338, %v7334
    %v7447 = vpack.c.bf16 %v7339, %v7335
    %v7448 = vpack.c.bf16 %v7340, %v7336
    %v7449 = vpack.c.bf16 %v7341, %v7337
    %v7450 = vpack.c.bf16 %v7346, %v7342
    %v7451 = vpack.c.bf16 %v7347, %v7343
    %v7452 = vpack.c.bf16 %v7348, %v7344
    %v7453 = vpack.c.bf16 %v7349, %v7345
    %v7454 = vpack.c.bf16 %v7354, %v7350
    %v7455 = vpack.c.bf16 %v7355, %v7351
    %v7456 = vpack.c.bf16 %v7356, %v7352
    %v7457 = vpack.c.bf16 %v7357, %v7353
    %v7458 = vpack.c.bf16 %v7362, %v7358
    %v7459 = vpack.c.bf16 %v7363, %v7359
    %v7460 = vpack.c.bf16 %v7364, %v7360
    %v7461 = vpack.c.bf16 %v7365, %v7361
    %v7462 = vpack.c.bf16 %v7370, %v7366
    %v7463 = vpack.c.bf16 %v7371, %v7367
    %v7464 = vpack.c.bf16 %v7372, %v7368
    %v7465 = vpack.c.bf16 %v7373, %v7369
    %v7466 = vpack.c.bf16 %v7378, %v7374
    %v7467 = vpack.c.bf16 %v7379, %v7375
    %v7468 = vpack.c.bf16 %v7380, %v7376
    %v7469 = vpack.c.bf16 %v7381, %v7377
    %v7470 = vpack.c.bf16 %v7386, %v7382
    %v7471 = vpack.c.bf16 %v7387, %v7383
    %v7472 = vpack.c.bf16 %v7388, %v7384
    %v7473 = vpack.c.bf16 %v7389, %v7385
    %v7474 = vpack.c.bf16 %v7394, %v7390
    %v7475 = vpack.c.bf16 %v7395, %v7391
    %v7476 = vpack.c.bf16 %v7396, %v7392
    %v7477 = vpack.c.bf16 %v7397, %v7393
    %v7478 = vpack.c.bf16 %v7402, %v7398
    %v7479 = vpack.c.bf16 %v7403, %v7399
    %v7480 = vpack.c.bf16 %v7404, %v7400
    %v7481 = vpack.c.bf16 %v7405, %v7401
    %v7482 = vpack.c.bf16 %v7410, %v7406
    %v7483 = vpack.c.bf16 %v7411, %v7407
    %v7484 = vpack.c.bf16 %v7412, %v7408
    %v7485 = vpack.c.bf16 %v7413, %v7409
    %v7486 = vpack.c.bf16 %v7418, %v7414
    %v7487 = vpack.c.bf16 %v7419, %v7415
    %v7488 = vpack.c.bf16 %v7420, %v7416
    %v7489 = vpack.c.bf16 %v7421, %v7417
    %v7490 = vpack.c.bf16 %v7426, %v7422
    %v7491 = vpack.c.bf16 %v7427, %v7423
    %v7492 = vpack.c.bf16 %v7428, %v7424
    %v7493 = vpack.c.bf16 %v7429, %v7425
    %v7494 = vld [vmem:[#allocation11] sm:$0xff]
    %v7495 = vld [vmem:[#allocation11 + $0x8] sm:$0xff]
    %v7496 = vld [vmem:[#allocation11 + $0x10] sm:$0xff]
    %v7497 = vld [vmem:[#allocation11 + $0x18] sm:$0xff]
    %v7498 = vld [vmem:[#allocation11 + $0x20] sm:$0xff]
    %v7499 = vld [vmem:[#allocation11 + $0x28] sm:$0xff]
    %v7500 = vld [vmem:[#allocation11 + $0x30] sm:$0xff]
    %v7501 = vld [vmem:[#allocation11 + $0x38] sm:$0xff]
    %v7502 = vld [vmem:[#allocation11 + $0x40] sm:$0xff]
    %v7503 = vld [vmem:[#allocation11 + $0x48] sm:$0xff]
    %v7504 = vld [vmem:[#allocation11 + $0x50] sm:$0xff]
    %v7505 = vld [vmem:[#allocation11 + $0x58] sm:$0xff]
    %v7506 = vld [vmem:[#allocation11 + $0x60] sm:$0xff]
    %v7507 = vld [vmem:[#allocation11 + $0x68] sm:$0xff]
    %v7508 = vld [vmem:[#allocation11 + $0x70] sm:$0xff]
    %v7509 = vld [vmem:[#allocation11 + $0x78] sm:$0xff]
    %v7510 = vld [vmem:[#allocation11 + $0x80] sm:$0xff]
    %v7511 = vld [vmem:[#allocation11 + $0x88] sm:$0xff]
    %v7512 = vld [vmem:[#allocation11 + $0x90] sm:$0xff]
    %v7513 = vld [vmem:[#allocation11 + $0x98] sm:$0xff]
    %v7514 = vld [vmem:[#allocation11 + $0xa0] sm:$0xff]
    %v7515 = vld [vmem:[#allocation11 + $0xa8] sm:$0xff]
    %v7516 = vld [vmem:[#allocation11 + $0xb0] sm:$0xff]
    %v7517 = vld [vmem:[#allocation11 + $0xb8] sm:$0xff]
    %v7518 = vld [vmem:[#allocation11 + $0xc0] sm:$0xff]
    %v7519 = vld [vmem:[#allocation11 + $0xc8] sm:$0xff]
    %v7520 = vld [vmem:[#allocation11 + $0xd0] sm:$0xff]
    %v7521 = vld [vmem:[#allocation11 + $0xd8] sm:$0xff]
    %v7522 = vld [vmem:[#allocation11 + $0xe0] sm:$0xff]
    %v7523 = vld [vmem:[#allocation11 + $0xe8] sm:$0xff]
    %v7524 = vld [vmem:[#allocation11 + $0xf0] sm:$0xff]
    %v7525 = vld [vmem:[#allocation11 + $0xf8] sm:$0xff]
    %v7526 = vld [vmem:[#allocation11 + $0x100] sm:$0xff]
    %v7527 = vld [vmem:[#allocation11 + $0x108] sm:$0xff]
    %v7528 = vld [vmem:[#allocation11 + $0x110] sm:$0xff]
    %v7529 = vld [vmem:[#allocation11 + $0x118] sm:$0xff]
    %v7530 = vld [vmem:[#allocation11 + $0x120] sm:$0xff]
    %v7531 = vld [vmem:[#allocation11 + $0x128] sm:$0xff]
    %v7532 = vld [vmem:[#allocation11 + $0x130] sm:$0xff]
    %v7533 = vld [vmem:[#allocation11 + $0x138] sm:$0xff]
    %v7534 = vld [vmem:[#allocation11 + $0x140] sm:$0xff]
    %v7535 = vld [vmem:[#allocation11 + $0x148] sm:$0xff]
    %v7536 = vld [vmem:[#allocation11 + $0x150] sm:$0xff]
    %v7537 = vld [vmem:[#allocation11 + $0x158] sm:$0xff]
    %v7538 = vld [vmem:[#allocation11 + $0x160] sm:$0xff]
    %v7539 = vld [vmem:[#allocation11 + $0x168] sm:$0xff]
    %v7540 = vld [vmem:[#allocation11 + $0x170] sm:$0xff]
    %v7541 = vld [vmem:[#allocation11 + $0x178] sm:$0xff]
    %v7542 = vld [vmem:[#allocation11 + $0x180] sm:$0xff]
    %v7543 = vld [vmem:[#allocation11 + $0x188] sm:$0xff]
    %v7544 = vld [vmem:[#allocation11 + $0x190] sm:$0xff]
    %v7545 = vld [vmem:[#allocation11 + $0x198] sm:$0xff]
    %v7546 = vld [vmem:[#allocation11 + $0x1a0] sm:$0xff]
    %v7547 = vld [vmem:[#allocation11 + $0x1a8] sm:$0xff]
    %v7548 = vld [vmem:[#allocation11 + $0x1b0] sm:$0xff]
    %v7549 = vld [vmem:[#allocation11 + $0x1b8] sm:$0xff]
    %v7550 = vld [vmem:[#allocation11 + $0x1c0] sm:$0xff]
    %v7551 = vld [vmem:[#allocation11 + $0x1c8] sm:$0xff]
    %v7552 = vld [vmem:[#allocation11 + $0x1d0] sm:$0xff]
    %v7553 = vld [vmem:[#allocation11 + $0x1d8] sm:$0xff]
    %v7554 = vld [vmem:[#allocation11 + $0x1e0] sm:$0xff]
    %v7555 = vld [vmem:[#allocation11 + $0x1e8] sm:$0xff]
    %v7556 = vld [vmem:[#allocation11 + $0x1f0] sm:$0xff]
    %v7557 = vld [vmem:[#allocation11 + $0x1f8] sm:$0xff]
    %v7558 = vld [vmem:[#allocation11 + $0x200] sm:$0xff]
    %v7559 = vld [vmem:[#allocation11 + $0x208] sm:$0xff]
    %v7560 = vld [vmem:[#allocation11 + $0x210] sm:$0xff]
    %v7561 = vld [vmem:[#allocation11 + $0x218] sm:$0xff]
    %v7562 = vld [vmem:[#allocation11 + $0x220] sm:$0xff]
    %v7563 = vld [vmem:[#allocation11 + $0x228] sm:$0xff]
    %v7564 = vld [vmem:[#allocation11 + $0x230] sm:$0xff]
    %v7565 = vld [vmem:[#allocation11 + $0x238] sm:$0xff]
    %v7566 = vld [vmem:[#allocation11 + $0x240] sm:$0xff]
    %v7567 = vld [vmem:[#allocation11 + $0x248] sm:$0xff]
    %v7568 = vld [vmem:[#allocation11 + $0x250] sm:$0xff]
    %v7569 = vld [vmem:[#allocation11 + $0x258] sm:$0xff]
    %v7570 = vld [vmem:[#allocation11 + $0x260] sm:$0xff]
    %v7571 = vld [vmem:[#allocation11 + $0x268] sm:$0xff]
    %v7572 = vld [vmem:[#allocation11 + $0x270] sm:$0xff]
    %v7573 = vld [vmem:[#allocation11 + $0x278] sm:$0xff]
    %v7574 = vld [vmem:[#allocation11 + $0x280] sm:$0xff]
    %v7575 = vld [vmem:[#allocation11 + $0x288] sm:$0xff]
    %v7576 = vld [vmem:[#allocation11 + $0x290] sm:$0xff]
    %v7577 = vld [vmem:[#allocation11 + $0x298] sm:$0xff]
    %v7578 = vld [vmem:[#allocation11 + $0x2a0] sm:$0xff]
    %v7579 = vld [vmem:[#allocation11 + $0x2a8] sm:$0xff]
    %v7580 = vld [vmem:[#allocation11 + $0x2b0] sm:$0xff]
    %v7581 = vld [vmem:[#allocation11 + $0x2b8] sm:$0xff]
    %v7582 = vld [vmem:[#allocation11 + $0x2c0] sm:$0xff]
    %v7583 = vld [vmem:[#allocation11 + $0x2c8] sm:$0xff]
    %v7584 = vld [vmem:[#allocation11 + $0x2d0] sm:$0xff]
    %v7585 = vld [vmem:[#allocation11 + $0x2d8] sm:$0xff]
    %v7586 = vld [vmem:[#allocation11 + $0x2e0] sm:$0xff]
    %v7587 = vld [vmem:[#allocation11 + $0x2e8] sm:$0xff]
    %v7588 = vld [vmem:[#allocation11 + $0x2f0] sm:$0xff]
    %v7589 = vld [vmem:[#allocation11 + $0x2f8] sm:$0xff]
    %v7590 = vld [vmem:[#allocation11 + $0x300] sm:$0xff]
    %v7591 = vld [vmem:[#allocation11 + $0x308] sm:$0xff]
    %v7592 = vld [vmem:[#allocation11 + $0x310] sm:$0xff]
    %v7593 = vld [vmem:[#allocation11 + $0x318] sm:$0xff]
    %v7594 = vld [vmem:[#allocation11 + $0x320] sm:$0xff]
    %v7595 = vld [vmem:[#allocation11 + $0x328] sm:$0xff]
    %v7596 = vld [vmem:[#allocation11 + $0x330] sm:$0xff]
    %v7597 = vld [vmem:[#allocation11 + $0x338] sm:$0xff]
    %v7598 = vld [vmem:[#allocation11 + $0x340] sm:$0xff]
    %v7599 = vld [vmem:[#allocation11 + $0x348] sm:$0xff]
    %v7600 = vld [vmem:[#allocation11 + $0x350] sm:$0xff]
    %v7601 = vld [vmem:[#allocation11 + $0x358] sm:$0xff]
    %v7602 = vld [vmem:[#allocation11 + $0x360] sm:$0xff]
    %v7603 = vld [vmem:[#allocation11 + $0x368] sm:$0xff]
    %v7604 = vld [vmem:[#allocation11 + $0x370] sm:$0xff]
    %v7605 = vld [vmem:[#allocation11 + $0x378] sm:$0xff]
    %v7606 = vld [vmem:[#allocation11 + $0x380] sm:$0xff]
    %v7607 = vld [vmem:[#allocation11 + $0x388] sm:$0xff]
    %v7608 = vld [vmem:[#allocation11 + $0x390] sm:$0xff]
    %v7609 = vld [vmem:[#allocation11 + $0x398] sm:$0xff]
    %v7610 = vld [vmem:[#allocation11 + $0x3a0] sm:$0xff]
    %v7611 = vld [vmem:[#allocation11 + $0x3a8] sm:$0xff]
    %v7612 = vld [vmem:[#allocation11 + $0x3b0] sm:$0xff]
    %v7613 = vld [vmem:[#allocation11 + $0x3b8] sm:$0xff]
    %v7614 = vld [vmem:[#allocation11 + $0x3c0] sm:$0xff]
    %v7615 = vld [vmem:[#allocation11 + $0x3c8] sm:$0xff]
    %v7616 = vld [vmem:[#allocation11 + $0x3d0] sm:$0xff]
    %v7617 = vld [vmem:[#allocation11 + $0x3d8] sm:$0xff]
    %v7618 = vld [vmem:[#allocation11 + $0x3e0] sm:$0xff]
    %v7619 = vld [vmem:[#allocation11 + $0x3e8] sm:$0xff]
    %v7620 = vld [vmem:[#allocation11 + $0x3f0] sm:$0xff]
    %v7621 = vld [vmem:[#allocation11 + $0x3f8] sm:$0xff]
    %v7622 = vld [vmem:[#allocation13] sm:$0xf]
    %v7624 = vperm.slane %v7622, 0
    %v7625 = vperm.slane %v7622, 1
    %v7626 = vperm.slane %v7622, 2
    %v7627 = vperm.slane %v7622, 3
    %v7760 = vunpack.c.l.b16 %v7494
    %v7761 = vunpack.c.h.b16 %v7494
    %v7762 = vunpack.c.l.b16 %v7495
    %v7763 = vunpack.c.h.b16 %v7495
    %v7764 = vunpack.c.l.b16 %v7496
    %v7765 = vunpack.c.h.b16 %v7496
    %v7766 = vunpack.c.l.b16 %v7497
    %v7767 = vunpack.c.h.b16 %v7497
    %v7768 = vunpack.c.l.b16 %v7498
    %v7769 = vunpack.c.h.b16 %v7498
    %v7770 = vunpack.c.l.b16 %v7499
    %v7771 = vunpack.c.h.b16 %v7499
    %v7772 = vunpack.c.l.b16 %v7500
    %v7773 = vunpack.c.h.b16 %v7500
    %v7774 = vunpack.c.l.b16 %v7501
    %v7775 = vunpack.c.h.b16 %v7501
    %v7776 = vunpack.c.l.b16 %v7502
    %v7777 = vunpack.c.h.b16 %v7502
    %v7778 = vunpack.c.l.b16 %v7503
    %v7779 = vunpack.c.h.b16 %v7503
    %v7780 = vunpack.c.l.b16 %v7504
    %v7781 = vunpack.c.h.b16 %v7504
    %v7782 = vunpack.c.l.b16 %v7505
    %v7783 = vunpack.c.h.b16 %v7505
    %v7784 = vunpack.c.l.b16 %v7506
    %v7785 = vunpack.c.h.b16 %v7506
    %v7786 = vunpack.c.l.b16 %v7507
    %v7787 = vunpack.c.h.b16 %v7507
    %v7788 = vunpack.c.l.b16 %v7508
    %v7789 = vunpack.c.h.b16 %v7508
    %v7790 = vunpack.c.l.b16 %v7509
    %v7791 = vunpack.c.h.b16 %v7509
    %v7792 = vunpack.c.l.b16 %v7510
    %v7793 = vunpack.c.h.b16 %v7510
    %v7794 = vunpack.c.l.b16 %v7511
    %v7795 = vunpack.c.h.b16 %v7511
    %v7796 = vunpack.c.l.b16 %v7512
    %v7797 = vunpack.c.h.b16 %v7512
    %v7798 = vunpack.c.l.b16 %v7513
    %v7799 = vunpack.c.h.b16 %v7513
    %v7800 = vunpack.c.l.b16 %v7514
    %v7801 = vunpack.c.h.b16 %v7514
    %v7802 = vunpack.c.l.b16 %v7515
    %v7803 = vunpack.c.h.b16 %v7515
    %v7804 = vunpack.c.l.b16 %v7516
    %v7805 = vunpack.c.h.b16 %v7516
    %v7806 = vunpack.c.l.b16 %v7517
    %v7807 = vunpack.c.h.b16 %v7517
    %v7808 = vunpack.c.l.b16 %v7518
    %v7809 = vunpack.c.h.b16 %v7518
    %v7810 = vunpack.c.l.b16 %v7519
    %v7811 = vunpack.c.h.b16 %v7519
    %v7812 = vunpack.c.l.b16 %v7520
    %v7813 = vunpack.c.h.b16 %v7520
    %v7814 = vunpack.c.l.b16 %v7521
    %v7815 = vunpack.c.h.b16 %v7521
    %v7816 = vunpack.c.l.b16 %v7522
    %v7817 = vunpack.c.h.b16 %v7522
    %v7818 = vunpack.c.l.b16 %v7523
    %v7819 = vunpack.c.h.b16 %v7523
    %v7820 = vunpack.c.l.b16 %v7524
    %v7821 = vunpack.c.h.b16 %v7524
    %v7822 = vunpack.c.l.b16 %v7525
    %v7823 = vunpack.c.h.b16 %v7525
    %v7824 = vunpack.c.l.b16 %v7526
    %v7825 = vunpack.c.h.b16 %v7526
    %v7826 = vunpack.c.l.b16 %v7527
    %v7827 = vunpack.c.h.b16 %v7527
    %v7828 = vunpack.c.l.b16 %v7528
    %v7829 = vunpack.c.h.b16 %v7528
    %v7830 = vunpack.c.l.b16 %v7529
    %v7831 = vunpack.c.h.b16 %v7529
    %v7832 = vunpack.c.l.b16 %v7530
    %v7833 = vunpack.c.h.b16 %v7530
    %v7834 = vunpack.c.l.b16 %v7531
    %v7835 = vunpack.c.h.b16 %v7531
    %v7836 = vunpack.c.l.b16 %v7532
    %v7837 = vunpack.c.h.b16 %v7532
    %v7838 = vunpack.c.l.b16 %v7533
    %v7839 = vunpack.c.h.b16 %v7533
    %v7840 = vunpack.c.l.b16 %v7534
    %v7841 = vunpack.c.h.b16 %v7534
    %v7842 = vunpack.c.l.b16 %v7535
    %v7843 = vunpack.c.h.b16 %v7535
    %v7844 = vunpack.c.l.b16 %v7536
    %v7845 = vunpack.c.h.b16 %v7536
    %v7846 = vunpack.c.l.b16 %v7537
    %v7847 = vunpack.c.h.b16 %v7537
    %v7848 = vunpack.c.l.b16 %v7538
    %v7849 = vunpack.c.h.b16 %v7538
    %v7850 = vunpack.c.l.b16 %v7539
    %v7851 = vunpack.c.h.b16 %v7539
    %v7852 = vunpack.c.l.b16 %v7540
    %v7853 = vunpack.c.h.b16 %v7540
    %v7854 = vunpack.c.l.b16 %v7541
    %v7855 = vunpack.c.h.b16 %v7541
    %v7856 = vunpack.c.l.b16 %v7542
    %v7857 = vunpack.c.h.b16 %v7542
    %v7858 = vunpack.c.l.b16 %v7543
    %v7859 = vunpack.c.h.b16 %v7543
    %v7860 = vunpack.c.l.b16 %v7544
    %v7861 = vunpack.c.h.b16 %v7544
    %v7862 = vunpack.c.l.b16 %v7545
    %v7863 = vunpack.c.h.b16 %v7545
    %v7864 = vunpack.c.l.b16 %v7546
    %v7865 = vunpack.c.h.b16 %v7546
    %v7866 = vunpack.c.l.b16 %v7547
    %v7867 = vunpack.c.h.b16 %v7547
    %v7868 = vunpack.c.l.b16 %v7548
    %v7869 = vunpack.c.h.b16 %v7548
    %v7870 = vunpack.c.l.b16 %v7549
    %v7871 = vunpack.c.h.b16 %v7549
    %v7872 = vunpack.c.l.b16 %v7550
    %v7873 = vunpack.c.h.b16 %v7550
    %v7874 = vunpack.c.l.b16 %v7551
    %v7875 = vunpack.c.h.b16 %v7551
    %v7876 = vunpack.c.l.b16 %v7552
    %v7877 = vunpack.c.h.b16 %v7552
    %v7878 = vunpack.c.l.b16 %v7553
    %v7879 = vunpack.c.h.b16 %v7553
    %v7880 = vunpack.c.l.b16 %v7554
    %v7881 = vunpack.c.h.b16 %v7554
    %v7882 = vunpack.c.l.b16 %v7555
    %v7883 = vunpack.c.h.b16 %v7555
    %v7884 = vunpack.c.l.b16 %v7556
    %v7885 = vunpack.c.h.b16 %v7556
    %v7886 = vunpack.c.l.b16 %v7557
    %v7887 = vunpack.c.h.b16 %v7557
    %v7888 = vunpack.c.l.b16 %v7558
    %v7889 = vunpack.c.h.b16 %v7558
    %v7890 = vunpack.c.l.b16 %v7559
    %v7891 = vunpack.c.h.b16 %v7559
    %v7892 = vunpack.c.l.b16 %v7560
    %v7893 = vunpack.c.h.b16 %v7560
    %v7894 = vunpack.c.l.b16 %v7561
    %v7895 = vunpack.c.h.b16 %v7561
    %v7896 = vunpack.c.l.b16 %v7562
    %v7897 = vunpack.c.h.b16 %v7562
    %v7898 = vunpack.c.l.b16 %v7563
    %v7899 = vunpack.c.h.b16 %v7563
    %v7900 = vunpack.c.l.b16 %v7564
    %v7901 = vunpack.c.h.b16 %v7564
    %v7902 = vunpack.c.l.b16 %v7565
    %v7903 = vunpack.c.h.b16 %v7565
    %v7904 = vunpack.c.l.b16 %v7566
    %v7905 = vunpack.c.h.b16 %v7566
    %v7906 = vunpack.c.l.b16 %v7567
    %v7907 = vunpack.c.h.b16 %v7567
    %v7908 = vunpack.c.l.b16 %v7568
    %v7909 = vunpack.c.h.b16 %v7568
    %v7910 = vunpack.c.l.b16 %v7569
    %v7911 = vunpack.c.h.b16 %v7569
    %v7912 = vunpack.c.l.b16 %v7570
    %v7913 = vunpack.c.h.b16 %v7570
    %v7914 = vunpack.c.l.b16 %v7571
    %v7915 = vunpack.c.h.b16 %v7571
    %v7916 = vunpack.c.l.b16 %v7572
    %v7917 = vunpack.c.h.b16 %v7572
    %v7918 = vunpack.c.l.b16 %v7573
    %v7919 = vunpack.c.h.b16 %v7573
    %v7920 = vunpack.c.l.b16 %v7574
    %v7921 = vunpack.c.h.b16 %v7574
    %v7922 = vunpack.c.l.b16 %v7575
    %v7923 = vunpack.c.h.b16 %v7575
    %v7924 = vunpack.c.l.b16 %v7576
    %v7925 = vunpack.c.h.b16 %v7576
    %v7926 = vunpack.c.l.b16 %v7577
    %v7927 = vunpack.c.h.b16 %v7577
    %v7928 = vunpack.c.l.b16 %v7578
    %v7929 = vunpack.c.h.b16 %v7578
    %v7930 = vunpack.c.l.b16 %v7579
    %v7931 = vunpack.c.h.b16 %v7579
    %v7932 = vunpack.c.l.b16 %v7580
    %v7933 = vunpack.c.h.b16 %v7580
    %v7934 = vunpack.c.l.b16 %v7581
    %v7935 = vunpack.c.h.b16 %v7581
    %v7936 = vunpack.c.l.b16 %v7582
    %v7937 = vunpack.c.h.b16 %v7582
    %v7938 = vunpack.c.l.b16 %v7583
    %v7939 = vunpack.c.h.b16 %v7583
    %v7940 = vunpack.c.l.b16 %v7584
    %v7941 = vunpack.c.h.b16 %v7584
    %v7942 = vunpack.c.l.b16 %v7585
    %v7943 = vunpack.c.h.b16 %v7585
    %v7944 = vunpack.c.l.b16 %v7586
    %v7945 = vunpack.c.h.b16 %v7586
    %v7946 = vunpack.c.l.b16 %v7587
    %v7947 = vunpack.c.h.b16 %v7587
    %v7948 = vunpack.c.l.b16 %v7588
    %v7949 = vunpack.c.h.b16 %v7588
    %v7950 = vunpack.c.l.b16 %v7589
    %v7951 = vunpack.c.h.b16 %v7589
    %v7952 = vunpack.c.l.b16 %v7590
    %v7953 = vunpack.c.h.b16 %v7590
    %v7954 = vunpack.c.l.b16 %v7591
    %v7955 = vunpack.c.h.b16 %v7591
    %v7956 = vunpack.c.l.b16 %v7592
    %v7957 = vunpack.c.h.b16 %v7592
    %v7958 = vunpack.c.l.b16 %v7593
    %v7959 = vunpack.c.h.b16 %v7593
    %v7960 = vunpack.c.l.b16 %v7594
    %v7961 = vunpack.c.h.b16 %v7594
    %v7962 = vunpack.c.l.b16 %v7595
    %v7963 = vunpack.c.h.b16 %v7595
    %v7964 = vunpack.c.l.b16 %v7596
    %v7965 = vunpack.c.h.b16 %v7596
    %v7966 = vunpack.c.l.b16 %v7597
    %v7967 = vunpack.c.h.b16 %v7597
    %v7968 = vunpack.c.l.b16 %v7598
    %v7969 = vunpack.c.h.b16 %v7598
    %v7970 = vunpack.c.l.b16 %v7599
    %v7971 = vunpack.c.h.b16 %v7599
    %v7972 = vunpack.c.l.b16 %v7600
    %v7973 = vunpack.c.h.b16 %v7600
    %v7974 = vunpack.c.l.b16 %v7601
    %v7975 = vunpack.c.h.b16 %v7601
    %v7976 = vunpack.c.l.b16 %v7602
    %v7977 = vunpack.c.h.b16 %v7602
    %v7978 = vunpack.c.l.b16 %v7603
    %v7979 = vunpack.c.h.b16 %v7603
    %v7980 = vunpack.c.l.b16 %v7604
    %v7981 = vunpack.c.h.b16 %v7604
    %v7982 = vunpack.c.l.b16 %v7605
    %v7983 = vunpack.c.h.b16 %v7605
    %v7984 = vunpack.c.l.b16 %v7606
    %v7985 = vunpack.c.h.b16 %v7606
    %v7986 = vunpack.c.l.b16 %v7607
    %v7987 = vunpack.c.h.b16 %v7607
    %v7988 = vunpack.c.l.b16 %v7608
    %v7989 = vunpack.c.h.b16 %v7608
    %v7990 = vunpack.c.l.b16 %v7609
    %v7991 = vunpack.c.h.b16 %v7609
    %v7992 = vunpack.c.l.b16 %v7610
    %v7993 = vunpack.c.h.b16 %v7610
    %v7994 = vunpack.c.l.b16 %v7611
    %v7995 = vunpack.c.h.b16 %v7611
    %v7996 = vunpack.c.l.b16 %v7612
    %v7997 = vunpack.c.h.b16 %v7612
    %v7998 = vunpack.c.l.b16 %v7613
    %v7999 = vunpack.c.h.b16 %v7613
    %v8000 = vunpack.c.l.b16 %v7614
    %v8001 = vunpack.c.h.b16 %v7614
    %v8002 = vunpack.c.l.b16 %v7615
    %v8003 = vunpack.c.h.b16 %v7615
    %v8004 = vunpack.c.l.b16 %v7616
    %v8005 = vunpack.c.h.b16 %v7616
    %v8006 = vunpack.c.l.b16 %v7617
    %v8007 = vunpack.c.h.b16 %v7617
    %v8008 = vunpack.c.l.b16 %v7618
    %v8009 = vunpack.c.h.b16 %v7618
    %v8010 = vunpack.c.l.b16 %v7619
    %v8011 = vunpack.c.h.b16 %v7619
    %v8012 = vunpack.c.l.b16 %v7620
    %v8013 = vunpack.c.h.b16 %v7620
    %v8014 = vunpack.c.l.b16 %v7621
    %v8015 = vunpack.c.h.b16 %v7621
    %v8016 = vpack.c.b16 %v7764, %v7760
    %v8017 = vpack.c.b16 %v7765, %v7761
    %v8018 = vpack.c.b16 %v7766, %v7762
    %v8019 = vpack.c.b16 %v7767, %v7763
    %v8020 = vpack.c.b16 %v7772, %v7768
    %v8021 = vpack.c.b16 %v7773, %v7769
    %v8022 = vpack.c.b16 %v7774, %v7770
    %v8023 = vpack.c.b16 %v7775, %v7771
    %v8024 = vpack.c.b16 %v7780, %v7776
    %v8025 = vpack.c.b16 %v7781, %v7777
    %v8026 = vpack.c.b16 %v7782, %v7778
    %v8027 = vpack.c.b16 %v7783, %v7779
    %v8028 = vpack.c.b16 %v7788, %v7784
    %v8029 = vpack.c.b16 %v7789, %v7785
    %v8030 = vpack.c.b16 %v7790, %v7786
    %v8031 = vpack.c.b16 %v7791, %v7787
    %v8032 = vpack.c.b16 %v7796, %v7792
    %v8033 = vpack.c.b16 %v7797, %v7793
    %v8034 = vpack.c.b16 %v7798, %v7794
    %v8035 = vpack.c.b16 %v7799, %v7795
    %v8036 = vpack.c.b16 %v7804, %v7800
    %v8037 = vpack.c.b16 %v7805, %v7801
    %v8038 = vpack.c.b16 %v7806, %v7802
    %v8039 = vpack.c.b16 %v7807, %v7803
    %v8040 = vpack.c.b16 %v7812, %v7808
    %v8041 = vpack.c.b16 %v7813, %v7809
    %v8042 = vpack.c.b16 %v7814, %v7810
    %v8043 = vpack.c.b16 %v7815, %v7811
    %v8044 = vpack.c.b16 %v7820, %v7816
    %v8045 = vpack.c.b16 %v7821, %v7817
    %v8046 = vpack.c.b16 %v7822, %v7818
    %v8047 = vpack.c.b16 %v7823, %v7819
    %v8048 = vpack.c.b16 %v7828, %v7824
    %v8049 = vpack.c.b16 %v7829, %v7825
    %v8050 = vpack.c.b16 %v7830, %v7826
    %v8051 = vpack.c.b16 %v7831, %v7827
    %v8052 = vpack.c.b16 %v7836, %v7832
    %v8053 = vpack.c.b16 %v7837, %v7833
    %v8054 = vpack.c.b16 %v7838, %v7834
    %v8055 = vpack.c.b16 %v7839, %v7835
    %v8056 = vpack.c.b16 %v7844, %v7840
    %v8057 = vpack.c.b16 %v7845, %v7841
    %v8058 = vpack.c.b16 %v7846, %v7842
    %v8059 = vpack.c.b16 %v7847, %v7843
    %v8060 = vpack.c.b16 %v7852, %v7848
    %v8061 = vpack.c.b16 %v7853, %v7849
    %v8062 = vpack.c.b16 %v7854, %v7850
    %v8063 = vpack.c.b16 %v7855, %v7851
    %v8064 = vpack.c.b16 %v7860, %v7856
    %v8065 = vpack.c.b16 %v7861, %v7857
    %v8066 = vpack.c.b16 %v7862, %v7858
    %v8067 = vpack.c.b16 %v7863, %v7859
    %v8068 = vpack.c.b16 %v7868, %v7864
    %v8069 = vpack.c.b16 %v7869, %v7865
    %v8070 = vpack.c.b16 %v7870, %v7866
    %v8071 = vpack.c.b16 %v7871, %v7867
    %v8072 = vpack.c.b16 %v7876, %v7872
    %v8073 = vpack.c.b16 %v7877, %v7873
    %v8074 = vpack.c.b16 %v7878, %v7874
    %v8075 = vpack.c.b16 %v7879, %v7875
    %v8076 = vpack.c.b16 %v7884, %v7880
    %v8077 = vpack.c.b16 %v7885, %v7881
    %v8078 = vpack.c.b16 %v7886, %v7882
    %v8079 = vpack.c.b16 %v7887, %v7883
    %v8080 = vpack.c.b16 %v7892, %v7888
    %v8081 = vpack.c.b16 %v7893, %v7889
    %v8082 = vpack.c.b16 %v7894, %v7890
    %v8083 = vpack.c.b16 %v7895, %v7891
    %v8084 = vpack.c.b16 %v7900, %v7896
    %v8085 = vpack.c.b16 %v7901, %v7897
    %v8086 = vpack.c.b16 %v7902, %v7898
    %v8087 = vpack.c.b16 %v7903, %v7899
    %v8088 = vpack.c.b16 %v7908, %v7904
    %v8089 = vpack.c.b16 %v7909, %v7905
    %v8090 = vpack.c.b16 %v7910, %v7906
    %v8091 = vpack.c.b16 %v7911, %v7907
    %v8092 = vpack.c.b16 %v7916, %v7912
    %v8093 = vpack.c.b16 %v7917, %v7913
    %v8094 = vpack.c.b16 %v7918, %v7914
    %v8095 = vpack.c.b16 %v7919, %v7915
    %v8096 = vpack.c.b16 %v7924, %v7920
    %v8097 = vpack.c.b16 %v7925, %v7921
    %v8098 = vpack.c.b16 %v7926, %v7922
    %v8099 = vpack.c.b16 %v7927, %v7923
    %v8100 = vpack.c.b16 %v7932, %v7928
    %v8101 = vpack.c.b16 %v7933, %v7929
    %v8102 = vpack.c.b16 %v7934, %v7930
    %v8103 = vpack.c.b16 %v7935, %v7931
    %v8104 = vpack.c.b16 %v7940, %v7936
    %v8105 = vpack.c.b16 %v7941, %v7937
    %v8106 = vpack.c.b16 %v7942, %v7938
    %v8107 = vpack.c.b16 %v7943, %v7939
    %v8108 = vpack.c.b16 %v7948, %v7944
    %v8109 = vpack.c.b16 %v7949, %v7945
    %v8110 = vpack.c.b16 %v7950, %v7946
    %v8111 = vpack.c.b16 %v7951, %v7947
    %v8112 = vpack.c.b16 %v7956, %v7952
    %v8113 = vpack.c.b16 %v7957, %v7953
    %v8114 = vpack.c.b16 %v7958, %v7954
    %v8115 = vpack.c.b16 %v7959, %v7955
    %v8116 = vpack.c.b16 %v7964, %v7960
    %v8117 = vpack.c.b16 %v7965, %v7961
    %v8118 = vpack.c.b16 %v7966, %v7962
    %v8119 = vpack.c.b16 %v7967, %v7963
    %v8120 = vpack.c.b16 %v7972, %v7968
    %v8121 = vpack.c.b16 %v7973, %v7969
    %v8122 = vpack.c.b16 %v7974, %v7970
    %v8123 = vpack.c.b16 %v7975, %v7971
    %v8124 = vpack.c.b16 %v7980, %v7976
    %v8125 = vpack.c.b16 %v7981, %v7977
    %v8126 = vpack.c.b16 %v7982, %v7978
    %v8127 = vpack.c.b16 %v7983, %v7979
    %v8128 = vpack.c.b16 %v7988, %v7984
    %v8129 = vpack.c.b16 %v7989, %v7985
    %v8130 = vpack.c.b16 %v7990, %v7986
    %v8131 = vpack.c.b16 %v7991, %v7987
    %v8132 = vpack.c.b16 %v7996, %v7992
    %v8133 = vpack.c.b16 %v7997, %v7993
    %v8134 = vpack.c.b16 %v7998, %v7994
    %v8135 = vpack.c.b16 %v7999, %v7995
    %v8136 = vpack.c.b16 %v8004, %v8000
    %v8137 = vpack.c.b16 %v8005, %v8001
    %v8138 = vpack.c.b16 %v8006, %v8002
    %v8139 = vpack.c.b16 %v8007, %v8003
    %v8140 = vpack.c.b16 %v8012, %v8008
    %v8141 = vpack.c.b16 %v8013, %v8009
    %v8142 = vpack.c.b16 %v8014, %v8010
    %v8143 = vpack.c.b16 %v8015, %v8011
    %8272 = vmatpush.bf16.msra.mxu0 %v8044
    %8273 = vmatpush.bf16.msra.mxu0 %v8040
    %8274 = vmatpush.bf16.msra.mxu0 %v8036
    %8275 = vmatpush.bf16.msra.mxu0 %v8032
    %8276 = vmatpush.bf16.msra.mxu0 %v8028
    %8277 = vmatpush.bf16.msra.mxu0 %v8024
    %8278 = vmatpush.bf16.msra.mxu0 %v8020
    %8279 = vmatpush.bf16.msra.mxu0 %v8016
    %8280 = vmatmul.bf16.gmra.mxu0 %v7430
    %v8281 = vpop.f32.mrf.mxu0
    %v8282 = vadd.f32 %v7624, %v8281
    %v8283 = vpop.f32.mrf.mxu0
    %v8284 = vadd.f32 %v7624, %v8283
    %8285 = vmatmul.bf16.gmra.mxu0 %v7434
    %v8286 = vpop.f32.mrf.mxu0
    %v8287 = vadd.f32 %v7624, %v8286
    %v8288 = vpop.f32.mrf.mxu0
    %v8289 = vadd.f32 %v7624, %v8288
    %8290 = vmatmul.bf16.gmra.mxu0 %v7438
    %v8291 = vpop.f32.mrf.mxu0
    %v8292 = vadd.f32 %v7624, %v8291
    %v8293 = vpop.f32.mrf.mxu0
    %v8294 = vadd.f32 %v7624, %v8293
    %8295 = vmatmul.bf16.gmra.mxu0 %v7442
    %v8296 = vpop.f32.mrf.mxu0
    %v8297 = vadd.f32 %v7624, %v8296
    %v8298 = vpop.f32.mrf.mxu0
    %v8299 = vadd.f32 %v7624, %v8298
    %8300 = vmatmul.bf16.gmra.mxu0 %v7446
    %v8301 = vpop.f32.mrf.mxu0
    %v8302 = vadd.f32 %v7624, %v8301
    %v8303 = vpop.f32.mrf.mxu0
    %v8304 = vadd.f32 %v7624, %v8303
    %8305 = vmatmul.bf16.gmra.mxu0 %v7450
    %v8306 = vpop.f32.mrf.mxu0
    %v8307 = vadd.f32 %v7624, %v8306
    %v8308 = vpop.f32.mrf.mxu0
    %v8309 = vadd.f32 %v7624, %v8308
    %8310 = vmatmul.bf16.gmra.mxu0 %v7454
    %v8311 = vpop.f32.mrf.mxu0
    %v8312 = vadd.f32 %v7624, %v8311
    %v8313 = vpop.f32.mrf.mxu0
    %v8314 = vadd.f32 %v7624, %v8313
    %8315 = vmatmul.bf16.gmra.mxu0 %v7458
    %v8316 = vpop.f32.mrf.mxu0
    %v8317 = vadd.f32 %v7624, %v8316
    %v8318 = vpop.f32.mrf.mxu0
    %v8319 = vadd.f32 %v7624, %v8318
    %8320 = vmatmul.bf16.gmra.mxu0 %v7462
    %v8321 = vpop.f32.mrf.mxu0
    %v8322 = vadd.f32 %v7624, %v8321
    %v8323 = vpop.f32.mrf.mxu0
    %v8324 = vadd.f32 %v7624, %v8323
    %8325 = vmatmul.bf16.gmra.mxu0 %v7466
    %v8326 = vpop.f32.mrf.mxu0
    %v8327 = vadd.f32 %v7624, %v8326
    %v8328 = vpop.f32.mrf.mxu0
    %v8329 = vadd.f32 %v7624, %v8328
    %8330 = vmatmul.bf16.gmra.mxu0 %v7470
    %v8331 = vpop.f32.mrf.mxu0
    %v8332 = vadd.f32 %v7624, %v8331
    %v8333 = vpop.f32.mrf.mxu0
    %v8334 = vadd.f32 %v7624, %v8333
    %8335 = vmatmul.bf16.gmra.mxu0 %v7474
    %v8336 = vpop.f32.mrf.mxu0
    %v8337 = vadd.f32 %v7624, %v8336
    %v8338 = vpop.f32.mrf.mxu0
    %v8339 = vadd.f32 %v7624, %v8338
    %8340 = vmatmul.bf16.gmra.mxu0 %v7478
    %v8341 = vpop.f32.mrf.mxu0
    %v8342 = vadd.f32 %v7624, %v8341
    %v8343 = vpop.f32.mrf.mxu0
    %v8344 = vadd.f32 %v7624, %v8343
    %8345 = vmatmul.bf16.gmra.mxu0 %v7482
    %v8346 = vpop.f32.mrf.mxu0
    %v8347 = vadd.f32 %v7624, %v8346
    %v8348 = vpop.f32.mrf.mxu0
    %v8349 = vadd.f32 %v7624, %v8348
    %8350 = vmatmul.bf16.gmra.mxu0 %v7486
    %v8351 = vpop.f32.mrf.mxu0
    %v8352 = vadd.f32 %v7624, %v8351
    %v8353 = vpop.f32.mrf.mxu0
    %v8354 = vadd.f32 %v7624, %v8353
    %8355 = vmatmul.bf16.gmra.mxu0 %v7490
    %v8356 = vpop.f32.mrf.mxu0
    %v8357 = vadd.f32 %v7624, %v8356
    %v8358 = vpop.f32.mrf.mxu0
    %v8359 = vadd.f32 %v7624, %v8358
    %8360 = vdwg.mxu0
    %8361 = vmatpush.bf16.msra.mxu0 %v8076
    %8362 = vmatpush.bf16.msra.mxu0 %v8072
    %8363 = vmatpush.bf16.msra.mxu0 %v8068
    %8364 = vmatpush.bf16.msra.mxu0 %v8064
    %8365 = vmatpush.bf16.msra.mxu0 %v8060
    %8366 = vmatpush.bf16.msra.mxu0 %v8056
    %8367 = vmatpush.bf16.msra.mxu0 %v8052
    %8368 = vmatpush.bf16.msra.mxu0 %v8048
    %8369 = vmatmul.bf16.gmra.mxu0 %v7431
    %v8370 = vpop.f32.mrf.mxu0
    %v8371 = vadd.f32 %v8282, %v8370
    %v8372 = vpop.f32.mrf.mxu0
    %v8373 = vadd.f32 %v8284, %v8372
    %8374 = vmatmul.bf16.gmra.mxu0 %v7435
    %v8375 = vpop.f32.mrf.mxu0
    %v8376 = vadd.f32 %v8287, %v8375
    %v8377 = vpop.f32.mrf.mxu0
    %v8378 = vadd.f32 %v8289, %v8377
    %8379 = vmatmul.bf16.gmra.mxu0 %v7439
    %v8380 = vpop.f32.mrf.mxu0
    %v8381 = vadd.f32 %v8292, %v8380
    %v8382 = vpop.f32.mrf.mxu0
    %v8383 = vadd.f32 %v8294, %v8382
    %8384 = vmatmul.bf16.gmra.mxu0 %v7443
    %v8385 = vpop.f32.mrf.mxu0
    %v8386 = vadd.f32 %v8297, %v8385
    %v8387 = vpop.f32.mrf.mxu0
    %v8388 = vadd.f32 %v8299, %v8387
    %8389 = vmatmul.bf16.gmra.mxu0 %v7447
    %v8390 = vpop.f32.mrf.mxu0
    %v8391 = vadd.f32 %v8302, %v8390
    %v8392 = vpop.f32.mrf.mxu0
    %v8393 = vadd.f32 %v8304, %v8392
    %8394 = vmatmul.bf16.gmra.mxu0 %v7451
    %v8395 = vpop.f32.mrf.mxu0
    %v8396 = vadd.f32 %v8307, %v8395
    %v8397 = vpop.f32.mrf.mxu0
    %v8398 = vadd.f32 %v8309, %v8397
    %8399 = vmatmul.bf16.gmra.mxu0 %v7455
    %v8400 = vpop.f32.mrf.mxu0
    %v8401 = vadd.f32 %v8312, %v8400
    %v8402 = vpop.f32.mrf.mxu0
    %v8403 = vadd.f32 %v8314, %v8402
    %8404 = vmatmul.bf16.gmra.mxu0 %v7459
    %v8405 = vpop.f32.mrf.mxu0
    %v8406 = vadd.f32 %v8317, %v8405
    %v8407 = vpop.f32.mrf.mxu0
    %v8408 = vadd.f32 %v8319, %v8407
    %8409 = vmatmul.bf16.gmra.mxu0 %v7463
    %v8410 = vpop.f32.mrf.mxu0
    %v8411 = vadd.f32 %v8322, %v8410
    %v8412 = vpop.f32.mrf.mxu0
    %v8413 = vadd.f32 %v8324, %v8412
    %8414 = vmatmul.bf16.gmra.mxu0 %v7467
    %v8415 = vpop.f32.mrf.mxu0
    %v8416 = vadd.f32 %v8327, %v8415
    %v8417 = vpop.f32.mrf.mxu0
    %v8418 = vadd.f32 %v8329, %v8417
    %8419 = vmatmul.bf16.gmra.mxu0 %v7471
    %v8420 = vpop.f32.mrf.mxu0
    %v8421 = vadd.f32 %v8332, %v8420
    %v8422 = vpop.f32.mrf.mxu0
    %v8423 = vadd.f32 %v8334, %v8422
    %8424 = vmatmul.bf16.gmra.mxu0 %v7475
    %v8425 = vpop.f32.mrf.mxu0
    %v8426 = vadd.f32 %v8337, %v8425
    %v8427 = vpop.f32.mrf.mxu0
    %v8428 = vadd.f32 %v8339, %v8427
    %8429 = vmatmul.bf16.gmra.mxu0 %v7479
    %v8430 = vpop.f32.mrf.mxu0
    %v8431 = vadd.f32 %v8342, %v8430
    %v8432 = vpop.f32.mrf.mxu0
    %v8433 = vadd.f32 %v8344, %v8432
    %8434 = vmatmul.bf16.gmra.mxu0 %v7483
    %v8435 = vpop.f32.mrf.mxu0
    %v8436 = vadd.f32 %v8347, %v8435
    %v8437 = vpop.f32.mrf.mxu0
    %v8438 = vadd.f32 %v8349, %v8437
    %8439 = vmatmul.bf16.gmra.mxu0 %v7487
    %v8440 = vpop.f32.mrf.mxu0
    %v8441 = vadd.f32 %v8352, %v8440
    %v8442 = vpop.f32.mrf.mxu0
    %v8443 = vadd.f32 %v8354, %v8442
    %8444 = vmatmul.bf16.gmra.mxu0 %v7491
    %v8445 = vpop.f32.mrf.mxu0
    %v8446 = vadd.f32 %v8357, %v8445
    %v8447 = vpop.f32.mrf.mxu0
    %v8448 = vadd.f32 %v8359, %v8447
    %8449 = vdwg.mxu0
    %8450 = vmatpush.bf16.msra.mxu0 %v8108
    %8451 = vmatpush.bf16.msra.mxu0 %v8104
    %8452 = vmatpush.bf16.msra.mxu0 %v8100
    %8453 = vmatpush.bf16.msra.mxu0 %v8096
    %8454 = vmatpush.bf16.msra.mxu0 %v8092
    %8455 = vmatpush.bf16.msra.mxu0 %v8088
    %8456 = vmatpush.bf16.msra.mxu0 %v8084
    %8457 = vmatpush.bf16.msra.mxu0 %v8080
    %8458 = vmatmul.bf16.gmra.mxu0 %v7432
    %v8459 = vpop.f32.mrf.mxu0
    %v8460 = vadd.f32 %v8371, %v8459
    %v8461 = vpop.f32.mrf.mxu0
    %v8462 = vadd.f32 %v8373, %v8461
    %8463 = vmatmul.bf16.gmra.mxu0 %v7436
    %v8464 = vpop.f32.mrf.mxu0
    %v8465 = vadd.f32 %v8376, %v8464
    %v8466 = vpop.f32.mrf.mxu0
    %v8467 = vadd.f32 %v8378, %v8466
    %8468 = vmatmul.bf16.gmra.mxu0 %v7440
    %v8469 = vpop.f32.mrf.mxu0
    %v8470 = vadd.f32 %v8381, %v8469
    %v8471 = vpop.f32.mrf.mxu0
    %v8472 = vadd.f32 %v8383, %v8471
    %8473 = vmatmul.bf16.gmra.mxu0 %v7444
    %v8474 = vpop.f32.mrf.mxu0
    %v8475 = vadd.f32 %v8386, %v8474
    %v8476 = vpop.f32.mrf.mxu0
    %v8477 = vadd.f32 %v8388, %v8476
    %8478 = vmatmul.bf16.gmra.mxu0 %v7448
    %v8479 = vpop.f32.mrf.mxu0
    %v8480 = vadd.f32 %v8391, %v8479
    %v8481 = vpop.f32.mrf.mxu0
    %v8482 = vadd.f32 %v8393, %v8481
    %8483 = vmatmul.bf16.gmra.mxu0 %v7452
    %v8484 = vpop.f32.mrf.mxu0
    %v8485 = vadd.f32 %v8396, %v8484
    %v8486 = vpop.f32.mrf.mxu0
    %v8487 = vadd.f32 %v8398, %v8486
    %8488 = vmatmul.bf16.gmra.mxu0 %v7456
    %v8489 = vpop.f32.mrf.mxu0
    %v8490 = vadd.f32 %v8401, %v8489
    %v8491 = vpop.f32.mrf.mxu0
    %v8492 = vadd.f32 %v8403, %v8491
    %8493 = vmatmul.bf16.gmra.mxu0 %v7460
    %v8494 = vpop.f32.mrf.mxu0
    %v8495 = vadd.f32 %v8406, %v8494
    %v8496 = vpop.f32.mrf.mxu0
    %v8497 = vadd.f32 %v8408, %v8496
    %8498 = vmatmul.bf16.gmra.mxu0 %v7464
    %v8499 = vpop.f32.mrf.mxu0
    %v8500 = vadd.f32 %v8411, %v8499
    %v8501 = vpop.f32.mrf.mxu0
    %v8502 = vadd.f32 %v8413, %v8501
    %8503 = vmatmul.bf16.gmra.mxu0 %v7468
    %v8504 = vpop.f32.mrf.mxu0
    %v8505 = vadd.f32 %v8416, %v8504
    %v8506 = vpop.f32.mrf.mxu0
    %v8507 = vadd.f32 %v8418, %v8506
    %8508 = vmatmul.bf16.gmra.mxu0 %v7472
    %v8509 = vpop.f32.mrf.mxu0
    %v8510 = vadd.f32 %v8421, %v8509
    %v8511 = vpop.f32.mrf.mxu0
    %v8512 = vadd.f32 %v8423, %v8511
    %8513 = vmatmul.bf16.gmra.mxu0 %v7476
    %v8514 = vpop.f32.mrf.mxu0
    %v8515 = vadd.f32 %v8426, %v8514
    %v8516 = vpop.f32.mrf.mxu0
    %v8517 = vadd.f32 %v8428, %v8516
    %8518 = vmatmul.bf16.gmra.mxu0 %v7480
    %v8519 = vpop.f32.mrf.mxu0
    %v8520 = vadd.f32 %v8431, %v8519
    %v8521 = vpop.f32.mrf.mxu0
    %v8522 = vadd.f32 %v8433, %v8521
    %8523 = vmatmul.bf16.gmra.mxu0 %v7484
    %v8524 = vpop.f32.mrf.mxu0
    %v8525 = vadd.f32 %v8436, %v8524
    %v8526 = vpop.f32.mrf.mxu0
    %v8527 = vadd.f32 %v8438, %v8526
    %8528 = vmatmul.bf16.gmra.mxu0 %v7488
    %v8529 = vpop.f32.mrf.mxu0
    %v8530 = vadd.f32 %v8441, %v8529
    %v8531 = vpop.f32.mrf.mxu0
    %v8532 = vadd.f32 %v8443, %v8531
    %8533 = vmatmul.bf16.gmra.mxu0 %v7492
    %v8534 = vpop.f32.mrf.mxu0
    %v8535 = vadd.f32 %v8446, %v8534
    %v8536 = vpop.f32.mrf.mxu0
    %v8537 = vadd.f32 %v8448, %v8536
    %8538 = vdwg.mxu0
    %8539 = vmatpush.bf16.msra.mxu0 %v8140
    %8540 = vmatpush.bf16.msra.mxu0 %v8136
    %8541 = vmatpush.bf16.msra.mxu0 %v8132
    %8542 = vmatpush.bf16.msra.mxu0 %v8128
    %8543 = vmatpush.bf16.msra.mxu0 %v8124
    %8544 = vmatpush.bf16.msra.mxu0 %v8120
    %8545 = vmatpush.bf16.msra.mxu0 %v8116
    %8546 = vmatpush.bf16.msra.mxu0 %v8112
    %8547 = vmatmul.bf16.gmra.mxu0 %v7433
    %v8548 = vpop.f32.mrf.mxu0
    %v8549 = vadd.f32 %v8460, %v8548
    %v8550 = vpop.f32.mrf.mxu0
    %v8551 = vadd.f32 %v8462, %v8550
    %8552 = vmatmul.bf16.gmra.mxu0 %v7437
    %v8553 = vpop.f32.mrf.mxu0
    %v8554 = vadd.f32 %v8465, %v8553
    %v8555 = vpop.f32.mrf.mxu0
    %v8556 = vadd.f32 %v8467, %v8555
    %8557 = vmatmul.bf16.gmra.mxu0 %v7441
    %v8558 = vpop.f32.mrf.mxu0
    %v8559 = vadd.f32 %v8470, %v8558
    %v8560 = vpop.f32.mrf.mxu0
    %v8561 = vadd.f32 %v8472, %v8560
    %8562 = vmatmul.bf16.gmra.mxu0 %v7445
    %v8563 = vpop.f32.mrf.mxu0
    %v8564 = vadd.f32 %v8475, %v8563
    %v8565 = vpop.f32.mrf.mxu0
    %v8566 = vadd.f32 %v8477, %v8565
    %8567 = vmatmul.bf16.gmra.mxu0 %v7449
    %v8568 = vpop.f32.mrf.mxu0
    %v8569 = vadd.f32 %v8480, %v8568
    %v8570 = vpop.f32.mrf.mxu0
    %v8571 = vadd.f32 %v8482, %v8570
    %8572 = vmatmul.bf16.gmra.mxu0 %v7453
    %v8573 = vpop.f32.mrf.mxu0
    %v8574 = vadd.f32 %v8485, %v8573
    %v8575 = vpop.f32.mrf.mxu0
    %v8576 = vadd.f32 %v8487, %v8575
    %8577 = vmatmul.bf16.gmra.mxu0 %v7457
    %v8578 = vpop.f32.mrf.mxu0
    %v8579 = vadd.f32 %v8490, %v8578
    %v8580 = vpop.f32.mrf.mxu0
    %v8581 = vadd.f32 %v8492, %v8580
    %8582 = vmatmul.bf16.gmra.mxu0 %v7461
    %v8583 = vpop.f32.mrf.mxu0
    %v8584 = vadd.f32 %v8495, %v8583
    %v8585 = vpop.f32.mrf.mxu0
    %v8586 = vadd.f32 %v8497, %v8585
    %8587 = vmatmul.bf16.gmra.mxu0 %v7465
    %v8588 = vpop.f32.mrf.mxu0
    %v8589 = vadd.f32 %v8500, %v8588
    %v8590 = vpop.f32.mrf.mxu0
    %v8591 = vadd.f32 %v8502, %v8590
    %8592 = vmatmul.bf16.gmra.mxu0 %v7469
    %v8593 = vpop.f32.mrf.mxu0
    %v8594 = vadd.f32 %v8505, %v8593
    %v8595 = vpop.f32.mrf.mxu0
    %v8596 = vadd.f32 %v8507, %v8595
    %8597 = vmatmul.bf16.gmra.mxu0 %v7473
    %v8598 = vpop.f32.mrf.mxu0
    %v8599 = vadd.f32 %v8510, %v8598
    %v8600 = vpop.f32.mrf.mxu0
    %v8601 = vadd.f32 %v8512, %v8600
    %8602 = vmatmul.bf16.gmra.mxu0 %v7477
    %v8603 = vpop.f32.mrf.mxu0
    %v8604 = vadd.f32 %v8515, %v8603
    %v8605 = vpop.f32.mrf.mxu0
    %v8606 = vadd.f32 %v8517, %v8605
    %8607 = vmatmul.bf16.gmra.mxu0 %v7481
    %v8608 = vpop.f32.mrf.mxu0
    %v8609 = vadd.f32 %v8520, %v8608
    %v8610 = vpop.f32.mrf.mxu0
    %v8611 = vadd.f32 %v8522, %v8610
    %8612 = vmatmul.bf16.gmra.mxu0 %v7485
    %v8613 = vpop.f32.mrf.mxu0
    %v8614 = vadd.f32 %v8525, %v8613
    %v8615 = vpop.f32.mrf.mxu0
    %v8616 = vadd.f32 %v8527, %v8615
    %8617 = vmatmul.bf16.gmra.mxu0 %v7489
    %v8618 = vpop.f32.mrf.mxu0
    %v8619 = vadd.f32 %v8530, %v8618
    %v8620 = vpop.f32.mrf.mxu0
    %v8621 = vadd.f32 %v8532, %v8620
    %8622 = vmatmul.bf16.gmra.mxu0 %v7493
    %v8623 = vpop.f32.mrf.mxu0
    %v8624 = vadd.f32 %v8535, %v8623
    %v8625 = vpop.f32.mrf.mxu0
    %v8626 = vadd.f32 %v8537, %v8625
    %8627 = vdwg.mxu0
    %8628 = vmatpush.bf16.msra.mxu0 %v8045
    %8629 = vmatpush.bf16.msra.mxu0 %v8041
    %8630 = vmatpush.bf16.msra.mxu0 %v8037
    %8631 = vmatpush.bf16.msra.mxu0 %v8033
    %8632 = vmatpush.bf16.msra.mxu0 %v8029
    %8633 = vmatpush.bf16.msra.mxu0 %v8025
    %8634 = vmatpush.bf16.msra.mxu0 %v8021
    %8635 = vmatpush.bf16.msra.mxu0 %v8017
    %8636 = vmatmul.bf16.gmra.mxu0 %v7430
    %v8637 = vpop.f32.mrf.mxu0
    %v8638 = vadd.f32 %v7625, %v8637
    %v8639 = vpop.f32.mrf.mxu0
    %v8640 = vadd.f32 %v7625, %v8639
    %8641 = vmatmul.bf16.gmra.mxu0 %v7434
    %v8642 = vpop.f32.mrf.mxu0
    %v8643 = vadd.f32 %v7625, %v8642
    %v8644 = vpop.f32.mrf.mxu0
    %v8645 = vadd.f32 %v7625, %v8644
    %8646 = vmatmul.bf16.gmra.mxu0 %v7438
    %v8647 = vpop.f32.mrf.mxu0
    %v8648 = vadd.f32 %v7625, %v8647
    %v8649 = vpop.f32.mrf.mxu0
    %v8650 = vadd.f32 %v7625, %v8649
    %8651 = vmatmul.bf16.gmra.mxu0 %v7442
    %v8652 = vpop.f32.mrf.mxu0
    %v8653 = vadd.f32 %v7625, %v8652
    %v8654 = vpop.f32.mrf.mxu0
    %v8655 = vadd.f32 %v7625, %v8654
    %8656 = vmatmul.bf16.gmra.mxu0 %v7446
    %v8657 = vpop.f32.mrf.mxu0
    %v8658 = vadd.f32 %v7625, %v8657
    %v8659 = vpop.f32.mrf.mxu0
    %v8660 = vadd.f32 %v7625, %v8659
    %8661 = vmatmul.bf16.gmra.mxu0 %v7450
    %v8662 = vpop.f32.mrf.mxu0
    %v8663 = vadd.f32 %v7625, %v8662
    %v8664 = vpop.f32.mrf.mxu0
    %v8665 = vadd.f32 %v7625, %v8664
    %8666 = vmatmul.bf16.gmra.mxu0 %v7454
    %v8667 = vpop.f32.mrf.mxu0
    %v8668 = vadd.f32 %v7625, %v8667
    %v8669 = vpop.f32.mrf.mxu0
    %v8670 = vadd.f32 %v7625, %v8669
    %8671 = vmatmul.bf16.gmra.mxu0 %v7458
    %v8672 = vpop.f32.mrf.mxu0
    %v8673 = vadd.f32 %v7625, %v8672
    %v8674 = vpop.f32.mrf.mxu0
    %v8675 = vadd.f32 %v7625, %v8674
    %8676 = vmatmul.bf16.gmra.mxu0 %v7462
    %v8677 = vpop.f32.mrf.mxu0
    %v8678 = vadd.f32 %v7625, %v8677
    %v8679 = vpop.f32.mrf.mxu0
    %v8680 = vadd.f32 %v7625, %v8679
    %8681 = vmatmul.bf16.gmra.mxu0 %v7466
    %v8682 = vpop.f32.mrf.mxu0
    %v8683 = vadd.f32 %v7625, %v8682
    %v8684 = vpop.f32.mrf.mxu0
    %v8685 = vadd.f32 %v7625, %v8684
    %8686 = vmatmul.bf16.gmra.mxu0 %v7470
    %v8687 = vpop.f32.mrf.mxu0
    %v8688 = vadd.f32 %v7625, %v8687
    %v8689 = vpop.f32.mrf.mxu0
    %v8690 = vadd.f32 %v7625, %v8689
    %8691 = vmatmul.bf16.gmra.mxu0 %v7474
    %v8692 = vpop.f32.mrf.mxu0
    %v8693 = vadd.f32 %v7625, %v8692
    %v8694 = vpop.f32.mrf.mxu0
    %v8695 = vadd.f32 %v7625, %v8694
    %8696 = vmatmul.bf16.gmra.mxu0 %v7478
    %v8697 = vpop.f32.mrf.mxu0
    %v8698 = vadd.f32 %v7625, %v8697
    %v8699 = vpop.f32.mrf.mxu0
    %v8700 = vadd.f32 %v7625, %v8699
    %8701 = vmatmul.bf16.gmra.mxu0 %v7482
    %v8702 = vpop.f32.mrf.mxu0
    %v8703 = vadd.f32 %v7625, %v8702
    %v8704 = vpop.f32.mrf.mxu0
    %v8705 = vadd.f32 %v7625, %v8704
    %8706 = vmatmul.bf16.gmra.mxu0 %v7486
    %v8707 = vpop.f32.mrf.mxu0
    %v8708 = vadd.f32 %v7625, %v8707
    %v8709 = vpop.f32.mrf.mxu0
    %v8710 = vadd.f32 %v7625, %v8709
    %8711 = vmatmul.bf16.gmra.mxu0 %v7490
    %v8712 = vpop.f32.mrf.mxu0
    %v8713 = vadd.f32 %v7625, %v8712
    %v8714 = vpop.f32.mrf.mxu0
    %v8715 = vadd.f32 %v7625, %v8714
    %8716 = vdwg.mxu0
    %8717 = vmatpush.bf16.msra.mxu0 %v8077
    %8718 = vmatpush.bf16.msra.mxu0 %v8073
    %8719 = vmatpush.bf16.msra.mxu0 %v8069
    %8720 = vmatpush.bf16.msra.mxu0 %v8065
    %8721 = vmatpush.bf16.msra.mxu0 %v8061
    %8722 = vmatpush.bf16.msra.mxu0 %v8057
    %8723 = vmatpush.bf16.msra.mxu0 %v8053
    %8724 = vmatpush.bf16.msra.mxu0 %v8049
    %8725 = vmatmul.bf16.gmra.mxu0 %v7431
    %v8726 = vpop.f32.mrf.mxu0
    %v8727 = vadd.f32 %v8638, %v8726
    %v8728 = vpop.f32.mrf.mxu0
    %v8729 = vadd.f32 %v8640, %v8728
    %8730 = vmatmul.bf16.gmra.mxu0 %v7435
    %v8731 = vpop.f32.mrf.mxu0
    %v8732 = vadd.f32 %v8643, %v8731
    %v8733 = vpop.f32.mrf.mxu0
    %v8734 = vadd.f32 %v8645, %v8733
    %8735 = vmatmul.bf16.gmra.mxu0 %v7439
    %v8736 = vpop.f32.mrf.mxu0
    %v8737 = vadd.f32 %v8648, %v8736
    %v8738 = vpop.f32.mrf.mxu0
    %v8739 = vadd.f32 %v8650, %v8738
    %8740 = vmatmul.bf16.gmra.mxu0 %v7443
    %v8741 = vpop.f32.mrf.mxu0
    %v8742 = vadd.f32 %v8653, %v8741
    %v8743 = vpop.f32.mrf.mxu0
    %v8744 = vadd.f32 %v8655, %v8743
    %8745 = vmatmul.bf16.gmra.mxu0 %v7447
    %v8746 = vpop.f32.mrf.mxu0
    %v8747 = vadd.f32 %v8658, %v8746
    %v8748 = vpop.f32.mrf.mxu0
    %v8749 = vadd.f32 %v8660, %v8748
    %8750 = vmatmul.bf16.gmra.mxu0 %v7451
    %v8751 = vpop.f32.mrf.mxu0
    %v8752 = vadd.f32 %v8663, %v8751
    %v8753 = vpop.f32.mrf.mxu0
    %v8754 = vadd.f32 %v8665, %v8753
    %8755 = vmatmul.bf16.gmra.mxu0 %v7455
    %v8756 = vpop.f32.mrf.mxu0
    %v8757 = vadd.f32 %v8668, %v8756
    %v8758 = vpop.f32.mrf.mxu0
    %v8759 = vadd.f32 %v8670, %v8758
    %8760 = vmatmul.bf16.gmra.mxu0 %v7459
    %v8761 = vpop.f32.mrf.mxu0
    %v8762 = vadd.f32 %v8673, %v8761
    %v8763 = vpop.f32.mrf.mxu0
    %v8764 = vadd.f32 %v8675, %v8763
    %8765 = vmatmul.bf16.gmra.mxu0 %v7463
    %v8766 = vpop.f32.mrf.mxu0
    %v8767 = vadd.f32 %v8678, %v8766
    %v8768 = vpop.f32.mrf.mxu0
    %v8769 = vadd.f32 %v8680, %v8768
    %8770 = vmatmul.bf16.gmra.mxu0 %v7467
    %v8771 = vpop.f32.mrf.mxu0
    %v8772 = vadd.f32 %v8683, %v8771
    %v8773 = vpop.f32.mrf.mxu0
    %v8774 = vadd.f32 %v8685, %v8773
    %8775 = vmatmul.bf16.gmra.mxu0 %v7471
    %v8776 = vpop.f32.mrf.mxu0
    %v8777 = vadd.f32 %v8688, %v8776
    %v8778 = vpop.f32.mrf.mxu0
    %v8779 = vadd.f32 %v8690, %v8778
    %8780 = vmatmul.bf16.gmra.mxu0 %v7475
    %v8781 = vpop.f32.mrf.mxu0
    %v8782 = vadd.f32 %v8693, %v8781
    %v8783 = vpop.f32.mrf.mxu0
    %v8784 = vadd.f32 %v8695, %v8783
    %8785 = vmatmul.bf16.gmra.mxu0 %v7479
    %v8786 = vpop.f32.mrf.mxu0
    %v8787 = vadd.f32 %v8698, %v8786
    %v8788 = vpop.f32.mrf.mxu0
    %v8789 = vadd.f32 %v8700, %v8788
    %8790 = vmatmul.bf16.gmra.mxu0 %v7483
    %v8791 = vpop.f32.mrf.mxu0
    %v8792 = vadd.f32 %v8703, %v8791
    %v8793 = vpop.f32.mrf.mxu0
    %v8794 = vadd.f32 %v8705, %v8793
    %8795 = vmatmul.bf16.gmra.mxu0 %v7487
    %v8796 = vpop.f32.mrf.mxu0
    %v8797 = vadd.f32 %v8708, %v8796
    %v8798 = vpop.f32.mrf.mxu0
    %v8799 = vadd.f32 %v8710, %v8798
    %8800 = vmatmul.bf16.gmra.mxu0 %v7491
    %v8801 = vpop.f32.mrf.mxu0
    %v8802 = vadd.f32 %v8713, %v8801
    %v8803 = vpop.f32.mrf.mxu0
    %v8804 = vadd.f32 %v8715, %v8803
    %8805 = vdwg.mxu0
    %8806 = vmatpush.bf16.msra.mxu0 %v8109
    %8807 = vmatpush.bf16.msra.mxu0 %v8105
    %8808 = vmatpush.bf16.msra.mxu0 %v8101
    %8809 = vmatpush.bf16.msra.mxu0 %v8097
    %8810 = vmatpush.bf16.msra.mxu0 %v8093
    %8811 = vmatpush.bf16.msra.mxu0 %v8089
    %8812 = vmatpush.bf16.msra.mxu0 %v8085
    %8813 = vmatpush.bf16.msra.mxu0 %v8081
    %8814 = vmatmul.bf16.gmra.mxu0 %v7432
    %v8815 = vpop.f32.mrf.mxu0
    %v8816 = vadd.f32 %v8727, %v8815
    %v8817 = vpop.f32.mrf.mxu0
    %v8818 = vadd.f32 %v8729, %v8817
    %8819 = vmatmul.bf16.gmra.mxu0 %v7436
    %v8820 = vpop.f32.mrf.mxu0
    %v8821 = vadd.f32 %v8732, %v8820
    %v8822 = vpop.f32.mrf.mxu0
    %v8823 = vadd.f32 %v8734, %v8822
    %8824 = vmatmul.bf16.gmra.mxu0 %v7440
    %v8825 = vpop.f32.mrf.mxu0
    %v8826 = vadd.f32 %v8737, %v8825
    %v8827 = vpop.f32.mrf.mxu0
    %v8828 = vadd.f32 %v8739, %v8827
    %8829 = vmatmul.bf16.gmra.mxu0 %v7444
    %v8830 = vpop.f32.mrf.mxu0
    %v8831 = vadd.f32 %v8742, %v8830
    %v8832 = vpop.f32.mrf.mxu0
    %v8833 = vadd.f32 %v8744, %v8832
    %8834 = vmatmul.bf16.gmra.mxu0 %v7448
    %v8835 = vpop.f32.mrf.mxu0
    %v8836 = vadd.f32 %v8747, %v8835
    %v8837 = vpop.f32.mrf.mxu0
    %v8838 = vadd.f32 %v8749, %v8837
    %8839 = vmatmul.bf16.gmra.mxu0 %v7452
    %v8840 = vpop.f32.mrf.mxu0
    %v8841 = vadd.f32 %v8752, %v8840
    %v8842 = vpop.f32.mrf.mxu0
    %v8843 = vadd.f32 %v8754, %v8842
    %8844 = vmatmul.bf16.gmra.mxu0 %v7456
    %v8845 = vpop.f32.mrf.mxu0
    %v8846 = vadd.f32 %v8757, %v8845
    %v8847 = vpop.f32.mrf.mxu0
    %v8848 = vadd.f32 %v8759, %v8847
    %8849 = vmatmul.bf16.gmra.mxu0 %v7460
    %v8850 = vpop.f32.mrf.mxu0
    %v8851 = vadd.f32 %v8762, %v8850
    %v8852 = vpop.f32.mrf.mxu0
    %v8853 = vadd.f32 %v8764, %v8852
    %8854 = vmatmul.bf16.gmra.mxu0 %v7464
    %v8855 = vpop.f32.mrf.mxu0
    %v8856 = vadd.f32 %v8767, %v8855
    %v8857 = vpop.f32.mrf.mxu0
    %v8858 = vadd.f32 %v8769, %v8857
    %8859 = vmatmul.bf16.gmra.mxu0 %v7468
    %v8860 = vpop.f32.mrf.mxu0
    %v8861 = vadd.f32 %v8772, %v8860
    %v8862 = vpop.f32.mrf.mxu0
    %v8863 = vadd.f32 %v8774, %v8862
    %8864 = vmatmul.bf16.gmra.mxu0 %v7472
    %v8865 = vpop.f32.mrf.mxu0
    %v8866 = vadd.f32 %v8777, %v8865
    %v8867 = vpop.f32.mrf.mxu0
    %v8868 = vadd.f32 %v8779, %v8867
    %8869 = vmatmul.bf16.gmra.mxu0 %v7476
    %v8870 = vpop.f32.mrf.mxu0
    %v8871 = vadd.f32 %v8782, %v8870
    %v8872 = vpop.f32.mrf.mxu0
    %v8873 = vadd.f32 %v8784, %v8872
    %8874 = vmatmul.bf16.gmra.mxu0 %v7480
    %v8875 = vpop.f32.mrf.mxu0
    %v8876 = vadd.f32 %v8787, %v8875
    %v8877 = vpop.f32.mrf.mxu0
    %v8878 = vadd.f32 %v8789, %v8877
    %8879 = vmatmul.bf16.gmra.mxu0 %v7484
    %v8880 = vpop.f32.mrf.mxu0
    %v8881 = vadd.f32 %v8792, %v8880
    %v8882 = vpop.f32.mrf.mxu0
    %v8883 = vadd.f32 %v8794, %v8882
    %8884 = vmatmul.bf16.gmra.mxu0 %v7488
    %v8885 = vpop.f32.mrf.mxu0
    %v8886 = vadd.f32 %v8797, %v8885
    %v8887 = vpop.f32.mrf.mxu0
    %v8888 = vadd.f32 %v8799, %v8887
    %8889 = vmatmul.bf16.gmra.mxu0 %v7492
    %v8890 = vpop.f32.mrf.mxu0
    %v8891 = vadd.f32 %v8802, %v8890
    %v8892 = vpop.f32.mrf.mxu0
    %v8893 = vadd.f32 %v8804, %v8892
    %8894 = vdwg.mxu0
    %8895 = vmatpush.bf16.msra.mxu0 %v8141
    %8896 = vmatpush.bf16.msra.mxu0 %v8137
    %8897 = vmatpush.bf16.msra.mxu0 %v8133
    %8898 = vmatpush.bf16.msra.mxu0 %v8129
    %8899 = vmatpush.bf16.msra.mxu0 %v8125
    %8900 = vmatpush.bf16.msra.mxu0 %v8121
    %8901 = vmatpush.bf16.msra.mxu0 %v8117
    %8902 = vmatpush.bf16.msra.mxu0 %v8113
    %8903 = vmatmul.bf16.gmra.mxu0 %v7433
    %v8904 = vpop.f32.mrf.mxu0
    %v8905 = vadd.f32 %v8816, %v8904
    %v8906 = vpop.f32.mrf.mxu0
    %v8907 = vadd.f32 %v8818, %v8906
    %8908 = vmatmul.bf16.gmra.mxu0 %v7437
    %v8909 = vpop.f32.mrf.mxu0
    %v8910 = vadd.f32 %v8821, %v8909
    %v8911 = vpop.f32.mrf.mxu0
    %v8912 = vadd.f32 %v8823, %v8911
    %8913 = vmatmul.bf16.gmra.mxu0 %v7441
    %v8914 = vpop.f32.mrf.mxu0
    %v8915 = vadd.f32 %v8826, %v8914
    %v8916 = vpop.f32.mrf.mxu0
    %v8917 = vadd.f32 %v8828, %v8916
    %8918 = vmatmul.bf16.gmra.mxu0 %v7445
    %v8919 = vpop.f32.mrf.mxu0
    %v8920 = vadd.f32 %v8831, %v8919
    %v8921 = vpop.f32.mrf.mxu0
    %v8922 = vadd.f32 %v8833, %v8921
    %8923 = vmatmul.bf16.gmra.mxu0 %v7449
    %v8924 = vpop.f32.mrf.mxu0
    %v8925 = vadd.f32 %v8836, %v8924
    %v8926 = vpop.f32.mrf.mxu0
    %v8927 = vadd.f32 %v8838, %v8926
    %8928 = vmatmul.bf16.gmra.mxu0 %v7453
    %v8929 = vpop.f32.mrf.mxu0
    %v8930 = vadd.f32 %v8841, %v8929
    %v8931 = vpop.f32.mrf.mxu0
    %v8932 = vadd.f32 %v8843, %v8931
    %8933 = vmatmul.bf16.gmra.mxu0 %v7457
    %v8934 = vpop.f32.mrf.mxu0
    %v8935 = vadd.f32 %v8846, %v8934
    %v8936 = vpop.f32.mrf.mxu0
    %v8937 = vadd.f32 %v8848, %v8936
    %8938 = vmatmul.bf16.gmra.mxu0 %v7461
    %v8939 = vpop.f32.mrf.mxu0
    %v8940 = vadd.f32 %v8851, %v8939
    %v8941 = vpop.f32.mrf.mxu0
    %v8942 = vadd.f32 %v8853, %v8941
    %8943 = vmatmul.bf16.gmra.mxu0 %v7465
    %v8944 = vpop.f32.mrf.mxu0
    %v8945 = vadd.f32 %v8856, %v8944
    %v8946 = vpop.f32.mrf.mxu0
    %v8947 = vadd.f32 %v8858, %v8946
    %8948 = vmatmul.bf16.gmra.mxu0 %v7469
    %v8949 = vpop.f32.mrf.mxu0
    %v8950 = vadd.f32 %v8861, %v8949
    %v8951 = vpop.f32.mrf.mxu0
    %v8952 = vadd.f32 %v8863, %v8951
    %8953 = vmatmul.bf16.gmra.mxu0 %v7473
    %v8954 = vpop.f32.mrf.mxu0
    %v8955 = vadd.f32 %v8866, %v8954
    %v8956 = vpop.f32.mrf.mxu0
    %v8957 = vadd.f32 %v8868, %v8956
    %8958 = vmatmul.bf16.gmra.mxu0 %v7477
    %v8959 = vpop.f32.mrf.mxu0
    %v8960 = vadd.f32 %v8871, %v8959
    %v8961 = vpop.f32.mrf.mxu0
    %v8962 = vadd.f32 %v8873, %v8961
    %8963 = vmatmul.bf16.gmra.mxu0 %v7481
    %v8964 = vpop.f32.mrf.mxu0
    %v8965 = vadd.f32 %v8876, %v8964
    %v8966 = vpop.f32.mrf.mxu0
    %v8967 = vadd.f32 %v8878, %v8966
    %8968 = vmatmul.bf16.gmra.mxu0 %v7485
    %v8969 = vpop.f32.mrf.mxu0
    %v8970 = vadd.f32 %v8881, %v8969
    %v8971 = vpop.f32.mrf.mxu0
    %v8972 = vadd.f32 %v8883, %v8971
    %8973 = vmatmul.bf16.gmra.mxu0 %v7489
    %v8974 = vpop.f32.mrf.mxu0
    %v8975 = vadd.f32 %v8886, %v8974
    %v8976 = vpop.f32.mrf.mxu0
    %v8977 = vadd.f32 %v8888, %v8976
    %8978 = vmatmul.bf16.gmra.mxu0 %v7493
    %v8979 = vpop.f32.mrf.mxu0
    %v8980 = vadd.f32 %v8891, %v8979
    %v8981 = vpop.f32.mrf.mxu0
    %v8982 = vadd.f32 %v8893, %v8981
    %8983 = vdwg.mxu0
    %8984 = vmatpush.bf16.msra.mxu0 %v8046
    %8985 = vmatpush.bf16.msra.mxu0 %v8042
    %8986 = vmatpush.bf16.msra.mxu0 %v8038
    %8987 = vmatpush.bf16.msra.mxu0 %v8034
    %8988 = vmatpush.bf16.msra.mxu0 %v8030
    %8989 = vmatpush.bf16.msra.mxu0 %v8026
    %8990 = vmatpush.bf16.msra.mxu0 %v8022
    %8991 = vmatpush.bf16.msra.mxu0 %v8018
    %8992 = vmatmul.bf16.gmra.mxu0 %v7430
    %v8993 = vpop.f32.mrf.mxu0
    %v8994 = vadd.f32 %v7626, %v8993
    %v8995 = vpop.f32.mrf.mxu0
    %v8996 = vadd.f32 %v7626, %v8995
    %8997 = vmatmul.bf16.gmra.mxu0 %v7434
    %v8998 = vpop.f32.mrf.mxu0
    %v8999 = vadd.f32 %v7626, %v8998
    %v9000 = vpop.f32.mrf.mxu0
    %v9001 = vadd.f32 %v7626, %v9000
    %9002 = vmatmul.bf16.gmra.mxu0 %v7438
    %v9003 = vpop.f32.mrf.mxu0
    %v9004 = vadd.f32 %v7626, %v9003
    %v9005 = vpop.f32.mrf.mxu0
    %v9006 = vadd.f32 %v7626, %v9005
    %9007 = vmatmul.bf16.gmra.mxu0 %v7442
    %v9008 = vpop.f32.mrf.mxu0
    %v9009 = vadd.f32 %v7626, %v9008
    %v9010 = vpop.f32.mrf.mxu0
    %v9011 = vadd.f32 %v7626, %v9010
    %9012 = vmatmul.bf16.gmra.mxu0 %v7446
    %v9013 = vpop.f32.mrf.mxu0
    %v9014 = vadd.f32 %v7626, %v9013
    %v9015 = vpop.f32.mrf.mxu0
    %v9016 = vadd.f32 %v7626, %v9015
    %9017 = vmatmul.bf16.gmra.mxu0 %v7450
    %v9018 = vpop.f32.mrf.mxu0
    %v9019 = vadd.f32 %v7626, %v9018
    %v9020 = vpop.f32.mrf.mxu0
    %v9021 = vadd.f32 %v7626, %v9020
    %9022 = vmatmul.bf16.gmra.mxu0 %v7454
    %v9023 = vpop.f32.mrf.mxu0
    %v9024 = vadd.f32 %v7626, %v9023
    %v9025 = vpop.f32.mrf.mxu0
    %v9026 = vadd.f32 %v7626, %v9025
    %9027 = vmatmul.bf16.gmra.mxu0 %v7458
    %v9028 = vpop.f32.mrf.mxu0
    %v9029 = vadd.f32 %v7626, %v9028
    %v9030 = vpop.f32.mrf.mxu0
    %v9031 = vadd.f32 %v7626, %v9030
    %9032 = vmatmul.bf16.gmra.mxu0 %v7462
    %v9033 = vpop.f32.mrf.mxu0
    %v9034 = vadd.f32 %v7626, %v9033
    %v9035 = vpop.f32.mrf.mxu0
    %v9036 = vadd.f32 %v7626, %v9035
    %9037 = vmatmul.bf16.gmra.mxu0 %v7466
    %v9038 = vpop.f32.mrf.mxu0
    %v9039 = vadd.f32 %v7626, %v9038
    %v9040 = vpop.f32.mrf.mxu0
    %v9041 = vadd.f32 %v7626, %v9040
    %9042 = vmatmul.bf16.gmra.mxu0 %v7470
    %v9043 = vpop.f32.mrf.mxu0
    %v9044 = vadd.f32 %v7626, %v9043
    %v9045 = vpop.f32.mrf.mxu0
    %v9046 = vadd.f32 %v7626, %v9045
    %9047 = vmatmul.bf16.gmra.mxu0 %v7474
    %v9048 = vpop.f32.mrf.mxu0
    %v9049 = vadd.f32 %v7626, %v9048
    %v9050 = vpop.f32.mrf.mxu0
    %v9051 = vadd.f32 %v7626, %v9050
    %9052 = vmatmul.bf16.gmra.mxu0 %v7478
    %v9053 = vpop.f32.mrf.mxu0
    %v9054 = vadd.f32 %v7626, %v9053
    %v9055 = vpop.f32.mrf.mxu0
    %v9056 = vadd.f32 %v7626, %v9055
    %9057 = vmatmul.bf16.gmra.mxu0 %v7482
    %v9058 = vpop.f32.mrf.mxu0
    %v9059 = vadd.f32 %v7626, %v9058
    %v9060 = vpop.f32.mrf.mxu0
    %v9061 = vadd.f32 %v7626, %v9060
    %9062 = vmatmul.bf16.gmra.mxu0 %v7486
    %v9063 = vpop.f32.mrf.mxu0
    %v9064 = vadd.f32 %v7626, %v9063
    %v9065 = vpop.f32.mrf.mxu0
    %v9066 = vadd.f32 %v7626, %v9065
    %9067 = vmatmul.bf16.gmra.mxu0 %v7490
    %v9068 = vpop.f32.mrf.mxu0
    %v9069 = vadd.f32 %v7626, %v9068
    %v9070 = vpop.f32.mrf.mxu0
    %v9071 = vadd.f32 %v7626, %v9070
    %9072 = vdwg.mxu0
    %9073 = vmatpush.bf16.msra.mxu0 %v8078
    %9074 = vmatpush.bf16.msra.mxu0 %v8074
    %9075 = vmatpush.bf16.msra.mxu0 %v8070
    %9076 = vmatpush.bf16.msra.mxu0 %v8066
    %9077 = vmatpush.bf16.msra.mxu0 %v8062
    %9078 = vmatpush.bf16.msra.mxu0 %v8058
    %9079 = vmatpush.bf16.msra.mxu0 %v8054
    %9080 = vmatpush.bf16.msra.mxu0 %v8050
    %9081 = vmatmul.bf16.gmra.mxu0 %v7431
    %v9082 = vpop.f32.mrf.mxu0
    %v9083 = vadd.f32 %v8994, %v9082
    %v9084 = vpop.f32.mrf.mxu0
    %v9085 = vadd.f32 %v8996, %v9084
    %9086 = vmatmul.bf16.gmra.mxu0 %v7435
    %v9087 = vpop.f32.mrf.mxu0
    %v9088 = vadd.f32 %v8999, %v9087
    %v9089 = vpop.f32.mrf.mxu0
    %v9090 = vadd.f32 %v9001, %v9089
    %9091 = vmatmul.bf16.gmra.mxu0 %v7439
    %v9092 = vpop.f32.mrf.mxu0
    %v9093 = vadd.f32 %v9004, %v9092
    %v9094 = vpop.f32.mrf.mxu0
    %v9095 = vadd.f32 %v9006, %v9094
    %9096 = vmatmul.bf16.gmra.mxu0 %v7443
    %v9097 = vpop.f32.mrf.mxu0
    %v9098 = vadd.f32 %v9009, %v9097
    %v9099 = vpop.f32.mrf.mxu0
    %v9100 = vadd.f32 %v9011, %v9099
    %9101 = vmatmul.bf16.gmra.mxu0 %v7447
    %v9102 = vpop.f32.mrf.mxu0
    %v9103 = vadd.f32 %v9014, %v9102
    %v9104 = vpop.f32.mrf.mxu0
    %v9105 = vadd.f32 %v9016, %v9104
    %9106 = vmatmul.bf16.gmra.mxu0 %v7451
    %v9107 = vpop.f32.mrf.mxu0
    %v9108 = vadd.f32 %v9019, %v9107
    %v9109 = vpop.f32.mrf.mxu0
    %v9110 = vadd.f32 %v9021, %v9109
    %9111 = vmatmul.bf16.gmra.mxu0 %v7455
    %v9112 = vpop.f32.mrf.mxu0
    %v9113 = vadd.f32 %v9024, %v9112
    %v9114 = vpop.f32.mrf.mxu0
    %v9115 = vadd.f32 %v9026, %v9114
    %9116 = vmatmul.bf16.gmra.mxu0 %v7459
    %v9117 = vpop.f32.mrf.mxu0
    %v9118 = vadd.f32 %v9029, %v9117
    %v9119 = vpop.f32.mrf.mxu0
    %v9120 = vadd.f32 %v9031, %v9119
    %9121 = vmatmul.bf16.gmra.mxu0 %v7463
    %v9122 = vpop.f32.mrf.mxu0
    %v9123 = vadd.f32 %v9034, %v9122
    %v9124 = vpop.f32.mrf.mxu0
    %v9125 = vadd.f32 %v9036, %v9124
    %9126 = vmatmul.bf16.gmra.mxu0 %v7467
    %v9127 = vpop.f32.mrf.mxu0
    %v9128 = vadd.f32 %v9039, %v9127
    %v9129 = vpop.f32.mrf.mxu0
    %v9130 = vadd.f32 %v9041, %v9129
    %9131 = vmatmul.bf16.gmra.mxu0 %v7471
    %v9132 = vpop.f32.mrf.mxu0
    %v9133 = vadd.f32 %v9044, %v9132
    %v9134 = vpop.f32.mrf.mxu0
    %v9135 = vadd.f32 %v9046, %v9134
    %9136 = vmatmul.bf16.gmra.mxu0 %v7475
    %v9137 = vpop.f32.mrf.mxu0
    %v9138 = vadd.f32 %v9049, %v9137
    %v9139 = vpop.f32.mrf.mxu0
    %v9140 = vadd.f32 %v9051, %v9139
    %9141 = vmatmul.bf16.gmra.mxu0 %v7479
    %v9142 = vpop.f32.mrf.mxu0
    %v9143 = vadd.f32 %v9054, %v9142
    %v9144 = vpop.f32.mrf.mxu0
    %v9145 = vadd.f32 %v9056, %v9144
    %9146 = vmatmul.bf16.gmra.mxu0 %v7483
    %v9147 = vpop.f32.mrf.mxu0
    %v9148 = vadd.f32 %v9059, %v9147
    %v9149 = vpop.f32.mrf.mxu0
    %v9150 = vadd.f32 %v9061, %v9149
    %9151 = vmatmul.bf16.gmra.mxu0 %v7487
    %v9152 = vpop.f32.mrf.mxu0
    %v9153 = vadd.f32 %v9064, %v9152
    %v9154 = vpop.f32.mrf.mxu0
    %v9155 = vadd.f32 %v9066, %v9154
    %9156 = vmatmul.bf16.gmra.mxu0 %v7491
    %v9157 = vpop.f32.mrf.mxu0
    %v9158 = vadd.f32 %v9069, %v9157
    %v9159 = vpop.f32.mrf.mxu0
    %v9160 = vadd.f32 %v9071, %v9159
    %9161 = vdwg.mxu0
    %9162 = vmatpush.bf16.msra.mxu0 %v8110
    %9163 = vmatpush.bf16.msra.mxu0 %v8106
    %9164 = vmatpush.bf16.msra.mxu0 %v8102
    %9165 = vmatpush.bf16.msra.mxu0 %v8098
    %9166 = vmatpush.bf16.msra.mxu0 %v8094
    %9167 = vmatpush.bf16.msra.mxu0 %v8090
    %9168 = vmatpush.bf16.msra.mxu0 %v8086
    %9169 = vmatpush.bf16.msra.mxu0 %v8082
    %9170 = vmatmul.bf16.gmra.mxu0 %v7432
    %v9171 = vpop.f32.mrf.mxu0
    %v9172 = vadd.f32 %v9083, %v9171
    %v9173 = vpop.f32.mrf.mxu0
    %v9174 = vadd.f32 %v9085, %v9173
    %9175 = vmatmul.bf16.gmra.mxu0 %v7436
    %v9176 = vpop.f32.mrf.mxu0
    %v9177 = vadd.f32 %v9088, %v9176
    %v9178 = vpop.f32.mrf.mxu0
    %v9179 = vadd.f32 %v9090, %v9178
    %9180 = vmatmul.bf16.gmra.mxu0 %v7440
    %v9181 = vpop.f32.mrf.mxu0
    %v9182 = vadd.f32 %v9093, %v9181
    %v9183 = vpop.f32.mrf.mxu0
    %v9184 = vadd.f32 %v9095, %v9183
    %9185 = vmatmul.bf16.gmra.mxu0 %v7444
    %v9186 = vpop.f32.mrf.mxu0
    %v9187 = vadd.f32 %v9098, %v9186
    %v9188 = vpop.f32.mrf.mxu0
    %v9189 = vadd.f32 %v9100, %v9188
    %9190 = vmatmul.bf16.gmra.mxu0 %v7448
    %v9191 = vpop.f32.mrf.mxu0
    %v9192 = vadd.f32 %v9103, %v9191
    %v9193 = vpop.f32.mrf.mxu0
    %v9194 = vadd.f32 %v9105, %v9193
    %9195 = vmatmul.bf16.gmra.mxu0 %v7452
    %v9196 = vpop.f32.mrf.mxu0
    %v9197 = vadd.f32 %v9108, %v9196
    %v9198 = vpop.f32.mrf.mxu0
    %v9199 = vadd.f32 %v9110, %v9198
    %9200 = vmatmul.bf16.gmra.mxu0 %v7456
    %v9201 = vpop.f32.mrf.mxu0
    %v9202 = vadd.f32 %v9113, %v9201
    %v9203 = vpop.f32.mrf.mxu0
    %v9204 = vadd.f32 %v9115, %v9203
    %9205 = vmatmul.bf16.gmra.mxu0 %v7460
    %v9206 = vpop.f32.mrf.mxu0
    %v9207 = vadd.f32 %v9118, %v9206
    %v9208 = vpop.f32.mrf.mxu0
    %v9209 = vadd.f32 %v9120, %v9208
    %9210 = vmatmul.bf16.gmra.mxu0 %v7464
    %v9211 = vpop.f32.mrf.mxu0
    %v9212 = vadd.f32 %v9123, %v9211
    %v9213 = vpop.f32.mrf.mxu0
    %v9214 = vadd.f32 %v9125, %v9213
    %9215 = vmatmul.bf16.gmra.mxu0 %v7468
    %v9216 = vpop.f32.mrf.mxu0
    %v9217 = vadd.f32 %v9128, %v9216
    %v9218 = vpop.f32.mrf.mxu0
    %v9219 = vadd.f32 %v9130, %v9218
    %9220 = vmatmul.bf16.gmra.mxu0 %v7472
    %v9221 = vpop.f32.mrf.mxu0
    %v9222 = vadd.f32 %v9133, %v9221
    %v9223 = vpop.f32.mrf.mxu0
    %v9224 = vadd.f32 %v9135, %v9223
    %9225 = vmatmul.bf16.gmra.mxu0 %v7476
    %v9226 = vpop.f32.mrf.mxu0
    %v9227 = vadd.f32 %v9138, %v9226
    %v9228 = vpop.f32.mrf.mxu0
    %v9229 = vadd.f32 %v9140, %v9228
    %9230 = vmatmul.bf16.gmra.mxu0 %v7480
    %v9231 = vpop.f32.mrf.mxu0
    %v9232 = vadd.f32 %v9143, %v9231
    %v9233 = vpop.f32.mrf.mxu0
    %v9234 = vadd.f32 %v9145, %v9233
    %9235 = vmatmul.bf16.gmra.mxu0 %v7484
    %v9236 = vpop.f32.mrf.mxu0
    %v9237 = vadd.f32 %v9148, %v9236
    %v9238 = vpop.f32.mrf.mxu0
    %v9239 = vadd.f32 %v9150, %v9238
    %9240 = vmatmul.bf16.gmra.mxu0 %v7488
    %v9241 = vpop.f32.mrf.mxu0
    %v9242 = vadd.f32 %v9153, %v9241
    %v9243 = vpop.f32.mrf.mxu0
    %v9244 = vadd.f32 %v9155, %v9243
    %9245 = vmatmul.bf16.gmra.mxu0 %v7492
    %v9246 = vpop.f32.mrf.mxu0
    %v9247 = vadd.f32 %v9158, %v9246
    %v9248 = vpop.f32.mrf.mxu0
    %v9249 = vadd.f32 %v9160, %v9248
    %9250 = vdwg.mxu0
    %9251 = vmatpush.bf16.msra.mxu0 %v8142
    %9252 = vmatpush.bf16.msra.mxu0 %v8138
    %9253 = vmatpush.bf16.msra.mxu0 %v8134
    %9254 = vmatpush.bf16.msra.mxu0 %v8130
    %9255 = vmatpush.bf16.msra.mxu0 %v8126
    %9256 = vmatpush.bf16.msra.mxu0 %v8122
    %9257 = vmatpush.bf16.msra.mxu0 %v8118
    %9258 = vmatpush.bf16.msra.mxu0 %v8114
    %9259 = vmatmul.bf16.gmra.mxu0 %v7433
    %v9260 = vpop.f32.mrf.mxu0
    %v9261 = vadd.f32 %v9172, %v9260
    %v9262 = vpop.f32.mrf.mxu0
    %v9263 = vadd.f32 %v9174, %v9262
    %9264 = vmatmul.bf16.gmra.mxu0 %v7437
    %v9265 = vpop.f32.mrf.mxu0
    %v9266 = vadd.f32 %v9177, %v9265
    %v9267 = vpop.f32.mrf.mxu0
    %v9268 = vadd.f32 %v9179, %v9267
    %9269 = vmatmul.bf16.gmra.mxu0 %v7441
    %v9270 = vpop.f32.mrf.mxu0
    %v9271 = vadd.f32 %v9182, %v9270
    %v9272 = vpop.f32.mrf.mxu0
    %v9273 = vadd.f32 %v9184, %v9272
    %9274 = vmatmul.bf16.gmra.mxu0 %v7445
    %v9275 = vpop.f32.mrf.mxu0
    %v9276 = vadd.f32 %v9187, %v9275
    %v9277 = vpop.f32.mrf.mxu0
    %v9278 = vadd.f32 %v9189, %v9277
    %9279 = vmatmul.bf16.gmra.mxu0 %v7449
    %v9280 = vpop.f32.mrf.mxu0
    %v9281 = vadd.f32 %v9192, %v9280
    %v9282 = vpop.f32.mrf.mxu0
    %v9283 = vadd.f32 %v9194, %v9282
    %9284 = vmatmul.bf16.gmra.mxu0 %v7453
    %v9285 = vpop.f32.mrf.mxu0
    %v9286 = vadd.f32 %v9197, %v9285
    %v9287 = vpop.f32.mrf.mxu0
    %v9288 = vadd.f32 %v9199, %v9287
    %9289 = vmatmul.bf16.gmra.mxu0 %v7457
    %v9290 = vpop.f32.mrf.mxu0
    %v9291 = vadd.f32 %v9202, %v9290
    %v9292 = vpop.f32.mrf.mxu0
    %v9293 = vadd.f32 %v9204, %v9292
    %9294 = vmatmul.bf16.gmra.mxu0 %v7461
    %v9295 = vpop.f32.mrf.mxu0
    %v9296 = vadd.f32 %v9207, %v9295
    %v9297 = vpop.f32.mrf.mxu0
    %v9298 = vadd.f32 %v9209, %v9297
    %9299 = vmatmul.bf16.gmra.mxu0 %v7465
    %v9300 = vpop.f32.mrf.mxu0
    %v9301 = vadd.f32 %v9212, %v9300
    %v9302 = vpop.f32.mrf.mxu0
    %v9303 = vadd.f32 %v9214, %v9302
    %9304 = vmatmul.bf16.gmra.mxu0 %v7469
    %v9305 = vpop.f32.mrf.mxu0
    %v9306 = vadd.f32 %v9217, %v9305
    %v9307 = vpop.f32.mrf.mxu0
    %v9308 = vadd.f32 %v9219, %v9307
    %9309 = vmatmul.bf16.gmra.mxu0 %v7473
    %v9310 = vpop.f32.mrf.mxu0
    %v9311 = vadd.f32 %v9222, %v9310
    %v9312 = vpop.f32.mrf.mxu0
    %v9313 = vadd.f32 %v9224, %v9312
    %9314 = vmatmul.bf16.gmra.mxu0 %v7477
    %v9315 = vpop.f32.mrf.mxu0
    %v9316 = vadd.f32 %v9227, %v9315
    %v9317 = vpop.f32.mrf.mxu0
    %v9318 = vadd.f32 %v9229, %v9317
    %9319 = vmatmul.bf16.gmra.mxu0 %v7481
    %v9320 = vpop.f32.mrf.mxu0
    %v9321 = vadd.f32 %v9232, %v9320
    %v9322 = vpop.f32.mrf.mxu0
    %v9323 = vadd.f32 %v9234, %v9322
    %9324 = vmatmul.bf16.gmra.mxu0 %v7485
    %v9325 = vpop.f32.mrf.mxu0
    %v9326 = vadd.f32 %v9237, %v9325
    %v9327 = vpop.f32.mrf.mxu0
    %v9328 = vadd.f32 %v9239, %v9327
    %9329 = vmatmul.bf16.gmra.mxu0 %v7489
    %v9330 = vpop.f32.mrf.mxu0
    %v9331 = vadd.f32 %v9242, %v9330
    %v9332 = vpop.f32.mrf.mxu0
    %v9333 = vadd.f32 %v9244, %v9332
    %9334 = vmatmul.bf16.gmra.mxu0 %v7493
    %v9335 = vpop.f32.mrf.mxu0
    %v9336 = vadd.f32 %v9247, %v9335
    %v9337 = vpop.f32.mrf.mxu0
    %v9338 = vadd.f32 %v9249, %v9337
    %9339 = vdwg.mxu0
    %9340 = vmatpush.bf16.msra.mxu0 %v8047
    %9341 = vmatpush.bf16.msra.mxu0 %v8043
    %9342 = vmatpush.bf16.msra.mxu0 %v8039
    %9343 = vmatpush.bf16.msra.mxu0 %v8035
    %9344 = vmatpush.bf16.msra.mxu0 %v8031
    %9345 = vmatpush.bf16.msra.mxu0 %v8027
    %9346 = vmatpush.bf16.msra.mxu0 %v8023
    %9347 = vmatpush.bf16.msra.mxu0 %v8019
    %9348 = vmatmul.bf16.gmra.mxu0 %v7430
    %v9349 = vpop.f32.mrf.mxu0
    %v9350 = vadd.f32 %v7627, %v9349
    %v9351 = vpop.f32.mrf.mxu0
    %v9352 = vadd.f32 %v7627, %v9351
    %9353 = vmatmul.bf16.gmra.mxu0 %v7434
    %v9354 = vpop.f32.mrf.mxu0
    %v9355 = vadd.f32 %v7627, %v9354
    %v9356 = vpop.f32.mrf.mxu0
    %v9357 = vadd.f32 %v7627, %v9356
    %9358 = vmatmul.bf16.gmra.mxu0 %v7438
    %v9359 = vpop.f32.mrf.mxu0
    %v9360 = vadd.f32 %v7627, %v9359
    %v9361 = vpop.f32.mrf.mxu0
    %v9362 = vadd.f32 %v7627, %v9361
    %9363 = vmatmul.bf16.gmra.mxu0 %v7442
    %v9364 = vpop.f32.mrf.mxu0
    %v9365 = vadd.f32 %v7627, %v9364
    %v9366 = vpop.f32.mrf.mxu0
    %v9367 = vadd.f32 %v7627, %v9366
    %9368 = vmatmul.bf16.gmra.mxu0 %v7446
    %v9369 = vpop.f32.mrf.mxu0
    %v9370 = vadd.f32 %v7627, %v9369
    %v9371 = vpop.f32.mrf.mxu0
    %v9372 = vadd.f32 %v7627, %v9371
    %9373 = vmatmul.bf16.gmra.mxu0 %v7450
    %v9374 = vpop.f32.mrf.mxu0
    %v9375 = vadd.f32 %v7627, %v9374
    %v9376 = vpop.f32.mrf.mxu0
    %v9377 = vadd.f32 %v7627, %v9376
    %9378 = vmatmul.bf16.gmra.mxu0 %v7454
    %v9379 = vpop.f32.mrf.mxu0
    %v9380 = vadd.f32 %v7627, %v9379
    %v9381 = vpop.f32.mrf.mxu0
    %v9382 = vadd.f32 %v7627, %v9381
    %9383 = vmatmul.bf16.gmra.mxu0 %v7458
    %v9384 = vpop.f32.mrf.mxu0
    %v9385 = vadd.f32 %v7627, %v9384
    %v9386 = vpop.f32.mrf.mxu0
    %v9387 = vadd.f32 %v7627, %v9386
    %9388 = vmatmul.bf16.gmra.mxu0 %v7462
    %v9389 = vpop.f32.mrf.mxu0
    %v9390 = vadd.f32 %v7627, %v9389
    %v9391 = vpop.f32.mrf.mxu0
    %v9392 = vadd.f32 %v7627, %v9391
    %9393 = vmatmul.bf16.gmra.mxu0 %v7466
    %v9394 = vpop.f32.mrf.mxu0
    %v9395 = vadd.f32 %v7627, %v9394
    %v9396 = vpop.f32.mrf.mxu0
    %v9397 = vadd.f32 %v7627, %v9396
    %9398 = vmatmul.bf16.gmra.mxu0 %v7470
    %v9399 = vpop.f32.mrf.mxu0
    %v9400 = vadd.f32 %v7627, %v9399
    %v9401 = vpop.f32.mrf.mxu0
    %v9402 = vadd.f32 %v7627, %v9401
    %9403 = vmatmul.bf16.gmra.mxu0 %v7474
    %v9404 = vpop.f32.mrf.mxu0
    %v9405 = vadd.f32 %v7627, %v9404
    %v9406 = vpop.f32.mrf.mxu0
    %v9407 = vadd.f32 %v7627, %v9406
    %9408 = vmatmul.bf16.gmra.mxu0 %v7478
    %v9409 = vpop.f32.mrf.mxu0
    %v9410 = vadd.f32 %v7627, %v9409
    %v9411 = vpop.f32.mrf.mxu0
    %v9412 = vadd.f32 %v7627, %v9411
    %9413 = vmatmul.bf16.gmra.mxu0 %v7482
    %v9414 = vpop.f32.mrf.mxu0
    %v9415 = vadd.f32 %v7627, %v9414
    %v9416 = vpop.f32.mrf.mxu0
    %v9417 = vadd.f32 %v7627, %v9416
    %9418 = vmatmul.bf16.gmra.mxu0 %v7486
    %v9419 = vpop.f32.mrf.mxu0
    %v9420 = vadd.f32 %v7627, %v9419
    %v9421 = vpop.f32.mrf.mxu0
    %v9422 = vadd.f32 %v7627, %v9421
    %9423 = vmatmul.bf16.gmra.mxu0 %v7490
    %v9424 = vpop.f32.mrf.mxu0
    %v9425 = vadd.f32 %v7627, %v9424
    %v9426 = vpop.f32.mrf.mxu0
    %v9427 = vadd.f32 %v7627, %v9426
    %9428 = vdwg.mxu0
    %9429 = vmatpush.bf16.msra.mxu0 %v8079
    %9430 = vmatpush.bf16.msra.mxu0 %v8075
    %9431 = vmatpush.bf16.msra.mxu0 %v8071
    %9432 = vmatpush.bf16.msra.mxu0 %v8067
    %9433 = vmatpush.bf16.msra.mxu0 %v8063
    %9434 = vmatpush.bf16.msra.mxu0 %v8059
    %9435 = vmatpush.bf16.msra.mxu0 %v8055
    %9436 = vmatpush.bf16.msra.mxu0 %v8051
    %9437 = vmatmul.bf16.gmra.mxu0 %v7431
    %v9438 = vpop.f32.mrf.mxu0
    %v9439 = vadd.f32 %v9350, %v9438
    %v9440 = vpop.f32.mrf.mxu0
    %v9441 = vadd.f32 %v9352, %v9440
    %9442 = vmatmul.bf16.gmra.mxu0 %v7435
    %v9443 = vpop.f32.mrf.mxu0
    %v9444 = vadd.f32 %v9355, %v9443
    %v9445 = vpop.f32.mrf.mxu0
    %v9446 = vadd.f32 %v9357, %v9445
    %9447 = vmatmul.bf16.gmra.mxu0 %v7439
    %v9448 = vpop.f32.mrf.mxu0
    %v9449 = vadd.f32 %v9360, %v9448
    %v9450 = vpop.f32.mrf.mxu0
    %v9451 = vadd.f32 %v9362, %v9450
    %9452 = vmatmul.bf16.gmra.mxu0 %v7443
    %v9453 = vpop.f32.mrf.mxu0
    %v9454 = vadd.f32 %v9365, %v9453
    %v9455 = vpop.f32.mrf.mxu0
    %v9456 = vadd.f32 %v9367, %v9455
    %9457 = vmatmul.bf16.gmra.mxu0 %v7447
    %v9458 = vpop.f32.mrf.mxu0
    %v9459 = vadd.f32 %v9370, %v9458
    %v9460 = vpop.f32.mrf.mxu0
    %v9461 = vadd.f32 %v9372, %v9460
    %9462 = vmatmul.bf16.gmra.mxu0 %v7451
    %v9463 = vpop.f32.mrf.mxu0
    %v9464 = vadd.f32 %v9375, %v9463
    %v9465 = vpop.f32.mrf.mxu0
    %v9466 = vadd.f32 %v9377, %v9465
    %9467 = vmatmul.bf16.gmra.mxu0 %v7455
    %v9468 = vpop.f32.mrf.mxu0
    %v9469 = vadd.f32 %v9380, %v9468
    %v9470 = vpop.f32.mrf.mxu0
    %v9471 = vadd.f32 %v9382, %v9470
    %9472 = vmatmul.bf16.gmra.mxu0 %v7459
    %v9473 = vpop.f32.mrf.mxu0
    %v9474 = vadd.f32 %v9385, %v9473
    %v9475 = vpop.f32.mrf.mxu0
    %v9476 = vadd.f32 %v9387, %v9475
    %9477 = vmatmul.bf16.gmra.mxu0 %v7463
    %v9478 = vpop.f32.mrf.mxu0
    %v9479 = vadd.f32 %v9390, %v9478
    %v9480 = vpop.f32.mrf.mxu0
    %v9481 = vadd.f32 %v9392, %v9480
    %9482 = vmatmul.bf16.gmra.mxu0 %v7467
    %v9483 = vpop.f32.mrf.mxu0
    %v9484 = vadd.f32 %v9395, %v9483
    %v9485 = vpop.f32.mrf.mxu0
    %v9486 = vadd.f32 %v9397, %v9485
    %9487 = vmatmul.bf16.gmra.mxu0 %v7471
    %v9488 = vpop.f32.mrf.mxu0
    %v9489 = vadd.f32 %v9400, %v9488
    %v9490 = vpop.f32.mrf.mxu0
    %v9491 = vadd.f32 %v9402, %v9490
    %9492 = vmatmul.bf16.gmra.mxu0 %v7475
    %v9493 = vpop.f32.mrf.mxu0
    %v9494 = vadd.f32 %v9405, %v9493
    %v9495 = vpop.f32.mrf.mxu0
    %v9496 = vadd.f32 %v9407, %v9495
    %9497 = vmatmul.bf16.gmra.mxu0 %v7479
    %v9498 = vpop.f32.mrf.mxu0
    %v9499 = vadd.f32 %v9410, %v9498
    %v9500 = vpop.f32.mrf.mxu0
    %v9501 = vadd.f32 %v9412, %v9500
    %9502 = vmatmul.bf16.gmra.mxu0 %v7483
    %v9503 = vpop.f32.mrf.mxu0
    %v9504 = vadd.f32 %v9415, %v9503
    %v9505 = vpop.f32.mrf.mxu0
    %v9506 = vadd.f32 %v9417, %v9505
    %9507 = vmatmul.bf16.gmra.mxu0 %v7487
    %v9508 = vpop.f32.mrf.mxu0
    %v9509 = vadd.f32 %v9420, %v9508
    %v9510 = vpop.f32.mrf.mxu0
    %v9511 = vadd.f32 %v9422, %v9510
    %9512 = vmatmul.bf16.gmra.mxu0 %v7491
    %v9513 = vpop.f32.mrf.mxu0
    %v9514 = vadd.f32 %v9425, %v9513
    %v9515 = vpop.f32.mrf.mxu0
    %v9516 = vadd.f32 %v9427, %v9515
    %9517 = vdwg.mxu0
    %9518 = vmatpush.bf16.msra.mxu0 %v8111
    %9519 = vmatpush.bf16.msra.mxu0 %v8107
    %9520 = vmatpush.bf16.msra.mxu0 %v8103
    %9521 = vmatpush.bf16.msra.mxu0 %v8099
    %9522 = vmatpush.bf16.msra.mxu0 %v8095
    %9523 = vmatpush.bf16.msra.mxu0 %v8091
    %9524 = vmatpush.bf16.msra.mxu0 %v8087
    %9525 = vmatpush.bf16.msra.mxu0 %v8083
    %9526 = vmatmul.bf16.gmra.mxu0 %v7432
    %v9527 = vpop.f32.mrf.mxu0
    %v9528 = vadd.f32 %v9439, %v9527
    %v9529 = vpop.f32.mrf.mxu0
    %v9530 = vadd.f32 %v9441, %v9529
    %9531 = vmatmul.bf16.gmra.mxu0 %v7436
    %v9532 = vpop.f32.mrf.mxu0
    %v9533 = vadd.f32 %v9444, %v9532
    %v9534 = vpop.f32.mrf.mxu0
    %v9535 = vadd.f32 %v9446, %v9534
    %9536 = vmatmul.bf16.gmra.mxu0 %v7440
    %v9537 = vpop.f32.mrf.mxu0
    %v9538 = vadd.f32 %v9449, %v9537
    %v9539 = vpop.f32.mrf.mxu0
    %v9540 = vadd.f32 %v9451, %v9539
    %9541 = vmatmul.bf16.gmra.mxu0 %v7444
    %v9542 = vpop.f32.mrf.mxu0
    %v9543 = vadd.f32 %v9454, %v9542
    %v9544 = vpop.f32.mrf.mxu0
    %v9545 = vadd.f32 %v9456, %v9544
    %9546 = vmatmul.bf16.gmra.mxu0 %v7448
    %v9547 = vpop.f32.mrf.mxu0
    %v9548 = vadd.f32 %v9459, %v9547
    %v9549 = vpop.f32.mrf.mxu0
    %v9550 = vadd.f32 %v9461, %v9549
    %9551 = vmatmul.bf16.gmra.mxu0 %v7452
    %v9552 = vpop.f32.mrf.mxu0
    %v9553 = vadd.f32 %v9464, %v9552
    %v9554 = vpop.f32.mrf.mxu0
    %v9555 = vadd.f32 %v9466, %v9554
    %9556 = vmatmul.bf16.gmra.mxu0 %v7456
    %v9557 = vpop.f32.mrf.mxu0
    %v9558 = vadd.f32 %v9469, %v9557
    %v9559 = vpop.f32.mrf.mxu0
    %v9560 = vadd.f32 %v9471, %v9559
    %9561 = vmatmul.bf16.gmra.mxu0 %v7460
    %v9562 = vpop.f32.mrf.mxu0
    %v9563 = vadd.f32 %v9474, %v9562
    %v9564 = vpop.f32.mrf.mxu0
    %v9565 = vadd.f32 %v9476, %v9564
    %9566 = vmatmul.bf16.gmra.mxu0 %v7464
    %v9567 = vpop.f32.mrf.mxu0
    %v9568 = vadd.f32 %v9479, %v9567
    %v9569 = vpop.f32.mrf.mxu0
    %v9570 = vadd.f32 %v9481, %v9569
    %9571 = vmatmul.bf16.gmra.mxu0 %v7468
    %v9572 = vpop.f32.mrf.mxu0
    %v9573 = vadd.f32 %v9484, %v9572
    %v9574 = vpop.f32.mrf.mxu0
    %v9575 = vadd.f32 %v9486, %v9574
    %9576 = vmatmul.bf16.gmra.mxu0 %v7472
    %v9577 = vpop.f32.mrf.mxu0
    %v9578 = vadd.f32 %v9489, %v9577
    %v9579 = vpop.f32.mrf.mxu0
    %v9580 = vadd.f32 %v9491, %v9579
    %9581 = vmatmul.bf16.gmra.mxu0 %v7476
    %v9582 = vpop.f32.mrf.mxu0
    %v9583 = vadd.f32 %v9494, %v9582
    %v9584 = vpop.f32.mrf.mxu0
    %v9585 = vadd.f32 %v9496, %v9584
    %9586 = vmatmul.bf16.gmra.mxu0 %v7480
    %v9587 = vpop.f32.mrf.mxu0
    %v9588 = vadd.f32 %v9499, %v9587
    %v9589 = vpop.f32.mrf.mxu0
    %v9590 = vadd.f32 %v9501, %v9589
    %9591 = vmatmul.bf16.gmra.mxu0 %v7484
    %v9592 = vpop.f32.mrf.mxu0
    %v9593 = vadd.f32 %v9504, %v9592
    %v9594 = vpop.f32.mrf.mxu0
    %v9595 = vadd.f32 %v9506, %v9594
    %9596 = vmatmul.bf16.gmra.mxu0 %v7488
    %v9597 = vpop.f32.mrf.mxu0
    %v9598 = vadd.f32 %v9509, %v9597
    %v9599 = vpop.f32.mrf.mxu0
    %v9600 = vadd.f32 %v9511, %v9599
    %9601 = vmatmul.bf16.gmra.mxu0 %v7492
    %v9602 = vpop.f32.mrf.mxu0
    %v9603 = vadd.f32 %v9514, %v9602
    %v9604 = vpop.f32.mrf.mxu0
    %v9605 = vadd.f32 %v9516, %v9604
    %9606 = vdwg.mxu0
    %9607 = vmatpush.bf16.msra.mxu0 %v8143
    %9608 = vmatpush.bf16.msra.mxu0 %v8139
    %9609 = vmatpush.bf16.msra.mxu0 %v8135
    %9610 = vmatpush.bf16.msra.mxu0 %v8131
    %9611 = vmatpush.bf16.msra.mxu0 %v8127
    %9612 = vmatpush.bf16.msra.mxu0 %v8123
    %9613 = vmatpush.bf16.msra.mxu0 %v8119
    %9614 = vmatpush.bf16.msra.mxu0 %v8115
    %9615 = vmatmul.bf16.gmra.mxu0 %v7433
    %v9616 = vpop.f32.mrf.mxu0
    %v9617 = vadd.f32 %v9528, %v9616
    %v9618 = vpop.f32.mrf.mxu0
    %v9619 = vadd.f32 %v9530, %v9618
    %9620 = vmatmul.bf16.gmra.mxu0 %v7437
    %v9621 = vpop.f32.mrf.mxu0
    %v9622 = vadd.f32 %v9533, %v9621
    %v9623 = vpop.f32.mrf.mxu0
    %v9624 = vadd.f32 %v9535, %v9623
    %9625 = vmatmul.bf16.gmra.mxu0 %v7441
    %v9626 = vpop.f32.mrf.mxu0
    %v9627 = vadd.f32 %v9538, %v9626
    %v9628 = vpop.f32.mrf.mxu0
    %v9629 = vadd.f32 %v9540, %v9628
    %9630 = vmatmul.bf16.gmra.mxu0 %v7445
    %v9631 = vpop.f32.mrf.mxu0
    %v9632 = vadd.f32 %v9543, %v9631
    %v9633 = vpop.f32.mrf.mxu0
    %v9634 = vadd.f32 %v9545, %v9633
    %9635 = vmatmul.bf16.gmra.mxu0 %v7449
    %v9636 = vpop.f32.mrf.mxu0
    %v9637 = vadd.f32 %v9548, %v9636
    %v9638 = vpop.f32.mrf.mxu0
    %v9639 = vadd.f32 %v9550, %v9638
    %9640 = vmatmul.bf16.gmra.mxu0 %v7453
    %v9641 = vpop.f32.mrf.mxu0
    %v9642 = vadd.f32 %v9553, %v9641
    %v9643 = vpop.f32.mrf.mxu0
    %v9644 = vadd.f32 %v9555, %v9643
    %9645 = vmatmul.bf16.gmra.mxu0 %v7457
    %v9646 = vpop.f32.mrf.mxu0
    %v9647 = vadd.f32 %v9558, %v9646
    %v9648 = vpop.f32.mrf.mxu0
    %v9649 = vadd.f32 %v9560, %v9648
    %9650 = vmatmul.bf16.gmra.mxu0 %v7461
    %v9651 = vpop.f32.mrf.mxu0
    %v9652 = vadd.f32 %v9563, %v9651
    %v9653 = vpop.f32.mrf.mxu0
    %v9654 = vadd.f32 %v9565, %v9653
    %9655 = vmatmul.bf16.gmra.mxu0 %v7465
    %v9656 = vpop.f32.mrf.mxu0
    %v9657 = vadd.f32 %v9568, %v9656
    %v9658 = vpop.f32.mrf.mxu0
    %v9659 = vadd.f32 %v9570, %v9658
    %9660 = vmatmul.bf16.gmra.mxu0 %v7469
    %v9661 = vpop.f32.mrf.mxu0
    %v9662 = vadd.f32 %v9573, %v9661
    %v9663 = vpop.f32.mrf.mxu0
    %v9664 = vadd.f32 %v9575, %v9663
    %9665 = vmatmul.bf16.gmra.mxu0 %v7473
    %v9666 = vpop.f32.mrf.mxu0
    %v9667 = vadd.f32 %v9578, %v9666
    %v9668 = vpop.f32.mrf.mxu0
    %v9669 = vadd.f32 %v9580, %v9668
    %9670 = vmatmul.bf16.gmra.mxu0 %v7477
    %v9671 = vpop.f32.mrf.mxu0
    %v9672 = vadd.f32 %v9583, %v9671
    %v9673 = vpop.f32.mrf.mxu0
    %v9674 = vadd.f32 %v9585, %v9673
    %9675 = vmatmul.bf16.gmra.mxu0 %v7481
    %v9676 = vpop.f32.mrf.mxu0
    %v9677 = vadd.f32 %v9588, %v9676
    %v9678 = vpop.f32.mrf.mxu0
    %v9679 = vadd.f32 %v9590, %v9678
    %9680 = vmatmul.bf16.gmra.mxu0 %v7485
    %v9681 = vpop.f32.mrf.mxu0
    %v9682 = vadd.f32 %v9593, %v9681
    %v9683 = vpop.f32.mrf.mxu0
    %v9684 = vadd.f32 %v9595, %v9683
    %9685 = vmatmul.bf16.gmra.mxu0 %v7489
    %v9686 = vpop.f32.mrf.mxu0
    %v9687 = vadd.f32 %v9598, %v9686
    %v9688 = vpop.f32.mrf.mxu0
    %v9689 = vadd.f32 %v9600, %v9688
    %9690 = vmatmul.bf16.gmra.mxu0 %v7493
    %v9691 = vpop.f32.mrf.mxu0
    %v9692 = vadd.f32 %v9603, %v9691
    %v9693 = vpop.f32.mrf.mxu0
    %v9694 = vadd.f32 %v9605, %v9693
    %9695 = vdwg.mxu0
    %v9696 = vpack.c.bf16 %v8905, %v8549
    %v9697 = vpack.c.bf16 %v9617, %v9261
    %v9698 = vpack.c.bf16 %v8907, %v8551
    %v9699 = vpack.c.bf16 %v9619, %v9263
    %v9700 = vpack.c.bf16 %v8910, %v8554
    %v9701 = vpack.c.bf16 %v9622, %v9266
    %v9702 = vpack.c.bf16 %v8912, %v8556
    %v9703 = vpack.c.bf16 %v9624, %v9268
    %v9704 = vpack.c.bf16 %v8915, %v8559
    %v9705 = vpack.c.bf16 %v9627, %v9271
    %v9706 = vpack.c.bf16 %v8917, %v8561
    %v9707 = vpack.c.bf16 %v9629, %v9273
    %v9708 = vpack.c.bf16 %v8920, %v8564
    %v9709 = vpack.c.bf16 %v9632, %v9276
    %v9710 = vpack.c.bf16 %v8922, %v8566
    %v9711 = vpack.c.bf16 %v9634, %v9278
    %v9712 = vpack.c.bf16 %v8925, %v8569
    %v9713 = vpack.c.bf16 %v9637, %v9281
    %v9714 = vpack.c.bf16 %v8927, %v8571
    %v9715 = vpack.c.bf16 %v9639, %v9283
    %v9716 = vpack.c.bf16 %v8930, %v8574
    %v9717 = vpack.c.bf16 %v9642, %v9286
    %v9718 = vpack.c.bf16 %v8932, %v8576
    %v9719 = vpack.c.bf16 %v9644, %v9288
    %v9720 = vpack.c.bf16 %v8935, %v8579
    %v9721 = vpack.c.bf16 %v9647, %v9291
    %v9722 = vpack.c.bf16 %v8937, %v8581
    %v9723 = vpack.c.bf16 %v9649, %v9293
    %v9724 = vpack.c.bf16 %v8940, %v8584
    %v9725 = vpack.c.bf16 %v9652, %v9296
    %v9726 = vpack.c.bf16 %v8942, %v8586
    %v9727 = vpack.c.bf16 %v9654, %v9298
    %v9728 = vpack.c.bf16 %v8945, %v8589
    %v9729 = vpack.c.bf16 %v9657, %v9301
    %v9730 = vpack.c.bf16 %v8947, %v8591
    %v9731 = vpack.c.bf16 %v9659, %v9303
    %v9732 = vpack.c.bf16 %v8950, %v8594
    %v9733 = vpack.c.bf16 %v9662, %v9306
    %v9734 = vpack.c.bf16 %v8952, %v8596
    %v9735 = vpack.c.bf16 %v9664, %v9308
    %v9736 = vpack.c.bf16 %v8955, %v8599
    %v9737 = vpack.c.bf16 %v9667, %v9311
    %v9738 = vpack.c.bf16 %v8957, %v8601
    %v9739 = vpack.c.bf16 %v9669, %v9313
    %v9740 = vpack.c.bf16 %v8960, %v8604
    %v9741 = vpack.c.bf16 %v9672, %v9316
    %v9742 = vpack.c.bf16 %v8962, %v8606
    %v9743 = vpack.c.bf16 %v9674, %v9318
    %v9744 = vpack.c.bf16 %v8965, %v8609
    %v9745 = vpack.c.bf16 %v9677, %v9321
    %v9746 = vpack.c.bf16 %v8967, %v8611
    %v9747 = vpack.c.bf16 %v9679, %v9323
    %v9748 = vpack.c.bf16 %v8970, %v8614
    %v9749 = vpack.c.bf16 %v9682, %v9326
    %v9750 = vpack.c.bf16 %v8972, %v8616
    %v9751 = vpack.c.bf16 %v9684, %v9328
    %v9752 = vpack.c.bf16 %v8975, %v8619
    %v9753 = vpack.c.bf16 %v9687, %v9331
    %v9754 = vpack.c.bf16 %v8977, %v8621
    %v9755 = vpack.c.bf16 %v9689, %v9333
    %v9756 = vpack.c.bf16 %v8980, %v8624
    %v9757 = vpack.c.bf16 %v9692, %v9336
    %v9758 = vpack.c.bf16 %v8982, %v8626
    %v9759 = vpack.c.bf16 %v9694, %v9338
    %9760 = vst [vmem:[#allocation14] sm:$0xff] %v9696
    %9761 = vst [vmem:[#allocation14 + $0x8] sm:$0xff] %v9697
    %9762 = vst [vmem:[#allocation14 + $0x10] sm:$0xff] %v9698
    %9763 = vst [vmem:[#allocation14 + $0x18] sm:$0xff] %v9699
    %9764 = vst [vmem:[#allocation14 + $0x20] sm:$0xff] %v9700
    %9765 = vst [vmem:[#allocation14 + $0x28] sm:$0xff] %v9701
    %9766 = vst [vmem:[#allocation14 + $0x30] sm:$0xff] %v9702
    %9767 = vst [vmem:[#allocation14 + $0x38] sm:$0xff] %v9703
    %9768 = vst [vmem:[#allocation14 + $0x40] sm:$0xff] %v9704
    %9769 = vst [vmem:[#allocation14 + $0x48] sm:$0xff] %v9705
    %9770 = vst [vmem:[#allocation14 + $0x50] sm:$0xff] %v9706
    %9771 = vst [vmem:[#allocation14 + $0x58] sm:$0xff] %v9707
    %9772 = vst [vmem:[#allocation14 + $0x60] sm:$0xff] %v9708
    %9773 = vst [vmem:[#allocation14 + $0x68] sm:$0xff] %v9709
    %9774 = vst [vmem:[#allocation14 + $0x70] sm:$0xff] %v9710
    %9775 = vst [vmem:[#allocation14 + $0x78] sm:$0xff] %v9711
    %9776 = vst [vmem:[#allocation14 + $0x80] sm:$0xff] %v9712
    %9777 = vst [vmem:[#allocation14 + $0x88] sm:$0xff] %v9713
    %9778 = vst [vmem:[#allocation14 + $0x90] sm:$0xff] %v9714
    %9779 = vst [vmem:[#allocation14 + $0x98] sm:$0xff] %v9715
    %9780 = vst [vmem:[#allocation14 + $0xa0] sm:$0xff] %v9716
    %9781 = vst [vmem:[#allocation14 + $0xa8] sm:$0xff] %v9717
    %9782 = vst [vmem:[#allocation14 + $0xb0] sm:$0xff] %v9718
    %9783 = vst [vmem:[#allocation14 + $0xb8] sm:$0xff] %v9719
    %9784 = vst [vmem:[#allocation14 + $0xc0] sm:$0xff] %v9720
    %9785 = vst [vmem:[#allocation14 + $0xc8] sm:$0xff] %v9721
    %9786 = vst [vmem:[#allocation14 + $0xd0] sm:$0xff] %v9722
    %9787 = vst [vmem:[#allocation14 + $0xd8] sm:$0xff] %v9723
    %9788 = vst [vmem:[#allocation14 + $0xe0] sm:$0xff] %v9724
    %9789 = vst [vmem:[#allocation14 + $0xe8] sm:$0xff] %v9725
    %9790 = vst [vmem:[#allocation14 + $0xf0] sm:$0xff] %v9726
    %9791 = vst [vmem:[#allocation14 + $0xf8] sm:$0xff] %v9727
    %9792 = vst [vmem:[#allocation14 + $0x100] sm:$0xff] %v9728
    %9793 = vst [vmem:[#allocation14 + $0x108] sm:$0xff] %v9729
    %9794 = vst [vmem:[#allocation14 + $0x110] sm:$0xff] %v9730
    %9795 = vst [vmem:[#allocation14 + $0x118] sm:$0xff] %v9731
    %9796 = vst [vmem:[#allocation14 + $0x120] sm:$0xff] %v9732
    %9797 = vst [vmem:[#allocation14 + $0x128] sm:$0xff] %v9733
    %9798 = vst [vmem:[#allocation14 + $0x130] sm:$0xff] %v9734
    %9799 = vst [vmem:[#allocation14 + $0x138] sm:$0xff] %v9735
    %9800 = vst [vmem:[#allocation14 + $0x140] sm:$0xff] %v9736
    %9801 = vst [vmem:[#allocation14 + $0x148] sm:$0xff] %v9737
    %9802 = vst [vmem:[#allocation14 + $0x150] sm:$0xff] %v9738
    %9803 = vst [vmem:[#allocation14 + $0x158] sm:$0xff] %v9739
    %9804 = vst [vmem:[#allocation14 + $0x160] sm:$0xff] %v9740
    %9805 = vst [vmem:[#allocation14 + $0x168] sm:$0xff] %v9741
    %9806 = vst [vmem:[#allocation14 + $0x170] sm:$0xff] %v9742
    %9807 = vst [vmem:[#allocation14 + $0x178] sm:$0xff] %v9743
    %9808 = vst [vmem:[#allocation14 + $0x180] sm:$0xff] %v9744
    %9809 = vst [vmem:[#allocation14 + $0x188] sm:$0xff] %v9745
    %9810 = vst [vmem:[#allocation14 + $0x190] sm:$0xff] %v9746
    %9811 = vst [vmem:[#allocation14 + $0x198] sm:$0xff] %v9747
    %9812 = vst [vmem:[#allocation14 + $0x1a0] sm:$0xff] %v9748
    %9813 = vst [vmem:[#allocation14 + $0x1a8] sm:$0xff] %v9749
    %9814 = vst [vmem:[#allocation14 + $0x1b0] sm:$0xff] %v9750
    %9815 = vst [vmem:[#allocation14 + $0x1b8] sm:$0xff] %v9751
    %9816 = vst [vmem:[#allocation14 + $0x1c0] sm:$0xff] %v9752
    %9817 = vst [vmem:[#allocation14 + $0x1c8] sm:$0xff] %v9753
    %9818 = vst [vmem:[#allocation14 + $0x1d0] sm:$0xff] %v9754
    %9819 = vst [vmem:[#allocation14 + $0x1d8] sm:$0xff] %v9755
    %9820 = vst [vmem:[#allocation14 + $0x1e0] sm:$0xff] %v9756
    %9821 = vst [vmem:[#allocation14 + $0x1e8] sm:$0xff] %v9757
    %9822 = vst [vmem:[#allocation14 + $0x1f0] sm:$0xff] %v9758
    %9823 = vst [vmem:[#allocation14 + $0x1f8] sm:$0xff] %v9759
    // Predicated region
    $region58: #{cell_embednet_forward.1} parent=1 // pred_check
      _
    $region59: #{cell_embednet_forward.1} parent=1 // pred_check_branch
      %9825 = sbr.rel (0) target = $region61
    $region60: #{cell_embednet_forward.1} parent=1 // pred_region
      %9827 = vsyncadd [#allocation4], 0
      %s9828 = sshll.u32 [#allocation14], 4
      %s9829 = int_to_ptr.vmem [resolvable:$true] %s9828
      %s9830 = sshll.u32 %s7, 4
      %s9831 = int_to_ptr.hbm [resolvable:$true] %s9830
      %9836 = dma.vmem_to_hbm [thread:$0]  %s9829, 8192, %s9831, [#allocation4], 256, 256, 16
    $region61: #{cell_embednet_forward.1} parent=1 // pred_fallthru
      _
    // Predicated region
    $region62: #{cell_embednet_forward.1} parent=1 // pred_check
      _
    $region63: #{cell_embednet_forward.1} parent=1 // pred_check_branch
      %9838 = sbr.rel (0) target = $region65
    $region64: #{cell_embednet_forward.1} parent=1 // pred_region
      %9840 = dma.done [#allocation4], 8192
    $region65: #{cell_embednet_forward.1} parent=1 // pred_fallthru
      _
    %9841 = vsyncpa [#allocation3], 1
    %9842 = vsyncpa [#allocation6], 1
    %9843 = vsyncpa [#allocation9], 1
    %9844 = vsyncpa [#allocation12], 1
    %9845 = vsyncpa [#allocation4], 1

</llo_original>
